<compile_context>
chip_gen: v6e
topology: v6e:2x2x1
jax: 0.10.0
libtpu: 0.0.40
codegen_flags: <defaults>
</compile_context>

<pallas_src>
import functools

import jax
import jax.numpy as jnp
from jax.experimental import pallas as pl
from jax.experimental.pallas import tpu as pltpu


def _round_up(x, m):
    return (x + m - 1) // m * m


def _full_block(shape):
    nd = len(shape)
    return pl.BlockSpec(shape, lambda *args, _nd=nd: (0,) * _nd)


# ---------------------------------------------------------------------------
# K1 / K2: fused conv (matmul over im2col tiles) + BN(train) + maxpool + ReLU
# ---------------------------------------------------------------------------

def _conv_bn_pool_relu_kernel(p_ref, w_ref, g_ref, b_ref, o_ref, sum_ref, sq_ref,
                              *, eps, inv_m, t_out):
    """grid = (2, n_tiles): pass 0 accumulates BN stats, pass 1 normalizes,
    pools (4 contiguous lane slabs of width t_out) and writes the output tile.
    Zero-padded patch columns contribute 0 to the sums; `inv_m` uses the real
    element count, so the padding never perturbs the statistics."""
    s = pl.program_id(0)
    m = pl.program_id(1)

    # conv as one MXU matmul (bf16 operands, f32 accumulation)
    y = jax.lax.dot_general(
        w_ref[...], p_ref[...],
        dimension_numbers=(((1,), (0,)), ((), ())),
        preferred_element_type=jnp.float32)                  # (Cout, 4*t_out) f32

    @pl.when(jnp.logical_and(s == 0, m == 0))
    def _():
        sum_ref[...] = jnp.zeros_like(sum_ref)
        sq_ref[...] = jnp.zeros_like(sq_ref)

    @pl.when(s == 0)                                         # stats pass
    def _():
        sum_ref[...] += jnp.sum(y, axis=1, keepdims=True)
        sq_ref[...] += jnp.sum(y * y, axis=1, keepdims=True)

    @pl.when(s == 1)                                         # normalize+pool+relu
    def _():
        mean = sum_ref[...] * inv_m
        var = sq_ref[...] * inv_m - mean * mean              # single-pass, f32
        scale = g_ref[...] * jax.lax.rsqrt(var + eps)
        shift = b_ref[...] - mean * scale
        yn = y * scale + shift
        pooled = yn[:, 0:t_out]                              # MaxPool2d(2): max
        for q in range(1, 4):                                # over 4 aligned slabs
            pooled = jnp.maximum(pooled, yn[:, q * t_out:(q + 1) * t_out])
        o_ref[...] = jnp.maximum(pooled, 0.0).astype(o_ref.dtype)   # ReLU


def conv_bn_pool_relu(p, w, g, b, *, cout, t_out, n_tiles, m_real, eps=1e-5):
    r = p.shape[0]
    return pl.pallas_call(
        functools.partial(_conv_bn_pool_relu_kernel,
                          eps=eps, inv_m=1.0 / float(m_real), t_out=t_out),
        grid=(2, n_tiles),
        in_specs=[
            pl.BlockSpec((r, 4 * t_out), lambda s, m: (0, m)),
            pl.BlockSpec((cout, r), lambda s, m: (0, 0)),
            pl.BlockSpec((cout, 1), lambda s, m: (0, 0)),
            pl.BlockSpec((cout, 1), lambda s, m: (0, 0)),
        ],
        # pass 0 parks the output window on block 0 (never written); pass 1
        # writes block m, so each block is only resident for consecutive steps.
        out_specs=pl.BlockSpec((cout, t_out), lambda s, m: (0, m * s)),
        out_shape=jax.ShapeDtypeStruct((cout, n_tiles * t_out), jnp.bfloat16),
        scratch_shapes=[pltpu.VMEM((cout, 1), jnp.float32),
                        pltpu.VMEM((cout, 1), jnp.float32)],
        # TODO(synk): the tile axis must stay "arbitrary" because the BN-stats
        # scratch is a sequential reduction; splitting the stats pass into its
        # own kernel would let the normalize pass run "parallel" on v7x.
        compiler_params=pltpu.CompilerParams(
            dimension_semantics=("arbitrary", "arbitrary")),
    )(p, w, g, b)


# ---------------------------------------------------------------------------
# K3: both classifier heads fused
# ---------------------------------------------------------------------------

def _heads_kernel(x_ref, w1_ref, bn1_ref, w2_ref, bn2_ref, w3_ref, bout_ref,
                  class_ref, domain_ref, *, eps):
    inv_n = 1.0 / x_ref.shape[0]

    def matmul(a, w_ref):
        return jax.lax.dot_general(
            a, w_ref[...], dimension_numbers=(((1,), (0,)), ((), ())),
            preferred_element_type=jnp.float32)

    def bn_relu(z, bn):                     # BatchNorm1d, training batch stats
        mean = jnp.sum(z, axis=0, keepdims=True) * inv_n
        var = jnp.sum(z * z, axis=0, keepdims=True) * inv_n - mean * mean
        scale = bn[0:1, :] * jax.lax.rsqrt(var + eps)
        return jnp.maximum(z * scale + (bn[1:2, :] - mean * scale), 0.0)

    def log_softmax(z):
        z = z - jnp.max(z, axis=1, keepdims=True)
        return z - jnp.log(jnp.sum(jnp.exp(z), axis=1, keepdims=True))

    x = x_ref[...]                                           # (N, 800) bf16
    # fused c_fc1 / d_fc1 (pre-BN biases dropped): cols 0:100 class, 128:228 dom
    h1 = bn_relu(matmul(x, w1_ref), bn1_ref[...]).astype(jnp.bfloat16)
    # TODO(synk): nn.Dropout()/nn.Dropout2d() train-mode masks not reproduced
    # (identity); BN running-stat EMA updates not emulated.
    # block-diagonal second layer: cols 0:100 = c_fc2, cols 100:102 = d_fc2
    z2 = matmul(h1, w2_ref)                                  # (N, 128) f32
    dom = z2[:, 100:102] + bout_ref[:, 10:12]                # d_fc2 bias kept
    h2 = bn_relu(z2, bn2_ref[...]).astype(jnp.bfloat16)
    cls = matmul(h2, w3_ref) + bout_ref[:, 0:10]             # c_fc3 (+ bias)
    class_ref[...] = log_softmax(cls)
    domain_ref[...] = log_softmax(dom)


def classifier_heads(x, hp, eps=1e-5):
    N = x.shape[0]
    args = (x, hp['w1'], hp['bn1'], hp['w2'], hp['bn2'], hp['w3'], hp['bout'])
    return pl.pallas_call(
        functools.partial(_heads_kernel, eps=eps),
        grid=(1,),
        in_specs=[_full_block(a.shape) for a in args],
        out_specs=(_full_block((N, 10)), _full_block((N, 2))),
        out_shape=(jax.ShapeDtypeStruct((N, 10), jnp.float32),
                   jax.ShapeDtypeStruct((N, 2), jnp.float32)),
        compiler_params=pltpu.CompilerParams(dimension_semantics=("arbitrary",)),
    )(*args)


# ---------------------------------------------------------------------------
# XLA-side layout plumbing (tiny tensors only)
# ---------------------------------------------------------------------------

def _build_patch_slab(x_cm, K, pool, t_out_cap=256):
    """Channel-major im2col with pool-friendly, tile-grouped column order.

    x_cm: (C, N, H, W).  Returns (patches, out_real, n_tiles, t_out) where
    patches is (C*K*K, n_tiles * pool*pool * t_out); inside each column tile
    the pool*pool pool positions form contiguous slabs of width t_out (a
    multiple of 128), so pooling in-kernel is a max over aligned lane slabs.
    Padded columns are zero (harmless for the BN sums)."""
    C, N, H, W = x_cm.shape
    oh, ow = H - K + 1, W - K + 1
    ohp, owp = oh // pool, ow // pool
    out_real = N * ohp * owp
    t_out = min(t_out_cap, _round_up(out_real, 128))
    n_tiles = -(-out_real // t_out)
    out_pad = n_tiles * t_out

    taps = []
    for ki in range(K):
        for kj in range(K):
            taps.append(x_cm[:, :, ki:ki + oh, kj:kj + ow])   # (C, N, oh, ow)
    p = jnp.stack(taps, axis=1)                               # (C, K*K, N, oh, ow)
    R = C * K * K
    p = p.reshape(R, N, ohp, pool, owp, pool)                 # rows: (c, ki, kj)
    p = p.transpose(0, 3, 5, 1, 2, 4)                         # (R, pi, pj, n, hp, wp)
    p = p.reshape(R, pool * pool, out_real)
    p = jnp.pad(p, ((0, 0), (0, 0), (0, out_pad - out_real)))
    p = p.reshape(R, pool * pool, n_tiles, t_out).transpose(0, 2, 1, 3)
    return p.reshape(R, n_tiles * pool * pool * t_out), out_real, n_tiles, t_out


def dann_forward(input_data, alpha, kp):
    del alpha  # ReverseLayerF is identity in the forward pass (gradient-only).
    N = input_data.shape[0]
    # The module broadcasts the single input channel to 3 identical channels;
    # that broadcast is folded into a channel-summed conv1 weight, so the
    # patch slab is built from the single channel.  Only valid for genuinely
    # single-channel (replicated) input, which is what the module assumes.
    assert input_data.shape[1] == 1, "expects single-channel (MNIST-like) input"
    x_cm = input_data.astype(jnp.bfloat16).reshape(N, 28, 28)[None]   # (1,N,28,28)

    # feature stage 1: conv1 -> bn1(train) -> pool1 -> relu1   (one fused kernel)
    p1, out1, nt1, t1 = _build_patch_slab(x_cm, K=5, pool=2)
    p1 = jnp.pad(p1, ((0, 32 - p1.shape[0]), (0, 0)))                 # rows 25->32
    o1 = conv_bn_pool_relu(p1, kp['f']['w1'], kp['f']['g1'], kp['f']['be1'],
                           cout=64, t_out=t1, n_tiles=nt1, m_real=N * 24 * 24)

    # feature stage 2: conv2 -> bn2 -> drop2d(id) -> pool2 -> relu2
    a1 = o1[:, :out1].reshape(64, N, 12, 12)                  # channel-major view
    p2, out2, nt2, t2 = _build_patch_slab(a1, K=5, pool=2)
    o2 = conv_bn_pool_relu(p2, kp['f']['w2'], kp['f']['g2'], kp['f']['be2'],
                           cout=64, t_out=t2, n_tiles=nt2, m_real=N * 8 * 8)
    # TODO(synk): conv2 still reads a 25x-duplicated im2col slab from HBM; an
    # in-kernel shifted-window conv over the (64,N,12,12) activation would
    # remove that duplication entirely.

    # feature.view(-1, 50*4*4): per-sample (c, h, w) flatten order.
    feat = (o2[:50, :out2].reshape(50, N, 16)
            .transpose(1, 0, 2).reshape(N, 800))
    return classifier_heads(feat, kp['h'])


# ---------------------------------------------------------------------------
# Parameters: PyTorch-layout init + kernel-ready packing
# ---------------------------------------------------------------------------

def init_params(key):
    """Fresh-module-style parameters in PyTorch layouts."""
    ks = jax.random.split(key, 14)

    def nrm(k, shape, scale=0.1):
        return scale * jax.random.normal(k, shape, jnp.float32)

    ones = lambda n: jnp.ones((n,), jnp.float32)
    zeros = lambda n: jnp.zeros((n,), jnp.float32)
    f = {'conv1_w': nrm(ks[0], (64, 3, 5, 5)), 'conv1_b': nrm(ks[1], (64,)),
         'bn1_g': ones(64), 'bn1_b': zeros(64),
         'conv2_w': nrm(ks[2], (50, 64, 5, 5)), 'conv2_b': nrm(ks[3], (50,)),
         'bn2_g': ones(50), 'bn2_b': zeros(50)}
    c = {'fc1_w': nrm(ks[4], (100, 800), 0.05), 'fc1_b': nrm(ks[5], (100,), 0.05),
         'bn1_g': ones(100), 'bn1_b': zeros(100),
         'fc2_w': nrm(ks[6], (100, 100), 0.05), 'fc2_b': nrm(ks[7], (100,), 0.05),
         'bn2_g': ones(100), 'bn2_b': zeros(100),
         'fc3_w': nrm(ks[8], (10, 100), 0.05), 'fc3_b': nrm(ks[9], (10,), 0.05)}
    d = {'fc1_w': nrm(ks[10], (100, 800), 0.05), 'fc1_b': nrm(ks[11], (100,), 0.05),
         'bn1_g': ones(100), 'bn1_b': zeros(100),
         'fc2_w': nrm(ks[12], (2, 100), 0.05), 'fc2_b': nrm(ks[13], (2,), 0.05)}
    return {'f': f, 'c': c, 'd': d}


def prepare_params(p):
    """Pack PyTorch-layout params into the kernel-ready layouts.

    Biases that feed a training-mode BatchNorm (conv1/conv2 biases, c_fc1,
    c_fc2, d_fc1 biases) are dropped: batch-mean centering cancels them."""
    f32, bf16 = jnp.float32, jnp.bfloat16
    f, c, d = p['f'], p['c'], p['d']

    # conv1: fold the 3-identical-channel broadcast into a channel sum; pad
    # the contraction dim 25 -> 32.
    w1 = f['conv1_w'].sum(axis=1).reshape(64, 25)
    w1 = jnp.pad(w1, ((0, 0), (0, 7))).astype(bf16)
    g1 = f['bn1_g'].reshape(64, 1).astype(f32)
    be1 = f['bn1_b'].reshape(64, 1).astype(f32)

    # conv2: pad Cout 50 -> 64 (zero weight rows; padded BN channels output 0).
    w2 = jnp.pad(f['conv2_w'].reshape(50, 1600), ((0, 14), (0, 0))).astype(bf16)
    g2 = jnp.pad(f['bn2_g'].reshape(50, 1), ((0, 14), (0, 0)),
                 constant_values=1.0).astype(f32)
    be2 = jnp.pad(f['bn2_b'].reshape(50, 1), ((0, 14), (0, 0))).astype(f32)

    # heads: fuse c_fc1 & d_fc1 (lane-padded to 128 each), block-diagonal
    # second layer, pack all tiny per-layer vectors into 3 small arrays.
    w1h = jnp.zeros((800, 256), f32)
    w1h = w1h.at[:, 0:100].set(c['fc1_w'].T)
    w1h = w1h.at[:, 128:228].set(d['fc1_w'].T)
    bn1 = jnp.zeros((2, 256), f32).at[0].set(1.0)
    bn1 = bn1.at[0, 0:100].set(c['bn1_g']).at[1, 0:100].set(c['bn1_b'])
    bn1 = bn1.at[0, 128:228].set(d['bn1_g']).at[1, 128:228].set(d['bn1_b'])

    w2h = jnp.zeros((256, 128), f32)
    w2h = w2h.at[0:100, 0:100].set(c['fc2_w'].T)
    w2h = w2h.at[128:228, 100:102].set(d['fc2_w'].T)
    bn2 = jnp.zeros((2, 128), f32).at[0].set(1.0)
    bn2 = bn2.at[0, 0:100].set(c['bn2_g']).at[1, 0:100].set(c['bn2_b'])

    w3h = jnp.zeros((128, 10), f32).at[0:100, :].set(c['fc3_w'].T)
    bout = jnp.zeros((1, 12), f32)
    bout = bout.at[0, 0:10].set(c['fc3_b']).at[0, 10:12].set(d['fc2_b'])

    return {
        'f': {'w1': w1, 'g1': g1, 'be1': be1, 'w2': w2, 'g2': g2, 'be2': be2},
        'h': {'w1': w1h.astype(bf16), 'bn1': bn1, 'w2': w2h.astype(bf16),
              'bn2': bn2, 'w3': w3h.astype(bf16), 'bout': bout},
    }


# ---------------------------------------------------------------------------
# Main
# ---------------------------------------------------------------------------

if __name__ == "__main__":
    key = jax.random.PRNGKey(0)
    k_params, k_x = jax.random.split(key)
    kparams = prepare_params(init_params(k_params))

    N = 2
    input_data = jax.random.normal(k_x, (N, 1, 28, 28), jnp.float32)  # MNIST-like
    alpha = jnp.float32(0.5)  # only scales gradients in ReverseLayerF

    fwd = jax.jit(dann_forward)
    class_out, domain_out = fwd(input_data, alpha, kparams)
    class_out, domain_out = jax.block_until_ready((class_out, domain_out))

    assert class_out.shape == (N, 10), class_out.shape
    assert domain_out.shape == (N, 2), domain_out.shape
    assert bool(jnp.all(jnp.isfinite(class_out)))
    assert bool(jnp.all(jnp.isfinite(domain_out)))
    # log-softmax rows must (log-)normalize to 0
    lse_c = jax.scipy.special.logsumexp(class_out, axis=1)
    lse_d = jax.scipy.special.logsumexp(domain_out, axis=1)
    assert bool(jnp.all(jnp.abs(lse_c) < 1e-4)), lse_c
    assert bool(jnp.all(jnp.abs(lse_d) < 1e-4)), lse_d
    print("KERNEL_OK")
</pallas_src>

<mosaic_0001>
module attributes {stable_mosaic.version = 11 : i64} {
  func.func @_conv_bn_pool_relu_kernel(%arg0: i32, %arg1: i32, %arg2: memref<32x1024xbf16, #tpu.memory_space<vmem>>, %arg3: memref<64x32xbf16, #tpu.memory_space<vmem>>, %arg4: memref<64x1xf32, #tpu.memory_space<vmem>>, %arg5: memref<64x1xf32, #tpu.memory_space<vmem>>, %arg6: memref<64x256xbf16, #tpu.memory_space<vmem>>, %arg7: memref<64x1xf32, #tpu.memory_space<vmem>>, %arg8: memref<64x1xf32, #tpu.memory_space<vmem>>) attributes {dimension_semantics = [#tpu.dimension_semantics<arbitrary>, #tpu.dimension_semantics<arbitrary>], iteration_bounds = array<i64: 2, 2>, scalar_prefetch = 0 : i64, scratch_operands = 2 : i64, tpu.core_type = #tpu.core_type<tc>, window_params = [{transform_indices = @transform_0, window_bounds = array<i64: 32, 1024>}, {pipeline_mode = #tpu.pipeline_mode<synchronous>, transform_indices = @transform_1, window_bounds = array<i64: 64, 32>}, {pipeline_mode = #tpu.pipeline_mode<synchronous>, transform_indices = @transform_2, window_bounds = array<i64: 64, 1>}, {pipeline_mode = #tpu.pipeline_mode<synchronous>, transform_indices = @transform_3, window_bounds = array<i64: 64, 1>}, {transform_indices = @transform_4, window_bounds = array<i64: 64, 256>}]} {
    %c0 = arith.constant 0 : index
    %c0_0 = arith.constant 0 : index
    %0 = vector.load %arg3[%c0, %c0_0] : memref<64x32xbf16, #tpu.memory_space<vmem>>, vector<64x32xbf16>
    %c0_1 = arith.constant 0 : index
    %c0_2 = arith.constant 0 : index
    %1 = vector.load %arg2[%c0_1, %c0_2] : memref<32x1024xbf16, #tpu.memory_space<vmem>>, vector<32x1024xbf16>
    %cst = arith.constant dense<0.000000e+00> : vector<64x1024xf32>
    %2 = tpu.matmul %0, %1, %cst {dimension_numbers = #tpu.dot_dimension_numbers<[1], [0], [0], [1], [0, 0, 1, 1], [], []>} : vector<64x32xbf16>, vector<32x1024xbf16>, vector<64x1024xf32> -> vector<64x1024xf32>
    %c0_i32 = arith.constant 0 : i32
    %3 = arith.cmpi eq, %arg0, %c0_i32 : i32
    %c0_i32_3 = arith.constant 0 : i32
    %4 = arith.cmpi eq, %arg1, %c0_i32_3 : i32
    %5 = arith.andi %3, %4 : i1
    %6 = arith.extui %5 : i1 to i32
    %c0_i32_4 = arith.constant 0 : i32
    %7 = arith.cmpi ne, %6, %c0_i32_4 : i32
    scf.if %7 {
      %cst_8 = arith.constant 0.000000e+00 : f32
      %14 = vector.broadcast %cst_8 : f32 to vector<64x1xf32>
      %c0_9 = arith.constant 0 : index
      %c0_10 = arith.constant 0 : index
      %15 = vector.load %arg7[%c0_9, %c0_10] : memref<64x1xf32, #tpu.memory_space<vmem>>, vector<64x1xf32>
      tpu.vector_store %arg7[%c0_9, %c0_10], %14 {strides = array<i32>} : memref<64x1xf32, #tpu.memory_space<vmem>>, vector<64x1xf32>,
      %cst_11 = arith.constant 0.000000e+00 : f32
      %16 = vector.broadcast %cst_11 : f32 to vector<64x1xf32>
      %c0_12 = arith.constant 0 : index
      %c0_13 = arith.constant 0 : index
      %17 = vector.load %arg8[%c0_12, %c0_13] : memref<64x1xf32, #tpu.memory_space<vmem>>, vector<64x1xf32>
      tpu.vector_store %arg8[%c0_12, %c0_13], %16 {strides = array<i32>} : memref<64x1xf32, #tpu.memory_space<vmem>>, vector<64x1xf32>,
    } else {
    }
    %c0_i32_5 = arith.constant 0 : i32
    %8 = arith.cmpi eq, %arg0, %c0_i32_5 : i32
    %9 = arith.extui %8 : i1 to i32
    %c0_i32_6 = arith.constant 0 : i32
    %10 = arith.cmpi ne, %9, %c0_i32_6 : i32
    scf.if %10 {
      %c0_8 = arith.constant 0 : index
      %c0_9 = arith.constant 0 : index
      %14 = vector.load %arg7[%c0_8, %c0_9] : memref<64x1xf32, #tpu.memory_space<vmem>>, vector<64x1xf32>
      %cst_10 = arith.constant dense<0.000000e+00> : vector<64xf32>
      %15 = vector.multi_reduction <add>, %2, %cst_10 [1] : vector<64x1024xf32> to vector<64xf32>
      %16 = vector.shape_cast %15 : vector<64xf32> to vector<64x1xf32>
      %17 = arith.addf %14, %16 : vector<64x1xf32>
      %c0_11 = arith.constant 0 : index
      %c0_12 = arith.constant 0 : index
      %18 = vector.load %arg7[%c0_11, %c0_12] : memref<64x1xf32, #tpu.memory_space<vmem>>, vector<64x1xf32>
      tpu.vector_store %arg7[%c0_11, %c0_12], %17 {strides = array<i32>} : memref<64x1xf32, #tpu.memory_space<vmem>>, vector<64x1xf32>,
      %c0_13 = arith.constant 0 : index
      %c0_14 = arith.constant 0 : index
      %19 = vector.load %arg8[%c0_13, %c0_14] : memref<64x1xf32, #tpu.memory_space<vmem>>, vector<64x1xf32>
      %20 = arith.mulf %2, %2 : vector<64x1024xf32>
      %cst_15 = arith.constant dense<0.000000e+00> : vector<64xf32>
      %21 = vector.multi_reduction <add>, %20, %cst_15 [1] : vector<64x1024xf32> to vector<64xf32>
      %22 = vector.shape_cast %21 : vector<64xf32> to vector<64x1xf32>
      %23 = arith.addf %19, %22 : vector<64x1xf32>
      %c0_16 = arith.constant 0 : index
      %c0_17 = arith.constant 0 : index
      %24 = vector.load %arg8[%c0_16, %c0_17] : memref<64x1xf32, #tpu.memory_space<vmem>>, vector<64x1xf32>
      tpu.vector_store %arg8[%c0_16, %c0_17], %23 {strides = array<i32>} : memref<64x1xf32, #tpu.memory_space<vmem>>, vector<64x1xf32>,
    } else {
    }
    %c1_i32 = arith.constant 1 : i32
    %11 = arith.cmpi eq, %arg0, %c1_i32 : i32
    %12 = arith.extui %11 : i1 to i32
    %c0_i32_7 = arith.constant 0 : i32
    %13 = arith.cmpi ne, %12, %c0_i32_7 : i32
    scf.if %13 {
      %c0_8 = arith.constant 0 : index
      %c0_9 = arith.constant 0 : index
      %14 = vector.load %arg7[%c0_8, %c0_9] : memref<64x1xf32, #tpu.memory_space<vmem>>, vector<64x1xf32>
      %cst_10 = arith.constant 8.68055562E-4 : f32
      %15 = vector.broadcast %cst_10 : f32 to vector<64x1xf32>
      %16 = arith.mulf %14, %15 : vector<64x1xf32>
      %c0_11 = arith.constant 0 : index
      %c0_12 = arith.constant 0 : index
      %17 = vector.load %arg8[%c0_11, %c0_12] : memref<64x1xf32, #tpu.memory_space<vmem>>, vector<64x1xf32>
      %cst_13 = arith.constant 8.68055562E-4 : f32
      %18 = vector.broadcast %cst_13 : f32 to vector<64x1xf32>
      %19 = arith.mulf %17, %18 : vector<64x1xf32>
      %20 = arith.mulf %16, %16 : vector<64x1xf32>
      %21 = arith.subf %19, %20 : vector<64x1xf32>
      %c0_14 = arith.constant 0 : index
      %c0_15 = arith.constant 0 : index
      %22 = vector.load %arg4[%c0_14, %c0_15] : memref<64x1xf32, #tpu.memory_space<vmem>>, vector<64x1xf32>
      %cst_16 = arith.constant 9.99999974E-6 : f32
      %23 = vector.broadcast %cst_16 : f32 to vector<64x1xf32>
      %24 = arith.addf %21, %23 : vector<64x1xf32>
      %25 = math.rsqrt %24 : vector<64x1xf32>
      %26 = arith.mulf %22, %25 : vector<64x1xf32>
      %c0_17 = arith.constant 0 : index
      %c0_18 = arith.constant 0 : index
      %27 = vector.load %arg5[%c0_17, %c0_18] : memref<64x1xf32, #tpu.memory_space<vmem>>, vector<64x1xf32>
      %28 = arith.mulf %16, %26 : vector<64x1xf32>
      %29 = arith.subf %27, %28 : vector<64x1xf32>
      %30 = vector.broadcast %26 : vector<64x1xf32> to vector<64x1024xf32>
      %31 = arith.mulf %2, %30 : vector<64x1024xf32>
      %32 = vector.broadcast %29 : vector<64x1xf32> to vector<64x1024xf32>
      %33 = arith.addf %31, %32 : vector<64x1024xf32>
      %34 = vector.extract_strided_slice %33 {offsets = [0, 0], sizes = [64, 256], strides = [1, 1]} : vector<64x1024xf32> to vector<64x256xf32>
      %35 = vector.extract_strided_slice %33 {offsets = [0, 256], sizes = [64, 256], strides = [1, 1]} : vector<64x1024xf32> to vector<64x256xf32>
      %36 = arith.maximumf %34, %35 : vector<64x256xf32>
      %37 = vector.extract_strided_slice %33 {offsets = [0, 512], sizes = [64, 256], strides = [1, 1]} : vector<64x1024xf32> to vector<64x256xf32>
      %38 = arith.maximumf %36, %37 : vector<64x256xf32>
      %39 = vector.extract_strided_slice %33 {offsets = [0, 768], sizes = [64, 256], strides = [1, 1]} : vector<64x1024xf32> to vector<64x256xf32>
      %40 = arith.maximumf %38, %39 : vector<64x256xf32>
      %cst_19 = arith.constant 0.000000e+00 : f32
      %41 = vector.broadcast %cst_19 : f32 to vector<64x256xf32>
      %42 = arith.maximumf %40, %41 : vector<64x256xf32>
      %43 = arith.truncf %42 : vector<64x256xf32> to vector<64x256xbf16>
      %c0_20 = arith.constant 0 : index
      %c0_21 = arith.constant 0 : index
      %44 = vector.load %arg6[%c0_20, %c0_21] : memref<64x256xbf16, #tpu.memory_space<vmem>>, vector<64x256xbf16>
      tpu.vector_store %arg6[%c0_20, %c0_21], %43 {strides = array<i32>} : memref<64x256xbf16, #tpu.memory_space<vmem>>, vector<64x256xbf16>,
    } else {
    }
    return
  }
  func.func @transform_0(%arg0: i32, %arg1: i32) -> (i32, i32) {
    %c0_i32 = arith.constant 0 : i32
    %c0_i32_0 = arith.constant 0 : i32
    return %c0_i32, %arg1 : i32, i32
  }
  func.func @transform_1(%arg0: i32, %arg1: i32) -> (i32, i32) {
    %c0_i32 = arith.constant 0 : i32
    %c0_i32_0 = arith.constant 0 : i32
    %c0_i32_1 = arith.constant 0 : i32
    return %c0_i32, %c0_i32_0 : i32, i32
  }
  func.func @transform_2(%arg0: i32, %arg1: i32) -> (i32, i32) {
    %c0_i32 = arith.constant 0 : i32
    %c0_i32_0 = arith.constant 0 : i32
    %c0_i32_1 = arith.constant 0 : i32
    return %c0_i32, %c0_i32_0 : i32, i32
  }
  func.func @transform_3(%arg0: i32, %arg1: i32) -> (i32, i32) {
    %c0_i32 = arith.constant 0 : i32
    %c0_i32_0 = arith.constant 0 : i32
    %c0_i32_1 = arith.constant 0 : i32
    return %c0_i32, %c0_i32_0 : i32, i32
  }
  func.func @transform_4(%arg0: i32, %arg1: i32) -> (i32, i32) {
    %0 = arith.muli %arg1, %arg0 : i32
    %c0_i32 = arith.constant 0 : i32
    %c0_i32_0 = arith.constant 0 : i32
    return %c0_i32, %0 : i32, i32
  }
}

module attributes {stable_mosaic.version = 11 : i64} {
  func.func @_conv_bn_pool_relu_kernel(%arg0: i32, %arg1: i32, %arg2: memref<1600x512xbf16, #tpu.memory_space<vmem>>, %arg3: memref<64x1600xbf16, #tpu.memory_space<vmem>>, %arg4: memref<64x1xf32, #tpu.memory_space<vmem>>, %arg5: memref<64x1xf32, #tpu.memory_space<vmem>>, %arg6: memref<64x128xbf16, #tpu.memory_space<vmem>>, %arg7: memref<64x1xf32, #tpu.memory_space<vmem>>, %arg8: memref<64x1xf32, #tpu.memory_space<vmem>>) attributes {dimension_semantics = [#tpu.dimension_semantics<arbitrary>, #tpu.dimension_semantics<arbitrary>], iteration_bounds = array<i64: 2, 1>, scalar_prefetch = 0 : i64, scratch_operands = 2 : i64, tpu.core_type = #tpu.core_type<tc>, window_params = [{transform_indices = @transform_0, window_bounds = array<i64: 1600, 512>}, {pipeline_mode = #tpu.pipeline_mode<synchronous>, transform_indices = @transform_1, window_bounds = array<i64: 64, 1600>}, {pipeline_mode = #tpu.pipeline_mode<synchronous>, transform_indices = @transform_2, window_bounds = array<i64: 64, 1>}, {pipeline_mode = #tpu.pipeline_mode<synchronous>, transform_indices = @transform_3, window_bounds = array<i64: 64, 1>}, {transform_indices = @transform_4, window_bounds = array<i64: 64, 128>}]} {
    %c0 = arith.constant 0 : index
    %c0_0 = arith.constant 0 : index
    %0 = vector.load %arg3[%c0, %c0_0] : memref<64x1600xbf16, #tpu.memory_space<vmem>>, vector<64x1600xbf16>
    %c0_1 = arith.constant 0 : index
    %c0_2 = arith.constant 0 : index
    %1 = vector.load %arg2[%c0_1, %c0_2] : memref<1600x512xbf16, #tpu.memory_space<vmem>>, vector<1600x512xbf16>
    %cst = arith.constant dense<0.000000e+00> : vector<64x512xf32>
    %2 = tpu.matmul %0, %1, %cst {dimension_numbers = #tpu.dot_dimension_numbers<[1], [0], [0], [1], [0, 0, 1, 1], [], []>} : vector<64x1600xbf16>, vector<1600x512xbf16>, vector<64x512xf32> -> vector<64x512xf32>
    %c0_i32 = arith.constant 0 : i32
    %3 = arith.cmpi eq, %arg0, %c0_i32 : i32
    %c0_i32_3 = arith.constant 0 : i32
    %4 = arith.cmpi eq, %arg1, %c0_i32_3 : i32
    %5 = arith.andi %3, %4 : i1
    %6 = arith.extui %5 : i1 to i32
    %c0_i32_4 = arith.constant 0 : i32
    %7 = arith.cmpi ne, %6, %c0_i32_4 : i32
    scf.if %7 {
      %cst_8 = arith.constant 0.000000e+00 : f32
      %14 = vector.broadcast %cst_8 : f32 to vector<64x1xf32>
      %c0_9 = arith.constant 0 : index
      %c0_10 = arith.constant 0 : index
      %15 = vector.load %arg7[%c0_9, %c0_10] : memref<64x1xf32, #tpu.memory_space<vmem>>, vector<64x1xf32>
      tpu.vector_store %arg7[%c0_9, %c0_10], %14 {strides = array<i32>} : memref<64x1xf32, #tpu.memory_space<vmem>>, vector<64x1xf32>,
      %cst_11 = arith.constant 0.000000e+00 : f32
      %16 = vector.broadcast %cst_11 : f32 to vector<64x1xf32>
      %c0_12 = arith.constant 0 : index
      %c0_13 = arith.constant 0 : index
      %17 = vector.load %arg8[%c0_12, %c0_13] : memref<64x1xf32, #tpu.memory_space<vmem>>, vector<64x1xf32>
      tpu.vector_store %arg8[%c0_12, %c0_13], %16 {strides = array<i32>} : memref<64x1xf32, #tpu.memory_space<vmem>>, vector<64x1xf32>,
    } else {
    }
    %c0_i32_5 = arith.constant 0 : i32
    %8 = arith.cmpi eq, %arg0, %c0_i32_5 : i32
    %9 = arith.extui %8 : i1 to i32
    %c0_i32_6 = arith.constant 0 : i32
    %10 = arith.cmpi ne, %9, %c0_i32_6 : i32
    scf.if %10 {
      %c0_8 = arith.constant 0 : index
      %c0_9 = arith.constant 0 : index
      %14 = vector.load %arg7[%c0_8, %c0_9] : memref<64x1xf32, #tpu.memory_space<vmem>>, vector<64x1xf32>
      %cst_10 = arith.constant dense<0.000000e+00> : vector<64xf32>
      %15 = vector.multi_reduction <add>, %2, %cst_10 [1] : vector<64x512xf32> to vector<64xf32>
      %16 = vector.shape_cast %15 : vector<64xf32> to vector<64x1xf32>
      %17 = arith.addf %14, %16 : vector<64x1xf32>
      %c0_11 = arith.constant 0 : index
      %c0_12 = arith.constant 0 : index
      %18 = vector.load %arg7[%c0_11, %c0_12] : memref<64x1xf32, #tpu.memory_space<vmem>>, vector<64x1xf32>
      tpu.vector_store %arg7[%c0_11, %c0_12], %17 {strides = array<i32>} : memref<64x1xf32, #tpu.memory_space<vmem>>, vector<64x1xf32>,
      %c0_13 = arith.constant 0 : index
      %c0_14 = arith.constant 0 : index
      %19 = vector.load %arg8[%c0_13, %c0_14] : memref<64x1xf32, #tpu.memory_space<vmem>>, vector<64x1xf32>
      %20 = arith.mulf %2, %2 : vector<64x512xf32>
      %cst_15 = arith.constant dense<0.000000e+00> : vector<64xf32>
      %21 = vector.multi_reduction <add>, %20, %cst_15 [1] : vector<64x512xf32> to vector<64xf32>
      %22 = vector.shape_cast %21 : vector<64xf32> to vector<64x1xf32>
      %23 = arith.addf %19, %22 : vector<64x1xf32>
      %c0_16 = arith.constant 0 : index
      %c0_17 = arith.constant 0 : index
      %24 = vector.load %arg8[%c0_16, %c0_17] : memref<64x1xf32, #tpu.memory_space<vmem>>, vector<64x1xf32>
      tpu.vector_store %arg8[%c0_16, %c0_17], %23 {strides = array<i32>} : memref<64x1xf32, #tpu.memory_space<vmem>>, vector<64x1xf32>,
    } else {
    }
    %c1_i32 = arith.constant 1 : i32
    %11 = arith.cmpi eq, %arg0, %c1_i32 : i32
    %12 = arith.extui %11 : i1 to i32
    %c0_i32_7 = arith.constant 0 : i32
    %13 = arith.cmpi ne, %12, %c0_i32_7 : i32
    scf.if %13 {
      %c0_8 = arith.constant 0 : index
      %c0_9 = arith.constant 0 : index
      %14 = vector.load %arg7[%c0_8, %c0_9] : memref<64x1xf32, #tpu.memory_space<vmem>>, vector<64x1xf32>
      %cst_10 = arith.constant 7.812500e-03 : f32
      %15 = vector.broadcast %cst_10 : f32 to vector<64x1xf32>
      %16 = arith.mulf %14, %15 : vector<64x1xf32>
      %c0_11 = arith.constant 0 : index
      %c0_12 = arith.constant 0 : index
      %17 = vector.load %arg8[%c0_11, %c0_12] : memref<64x1xf32, #tpu.memory_space<vmem>>, vector<64x1xf32>
      %cst_13 = arith.constant 7.812500e-03 : f32
      %18 = vector.broadcast %cst_13 : f32 to vector<64x1xf32>
      %19 = arith.mulf %17, %18 : vector<64x1xf32>
      %20 = arith.mulf %16, %16 : vector<64x1xf32>
      %21 = arith.subf %19, %20 : vector<64x1xf32>
      %c0_14 = arith.constant 0 : index
      %c0_15 = arith.constant 0 : index
      %22 = vector.load %arg4[%c0_14, %c0_15] : memref<64x1xf32, #tpu.memory_space<vmem>>, vector<64x1xf32>
      %cst_16 = arith.constant 9.99999974E-6 : f32
      %23 = vector.broadcast %cst_16 : f32 to vector<64x1xf32>
      %24 = arith.addf %21, %23 : vector<64x1xf32>
      %25 = math.rsqrt %24 : vector<64x1xf32>
      %26 = arith.mulf %22, %25 : vector<64x1xf32>
      %c0_17 = arith.constant 0 : index
      %c0_18 = arith.constant 0 : index
      %27 = vector.load %arg5[%c0_17, %c0_18] : memref<64x1xf32, #tpu.memory_space<vmem>>, vector<64x1xf32>
      %28 = arith.mulf %16, %26 : vector<64x1xf32>
      %29 = arith.subf %27, %28 : vector<64x1xf32>
      %30 = vector.broadcast %26 : vector<64x1xf32> to vector<64x512xf32>
      %31 = arith.mulf %2, %30 : vector<64x512xf32>
      %32 = vector.broadcast %29 : vector<64x1xf32> to vector<64x512xf32>
      %33 = arith.addf %31, %32 : vector<64x512xf32>
      %34 = vector.extract_strided_slice %33 {offsets = [0, 0], sizes = [64, 128], strides = [1, 1]} : vector<64x512xf32> to vector<64x128xf32>
      %35 = vector.extract_strided_slice %33 {offsets = [0, 128], sizes = [64, 128], strides = [1, 1]} : vector<64x512xf32> to vector<64x128xf32>
      %36 = arith.maximumf %34, %35 : vector<64x128xf32>
      %37 = vector.extract_strided_slice %33 {offsets = [0, 256], sizes = [64, 128], strides = [1, 1]} : vector<64x512xf32> to vector<64x128xf32>
      %38 = arith.maximumf %36, %37 : vector<64x128xf32>
      %39 = vector.extract_strided_slice %33 {offsets = [0, 384], sizes = [64, 128], strides = [1, 1]} : vector<64x512xf32> to vector<64x128xf32>
      %40 = arith.maximumf %38, %39 : vector<64x128xf32>
      %cst_19 = arith.constant 0.000000e+00 : f32
      %41 = vector.broadcast %cst_19 : f32 to vector<64x128xf32>
      %42 = arith.maximumf %40, %41 : vector<64x128xf32>
      %43 = arith.truncf %42 : vector<64x128xf32> to vector<64x128xbf16>
      %c0_20 = arith.constant 0 : index
      %c0_21 = arith.constant 0 : index
      %44 = vector.load %arg6[%c0_20, %c0_21] : memref<64x128xbf16, #tpu.memory_space<vmem>>, vector<64x128xbf16>
      tpu.vector_store %arg6[%c0_20, %c0_21], %43 {strides = array<i32>} : memref<64x128xbf16, #tpu.memory_space<vmem>>, vector<64x128xbf16>,
    } else {
    }
    return
  }
  func.func @transform_0(%arg0: i32, %arg1: i32) -> (i32, i32) {
    %c0_i32 = arith.constant 0 : i32
    %c0_i32_0 = arith.constant 0 : i32
    return %c0_i32, %arg1 : i32, i32
  }
  func.func @transform_1(%arg0: i32, %arg1: i32) -> (i32, i32) {
    %c0_i32 = arith.constant 0 : i32
    %c0_i32_0 = arith.constant 0 : i32
    %c0_i32_1 = arith.constant 0 : i32
    return %c0_i32, %c0_i32_0 : i32, i32
  }
  func.func @transform_2(%arg0: i32, %arg1: i32) -> (i32, i32) {
    %c0_i32 = arith.constant 0 : i32
    %c0_i32_0 = arith.constant 0 : i32
    %c0_i32_1 = arith.constant 0 : i32
    return %c0_i32, %c0_i32_0 : i32, i32
  }
  func.func @transform_3(%arg0: i32, %arg1: i32) -> (i32, i32) {
    %c0_i32 = arith.constant 0 : i32
    %c0_i32_0 = arith.constant 0 : i32
    %c0_i32_1 = arith.constant 0 : i32
    return %c0_i32, %c0_i32_0 : i32, i32
  }
  func.func @transform_4(%arg0: i32, %arg1: i32) -> (i32, i32) {
    %0 = arith.muli %arg1, %arg0 : i32
    %c0_i32 = arith.constant 0 : i32
    %c0_i32_0 = arith.constant 0 : i32
    return %c0_i32, %0 : i32, i32
  }
}

module attributes {stable_mosaic.version = 11 : i64} {
  func.func @_heads_kernel(%arg0: i32, %arg1: memref<2x800xbf16, #tpu.memory_space<vmem>>, %arg2: memref<800x256xbf16, #tpu.memory_space<vmem>>, %arg3: memref<2x256xf32, #tpu.memory_space<vmem>>, %arg4: memref<256x128xbf16, #tpu.memory_space<vmem>>, %arg5: memref<2x128xf32, #tpu.memory_space<vmem>>, %arg6: memref<128x10xbf16, #tpu.memory_space<vmem>>, %arg7: memref<1x12xf32, #tpu.memory_space<vmem>>, %arg8: memref<2x10xf32, #tpu.memory_space<vmem>>, %arg9: memref<2x2xf32, #tpu.memory_space<vmem>>) attributes {dimension_semantics = [#tpu.dimension_semantics<arbitrary>], iteration_bounds = array<i64: 1>, scalar_prefetch = 0 : i64, scratch_operands = 0 : i64, tpu.core_type = #tpu.core_type<tc>, window_params = [{pipeline_mode = #tpu.pipeline_mode<synchronous>, transform_indices = @transform_0, window_bounds = array<i64: 2, 800>}, {pipeline_mode = #tpu.pipeline_mode<synchronous>, transform_indices = @transform_1, window_bounds = array<i64: 800, 256>}, {pipeline_mode = #tpu.pipeline_mode<synchronous>, transform_indices = @transform_2, window_bounds = array<i64: 2, 256>}, {pipeline_mode = #tpu.pipeline_mode<synchronous>, transform_indices = @transform_3, window_bounds = array<i64: 256, 128>}, {pipeline_mode = #tpu.pipeline_mode<synchronous>, transform_indices = @transform_4, window_bounds = array<i64: 2, 128>}, {pipeline_mode = #tpu.pipeline_mode<synchronous>, transform_indices = @transform_5, window_bounds = array<i64: 128, 10>}, {pipeline_mode = #tpu.pipeline_mode<synchronous>, transform_indices = @transform_6, window_bounds = array<i64: 1, 12>}, {pipeline_mode = #tpu.pipeline_mode<synchronous>, transform_indices = @transform_7, window_bounds = array<i64: 2, 10>}, {pipeline_mode = #tpu.pipeline_mode<synchronous>, transform_indices = @transform_8, window_bounds = array<i64: 2, 2>}]} {
    %c0 = arith.constant 0 : index
    %c0_0 = arith.constant 0 : index
    %0 = vector.load %arg1[%c0, %c0_0] : memref<2x800xbf16, #tpu.memory_space<vmem>>, vector<2x800xbf16>
    %c0_1 = arith.constant 0 : index
    %c0_2 = arith.constant 0 : index
    %1 = vector.load %arg2[%c0_1, %c0_2] : memref<800x256xbf16, #tpu.memory_space<vmem>>, vector<800x256xbf16>
    %cst = arith.constant dense<0.000000e+00> : vector<2x256xf32>
    %2 = tpu.matmul %0, %1, %cst {dimension_numbers = #tpu.dot_dimension_numbers<[1], [0], [0], [1], [0, 0, 1, 1], [], []>} : vector<2x800xbf16>, vector<800x256xbf16>, vector<2x256xf32> -> vector<2x256xf32>
    %c0_3 = arith.constant 0 : index
    %c0_4 = arith.constant 0 : index
    %3 = vector.load %arg3[%c0_3, %c0_4] : memref<2x256xf32, #tpu.memory_space<vmem>>, vector<2x256xf32>
    %cst_5 = arith.constant dense<0.000000e+00> : vector<256xf32>
    %4 = vector.multi_reduction <add>, %2, %cst_5 [0] : vector<2x256xf32> to vector<256xf32>
    %5 = vector.shape_cast %4 : vector<256xf32> to vector<1x256xf32>
    %cst_6 = arith.constant 5.000000e-01 : f32
    %6 = vector.broadcast %cst_6 : f32 to vector<1x256xf32>
    %7 = arith.mulf %5, %6 : vector<1x256xf32>
    %8 = arith.mulf %2, %2 : vector<2x256xf32>
    %cst_7 = arith.constant dense<0.000000e+00> : vector<256xf32>
    %9 = vector.multi_reduction <add>, %8, %cst_7 [0] : vector<2x256xf32> to vector<256xf32>
    %10 = vector.shape_cast %9 : vector<256xf32> to vector<1x256xf32>
    %cst_8 = arith.constant 5.000000e-01 : f32
    %11 = vector.broadcast %cst_8 : f32 to vector<1x256xf32>
    %12 = arith.mulf %10, %11 : vector<1x256xf32>
    %13 = arith.mulf %7, %7 : vector<1x256xf32>
    %14 = arith.subf %12, %13 : vector<1x256xf32>
    %15 = vector.extract_strided_slice %3 {offsets = [0, 0], sizes = [1, 256], strides = [1, 1]} : vector<2x256xf32> to vector<1x256xf32>
    %cst_9 = arith.constant 9.99999974E-6 : f32
    %16 = vector.broadcast %cst_9 : f32 to vector<1x256xf32>
    %17 = arith.addf %14, %16 : vector<1x256xf32>
    %18 = math.rsqrt %17 : vector<1x256xf32>
    %19 = arith.mulf %15, %18 : vector<1x256xf32>
    %20 = vector.broadcast %19 : vector<1x256xf32> to vector<2x256xf32>
    %21 = arith.mulf %2, %20 : vector<2x256xf32>
    %22 = vector.extract_strided_slice %3 {offsets = [1, 0], sizes = [1, 256], strides = [1, 1]} : vector<2x256xf32> to vector<1x256xf32>
    %23 = arith.mulf %7, %19 : vector<1x256xf32>
    %24 = arith.subf %22, %23 : vector<1x256xf32>
    %25 = vector.broadcast %24 : vector<1x256xf32> to vector<2x256xf32>
    %26 = arith.addf %21, %25 : vector<2x256xf32>
    %cst_10 = arith.constant 0.000000e+00 : f32
    %27 = vector.broadcast %cst_10 : f32 to vector<2x256xf32>
    %28 = arith.maximumf %26, %27 : vector<2x256xf32>
    %29 = arith.truncf %28 : vector<2x256xf32> to vector<2x256xbf16>
    %c0_11 = arith.constant 0 : index
    %c0_12 = arith.constant 0 : index
    %30 = vector.load %arg4[%c0_11, %c0_12] : memref<256x128xbf16, #tpu.memory_space<vmem>>, vector<256x128xbf16>
    %cst_13 = arith.constant dense<0.000000e+00> : vector<2x128xf32>
    %31 = tpu.matmul %29, %30, %cst_13 {dimension_numbers = #tpu.dot_dimension_numbers<[1], [0], [0], [1], [0, 0, 1, 1], [], []>} : vector<2x256xbf16>, vector<256x128xbf16>, vector<2x128xf32> -> vector<2x128xf32>
    %32 = vector.extract_strided_slice %31 {offsets = [0, 100], sizes = [2, 2], strides = [1, 1]} : vector<2x128xf32> to vector<2x2xf32>
    %c0_14 = arith.constant 0 : index
    %c10 = arith.constant 10 : index
    %33 = vector.load %arg7[%c0_14, %c10] : memref<1x12xf32, #tpu.memory_space<vmem>>, vector<1x2xf32>
    %34 = vector.broadcast %33 : vector<1x2xf32> to vector<2x2xf32>
    %35 = arith.addf %32, %34 : vector<2x2xf32>
    %c0_15 = arith.constant 0 : index
    %c0_16 = arith.constant 0 : index
    %36 = vector.load %arg5[%c0_15, %c0_16] : memref<2x128xf32, #tpu.memory_space<vmem>>, vector<2x128xf32>
    %cst_17 = arith.constant dense<0.000000e+00> : vector<128xf32>
    %37 = vector.multi_reduction <add>, %31, %cst_17 [0] : vector<2x128xf32> to vector<128xf32>
    %38 = vector.shape_cast %37 : vector<128xf32> to vector<1x128xf32>
    %cst_18 = arith.constant 5.000000e-01 : f32
    %39 = vector.broadcast %cst_18 : f32 to vector<1x128xf32>
    %40 = arith.mulf %38, %39 : vector<1x128xf32>
    %41 = arith.mulf %31, %31 : vector<2x128xf32>
    %cst_19 = arith.constant dense<0.000000e+00> : vector<128xf32>
    %42 = vector.multi_reduction <add>, %41, %cst_19 [0] : vector<2x128xf32> to vector<128xf32>
    %43 = vector.shape_cast %42 : vector<128xf32> to vector<1x128xf32>
    %cst_20 = arith.constant 5.000000e-01 : f32
    %44 = vector.broadcast %cst_20 : f32 to vector<1x128xf32>
    %45 = arith.mulf %43, %44 : vector<1x128xf32>
    %46 = arith.mulf %40, %40 : vector<1x128xf32>
    %47 = arith.subf %45, %46 : vector<1x128xf32>
    %48 = vector.extract_strided_slice %36 {offsets = [0, 0], sizes = [1, 128], strides = [1, 1]} : vector<2x128xf32> to vector<1x128xf32>
    %cst_21 = arith.constant 9.99999974E-6 : f32
    %49 = vector.broadcast %cst_21 : f32 to vector<1x128xf32>
    %50 = arith.addf %47, %49 : vector<1x128xf32>
    %51 = math.rsqrt %50 : vector<1x128xf32>
    %52 = arith.mulf %48, %51 : vector<1x128xf32>
    %53 = vector.broadcast %52 : vector<1x128xf32> to vector<2x128xf32>
    %54 = arith.mulf %31, %53 : vector<2x128xf32>
    %55 = vector.extract_strided_slice %36 {offsets = [1, 0], sizes = [1, 128], strides = [1, 1]} : vector<2x128xf32> to vector<1x128xf32>
    %56 = arith.mulf %40, %52 : vector<1x128xf32>
    %57 = arith.subf %55, %56 : vector<1x128xf32>
    %58 = vector.broadcast %57 : vector<1x128xf32> to vector<2x128xf32>
    %59 = arith.addf %54, %58 : vector<2x128xf32>
    %cst_22 = arith.constant 0.000000e+00 : f32
    %60 = vector.broadcast %cst_22 : f32 to vector<2x128xf32>
    %61 = arith.maximumf %59, %60 : vector<2x128xf32>
    %62 = arith.truncf %61 : vector<2x128xf32> to vector<2x128xbf16>
    %c0_23 = arith.constant 0 : index
    %c0_24 = arith.constant 0 : index
    %63 = vector.load %arg6[%c0_23, %c0_24] : memref<128x10xbf16, #tpu.memory_space<vmem>>, vector<128x10xbf16>
    %cst_25 = arith.constant dense<0.000000e+00> : vector<2x10xf32>
    %64 = tpu.matmul %62, %63, %cst_25 {dimension_numbers = #tpu.dot_dimension_numbers<[1], [0], [0], [1], [0, 0, 1, 1], [], []>} : vector<2x128xbf16>, vector<128x10xbf16>, vector<2x10xf32> -> vector<2x10xf32>
    %c0_26 = arith.constant 0 : index
    %c0_27 = arith.constant 0 : index
    %65 = vector.load %arg7[%c0_26, %c0_27] : memref<1x12xf32, #tpu.memory_space<vmem>>, vector<1x10xf32>
    %66 = vector.broadcast %65 : vector<1x10xf32> to vector<2x10xf32>
    %67 = arith.addf %64, %66 : vector<2x10xf32>
    %cst_28 = arith.constant dense<0xFF800000> : vector<2xf32>
    %68 = vector.multi_reduction <maximumf>, %67, %cst_28 [1] : vector<2x10xf32> to vector<2xf32>
    %69 = vector.shape_cast %68 : vector<2xf32> to vector<2x1xf32>
    %70 = vector.broadcast %69 : vector<2x1xf32> to vector<2x10xf32>
    %71 = arith.subf %67, %70 : vector<2x10xf32>
    %72 = math.exp %71 : vector<2x10xf32>
    %cst_29 = arith.constant dense<0.000000e+00> : vector<2xf32>
    %73 = vector.multi_reduction <add>, %72, %cst_29 [1] : vector<2x10xf32> to vector<2xf32>
    %74 = vector.shape_cast %73 : vector<2xf32> to vector<2x1xf32>
    %75 = math.log %74 : vector<2x1xf32>
    %76 = vector.broadcast %75 : vector<2x1xf32> to vector<2x10xf32>
    %77 = arith.subf %71, %76 : vector<2x10xf32>
    %c0_30 = arith.constant 0 : index
    %c0_31 = arith.constant 0 : index
    %78 = vector.load %arg8[%c0_30, %c0_31] : memref<2x10xf32, #tpu.memory_space<vmem>>, vector<2x10xf32>
    tpu.vector_store %arg8[%c0_30, %c0_31], %77 {strides = array<i32>} : memref<2x10xf32, #tpu.memory_space<vmem>>, vector<2x10xf32>,
    %cst_32 = arith.constant dense<0xFF800000> : vector<2xf32>
    %79 = vector.multi_reduction <maximumf>, %35, %cst_32 [1] : vector<2x2xf32> to vector<2xf32>
    %80 = vector.shape_cast %79 : vector<2xf32> to vector<2x1xf32>
    %81 = vector.broadcast %80 : vector<2x1xf32> to vector<2x2xf32>
    %82 = arith.subf %35, %81 : vector<2x2xf32>
    %83 = math.exp %82 : vector<2x2xf32>
    %cst_33 = arith.constant dense<0.000000e+00> : vector<2xf32>
    %84 = vector.multi_reduction <add>, %83, %cst_33 [1] : vector<2x2xf32> to vector<2xf32>
    %85 = vector.shape_cast %84 : vector<2xf32> to vector<2x1xf32>
    %86 = math.log %85 : vector<2x1xf32>
    %87 = vector.broadcast %86 : vector<2x1xf32> to vector<2x2xf32>
    %88 = arith.subf %82, %87 : vector<2x2xf32>
    %c0_34 = arith.constant 0 : index
    %c0_35 = arith.constant 0 : index
    %89 = vector.load %arg9[%c0_34, %c0_35] : memref<2x2xf32, #tpu.memory_space<vmem>>, vector<2x2xf32>
    tpu.vector_store %arg9[%c0_34, %c0_35], %88 {strides = array<i32>} : memref<2x2xf32, #tpu.memory_space<vmem>>, vector<2x2xf32>,
    return
  }
  func.func @transform_0(%arg0: i32) -> (i32, i32) {
    %c0_i32 = arith.constant 0 : i32
    %c0_i32_0 = arith.constant 0 : i32
    %c0_i32_1 = arith.constant 0 : i32
    return %c0_i32, %c0_i32_0 : i32, i32
  }
  func.func @transform_1(%arg0: i32) -> (i32, i32) {
    %c0_i32 = arith.constant 0 : i32
    %c0_i32_0 = arith.constant 0 : i32
    %c0_i32_1 = arith.constant 0 : i32
    return %c0_i32, %c0_i32_0 : i32, i32
  }
  func.func @transform_2(%arg0: i32) -> (i32, i32) {
    %c0_i32 = arith.constant 0 : i32
    %c0_i32_0 = arith.constant 0 : i32
    %c0_i32_1 = arith.constant 0 : i32
    return %c0_i32, %c0_i32_0 : i32, i32
  }
  func.func @transform_3(%arg0: i32) -> (i32, i32) {
    %c0_i32 = arith.constant 0 : i32
    %c0_i32_0 = arith.constant 0 : i32
    %c0_i32_1 = arith.constant 0 : i32
    return %c0_i32, %c0_i32_0 : i32, i32
  }
  func.func @transform_4(%arg0: i32) -> (i32, i32) {
    %c0_i32 = arith.constant 0 : i32
    %c0_i32_0 = arith.constant 0 : i32
    %c0_i32_1 = arith.constant 0 : i32
    return %c0_i32, %c0_i32_0 : i32, i32
  }
  func.func @transform_5(%arg0: i32) -> (i32, i32) {
    %c0_i32 = arith.constant 0 : i32
    %c0_i32_0 = arith.constant 0 : i32
    %c0_i32_1 = arith.constant 0 : i32
    return %c0_i32, %c0_i32_0 : i32, i32
  }
  func.func @transform_6(%arg0: i32) -> (i32, i32) {
    %c0_i32 = arith.constant 0 : i32
    %c0_i32_0 = arith.constant 0 : i32
    %c0_i32_1 = arith.constant 0 : i32
    return %c0_i32, %c0_i32_0 : i32, i32
  }
  func.func @transform_7(%arg0: i32) -> (i32, i32) {
    %c0_i32 = arith.constant 0 : i32
    %c0_i32_0 = arith.constant 0 : i32
    %c0_i32_1 = arith.constant 0 : i32
    return %c0_i32, %c0_i32_0 : i32, i32
  }
  func.func @transform_8(%arg0: i32) -> (i32, i32) {
    %c0_i32 = arith.constant 0 : i32
    %c0_i32_0 = arith.constant 0 : i32
    %c0_i32_1 = arith.constant 0 : i32
    return %c0_i32, %c0_i32_0 : i32, i32
  }
}

</mosaic_0001>

<llo_original>
// kernel: dann_forward.3
$region0: #{dann_forward.3}
  #allocation0 [shape = 'u32[]', space=smem, size = 0x4, offset = 0x4, fixed_abs, tag = 'smem constant byte address 0x4 - core index']
  #allocation1 [shape = 'u32[144,128]{1,0:T(1,128)}', space=vmem, size = 0x12000, scoped, tag = 'internal scratch']
  #allocation2 [shape = 'f32[64,1]{1,0:T(8,128)}', space=vmem, size = 0x8000, scoped, tag = 'scratch operand']
  #allocation3 [shape = 'f32[64,1]{1,0:T(8,128)}', space=vmem, size = 0x8000, scoped, tag = 'scratch operand']
  %s0 = inlined_call_operand.vmem [shape: bf16[32,2048], index: 0, kind: input, shape index: {}]
  %s1 = inlined_call_operand.vmem [shape: bf16[64,32], index: 1, kind: input, shape index: {}]
  %s2 = inlined_call_operand.vmem [shape: f32[64,1], index: 2, kind: input, shape index: {}]
  %s3 = inlined_call_operand.vmem [shape: f32[64,1], index: 3, kind: input, shape index: {}]
  %s4 = inlined_call_operand.vmem [shape: bf16[64,512], index: 4, kind: output, shape index: {}]
  %s5 = sld [smem:[#allocation0]]
  $region118: #{dann_forward.3} parent=0
    _
  %s7 = ssub.s32 1, %s5
  %s8 = scalar_select 0, %s7, %s5
  $region1: #{dann_forward.3} parent=0
    #allocation4 [shape = 'u8[131072]{0}', space=vmem, size = 0x20000, scoped, tag = 'input window, operand 0']
    #allocation5 [shape = 'u8[65536]{0}', space=vmem, size = 0x10000, scoped, tag = 'output window, operand 0']
    loop: start=0, step=1, limit=6
    $region2: #{dann_forward.3} parent=1 // loop_pre_header
      _
    $region3: #{dann_forward.3} parent=1 // loop_header
      %s10 = sphi 0, %s14
      %p11 = scmp.ge.s32.totalorder %s10, 6
      %s17 = sphi 0, %s29
      %s18 = sphi 0, %s25
      %s19 = sphi 0, %s17
      %s20 = sphi 0, %s18
      %s21 = sphi 0, %s19
      %s22 = sphi 0, %s20
      %s32 = sphi 0, %s34
      %s35 = sphi 0, %s32
      %s36 = sphi 0, %s35
      %s52 = sphi 0, %s36
      %s56 = sphi 0, %s56
      %s58 = sphi 0, %s56
      %s59 = sphi 0, %s58
      %s73 = sphi 0, %s59
      %s77 = sphi 0, %s77
      %s79 = sphi 0, %s77
      %s80 = sphi 0, %s79
      %s94 = sphi 0, %s80
      %s98 = sphi 0, %s98
      %s100 = sphi 0, %s98
      %s101 = sphi 0, %s100
      %s115 = sphi 0, %s101
      %s123 = sphi 0, %s125
      %s126 = sphi 0, %s123
      %s127 = sphi 0, %s126
      %s143 = sphi 0, %s127
    $region4: #{dann_forward.3} parent=1 // loop_header_branch
      %13 = sbr.rel (%p11) target = $region8
    $region5: #{dann_forward.3} parent=1 // loop_body
      %s15 = ssub.s32 %s10, 1
      %s16 = ssub.s32 %s10, 2
      %s23 = sadd.s32 1, %s18
      %p24 = scmp.ge.s32.totalorder %s23, 2
      %s25 = scalar_select %p24, 0, %s23
      %s26 = sadd.s32 1, %s17
      %s27 = scalar_select %p24, %s26, %s17
      %p28 = scmp.ge.s32.totalorder %s27, 2
      %s29 = scalar_select %p28, 0, %s27
      %s30 = ssub.s32 %s18, %s25
      %p31 = scmp.eq.s32.totalorder %s30, 0
      %s33 = sadd.s32 %s32, 1
      %s34 = scalar_select %p31, %s32, %s33
      %p37 = pneg %p31
      %p38 = scmp.eq.s32.totalorder %s10, 3
      %p39 = por %p37, %p38
      %p40 = scmp.ne.s32.totalorder %s32, %s35
      %p41 = scmp.eq.s32.totalorder %s10, 0
      %p42 = por %p40, %p41
      %p43 = scmp.ne.s32.totalorder %s32, %s35
      %p44 = scmp.eq.s32.totalorder %s15, 3
      %p45 = por %p43, %p44
      %p46 = scmp.ne.s32.totalorder %s35, %s36
      %p47 = scmp.eq.s32.totalorder %s15, 0
      %p48 = por %p46, %p47
      %p49 = scmp.ne.s32.totalorder %s35, %s36
      %p50 = scmp.eq.s32.totalorder %s16, 3
      %p51 = por %p49, %p50
      %p53 = scmp.ne.s32.totalorder %s36, %s52
      %p54 = scmp.eq.s32.totalorder %s16, 0
      %p55 = por %p53, %p54
      %s57 = sadd.s32 %s56, 1
      %p60 = scmp.eq.s32.totalorder %s10, 3
      %p61 = scmp.ne.s32.totalorder %s56, %s58
      %p62 = scmp.eq.s32.totalorder %s10, 0
      %p63 = por %p61, %p62
      %p64 = scmp.ne.s32.totalorder %s56, %s58
      %p65 = scmp.eq.s32.totalorder %s15, 3
      %p66 = por %p64, %p65
      %p67 = scmp.ne.s32.totalorder %s58, %s59
      %p68 = scmp.eq.s32.totalorder %s15, 0
      %p69 = por %p67, %p68
      %p70 = scmp.ne.s32.totalorder %s58, %s59
      %p71 = scmp.eq.s32.totalorder %s16, 3
      %p72 = por %p70, %p71
      %p74 = scmp.ne.s32.totalorder %s59, %s73
      %p75 = scmp.eq.s32.totalorder %s16, 0
      %p76 = por %p74, %p75
      %s78 = sadd.s32 %s77, 1
      %p81 = scmp.eq.s32.totalorder %s10, 3
      %p82 = scmp.ne.s32.totalorder %s77, %s79
      %p83 = scmp.eq.s32.totalorder %s10, 0
      %p84 = por %p82, %p83
      %p85 = scmp.ne.s32.totalorder %s77, %s79
      %p86 = scmp.eq.s32.totalorder %s15, 3
      %p87 = por %p85, %p86
      %p88 = scmp.ne.s32.totalorder %s79, %s80
      %p89 = scmp.eq.s32.totalorder %s15, 0
      %p90 = por %p88, %p89
      %p91 = scmp.ne.s32.totalorder %s79, %s80
      %p92 = scmp.eq.s32.totalorder %s16, 3
      %p93 = por %p91, %p92
      %p95 = scmp.ne.s32.totalorder %s80, %s94
      %p96 = scmp.eq.s32.totalorder %s16, 0
      %p97 = por %p95, %p96
      %s99 = sadd.s32 %s98, 1
      %p102 = scmp.eq.s32.totalorder %s10, 3
      %p103 = scmp.ne.s32.totalorder %s98, %s100
      %p104 = scmp.eq.s32.totalorder %s10, 0
      %p105 = por %p103, %p104
      %p106 = scmp.ne.s32.totalorder %s98, %s100
      %p107 = scmp.eq.s32.totalorder %s15, 3
      %p108 = por %p106, %p107
      %p109 = scmp.ne.s32.totalorder %s100, %s101
      %p110 = scmp.eq.s32.totalorder %s15, 0
      %p111 = por %p109, %p110
      %p112 = scmp.ne.s32.totalorder %s100, %s101
      %p113 = scmp.eq.s32.totalorder %s16, 3
      %p114 = por %p112, %p113
      %p116 = scmp.ne.s32.totalorder %s101, %s115
      %p117 = scmp.eq.s32.totalorder %s16, 0
      %p118 = por %p116, %p117
      %s119 = smul.u32 %s18, %s17
      %s120 = smul.u32 %s25, %s29
      %s121 = ssub.s32 %s119, %s120
      %p122 = scmp.eq.s32.totalorder %s121, 0
      %s124 = sadd.s32 %s123, 1
      %s125 = scalar_select %p122, %s123, %s124
      %p128 = pneg %p122
      %p129 = scmp.eq.s32.totalorder %s10, 3
      %p130 = por %p128, %p129
      %p131 = scmp.ne.s32.totalorder %s123, %s126
      %p132 = scmp.eq.s32.totalorder %s10, 0
      %p133 = por %p131, %p132
      %p134 = scmp.ne.s32.totalorder %s123, %s126
      %p135 = scmp.eq.s32.totalorder %s15, 3
      %p136 = por %p134, %p135
      %p137 = scmp.ne.s32.totalorder %s126, %s127
      %p138 = scmp.eq.s32.totalorder %s15, 0
      %p139 = por %p137, %p138
      %p140 = scmp.ne.s32.totalorder %s126, %s127
      %p141 = scmp.eq.s32.totalorder %s16, 3
      %p142 = por %p140, %p141
      %p144 = scmp.ne.s32.totalorder %s127, %s143
      %p145 = scmp.eq.s32.totalorder %s16, 0
      %p146 = por %p144, %p145
      %p147 = scmp.le.s32.totalorder 1, %s10
      %p148 = scmp.lt.s32.totalorder %s10, 5
      %p149 = pnand %p147, %p148
      %p150 = pneg %p149
      // Predicated region
      $region9: #{dann_forward.3} parent=5 // pred_check
        _
      $region10: #{dann_forward.3} parent=5 // pred_check_branch
        %152 = sbr.rel (%p149) target = $region12
      $region11: #{dann_forward.3} parent=5 // pred_region
        %s153 = ssub.s32 %s10, 1
        // Predicated region
        $region13: #{dann_forward.3} parent=11 // pred_check
          %p154 = pneg %p69
        $region14: #{dann_forward.3} parent=11 // pred_check_branch
          %156 = sbr.rel (%p154) target = $region16
        $region15: #{dann_forward.3} parent=11 // pred_region
          _
        $region16: #{dann_forward.3} parent=11 // pred_fallthru
          _
        // Predicated region
        $region17: #{dann_forward.3} parent=11 // pred_check
          %p157 = pneg %p90
        $region18: #{dann_forward.3} parent=11 // pred_check_branch
          %159 = sbr.rel (%p157) target = $region20
        $region19: #{dann_forward.3} parent=11 // pred_region
          _
        $region20: #{dann_forward.3} parent=11 // pred_fallthru
          _
        // Predicated region
        $region21: #{dann_forward.3} parent=11 // pred_check
          %p160 = pneg %p111
        $region22: #{dann_forward.3} parent=11 // pred_check_branch
          %162 = sbr.rel (%p160) target = $region24
        $region23: #{dann_forward.3} parent=11 // pred_region
          _
        $region24: #{dann_forward.3} parent=11 // pred_fallthru
          _
      $region12: #{dann_forward.3} parent=5 // pred_fallthru
        _
      %p163 = scmp.lt.s32.totalorder %s10, 4
      // Predicated region
      $region25: #{dann_forward.3} parent=5 // pred_check
        %p164 = pneg %p163
      $region26: #{dann_forward.3} parent=5 // pred_check_branch
        %166 = sbr.rel (%p164) target = $region28
      $region27: #{dann_forward.3} parent=5 // pred_region
        // Predicated region
        $region29: #{dann_forward.3} parent=27 // pred_check
          %p167 = pneg %p42
        $region30: #{dann_forward.3} parent=27 // pred_check_branch
          %169 = sbr.rel (%p167) target = $region32
        $region31: #{dann_forward.3} parent=27 // pred_region
          %s170 = sand.u32 %s32, 1
          %s171 = sand.u32 %s32, 1
          %s172 = smul.addr %s171, 128
          %s173 = scalar_lea.vmem [#allocation4], %s172
          %s174 = smul.u32 8, %s18
          %s175 = smul.addr %s174, 4
          %s176 = scalar_lea.vmem %s0, %s175
          // Predicated region
          $region33: #{dann_forward.3} parent=31 // pred_check
            _
          $region34: #{dann_forward.3} parent=31 // pred_check_branch
            %178 = sbr.rel (0) target = $region36
          $region35: #{dann_forward.3} parent=31 // pred_region
            // Predicated region
            $region37: #{dann_forward.3} parent=35 // pred_check
              _
            $region38: #{dann_forward.3} parent=35 // pred_check_branch
              %180 = sbr.rel (0) target = $region40
            $region39: #{dann_forward.3} parent=35 // pred_region
              loop: start=0, step=1, limit=1
              $region41: #{dann_forward.3} parent=39 // loop_pre_header
                _
              $region42: #{dann_forward.3} parent=39 // loop_header
                %s182 = sphi 0, %s186
                %p183 = scmp.ge.s32.totalorder %s182, 1
                %s187 = sphi %s176, %s176
                %s188 = sphi %s173, %s173
              $region43: #{dann_forward.3} parent=39 // loop_header_branch
                %185 = sbr.rel (%p183) target = $region47
              $region44: #{dann_forward.3} parent=39 // loop_body
                %v189 = vld [vmem:[%s187] sm:$0xff]
                %190 = vst [vmem:[%s188] sm:$0xff] %v189
                %v191 = vld [vmem:[%s187 + $0x8] sm:$0xff]
                %192 = vst [vmem:[%s188 + $0x8] sm:$0xff] %v191
                %v193 = vld [vmem:[%s187 + $0x10] sm:$0xff]
                %194 = vst [vmem:[%s188 + $0x10] sm:$0xff] %v193
                %v195 = vld [vmem:[%s187 + $0x18] sm:$0xff]
                %196 = vst [vmem:[%s188 + $0x18] sm:$0xff] %v195
                %v197 = vld [vmem:[%s187 + $0x40] sm:$0xff]
                %198 = vst [vmem:[%s188 + $0x20] sm:$0xff] %v197
                %v199 = vld [vmem:[%s187 + $0x48] sm:$0xff]
                %200 = vst [vmem:[%s188 + $0x28] sm:$0xff] %v199
                %v201 = vld [vmem:[%s187 + $0x50] sm:$0xff]
                %202 = vst [vmem:[%s188 + $0x30] sm:$0xff] %v201
                %v203 = vld [vmem:[%s187 + $0x58] sm:$0xff]
                %204 = vst [vmem:[%s188 + $0x38] sm:$0xff] %v203
                %v205 = vld [vmem:[%s187 + $0x80] sm:$0xff]
                %206 = vst [vmem:[%s188 + $0x40] sm:$0xff] %v205
                %v207 = vld [vmem:[%s187 + $0x88] sm:$0xff]
                %208 = vst [vmem:[%s188 + $0x48] sm:$0xff] %v207
                %v209 = vld [vmem:[%s187 + $0x90] sm:$0xff]
                %210 = vst [vmem:[%s188 + $0x50] sm:$0xff] %v209
                %v211 = vld [vmem:[%s187 + $0x98] sm:$0xff]
                %212 = vst [vmem:[%s188 + $0x58] sm:$0xff] %v211
                %v213 = vld [vmem:[%s187 + $0xc0] sm:$0xff]
                %214 = vst [vmem:[%s188 + $0x60] sm:$0xff] %v213
                %v215 = vld [vmem:[%s187 + $0xc8] sm:$0xff]
                %216 = vst [vmem:[%s188 + $0x68] sm:$0xff] %v215
                %v217 = vld [vmem:[%s187 + $0xd0] sm:$0xff]
                %218 = vst [vmem:[%s188 + $0x70] sm:$0xff] %v217
                %v219 = vld [vmem:[%s187 + $0xd8] sm:$0xff]
                %220 = vst [vmem:[%s188 + $0x78] sm:$0xff] %v219
              $region45: #{dann_forward.3} parent=39 // loop_footer
                %s186 = sadd.s32 1, %s182
              $region46: #{dann_forward.3} parent=39 // loop_footer_branch
                %181 = sbr.rel target = $region42
              $region47: #{dann_forward.3} parent=39 // loop_exit
                _
            $region40: #{dann_forward.3} parent=35 // pred_fallthru
              _
            // Predicated region
            $region48: #{dann_forward.3} parent=35 // pred_check
              _
            $region49: #{dann_forward.3} parent=35 // pred_check_branch
              %222 = sbr.rel target = $region51
            $region50: #{dann_forward.3} parent=35 // pred_region
              _
            $region51: #{dann_forward.3} parent=35 // pred_fallthru
              _
          $region36: #{dann_forward.3} parent=31 // pred_fallthru
            _
          %223 = vnop
        $region32: #{dann_forward.3} parent=27 // pred_fallthru
          _
      $region28: #{dann_forward.3} parent=5 // pred_fallthru
        _
      %p224 = scmp.le.s32.totalorder 1, %s10
      %p225 = scmp.lt.s32.totalorder %s10, 5
      %p226 = pnand %p224, %p225
      %p227 = pneg %p226
      // Predicated region
      $region52: #{dann_forward.3} parent=5 // pred_check
        _
      $region53: #{dann_forward.3} parent=5 // pred_check_branch
        %229 = sbr.rel (%p226) target = $region55
      $region54: #{dann_forward.3} parent=5 // pred_region
        %s230 = ssub.s32 %s10, 1
        %s231 = sand.u32 %s35, 1
        %s232 = sand.u32 %s35, 1
        %s233 = smul.addr %s232, 128
        %s234 = scalar_lea.vmem [#allocation4], %s233
        // Predicated region
        $region56: #{dann_forward.3} parent=54 // pred_check
          %p235 = pneg %p48
        $region57: #{dann_forward.3} parent=54 // pred_check_branch
          %237 = sbr.rel (%p235) target = $region59
        $region58: #{dann_forward.3} parent=54 // pred_region
          _
        $region59: #{dann_forward.3} parent=54 // pred_fallthru
          _
        %s238 = sand.u32 %s35, 1
        %s239 = sand.u32 %s35, 1
        %s240 = smul.addr %s239, 128
        %s241 = scalar_lea.vmem [#allocation4], %s240
        %p242 = pneg %p48
        %p243 = pneg %p45
        %p244 = pneg %p69
        %p245 = pneg %p66
        %p246 = pneg %p90
        %p247 = pneg %p87
        %p248 = pneg %p111
        %p249 = pneg %p108
        %p250 = pneg %p139
        %p251 = pneg %p136
        %s252 = sand.u32 %s126, 1
        %s253 = sand.u32 %s126, 1
        %s254 = smul.addr %s253, 64
        %s255 = scalar_lea.vmem [#allocation5], %s254
        %s256 = smul.u32 8, %s20
        %s257 = smul.u32 %s20, %s19
        %s258 = smul.u32 2, %s257
        %v260 = vld [vmem:[%s1] sm:$0xf]
        %v261 = vld [vmem:[%s1 + $0x4] sm:$0xf]
        %v262 = vld [vmem:[%s1 + $0x8] sm:$0xf]
        %v263 = vld [vmem:[%s1 + $0xc] sm:$0xf]
        %v264 = vld [vmem:[%s1 + $0x10] sm:$0xf]
        %v265 = vld [vmem:[%s1 + $0x14] sm:$0xf]
        %v266 = vld [vmem:[%s1 + $0x18] sm:$0xf]
        %v267 = vld [vmem:[%s1 + $0x1c] sm:$0xf]
        %v268 = vld [vmem:[%s234] sm:$0xff]
        %v269 = vld [vmem:[%s234 + $0x8] sm:$0xff]
        %v270 = vld [vmem:[%s234 + $0x10] sm:$0xff]
        %v271 = vld [vmem:[%s234 + $0x18] sm:$0xff]
        %v272 = vld [vmem:[%s234 + $0x20] sm:$0xff]
        %v273 = vld [vmem:[%s234 + $0x28] sm:$0xff]
        %v274 = vld [vmem:[%s234 + $0x30] sm:$0xff]
        %v275 = vld [vmem:[%s234 + $0x38] sm:$0xff]
        %v276 = vld [vmem:[%s234 + $0x40] sm:$0xff]
        %v277 = vld [vmem:[%s234 + $0x48] sm:$0xff]
        %v278 = vld [vmem:[%s234 + $0x50] sm:$0xff]
        %v279 = vld [vmem:[%s234 + $0x58] sm:$0xff]
        %v280 = vld [vmem:[%s234 + $0x60] sm:$0xff]
        %v281 = vld [vmem:[%s234 + $0x68] sm:$0xff]
        %v282 = vld [vmem:[%s234 + $0x70] sm:$0xff]
        %v283 = vld [vmem:[%s234 + $0x78] sm:$0xff]
        %v292 = vunpack.c.l.b16 %v260
        %v293 = vunpack.c.l.b16 %v261
        %v294 = vunpack.c.l.b16 %v262
        %v295 = vunpack.c.l.b16 %v263
        %v296 = vunpack.c.l.b16 %v264
        %v297 = vunpack.c.l.b16 %v265
        %v298 = vunpack.c.l.b16 %v266
        %v299 = vunpack.c.l.b16 %v267
        %v300 = vpack.c.b16 %v293, %v292
        %v301 = vpack.c.b16 %v295, %v294
        %v302 = vpack.c.b16 %v297, %v296
        %v303 = vpack.c.b16 %v299, %v298
        %v320 = vunpack.c.l.b16 %v268
        %v321 = vunpack.c.h.b16 %v268
        %v322 = vunpack.c.l.b16 %v269
        %v323 = vunpack.c.h.b16 %v269
        %v324 = vunpack.c.l.b16 %v270
        %v325 = vunpack.c.h.b16 %v270
        %v326 = vunpack.c.l.b16 %v271
        %v327 = vunpack.c.h.b16 %v271
        %v328 = vunpack.c.l.b16 %v272
        %v329 = vunpack.c.h.b16 %v272
        %v330 = vunpack.c.l.b16 %v273
        %v331 = vunpack.c.h.b16 %v273
        %v332 = vunpack.c.l.b16 %v274
        %v333 = vunpack.c.h.b16 %v274
        %v334 = vunpack.c.l.b16 %v275
        %v335 = vunpack.c.h.b16 %v275
        %v336 = vunpack.c.l.b16 %v276
        %v337 = vunpack.c.h.b16 %v276
        %v338 = vunpack.c.l.b16 %v277
        %v339 = vunpack.c.h.b16 %v277
        %v340 = vunpack.c.l.b16 %v278
        %v341 = vunpack.c.h.b16 %v278
        %v342 = vunpack.c.l.b16 %v279
        %v343 = vunpack.c.h.b16 %v279
        %v344 = vunpack.c.l.b16 %v280
        %v345 = vunpack.c.h.b16 %v280
        %v346 = vunpack.c.l.b16 %v281
        %v347 = vunpack.c.h.b16 %v281
        %v348 = vunpack.c.l.b16 %v282
        %v349 = vunpack.c.h.b16 %v282
        %v350 = vunpack.c.l.b16 %v283
        %v351 = vunpack.c.h.b16 %v283
        %v352 = vpack.c.b16 %v328, %v320
        %v353 = vpack.c.b16 %v329, %v321
        %v354 = vpack.c.b16 %v330, %v322
        %v355 = vpack.c.b16 %v331, %v323
        %v356 = vpack.c.b16 %v332, %v324
        %v357 = vpack.c.b16 %v333, %v325
        %v358 = vpack.c.b16 %v334, %v326
        %v359 = vpack.c.b16 %v335, %v327
        %v360 = vpack.c.b16 %v344, %v336
        %v361 = vpack.c.b16 %v345, %v337
        %v362 = vpack.c.b16 %v346, %v338
        %v363 = vpack.c.b16 %v347, %v339
        %v364 = vpack.c.b16 %v348, %v340
        %v365 = vpack.c.b16 %v349, %v341
        %v366 = vpack.c.b16 %v350, %v342
        %v367 = vpack.c.b16 %v351, %v343
        %vm384 = vcmask 261120
        %v386 = vsel %vm384, %v300, 0
        %v389 = vsel %vm384, %v301, 0
        %v392 = vsel %vm384, %v302, 0
        %v395 = vsel %vm384, %v303, 0
        %397 = vmatprep.subr.bf16.mxu0 0
        %398 = vmatpush1.bf16.msra.mxu0 0
        %399 = vmatprep.subr.bf16.mxu0 0
        %400 = vmatpush1.bf16.msra.mxu0 0
        %401 = vmatprep.subr.bf16.mxu0 0
        %402 = vmatpush1.bf16.msra.mxu0 0
        %403 = vmatprep.subr.bf16.mxu0 0
        %404 = vmatpush1.bf16.msra.mxu0 0
        %405 = vmatprep.subr.bf16.mxu0 0
        %406 = vmatpush1.bf16.msra.mxu0 0
        %407 = vmatprep.subr.bf16.mxu0 0
        %408 = vmatpush1.bf16.msra.mxu0 0
        %409 = vmatprep.subr.bf16.mxu0 %v361
        %410 = vmatpush1.bf16.msra.mxu0 %v360
        %411 = vmatprep.subr.bf16.mxu0 %v353
        %412 = vmatpush1.bf16.msra.mxu0 %v352
        %413 = vmatprep.subr.bf16.mxu0 0
        %414 = vmatpush2.bf16.msra.mxu0 0
        %415 = vmatprep.subr.bf16.mxu0 0
        %416 = vmatpush2.bf16.msra.mxu0 0
        %417 = vmatprep.subr.bf16.mxu0 0
        %418 = vmatpush2.bf16.msra.mxu0 0
        %419 = vmatprep.subr.bf16.mxu0 0
        %420 = vmatpush2.bf16.msra.mxu0 0
        %421 = vmatprep.subr.bf16.mxu0 0
        %422 = vmatpush2.bf16.msra.mxu0 0
        %423 = vmatprep.subr.bf16.mxu0 0
        %424 = vmatpush2.bf16.msra.mxu0 0
        %425 = vmatprep.subr.bf16.mxu0 0
        %426 = vmatpush2.bf16.msra.mxu0 0
        %427 = vmatprep.subr.bf16.mxu0 0
        %428 = vmatpush2.bf16.msra.mxu0 0
        %429 = vmatprep.mubr.bf16.mxu0 0
        %430 = vmatmul.mubr.bf16.gmra.mxu0 %v386
        %v431 = vpop.f32.mrf.mxu0
        %v432 = vadd.f32 0.0, %v431
        %v433 = vpop.f32.mrf.mxu0
        %v434 = vadd.f32 0.0, %v433
        %v435 = vpop.f32.mrf.mxu0
        %v436 = vadd.f32 0.0, %v435
        %v437 = vpop.f32.mrf.mxu0
        %v438 = vadd.f32 0.0, %v437
        %439 = vmatprep.mubr.bf16.mxu0 0
        %440 = vmatmul.mubr.bf16.gmra.mxu0 %v389
        %v441 = vpop.f32.mrf.mxu0
        %v442 = vadd.f32 0.0, %v441
        %v443 = vpop.f32.mrf.mxu0
        %v444 = vadd.f32 0.0, %v443
        %v445 = vpop.f32.mrf.mxu0
        %v446 = vadd.f32 0.0, %v445
        %v447 = vpop.f32.mrf.mxu0
        %v448 = vadd.f32 0.0, %v447
        %449 = vmatprep.mubr.bf16.mxu0 0
        %450 = vmatmul.mubr.bf16.gmra.mxu0 %v392
        %v451 = vpop.f32.mrf.mxu0
        %v452 = vadd.f32 0.0, %v451
        %v453 = vpop.f32.mrf.mxu0
        %v454 = vadd.f32 0.0, %v453
        %v455 = vpop.f32.mrf.mxu0
        %v456 = vadd.f32 0.0, %v455
        %v457 = vpop.f32.mrf.mxu0
        %v458 = vadd.f32 0.0, %v457
        %459 = vmatprep.mubr.bf16.mxu0 0
        %460 = vmatmul.mubr.bf16.gmra.mxu0 %v395
        %v461 = vpop.f32.mrf.mxu0
        %v462 = vadd.f32 0.0, %v461
        %v463 = vpop.f32.mrf.mxu0
        %v464 = vadd.f32 0.0, %v463
        %v465 = vpop.f32.mrf.mxu0
        %v466 = vadd.f32 0.0, %v465
        %v467 = vpop.f32.mrf.mxu0
        %v468 = vadd.f32 0.0, %v467
        %469 = vdwg.mxu0
        %470 = vmatprep.subr.bf16.mxu0 0
        %471 = vmatpush1.bf16.msra.mxu0 0
        %472 = vmatprep.subr.bf16.mxu0 0
        %473 = vmatpush1.bf16.msra.mxu0 0
        %474 = vmatprep.subr.bf16.mxu0 0
        %475 = vmatpush1.bf16.msra.mxu0 0
        %476 = vmatprep.subr.bf16.mxu0 0
        %477 = vmatpush1.bf16.msra.mxu0 0
        %478 = vmatprep.subr.bf16.mxu0 0
        %479 = vmatpush1.bf16.msra.mxu0 0
        %480 = vmatprep.subr.bf16.mxu0 0
        %481 = vmatpush1.bf16.msra.mxu0 0
        %482 = vmatprep.subr.bf16.mxu0 %v363
        %483 = vmatpush1.bf16.msra.mxu0 %v362
        %484 = vmatprep.subr.bf16.mxu0 %v355
        %485 = vmatpush1.bf16.msra.mxu0 %v354
        %486 = vmatprep.subr.bf16.mxu0 0
        %487 = vmatpush2.bf16.msra.mxu0 0
        %488 = vmatprep.subr.bf16.mxu0 0
        %489 = vmatpush2.bf16.msra.mxu0 0
        %490 = vmatprep.subr.bf16.mxu0 0
        %491 = vmatpush2.bf16.msra.mxu0 0
        %492 = vmatprep.subr.bf16.mxu0 0
        %493 = vmatpush2.bf16.msra.mxu0 0
        %494 = vmatprep.subr.bf16.mxu0 0
        %495 = vmatpush2.bf16.msra.mxu0 0
        %496 = vmatprep.subr.bf16.mxu0 0
        %497 = vmatpush2.bf16.msra.mxu0 0
        %498 = vmatprep.subr.bf16.mxu0 0
        %499 = vmatpush2.bf16.msra.mxu0 0
        %500 = vmatprep.subr.bf16.mxu0 0
        %501 = vmatpush2.bf16.msra.mxu0 0
        %502 = vmatprep.mubr.bf16.mxu0 0
        %503 = vmatmul.mubr.bf16.gmra.mxu0 %v386
        %v504 = vpop.f32.mrf.mxu0
        %v505 = vadd.f32 0.0, %v504
        %v506 = vpop.f32.mrf.mxu0
        %v507 = vadd.f32 0.0, %v506
        %v508 = vpop.f32.mrf.mxu0
        %v509 = vadd.f32 0.0, %v508
        %v510 = vpop.f32.mrf.mxu0
        %v511 = vadd.f32 0.0, %v510
        %512 = vmatprep.mubr.bf16.mxu0 0
        %513 = vmatmul.mubr.bf16.gmra.mxu0 %v389
        %v514 = vpop.f32.mrf.mxu0
        %v515 = vadd.f32 0.0, %v514
        %v516 = vpop.f32.mrf.mxu0
        %v517 = vadd.f32 0.0, %v516
        %v518 = vpop.f32.mrf.mxu0
        %v519 = vadd.f32 0.0, %v518
        %v520 = vpop.f32.mrf.mxu0
        %v521 = vadd.f32 0.0, %v520
        %522 = vmatprep.mubr.bf16.mxu0 0
        %523 = vmatmul.mubr.bf16.gmra.mxu0 %v392
        %v524 = vpop.f32.mrf.mxu0
        %v525 = vadd.f32 0.0, %v524
        %v526 = vpop.f32.mrf.mxu0
        %v527 = vadd.f32 0.0, %v526
        %v528 = vpop.f32.mrf.mxu0
        %v529 = vadd.f32 0.0, %v528
        %v530 = vpop.f32.mrf.mxu0
        %v531 = vadd.f32 0.0, %v530
        %532 = vmatprep.mubr.bf16.mxu0 0
        %533 = vmatmul.mubr.bf16.gmra.mxu0 %v395
        %v534 = vpop.f32.mrf.mxu0
        %v535 = vadd.f32 0.0, %v534
        %v536 = vpop.f32.mrf.mxu0
        %v537 = vadd.f32 0.0, %v536
        %v538 = vpop.f32.mrf.mxu0
        %v539 = vadd.f32 0.0, %v538
        %v540 = vpop.f32.mrf.mxu0
        %v541 = vadd.f32 0.0, %v540
        %542 = vdwg.mxu0
        %543 = vmatprep.subr.bf16.mxu0 0
        %544 = vmatpush1.bf16.msra.mxu0 0
        %545 = vmatprep.subr.bf16.mxu0 0
        %546 = vmatpush1.bf16.msra.mxu0 0
        %547 = vmatprep.subr.bf16.mxu0 0
        %548 = vmatpush1.bf16.msra.mxu0 0
        %549 = vmatprep.subr.bf16.mxu0 0
        %550 = vmatpush1.bf16.msra.mxu0 0
        %551 = vmatprep.subr.bf16.mxu0 0
        %552 = vmatpush1.bf16.msra.mxu0 0
        %553 = vmatprep.subr.bf16.mxu0 0
        %554 = vmatpush1.bf16.msra.mxu0 0
        %555 = vmatprep.subr.bf16.mxu0 %v365
        %556 = vmatpush1.bf16.msra.mxu0 %v364
        %557 = vmatprep.subr.bf16.mxu0 %v357
        %558 = vmatpush1.bf16.msra.mxu0 %v356
        %559 = vmatprep.subr.bf16.mxu0 0
        %560 = vmatpush2.bf16.msra.mxu0 0
        %561 = vmatprep.subr.bf16.mxu0 0
        %562 = vmatpush2.bf16.msra.mxu0 0
        %563 = vmatprep.subr.bf16.mxu0 0
        %564 = vmatpush2.bf16.msra.mxu0 0
        %565 = vmatprep.subr.bf16.mxu0 0
        %566 = vmatpush2.bf16.msra.mxu0 0
        %567 = vmatprep.subr.bf16.mxu0 0
        %568 = vmatpush2.bf16.msra.mxu0 0
        %569 = vmatprep.subr.bf16.mxu0 0
        %570 = vmatpush2.bf16.msra.mxu0 0
        %571 = vmatprep.subr.bf16.mxu0 0
        %572 = vmatpush2.bf16.msra.mxu0 0
        %573 = vmatprep.subr.bf16.mxu0 0
        %574 = vmatpush2.bf16.msra.mxu0 0
        %575 = vmatprep.mubr.bf16.mxu0 0
        %576 = vmatmul.mubr.bf16.gmra.mxu0 %v386
        %v577 = vpop.f32.mrf.mxu0
        %v578 = vadd.f32 0.0, %v577
        %v579 = vpop.f32.mrf.mxu0
        %v580 = vadd.f32 0.0, %v579
        %v581 = vpop.f32.mrf.mxu0
        %v582 = vadd.f32 0.0, %v581
        %v583 = vpop.f32.mrf.mxu0
        %v584 = vadd.f32 0.0, %v583
        %585 = vmatprep.mubr.bf16.mxu0 0
        %586 = vmatmul.mubr.bf16.gmra.mxu0 %v389
        %v587 = vpop.f32.mrf.mxu0
        %v588 = vadd.f32 0.0, %v587
        %v589 = vpop.f32.mrf.mxu0
        %v590 = vadd.f32 0.0, %v589
        %v591 = vpop.f32.mrf.mxu0
        %v592 = vadd.f32 0.0, %v591
        %v593 = vpop.f32.mrf.mxu0
        %v594 = vadd.f32 0.0, %v593
        %595 = vmatprep.mubr.bf16.mxu0 0
        %596 = vmatmul.mubr.bf16.gmra.mxu0 %v392
        %v597 = vpop.f32.mrf.mxu0
        %v598 = vadd.f32 0.0, %v597
        %v599 = vpop.f32.mrf.mxu0
        %v600 = vadd.f32 0.0, %v599
        %v601 = vpop.f32.mrf.mxu0
        %v602 = vadd.f32 0.0, %v601
        %v603 = vpop.f32.mrf.mxu0
        %v604 = vadd.f32 0.0, %v603
        %605 = vmatprep.mubr.bf16.mxu0 0
        %606 = vmatmul.mubr.bf16.gmra.mxu0 %v395
        %v607 = vpop.f32.mrf.mxu0
        %v608 = vadd.f32 0.0, %v607
        %v609 = vpop.f32.mrf.mxu0
        %v610 = vadd.f32 0.0, %v609
        %v611 = vpop.f32.mrf.mxu0
        %v612 = vadd.f32 0.0, %v611
        %v613 = vpop.f32.mrf.mxu0
        %v614 = vadd.f32 0.0, %v613
        %615 = vdwg.mxu0
        %616 = vmatprep.subr.bf16.mxu0 0
        %617 = vmatpush1.bf16.msra.mxu0 0
        %618 = vmatprep.subr.bf16.mxu0 0
        %619 = vmatpush1.bf16.msra.mxu0 0
        %620 = vmatprep.subr.bf16.mxu0 0
        %621 = vmatpush1.bf16.msra.mxu0 0
        %622 = vmatprep.subr.bf16.mxu0 0
        %623 = vmatpush1.bf16.msra.mxu0 0
        %624 = vmatprep.subr.bf16.mxu0 0
        %625 = vmatpush1.bf16.msra.mxu0 0
        %626 = vmatprep.subr.bf16.mxu0 0
        %627 = vmatpush1.bf16.msra.mxu0 0
        %628 = vmatprep.subr.bf16.mxu0 %v367
        %629 = vmatpush1.bf16.msra.mxu0 %v366
        %630 = vmatprep.subr.bf16.mxu0 %v359
        %631 = vmatpush1.bf16.msra.mxu0 %v358
        %632 = vmatprep.subr.bf16.mxu0 0
        %633 = vmatpush2.bf16.msra.mxu0 0
        %634 = vmatprep.subr.bf16.mxu0 0
        %635 = vmatpush2.bf16.msra.mxu0 0
        %636 = vmatprep.subr.bf16.mxu0 0
        %637 = vmatpush2.bf16.msra.mxu0 0
        %638 = vmatprep.subr.bf16.mxu0 0
        %639 = vmatpush2.bf16.msra.mxu0 0
        %640 = vmatprep.subr.bf16.mxu0 0
        %641 = vmatpush2.bf16.msra.mxu0 0
        %642 = vmatprep.subr.bf16.mxu0 0
        %643 = vmatpush2.bf16.msra.mxu0 0
        %644 = vmatprep.subr.bf16.mxu0 0
        %645 = vmatpush2.bf16.msra.mxu0 0
        %646 = vmatprep.subr.bf16.mxu0 0
        %647 = vmatpush2.bf16.msra.mxu0 0
        %648 = vmatprep.mubr.bf16.mxu0 0
        %649 = vmatmul.mubr.bf16.gmra.mxu0 %v386
        %v650 = vpop.f32.mrf.mxu0
        %v651 = vadd.f32 0.0, %v650
        %v652 = vpop.f32.mrf.mxu0
        %v653 = vadd.f32 0.0, %v652
        %v654 = vpop.f32.mrf.mxu0
        %v655 = vadd.f32 0.0, %v654
        %v656 = vpop.f32.mrf.mxu0
        %v657 = vadd.f32 0.0, %v656
        %658 = vmatprep.mubr.bf16.mxu0 0
        %659 = vmatmul.mubr.bf16.gmra.mxu0 %v389
        %v660 = vpop.f32.mrf.mxu0
        %v661 = vadd.f32 0.0, %v660
        %v662 = vpop.f32.mrf.mxu0
        %v663 = vadd.f32 0.0, %v662
        %v664 = vpop.f32.mrf.mxu0
        %v665 = vadd.f32 0.0, %v664
        %v666 = vpop.f32.mrf.mxu0
        %v667 = vadd.f32 0.0, %v666
        %668 = vmatprep.mubr.bf16.mxu0 0
        %669 = vmatmul.mubr.bf16.gmra.mxu0 %v392
        %v670 = vpop.f32.mrf.mxu0
        %v671 = vadd.f32 0.0, %v670
        %v672 = vpop.f32.mrf.mxu0
        %v673 = vadd.f32 0.0, %v672
        %v674 = vpop.f32.mrf.mxu0
        %v675 = vadd.f32 0.0, %v674
        %v676 = vpop.f32.mrf.mxu0
        %v677 = vadd.f32 0.0, %v676
        %678 = vmatprep.mubr.bf16.mxu0 0
        %679 = vmatmul.mubr.bf16.gmra.mxu0 %v395
        %v680 = vpop.f32.mrf.mxu0
        %v681 = vadd.f32 0.0, %v680
        %v682 = vpop.f32.mrf.mxu0
        %v683 = vadd.f32 0.0, %v682
        %v684 = vpop.f32.mrf.mxu0
        %v685 = vadd.f32 0.0, %v684
        %v686 = vpop.f32.mrf.mxu0
        %v687 = vadd.f32 0.0, %v686
        %688 = vdwg.mxu0
        %p689 = scmp.eq.s32.totalorder %s19, 0
        %p690 = scmp.eq.s32.totalorder %s20, 0
        %p691 = pnand %p689, %p690
        %p692 = pneg %p691
        // Predicated region
        $region60: #{dann_forward.3} parent=54 // pred_check
          _
        $region61: #{dann_forward.3} parent=54 // pred_check_branch
          %694 = sbr.rel (%p691) target = $region63
        $region62: #{dann_forward.3} parent=54 // pred_region
          %vm695 = vcmask 7168
          %696 = vst.msk [vmem:[#allocation2] sm:$0xff] %vm695, 0.0
          %697 = vst.msk [vmem:[#allocation2 + $0x8] sm:$0xff] %vm695, 0.0
          %698 = vst.msk [vmem:[#allocation2 + $0x10] sm:$0xff] %vm695, 0.0
          %699 = vst.msk [vmem:[#allocation2 + $0x18] sm:$0xff] %vm695, 0.0
          %700 = vst.msk [vmem:[#allocation2 + $0x20] sm:$0xff] %vm695, 0.0
          %701 = vst.msk [vmem:[#allocation2 + $0x28] sm:$0xff] %vm695, 0.0
          %702 = vst.msk [vmem:[#allocation2 + $0x30] sm:$0xff] %vm695, 0.0
          %703 = vst.msk [vmem:[#allocation2 + $0x38] sm:$0xff] %vm695, 0.0
          %704 = vst.msk [vmem:[#allocation3] sm:$0xff] %vm695, 0.0
          %705 = vst.msk [vmem:[#allocation3 + $0x8] sm:$0xff] %vm695, 0.0
          %706 = vst.msk [vmem:[#allocation3 + $0x10] sm:$0xff] %vm695, 0.0
          %707 = vst.msk [vmem:[#allocation3 + $0x18] sm:$0xff] %vm695, 0.0
          %708 = vst.msk [vmem:[#allocation3 + $0x20] sm:$0xff] %vm695, 0.0
          %709 = vst.msk [vmem:[#allocation3 + $0x28] sm:$0xff] %vm695, 0.0
          %710 = vst.msk [vmem:[#allocation3 + $0x30] sm:$0xff] %vm695, 0.0
          %711 = vst.msk [vmem:[#allocation3 + $0x38] sm:$0xff] %vm695, 0.0
        $region63: #{dann_forward.3} parent=54 // pred_fallthru
          _
        // Predicated region
        $region64: #{dann_forward.3} parent=54 // pred_check
          %p712 = pneg %p689
        $region65: #{dann_forward.3} parent=54 // pred_check_branch
          %714 = sbr.rel (%p712) target = $region67
        $region66: #{dann_forward.3} parent=54 // pred_region
          %v715 = vld [vmem:[#allocation2] sm:$0xff]
          %v716 = vld [vmem:[#allocation2 + $0x8] sm:$0xff]
          %v717 = vld [vmem:[#allocation2 + $0x10] sm:$0xff]
          %v718 = vld [vmem:[#allocation2 + $0x18] sm:$0xff]
          %v719 = vld [vmem:[#allocation2 + $0x20] sm:$0xff]
          %v720 = vld [vmem:[#allocation2 + $0x28] sm:$0xff]
          %v721 = vld [vmem:[#allocation2 + $0x30] sm:$0xff]
          %v722 = vld [vmem:[#allocation2 + $0x38] sm:$0xff]
          %v723 = vadd.f32 %v432, %v434
          %v724 = vadd.f32 %v723, %v505
          %v725 = vadd.f32 %v724, %v507
          %v726 = vadd.f32 %v725, %v578
          %v727 = vadd.f32 %v726, %v580
          %v728 = vadd.f32 %v727, %v651
          %v729 = vadd.f32 %v728, %v653
          %730 = vadd.xlane.f32.xlu0 %v729
          %v731 = vpop.xlane.xlu0 %730
          %v732 = vadd.f32 %v436, %v438
          %v733 = vadd.f32 %v732, %v509
          %v734 = vadd.f32 %v733, %v511
          %v735 = vadd.f32 %v734, %v582
          %v736 = vadd.f32 %v735, %v584
          %v737 = vadd.f32 %v736, %v655
          %v738 = vadd.f32 %v737, %v657
          %739 = vadd.xlane.f32.xlu0 %v738
          %v740 = vpop.xlane.xlu0 %739
          %v741 = vadd.f32 %v442, %v444
          %v742 = vadd.f32 %v741, %v515
          %v743 = vadd.f32 %v742, %v517
          %v744 = vadd.f32 %v743, %v588
          %v745 = vadd.f32 %v744, %v590
          %v746 = vadd.f32 %v745, %v661
          %v747 = vadd.f32 %v746, %v663
          %748 = vadd.xlane.f32.xlu0 %v747
          %v749 = vpop.xlane.xlu0 %748
          %v750 = vadd.f32 %v446, %v448
          %v751 = vadd.f32 %v750, %v519
          %v752 = vadd.f32 %v751, %v521
          %v753 = vadd.f32 %v752, %v592
          %v754 = vadd.f32 %v753, %v594
          %v755 = vadd.f32 %v754, %v665
          %v756 = vadd.f32 %v755, %v667
          %757 = vadd.xlane.f32.xlu0 %v756
          %v758 = vpop.xlane.xlu0 %757
          %v759 = vadd.f32 %v452, %v454
          %v760 = vadd.f32 %v759, %v525
          %v761 = vadd.f32 %v760, %v527
          %v762 = vadd.f32 %v761, %v598
          %v763 = vadd.f32 %v762, %v600
          %v764 = vadd.f32 %v763, %v671
          %v765 = vadd.f32 %v764, %v673
          %766 = vadd.xlane.f32.xlu0 %v765
          %v767 = vpop.xlane.xlu0 %766
          %v768 = vadd.f32 %v456, %v458
          %v769 = vadd.f32 %v768, %v529
          %v770 = vadd.f32 %v769, %v531
          %v771 = vadd.f32 %v770, %v602
          %v772 = vadd.f32 %v771, %v604
          %v773 = vadd.f32 %v772, %v675
          %v774 = vadd.f32 %v773, %v677
          %775 = vadd.xlane.f32.xlu0 %v774
          %v776 = vpop.xlane.xlu0 %775
          %v777 = vadd.f32 %v462, %v464
          %v778 = vadd.f32 %v777, %v535
          %v779 = vadd.f32 %v778, %v537
          %v780 = vadd.f32 %v779, %v608
          %v781 = vadd.f32 %v780, %v610
          %v782 = vadd.f32 %v781, %v681
          %v783 = vadd.f32 %v782, %v683
          %784 = vadd.xlane.f32.xlu0 %v783
          %v785 = vpop.xlane.xlu0 %784
          %v786 = vadd.f32 %v466, %v468
          %v787 = vadd.f32 %v786, %v539
          %v788 = vadd.f32 %v787, %v541
          %v789 = vadd.f32 %v788, %v612
          %v790 = vadd.f32 %v789, %v614
          %v791 = vadd.f32 %v790, %v685
          %v792 = vadd.f32 %v791, %v687
          %793 = vadd.xlane.f32.xlu0 %v792
          %v794 = vpop.xlane.xlu0 %793
          %v795 = vadd.f32 %v715, %v731
          %v796 = vadd.f32 %v716, %v740
          %v797 = vadd.f32 %v717, %v749
          %v798 = vadd.f32 %v718, %v758
          %v799 = vadd.f32 %v719, %v767
          %v800 = vadd.f32 %v720, %v776
          %v801 = vadd.f32 %v721, %v785
          %v802 = vadd.f32 %v722, %v794
          %vm803 = vcmask 7168
          %804 = vst.msk [vmem:[#allocation2] sm:$0xff] %vm803, %v795
          %805 = vst.msk [vmem:[#allocation2 + $0x8] sm:$0xff] %vm803, %v796
          %806 = vst.msk [vmem:[#allocation2 + $0x10] sm:$0xff] %vm803, %v797
          %807 = vst.msk [vmem:[#allocation2 + $0x18] sm:$0xff] %vm803, %v798
          %808 = vst.msk [vmem:[#allocation2 + $0x20] sm:$0xff] %vm803, %v799
          %809 = vst.msk [vmem:[#allocation2 + $0x28] sm:$0xff] %vm803, %v800
          %810 = vst.msk [vmem:[#allocation2 + $0x30] sm:$0xff] %vm803, %v801
          %811 = vst.msk [vmem:[#allocation2 + $0x38] sm:$0xff] %vm803, %v802
          %v812 = vld [vmem:[#allocation3] sm:$0xff]
          %v813 = vld [vmem:[#allocation3 + $0x8] sm:$0xff]
          %v814 = vld [vmem:[#allocation3 + $0x10] sm:$0xff]
          %v815 = vld [vmem:[#allocation3 + $0x18] sm:$0xff]
          %v816 = vld [vmem:[#allocation3 + $0x20] sm:$0xff]
          %v817 = vld [vmem:[#allocation3 + $0x28] sm:$0xff]
          %v818 = vld [vmem:[#allocation3 + $0x30] sm:$0xff]
          %v819 = vld [vmem:[#allocation3 + $0x38] sm:$0xff]
          %v820 = vmul.f32 %v432, %v432
          %v821 = vmul.f32 %v434, %v434
          %v822 = vmul.f32 %v505, %v505
          %v823 = vmul.f32 %v507, %v507
          %v824 = vmul.f32 %v578, %v578
          %v825 = vmul.f32 %v580, %v580
          %v826 = vmul.f32 %v651, %v651
          %v827 = vmul.f32 %v653, %v653
          %v828 = vmul.f32 %v436, %v436
          %v829 = vmul.f32 %v438, %v438
          %v830 = vmul.f32 %v509, %v509
          %v831 = vmul.f32 %v511, %v511
          %v832 = vmul.f32 %v582, %v582
          %v833 = vmul.f32 %v584, %v584
          %v834 = vmul.f32 %v655, %v655
          %v835 = vmul.f32 %v657, %v657
          %v836 = vmul.f32 %v442, %v442
          %v837 = vmul.f32 %v444, %v444
          %v838 = vmul.f32 %v515, %v515
          %v839 = vmul.f32 %v517, %v517
          %v840 = vmul.f32 %v588, %v588
          %v841 = vmul.f32 %v590, %v590
          %v842 = vmul.f32 %v661, %v661
          %v843 = vmul.f32 %v663, %v663
          %v844 = vmul.f32 %v446, %v446
          %v845 = vmul.f32 %v448, %v448
          %v846 = vmul.f32 %v519, %v519
          %v847 = vmul.f32 %v521, %v521
          %v848 = vmul.f32 %v592, %v592
          %v849 = vmul.f32 %v594, %v594
          %v850 = vmul.f32 %v665, %v665
          %v851 = vmul.f32 %v667, %v667
          %v852 = vmul.f32 %v452, %v452
          %v853 = vmul.f32 %v454, %v454
          %v854 = vmul.f32 %v525, %v525
          %v855 = vmul.f32 %v527, %v527
          %v856 = vmul.f32 %v598, %v598
          %v857 = vmul.f32 %v600, %v600
          %v858 = vmul.f32 %v671, %v671
          %v859 = vmul.f32 %v673, %v673
          %v860 = vmul.f32 %v456, %v456
          %v861 = vmul.f32 %v458, %v458
          %v862 = vmul.f32 %v529, %v529
          %v863 = vmul.f32 %v531, %v531
          %v864 = vmul.f32 %v602, %v602
          %v865 = vmul.f32 %v604, %v604
          %v866 = vmul.f32 %v675, %v675
          %v867 = vmul.f32 %v677, %v677
          %v868 = vmul.f32 %v462, %v462
          %v869 = vmul.f32 %v464, %v464
          %v870 = vmul.f32 %v535, %v535
          %v871 = vmul.f32 %v537, %v537
          %v872 = vmul.f32 %v608, %v608
          %v873 = vmul.f32 %v610, %v610
          %v874 = vmul.f32 %v681, %v681
          %v875 = vmul.f32 %v683, %v683
          %v876 = vmul.f32 %v466, %v466
          %v877 = vmul.f32 %v468, %v468
          %v878 = vmul.f32 %v539, %v539
          %v879 = vmul.f32 %v541, %v541
          %v880 = vmul.f32 %v612, %v612
          %v881 = vmul.f32 %v614, %v614
          %v882 = vmul.f32 %v685, %v685
          %v883 = vmul.f32 %v687, %v687
          %v884 = vadd.f32 %v820, %v821
          %v885 = vadd.f32 %v884, %v822
          %v886 = vadd.f32 %v885, %v823
          %v887 = vadd.f32 %v886, %v824
          %v888 = vadd.f32 %v887, %v825
          %v889 = vadd.f32 %v888, %v826
          %v890 = vadd.f32 %v889, %v827
          %891 = vadd.xlane.f32.xlu0 %v890
          %v892 = vpop.xlane.xlu0 %891
          %v893 = vadd.f32 %v828, %v829
          %v894 = vadd.f32 %v893, %v830
          %v895 = vadd.f32 %v894, %v831
          %v896 = vadd.f32 %v895, %v832
          %v897 = vadd.f32 %v896, %v833
          %v898 = vadd.f32 %v897, %v834
          %v899 = vadd.f32 %v898, %v835
          %900 = vadd.xlane.f32.xlu0 %v899
          %v901 = vpop.xlane.xlu0 %900
          %v902 = vadd.f32 %v836, %v837
          %v903 = vadd.f32 %v902, %v838
          %v904 = vadd.f32 %v903, %v839
          %v905 = vadd.f32 %v904, %v840
          %v906 = vadd.f32 %v905, %v841
          %v907 = vadd.f32 %v906, %v842
          %v908 = vadd.f32 %v907, %v843
          %909 = vadd.xlane.f32.xlu0 %v908
          %v910 = vpop.xlane.xlu0 %909
          %v911 = vadd.f32 %v844, %v845
          %v912 = vadd.f32 %v911, %v846
          %v913 = vadd.f32 %v912, %v847
          %v914 = vadd.f32 %v913, %v848
          %v915 = vadd.f32 %v914, %v849
          %v916 = vadd.f32 %v915, %v850
          %v917 = vadd.f32 %v916, %v851
          %918 = vadd.xlane.f32.xlu0 %v917
          %v919 = vpop.xlane.xlu0 %918
          %v920 = vadd.f32 %v852, %v853
          %v921 = vadd.f32 %v920, %v854
          %v922 = vadd.f32 %v921, %v855
          %v923 = vadd.f32 %v922, %v856
          %v924 = vadd.f32 %v923, %v857
          %v925 = vadd.f32 %v924, %v858
          %v926 = vadd.f32 %v925, %v859
          %927 = vadd.xlane.f32.xlu0 %v926
          %v928 = vpop.xlane.xlu0 %927
          %v929 = vadd.f32 %v860, %v861
          %v930 = vadd.f32 %v929, %v862
          %v931 = vadd.f32 %v930, %v863
          %v932 = vadd.f32 %v931, %v864
          %v933 = vadd.f32 %v932, %v865
          %v934 = vadd.f32 %v933, %v866
          %v935 = vadd.f32 %v934, %v867
          %936 = vadd.xlane.f32.xlu0 %v935
          %v937 = vpop.xlane.xlu0 %936
          %v938 = vadd.f32 %v868, %v869
          %v939 = vadd.f32 %v938, %v870
          %v940 = vadd.f32 %v939, %v871
          %v941 = vadd.f32 %v940, %v872
          %v942 = vadd.f32 %v941, %v873
          %v943 = vadd.f32 %v942, %v874
          %v944 = vadd.f32 %v943, %v875
          %945 = vadd.xlane.f32.xlu0 %v944
          %v946 = vpop.xlane.xlu0 %945
          %v947 = vadd.f32 %v876, %v877
          %v948 = vadd.f32 %v947, %v878
          %v949 = vadd.f32 %v948, %v879
          %v950 = vadd.f32 %v949, %v880
          %v951 = vadd.f32 %v950, %v881
          %v952 = vadd.f32 %v951, %v882
          %v953 = vadd.f32 %v952, %v883
          %954 = vadd.xlane.f32.xlu0 %v953
          %v955 = vpop.xlane.xlu0 %954
          %v956 = vadd.f32 %v812, %v892
          %v957 = vadd.f32 %v813, %v901
          %v958 = vadd.f32 %v814, %v910
          %v959 = vadd.f32 %v815, %v919
          %v960 = vadd.f32 %v816, %v928
          %v961 = vadd.f32 %v817, %v937
          %v962 = vadd.f32 %v818, %v946
          %v963 = vadd.f32 %v819, %v955
          %964 = vst.msk [vmem:[#allocation3] sm:$0xff] %vm803, %v956
          %965 = vst.msk [vmem:[#allocation3 + $0x8] sm:$0xff] %vm803, %v957
          %966 = vst.msk [vmem:[#allocation3 + $0x10] sm:$0xff] %vm803, %v958
          %967 = vst.msk [vmem:[#allocation3 + $0x18] sm:$0xff] %vm803, %v959
          %968 = vst.msk [vmem:[#allocation3 + $0x20] sm:$0xff] %vm803, %v960
          %969 = vst.msk [vmem:[#allocation3 + $0x28] sm:$0xff] %vm803, %v961
          %970 = vst.msk [vmem:[#allocation3 + $0x30] sm:$0xff] %vm803, %v962
          %971 = vst.msk [vmem:[#allocation3 + $0x38] sm:$0xff] %vm803, %v963
        $region67: #{dann_forward.3} parent=54 // pred_fallthru
          _
        %p972 = scmp.eq.s32.totalorder %s19, 1
        // Predicated region
        $region68: #{dann_forward.3} parent=54 // pred_check
          %p973 = pneg %p972
        $region69: #{dann_forward.3} parent=54 // pred_check_branch
          %975 = sbr.rel (%p973) target = $region71
        $region70: #{dann_forward.3} parent=54 // pred_region
          %v976 = vld [vmem:[#allocation2] sm:$0xff]
          %v977 = vld [vmem:[#allocation2 + $0x8] sm:$0xff]
          %v978 = vld [vmem:[#allocation2 + $0x10] sm:$0xff]
          %v979 = vld [vmem:[#allocation2 + $0x18] sm:$0xff]
          %v980 = vld [vmem:[#allocation2 + $0x20] sm:$0xff]
          %v981 = vld [vmem:[#allocation2 + $0x28] sm:$0xff]
          %v982 = vld [vmem:[#allocation2 + $0x30] sm:$0xff]
          %v983 = vld [vmem:[#allocation2 + $0x38] sm:$0xff]
          %v984 = vmul.f32 %v976, 0.00086805556
          %v985 = vmul.f32 %v977, 0.00086805556
          %v986 = vmul.f32 %v978, 0.00086805556
          %v987 = vmul.f32 %v979, 0.00086805556
          %v988 = vmul.f32 %v980, 0.00086805556
          %v989 = vmul.f32 %v981, 0.00086805556
          %v990 = vmul.f32 %v982, 0.00086805556
          %v991 = vmul.f32 %v983, 0.00086805556
          %v992 = vld [vmem:[#allocation3] sm:$0xff]
          %v993 = vld [vmem:[#allocation3 + $0x8] sm:$0xff]
          %v994 = vld [vmem:[#allocation3 + $0x10] sm:$0xff]
          %v995 = vld [vmem:[#allocation3 + $0x18] sm:$0xff]
          %v996 = vld [vmem:[#allocation3 + $0x20] sm:$0xff]
          %v997 = vld [vmem:[#allocation3 + $0x28] sm:$0xff]
          %v998 = vld [vmem:[#allocation3 + $0x30] sm:$0xff]
          %v999 = vld [vmem:[#allocation3 + $0x38] sm:$0xff]
          %v1000 = vmul.f32 %v992, 0.00086805556
          %v1001 = vmul.f32 %v993, 0.00086805556
          %v1002 = vmul.f32 %v994, 0.00086805556
          %v1003 = vmul.f32 %v995, 0.00086805556
          %v1004 = vmul.f32 %v996, 0.00086805556
          %v1005 = vmul.f32 %v997, 0.00086805556
          %v1006 = vmul.f32 %v998, 0.00086805556
          %v1007 = vmul.f32 %v999, 0.00086805556
          %v1008 = vmul.f32 %v984, %v984
          %v1009 = vmul.f32 %v985, %v985
          %v1010 = vmul.f32 %v986, %v986
          %v1011 = vmul.f32 %v987, %v987
          %v1012 = vmul.f32 %v988, %v988
          %v1013 = vmul.f32 %v989, %v989
          %v1014 = vmul.f32 %v990, %v990
          %v1015 = vmul.f32 %v991, %v991
          %v1016 = vsub.f32 %v1000, %v1008
          %v1017 = vsub.f32 %v1001, %v1009
          %v1018 = vsub.f32 %v1002, %v1010
          %v1019 = vsub.f32 %v1003, %v1011
          %v1020 = vsub.f32 %v1004, %v1012
          %v1021 = vsub.f32 %v1005, %v1013
          %v1022 = vsub.f32 %v1006, %v1014
          %v1023 = vsub.f32 %v1007, %v1015
          %v1024 = vld [vmem:[%s2] sm:$0xff]
          %v1025 = vld [vmem:[%s2 + $0x8] sm:$0xff]
          %v1026 = vld [vmem:[%s2 + $0x10] sm:$0xff]
          %v1027 = vld [vmem:[%s2 + $0x18] sm:$0xff]
          %v1028 = vld [vmem:[%s2 + $0x20] sm:$0xff]
          %v1029 = vld [vmem:[%s2 + $0x28] sm:$0xff]
          %v1030 = vld [vmem:[%s2 + $0x30] sm:$0xff]
          %v1031 = vld [vmem:[%s2 + $0x38] sm:$0xff]
          %v1032 = vadd.f32 %v1016, 1e-05
          %v1033 = vadd.f32 %v1017, 1e-05
          %v1034 = vadd.f32 %v1018, 1e-05
          %v1035 = vadd.f32 %v1019, 1e-05
          %v1036 = vadd.f32 %v1020, 1e-05
          %v1037 = vadd.f32 %v1021, 1e-05
          %v1038 = vadd.f32 %v1022, 1e-05
          %v1039 = vadd.f32 %v1023, 1e-05
          %v1040 = vrsqrt.pop %v1032
          %v1041 = vrsqrt.pop %v1033
          %v1042 = vrsqrt.pop %v1034
          %v1043 = vrsqrt.pop %v1035
          %v1044 = vrsqrt.pop %v1036
          %v1045 = vrsqrt.pop %v1037
          %v1046 = vrsqrt.pop %v1038
          %v1047 = vrsqrt.pop %v1039
          %v1048 = vmul.f32 %v1024, %v1040
          %v1049 = vmul.f32 %v1025, %v1041
          %v1050 = vmul.f32 %v1026, %v1042
          %v1051 = vmul.f32 %v1027, %v1043
          %v1052 = vmul.f32 %v1028, %v1044
          %v1053 = vmul.f32 %v1029, %v1045
          %v1054 = vmul.f32 %v1030, %v1046
          %v1055 = vmul.f32 %v1031, %v1047
          %v1056 = vld [vmem:[%s3] sm:$0xff]
          %v1057 = vld [vmem:[%s3 + $0x8] sm:$0xff]
          %v1058 = vld [vmem:[%s3 + $0x10] sm:$0xff]
          %v1059 = vld [vmem:[%s3 + $0x18] sm:$0xff]
          %v1060 = vld [vmem:[%s3 + $0x20] sm:$0xff]
          %v1061 = vld [vmem:[%s3 + $0x28] sm:$0xff]
          %v1062 = vld [vmem:[%s3 + $0x30] sm:$0xff]
          %v1063 = vld [vmem:[%s3 + $0x38] sm:$0xff]
          %v1064 = vmul.f32 %v984, %v1048
          %v1065 = vmul.f32 %v985, %v1049
          %v1066 = vmul.f32 %v986, %v1050
          %v1067 = vmul.f32 %v987, %v1051
          %v1068 = vmul.f32 %v988, %v1052
          %v1069 = vmul.f32 %v989, %v1053
          %v1070 = vmul.f32 %v990, %v1054
          %v1071 = vmul.f32 %v991, %v1055
          %v1072 = vsub.f32 %v1056, %v1064
          %v1073 = vsub.f32 %v1057, %v1065
          %v1074 = vsub.f32 %v1058, %v1066
          %v1075 = vsub.f32 %v1059, %v1067
          %v1076 = vsub.f32 %v1060, %v1068
          %v1077 = vsub.f32 %v1061, %v1069
          %v1078 = vsub.f32 %v1062, %v1070
          %v1079 = vsub.f32 %v1063, %v1071
          %1081 = vset.pattern.permute.xlu0 0
          %1082 = vperm.xlu0 %1081, %v1048
          %v1083 = vpop.permute.xlu0 %1082
          %1086 = vset.pattern.permute.xlu0 0
          %1087 = vperm.xlu0 %1086, %v1049
          %v1088 = vpop.permute.xlu0 %1087
          %1091 = vset.pattern.permute.xlu0 0
          %1092 = vperm.xlu0 %1091, %v1050
          %v1093 = vpop.permute.xlu0 %1092
          %1096 = vset.pattern.permute.xlu0 0
          %1097 = vperm.xlu0 %1096, %v1051
          %v1098 = vpop.permute.xlu0 %1097
          %1101 = vset.pattern.permute.xlu0 0
          %1102 = vperm.xlu0 %1101, %v1052
          %v1103 = vpop.permute.xlu0 %1102
          %1106 = vset.pattern.permute.xlu0 0
          %1107 = vperm.xlu0 %1106, %v1053
          %v1108 = vpop.permute.xlu0 %1107
          %1111 = vset.pattern.permute.xlu0 0
          %1112 = vperm.xlu0 %1111, %v1054
          %v1113 = vpop.permute.xlu0 %1112
          %1116 = vset.pattern.permute.xlu0 0
          %1117 = vperm.xlu0 %1116, %v1055
          %v1118 = vpop.permute.xlu0 %1117
          %v1120 = vmul.f32 %v432, %v1083
          %v1121 = vmul.f32 %v434, %v1083
          %v1122 = vmul.f32 %v505, %v1083
          %v1123 = vmul.f32 %v507, %v1083
          %v1124 = vmul.f32 %v578, %v1083
          %v1125 = vmul.f32 %v580, %v1083
          %v1126 = vmul.f32 %v651, %v1083
          %v1127 = vmul.f32 %v653, %v1083
          %v1128 = vmul.f32 %v436, %v1088
          %v1129 = vmul.f32 %v438, %v1088
          %v1130 = vmul.f32 %v509, %v1088
          %v1131 = vmul.f32 %v511, %v1088
          %v1132 = vmul.f32 %v582, %v1088
          %v1133 = vmul.f32 %v584, %v1088
          %v1134 = vmul.f32 %v655, %v1088
          %v1135 = vmul.f32 %v657, %v1088
          %v1136 = vmul.f32 %v442, %v1093
          %v1137 = vmul.f32 %v444, %v1093
          %v1138 = vmul.f32 %v515, %v1093
          %v1139 = vmul.f32 %v517, %v1093
          %v1140 = vmul.f32 %v588, %v1093
          %v1141 = vmul.f32 %v590, %v1093
          %v1142 = vmul.f32 %v661, %v1093
          %v1143 = vmul.f32 %v663, %v1093
          %v1144 = vmul.f32 %v446, %v1098
          %v1145 = vmul.f32 %v448, %v1098
          %v1146 = vmul.f32 %v519, %v1098
          %v1147 = vmul.f32 %v521, %v1098
          %v1148 = vmul.f32 %v592, %v1098
          %v1149 = vmul.f32 %v594, %v1098
          %v1150 = vmul.f32 %v665, %v1098
          %v1151 = vmul.f32 %v667, %v1098
          %v1152 = vmul.f32 %v452, %v1103
          %v1153 = vmul.f32 %v454, %v1103
          %v1154 = vmul.f32 %v525, %v1103
          %v1155 = vmul.f32 %v527, %v1103
          %v1156 = vmul.f32 %v598, %v1103
          %v1157 = vmul.f32 %v600, %v1103
          %v1158 = vmul.f32 %v671, %v1103
          %v1159 = vmul.f32 %v673, %v1103
          %v1160 = vmul.f32 %v456, %v1108
          %v1161 = vmul.f32 %v458, %v1108
          %v1162 = vmul.f32 %v529, %v1108
          %v1163 = vmul.f32 %v531, %v1108
          %v1164 = vmul.f32 %v602, %v1108
          %v1165 = vmul.f32 %v604, %v1108
          %v1166 = vmul.f32 %v675, %v1108
          %v1167 = vmul.f32 %v677, %v1108
          %v1168 = vmul.f32 %v462, %v1113
          %v1169 = vmul.f32 %v464, %v1113
          %v1170 = vmul.f32 %v535, %v1113
          %v1171 = vmul.f32 %v537, %v1113
          %v1172 = vmul.f32 %v608, %v1113
          %v1173 = vmul.f32 %v610, %v1113
          %v1174 = vmul.f32 %v681, %v1113
          %v1175 = vmul.f32 %v683, %v1113
          %v1176 = vmul.f32 %v466, %v1118
          %v1177 = vmul.f32 %v468, %v1118
          %v1178 = vmul.f32 %v539, %v1118
          %v1179 = vmul.f32 %v541, %v1118
          %v1180 = vmul.f32 %v612, %v1118
          %v1181 = vmul.f32 %v614, %v1118
          %v1182 = vmul.f32 %v685, %v1118
          %v1183 = vmul.f32 %v687, %v1118
          %1185 = vset.pattern.permute.xlu0 0
          %1186 = vperm.xlu0 %1185, %v1072
          %v1187 = vpop.permute.xlu0 %1186
          %1190 = vset.pattern.permute.xlu0 0
          %1191 = vperm.xlu0 %1190, %v1073
          %v1192 = vpop.permute.xlu0 %1191
          %1195 = vset.pattern.permute.xlu0 0
          %1196 = vperm.xlu0 %1195, %v1074
          %v1197 = vpop.permute.xlu0 %1196
          %1200 = vset.pattern.permute.xlu0 0
          %1201 = vperm.xlu0 %1200, %v1075
          %v1202 = vpop.permute.xlu0 %1201
          %1205 = vset.pattern.permute.xlu0 0
          %1206 = vperm.xlu0 %1205, %v1076
          %v1207 = vpop.permute.xlu0 %1206
          %1210 = vset.pattern.permute.xlu0 0
          %1211 = vperm.xlu0 %1210, %v1077
          %v1212 = vpop.permute.xlu0 %1211
          %1215 = vset.pattern.permute.xlu0 0
          %1216 = vperm.xlu0 %1215, %v1078
          %v1217 = vpop.permute.xlu0 %1216
          %1220 = vset.pattern.permute.xlu0 0
          %1221 = vperm.xlu0 %1220, %v1079
          %v1222 = vpop.permute.xlu0 %1221
          %v1224 = vadd.f32 %v1120, %v1187
          %v1225 = vadd.f32 %v1121, %v1187
          %v1226 = vadd.f32 %v1122, %v1187
          %v1227 = vadd.f32 %v1123, %v1187
          %v1228 = vadd.f32 %v1124, %v1187
          %v1229 = vadd.f32 %v1125, %v1187
          %v1230 = vadd.f32 %v1126, %v1187
          %v1231 = vadd.f32 %v1127, %v1187
          %v1232 = vadd.f32 %v1128, %v1192
          %v1233 = vadd.f32 %v1129, %v1192
          %v1234 = vadd.f32 %v1130, %v1192
          %v1235 = vadd.f32 %v1131, %v1192
          %v1236 = vadd.f32 %v1132, %v1192
          %v1237 = vadd.f32 %v1133, %v1192
          %v1238 = vadd.f32 %v1134, %v1192
          %v1239 = vadd.f32 %v1135, %v1192
          %v1240 = vadd.f32 %v1136, %v1197
          %v1241 = vadd.f32 %v1137, %v1197
          %v1242 = vadd.f32 %v1138, %v1197
          %v1243 = vadd.f32 %v1139, %v1197
          %v1244 = vadd.f32 %v1140, %v1197
          %v1245 = vadd.f32 %v1141, %v1197
          %v1246 = vadd.f32 %v1142, %v1197
          %v1247 = vadd.f32 %v1143, %v1197
          %v1248 = vadd.f32 %v1144, %v1202
          %v1249 = vadd.f32 %v1145, %v1202
          %v1250 = vadd.f32 %v1146, %v1202
          %v1251 = vadd.f32 %v1147, %v1202
          %v1252 = vadd.f32 %v1148, %v1202
          %v1253 = vadd.f32 %v1149, %v1202
          %v1254 = vadd.f32 %v1150, %v1202
          %v1255 = vadd.f32 %v1151, %v1202
          %v1256 = vadd.f32 %v1152, %v1207
          %v1257 = vadd.f32 %v1153, %v1207
          %v1258 = vadd.f32 %v1154, %v1207
          %v1259 = vadd.f32 %v1155, %v1207
          %v1260 = vadd.f32 %v1156, %v1207
          %v1261 = vadd.f32 %v1157, %v1207
          %v1262 = vadd.f32 %v1158, %v1207
          %v1263 = vadd.f32 %v1159, %v1207
          %v1264 = vadd.f32 %v1160, %v1212
          %v1265 = vadd.f32 %v1161, %v1212
          %v1266 = vadd.f32 %v1162, %v1212
          %v1267 = vadd.f32 %v1163, %v1212
          %v1268 = vadd.f32 %v1164, %v1212
          %v1269 = vadd.f32 %v1165, %v1212
          %v1270 = vadd.f32 %v1166, %v1212
          %v1271 = vadd.f32 %v1167, %v1212
          %v1272 = vadd.f32 %v1168, %v1217
          %v1273 = vadd.f32 %v1169, %v1217
          %v1274 = vadd.f32 %v1170, %v1217
          %v1275 = vadd.f32 %v1171, %v1217
          %v1276 = vadd.f32 %v1172, %v1217
          %v1277 = vadd.f32 %v1173, %v1217
          %v1278 = vadd.f32 %v1174, %v1217
          %v1279 = vadd.f32 %v1175, %v1217
          %v1280 = vadd.f32 %v1176, %v1222
          %v1281 = vadd.f32 %v1177, %v1222
          %v1282 = vadd.f32 %v1178, %v1222
          %v1283 = vadd.f32 %v1179, %v1222
          %v1284 = vadd.f32 %v1180, %v1222
          %v1285 = vadd.f32 %v1181, %v1222
          %v1286 = vadd.f32 %v1182, %v1222
          %v1287 = vadd.f32 %v1183, %v1222
          %v1288 = vmax.f32 %v1224, %v1226
          %v1289 = vmax.f32 %v1225, %v1227
          %v1290 = vmax.f32 %v1232, %v1234
          %v1291 = vmax.f32 %v1233, %v1235
          %v1292 = vmax.f32 %v1240, %v1242
          %v1293 = vmax.f32 %v1241, %v1243
          %v1294 = vmax.f32 %v1248, %v1250
          %v1295 = vmax.f32 %v1249, %v1251
          %v1296 = vmax.f32 %v1256, %v1258
          %v1297 = vmax.f32 %v1257, %v1259
          %v1298 = vmax.f32 %v1264, %v1266
          %v1299 = vmax.f32 %v1265, %v1267
          %v1300 = vmax.f32 %v1272, %v1274
          %v1301 = vmax.f32 %v1273, %v1275
          %v1302 = vmax.f32 %v1280, %v1282
          %v1303 = vmax.f32 %v1281, %v1283
          %v1304 = vmax.f32 %v1288, %v1228
          %v1305 = vmax.f32 %v1289, %v1229
          %v1306 = vmax.f32 %v1290, %v1236
          %v1307 = vmax.f32 %v1291, %v1237
          %v1308 = vmax.f32 %v1292, %v1244
          %v1309 = vmax.f32 %v1293, %v1245
          %v1310 = vmax.f32 %v1294, %v1252
          %v1311 = vmax.f32 %v1295, %v1253
          %v1312 = vmax.f32 %v1296, %v1260
          %v1313 = vmax.f32 %v1297, %v1261
          %v1314 = vmax.f32 %v1298, %v1268
          %v1315 = vmax.f32 %v1299, %v1269
          %v1316 = vmax.f32 %v1300, %v1276
          %v1317 = vmax.f32 %v1301, %v1277
          %v1318 = vmax.f32 %v1302, %v1284
          %v1319 = vmax.f32 %v1303, %v1285
          %v1320 = vmax.f32 %v1304, %v1230
          %v1321 = vmax.f32 %v1305, %v1231
          %v1322 = vmax.f32 %v1306, %v1238
          %v1323 = vmax.f32 %v1307, %v1239
          %v1324 = vmax.f32 %v1308, %v1246
          %v1325 = vmax.f32 %v1309, %v1247
          %v1326 = vmax.f32 %v1310, %v1254
          %v1327 = vmax.f32 %v1311, %v1255
          %v1328 = vmax.f32 %v1312, %v1262
          %v1329 = vmax.f32 %v1313, %v1263
          %v1330 = vmax.f32 %v1314, %v1270
          %v1331 = vmax.f32 %v1315, %v1271
          %v1332 = vmax.f32 %v1316, %v1278
          %v1333 = vmax.f32 %v1317, %v1279
          %v1334 = vmax.f32 %v1318, %v1286
          %v1335 = vmax.f32 %v1319, %v1287
          %v1336 = vmax.f32 %v1320, 0.0
          %v1337 = vmax.f32 %v1321, 0.0
          %v1338 = vmax.f32 %v1322, 0.0
          %v1339 = vmax.f32 %v1323, 0.0
          %v1340 = vmax.f32 %v1324, 0.0
          %v1341 = vmax.f32 %v1325, 0.0
          %v1342 = vmax.f32 %v1326, 0.0
          %v1343 = vmax.f32 %v1327, 0.0
          %v1344 = vmax.f32 %v1328, 0.0
          %v1345 = vmax.f32 %v1329, 0.0
          %v1346 = vmax.f32 %v1330, 0.0
          %v1347 = vmax.f32 %v1331, 0.0
          %v1348 = vmax.f32 %v1332, 0.0
          %v1349 = vmax.f32 %v1333, 0.0
          %v1350 = vmax.f32 %v1334, 0.0
          %v1351 = vmax.f32 %v1335, 0.0
          %v1352 = vpack.c.bf16 %v1338, %v1336
          %v1353 = vpack.c.bf16 %v1339, %v1337
          %v1354 = vpack.c.bf16 %v1342, %v1340
          %v1355 = vpack.c.bf16 %v1343, %v1341
          %v1356 = vpack.c.bf16 %v1346, %v1344
          %v1357 = vpack.c.bf16 %v1347, %v1345
          %v1358 = vpack.c.bf16 %v1350, %v1348
          %v1359 = vpack.c.bf16 %v1351, %v1349
          %v1368 = vunpack.c.l.b16 %v1352
          %v1369 = vunpack.c.l.b16 %v1353
          %v1370 = vunpack.c.h.b16 %v1352
          %v1371 = vunpack.c.h.b16 %v1353
          %v1372 = vunpack.c.l.b16 %v1354
          %v1373 = vunpack.c.l.b16 %v1355
          %v1374 = vunpack.c.h.b16 %v1354
          %v1375 = vunpack.c.h.b16 %v1355
          %v1376 = vunpack.c.l.b16 %v1356
          %v1377 = vunpack.c.l.b16 %v1357
          %v1378 = vunpack.c.h.b16 %v1356
          %v1379 = vunpack.c.h.b16 %v1357
          %v1380 = vunpack.c.l.b16 %v1358
          %v1381 = vunpack.c.l.b16 %v1359
          %v1382 = vunpack.c.h.b16 %v1358
          %v1383 = vunpack.c.h.b16 %v1359
          %v1384 = vpack.c.b16 %v1369, %v1368
          %v1385 = vpack.c.b16 %v1371, %v1370
          %v1386 = vpack.c.b16 %v1373, %v1372
          %v1387 = vpack.c.b16 %v1375, %v1374
          %v1388 = vpack.c.b16 %v1377, %v1376
          %v1389 = vpack.c.b16 %v1379, %v1378
          %v1390 = vpack.c.b16 %v1381, %v1380
          %v1391 = vpack.c.b16 %v1383, %v1382
          %1400 = vst [vmem:[%s255] sm:$0xff] %v1384
          %1401 = vst [vmem:[%s255 + $0x8] sm:$0xff] %v1385
          %1402 = vst [vmem:[%s255 + $0x10] sm:$0xff] %v1386
          %1403 = vst [vmem:[%s255 + $0x18] sm:$0xff] %v1387
          %1404 = vst [vmem:[%s255 + $0x20] sm:$0xff] %v1388
          %1405 = vst [vmem:[%s255 + $0x28] sm:$0xff] %v1389
          %1406 = vst [vmem:[%s255 + $0x30] sm:$0xff] %v1390
          %1407 = vst [vmem:[%s255 + $0x38] sm:$0xff] %v1391
        $region71: #{dann_forward.3} parent=54 // pred_fallthru
          _
        %s1408 = sand.u32 %s126, 1
        %s1409 = sand.u32 %s126, 1
        %s1410 = smul.addr %s1409, 64
        %s1411 = scalar_lea.vmem [#allocation5], %s1410
        // Predicated region
        $region72: #{dann_forward.3} parent=54 // pred_check
          %p1412 = pneg %p136
        $region73: #{dann_forward.3} parent=54 // pred_check_branch
          %1414 = sbr.rel (%p1412) target = $region75
        $region74: #{dann_forward.3} parent=54 // pred_region
          %s1415 = smul.u32 %s20, %s19
          %s1416 = smul.u32 2, %s1415
          %s1417 = smul.addr %s1416, 4
          %s1418 = scalar_lea.vmem %s4, %s1417
          // Predicated region
          $region76: #{dann_forward.3} parent=74 // pred_check
            _
          $region77: #{dann_forward.3} parent=74 // pred_check_branch
            %1420 = sbr.rel (0) target = $region79
          $region78: #{dann_forward.3} parent=74 // pred_region
            // Predicated region
            $region80: #{dann_forward.3} parent=78 // pred_check
              _
            $region81: #{dann_forward.3} parent=78 // pred_check_branch
              %1422 = sbr.rel (0) target = $region83
            $region82: #{dann_forward.3} parent=78 // pred_region
              // Predicated region
              $region95: #{dann_forward.3} parent=82 // pred_check
                _
              $region96: #{dann_forward.3} parent=82 // pred_check_branch
                %1452 = sbr.rel (0) target = $region98
              $region97: #{dann_forward.3} parent=82 // pred_region
                loop: start=0, step=1, limit=1
                $region99: #{dann_forward.3} parent=97 // loop_pre_header
                  _
                $region100: #{dann_forward.3} parent=97 // loop_header
                  %s1454 = sphi 0, %s1458
                  %p1455 = scmp.ge.s32.totalorder %s1454, 1
                  %s1459 = sphi %s1411, %s1411
                  %s1460 = sphi %s1418, %s1418
                $region101: #{dann_forward.3} parent=97 // loop_header_branch
                  %1457 = sbr.rel (%p1455) target = $region105
                $region102: #{dann_forward.3} parent=97 // loop_body
                  %v1461 = vld [vmem:[%s1459] sm:$0xff]
                  %1462 = vst [vmem:[%s1460] sm:$0xff] %v1461
                  %v1463 = vld [vmem:[%s1459 + $0x8] sm:$0xff]
                  %1464 = vst [vmem:[%s1460 + $0x10] sm:$0xff] %v1463
                  %v1465 = vld [vmem:[%s1459 + $0x10] sm:$0xff]
                  %1466 = vst [vmem:[%s1460 + $0x20] sm:$0xff] %v1465
                  %v1467 = vld [vmem:[%s1459 + $0x18] sm:$0xff]
                  %1468 = vst [vmem:[%s1460 + $0x30] sm:$0xff] %v1467
                  %v1469 = vld [vmem:[%s1459 + $0x20] sm:$0xff]
                  %1470 = vst [vmem:[%s1460 + $0x40] sm:$0xff] %v1469
                  %v1471 = vld [vmem:[%s1459 + $0x28] sm:$0xff]
                  %1472 = vst [vmem:[%s1460 + $0x50] sm:$0xff] %v1471
                  %v1473 = vld [vmem:[%s1459 + $0x30] sm:$0xff]
                  %1474 = vst [vmem:[%s1460 + $0x60] sm:$0xff] %v1473
                  %v1475 = vld [vmem:[%s1459 + $0x38] sm:$0xff]
                  %1476 = vst [vmem:[%s1460 + $0x70] sm:$0xff] %v1475
                $region103: #{dann_forward.3} parent=97 // loop_footer
                  %s1458 = sadd.s32 1, %s1454
                $region104: #{dann_forward.3} parent=97 // loop_footer_branch
                  %1453 = sbr.rel target = $region100
                $region105: #{dann_forward.3} parent=97 // loop_exit
                  _
              $region98: #{dann_forward.3} parent=82 // pred_fallthru
                _
              // Predicated region
              $region106: #{dann_forward.3} parent=82 // pred_check
                _
              $region107: #{dann_forward.3} parent=82 // pred_check_branch
                %1478 = sbr.rel target = $region109
              $region108: #{dann_forward.3} parent=82 // pred_region
                _
              $region109: #{dann_forward.3} parent=82 // pred_fallthru
                _
            $region83: #{dann_forward.3} parent=78 // pred_fallthru
              _
            // Predicated region
            $region84: #{dann_forward.3} parent=78 // pred_check
              _
            $region85: #{dann_forward.3} parent=78 // pred_check_branch
              %1424 = sbr.rel target = $region87
            $region86: #{dann_forward.3} parent=78 // pred_region
              %s1426 = ssub.s32 256, 1
              loop: start=0, step=1, limit=1
              $region88: #{dann_forward.3} parent=86 // loop_pre_header
                _
              $region89: #{dann_forward.3} parent=86 // loop_header
                %s1428 = sphi 0, %s1432
                %p1429 = scmp.ge.s32.totalorder %s1428, 1
                %s1433 = sphi %s1411, %s1411
                %s1434 = sphi %s1418, %s1418
              $region90: #{dann_forward.3} parent=86 // loop_header_branch
                %1431 = sbr.rel (%p1429) target = $region94
              $region91: #{dann_forward.3} parent=86 // loop_body
                %v1435 = vld [vmem:[%s1433] sm:%s1426]
                %1436 = vst [vmem:[%s1434] sm:%s1426] %v1435
                %v1437 = vld [vmem:[%s1433 + $0x8] sm:%s1426]
                %1438 = vst [vmem:[%s1434 + $0x10] sm:%s1426] %v1437
                %v1439 = vld [vmem:[%s1433 + $0x10] sm:%s1426]
                %1440 = vst [vmem:[%s1434 + $0x20] sm:%s1426] %v1439
                %v1441 = vld [vmem:[%s1433 + $0x18] sm:%s1426]
                %1442 = vst [vmem:[%s1434 + $0x30] sm:%s1426] %v1441
                %v1443 = vld [vmem:[%s1433 + $0x20] sm:%s1426]
                %1444 = vst [vmem:[%s1434 + $0x40] sm:%s1426] %v1443
                %v1445 = vld [vmem:[%s1433 + $0x28] sm:%s1426]
                %1446 = vst [vmem:[%s1434 + $0x50] sm:%s1426] %v1445
                %v1447 = vld [vmem:[%s1433 + $0x30] sm:%s1426]
                %1448 = vst [vmem:[%s1434 + $0x60] sm:%s1426] %v1447
                %v1449 = vld [vmem:[%s1433 + $0x38] sm:%s1426]
                %1450 = vst [vmem:[%s1434 + $0x70] sm:%s1426] %v1449
              $region92: #{dann_forward.3} parent=86 // loop_footer
                %s1432 = sadd.s32 1, %s1428
              $region93: #{dann_forward.3} parent=86 // loop_footer_branch
                %1427 = sbr.rel target = $region89
              $region94: #{dann_forward.3} parent=86 // loop_exit
                _
            $region87: #{dann_forward.3} parent=78 // pred_fallthru
              _
          $region79: #{dann_forward.3} parent=74 // pred_fallthru
            _
          %1479 = vnop
        $region75: #{dann_forward.3} parent=54 // pred_fallthru
          _
      $region55: #{dann_forward.3} parent=5 // pred_fallthru
        _
      %p1480 = scmp.le.s32.totalorder 2, %s10
      // Predicated region
      $region110: #{dann_forward.3} parent=5 // pred_check
        %p1481 = pneg %p1480
      $region111: #{dann_forward.3} parent=5 // pred_check_branch
        %1483 = sbr.rel (%p1481) target = $region113
      $region112: #{dann_forward.3} parent=5 // pred_region
        %s1484 = ssub.s32 %s10, 2
        // Predicated region
        $region114: #{dann_forward.3} parent=112 // pred_check
          %p1485 = pneg %p142
        $region115: #{dann_forward.3} parent=112 // pred_check_branch
          %1487 = sbr.rel (%p1485) target = $region117
        $region116: #{dann_forward.3} parent=112 // pred_region
          %s1488 = sand.u32 %s127, 1
          %s1489 = sand.u32 %s127, 1
          %s1490 = smul.addr %s1489, 64
          %s1491 = scalar_lea.vmem [#allocation5], %s1490
        $region117: #{dann_forward.3} parent=112 // pred_fallthru
          _
      $region113: #{dann_forward.3} parent=5 // pred_fallthru
        _
    $region6: #{dann_forward.3} parent=1 // loop_footer
      %s14 = sadd.s32 1, %s10
    $region7: #{dann_forward.3} parent=1 // loop_footer_branch
      %9 = sbr.rel target = $region3
    $region8: #{dann_forward.3} parent=1 // loop_exit
      _

// kernel: dann_forward.4
$region0: #{dann_forward.4}
  #allocation0 [shape = 'u32[]', space=smem, size = 0x4, offset = 0x4, fixed_abs, tag = 'smem constant byte address 0x4 - core index']
  #allocation1 [shape = 'u32[144,128]{1,0:T(1,128)}', space=vmem, size = 0x12000, scoped, tag = 'internal scratch']
  #allocation2 [shape = 'f32[64,1]{1,0:T(8,128)}', space=vmem, size = 0x8000, scoped, tag = 'scratch operand']
  #allocation3 [shape = 'f32[64,1]{1,0:T(8,128)}', space=vmem, size = 0x8000, scoped, tag = 'scratch operand']
  %s0 = inlined_call_operand.vmem [shape: bf16[1600,512], index: 0, kind: input, shape index: {}]
  %s1 = inlined_call_operand.vmem [shape: bf16[64,1600], index: 1, kind: input, shape index: {}]
  %s2 = inlined_call_operand.vmem [shape: f32[64,1], index: 2, kind: input, shape index: {}]
  %s3 = inlined_call_operand.vmem [shape: f32[64,1], index: 3, kind: input, shape index: {}]
  %s4 = inlined_call_operand.vmem [shape: bf16[64,128], index: 4, kind: output, shape index: {}]
  %s5 = sld [smem:[#allocation0]]
  $region61: #{dann_forward.4} parent=0
    _
  %s7 = ssub.s32 1, %s5
  %s8 = scalar_select 0, %s7, %s5
  loop: start=0, step=1, limit=4
  $region2: #{dann_forward.4} parent=0 // loop_pre_header
    _
  $region3: #{dann_forward.4} parent=0 // loop_header
    %s10 = sphi 0, %s14
    %p11 = scmp.ge.s32.totalorder %s10, 4
    %s17 = sphi 0, %s29
    %s18 = sphi 0, %s25
    %s19 = sphi 0, %s17
    %s20 = sphi 0, %s18
    %s21 = sphi 0, %s19
    %s22 = sphi 0, %s20
    %s32 = sphi 0, %s34
    %s35 = sphi 0, %s32
    %s36 = sphi 0, %s35
    %s52 = sphi 0, %s36
    %s56 = sphi 0, %s56
    %s58 = sphi 0, %s56
    %s59 = sphi 0, %s58
    %s73 = sphi 0, %s59
    %s77 = sphi 0, %s77
    %s79 = sphi 0, %s77
    %s80 = sphi 0, %s79
    %s94 = sphi 0, %s80
    %s98 = sphi 0, %s98
    %s100 = sphi 0, %s98
    %s101 = sphi 0, %s100
    %s115 = sphi 0, %s101
    %s123 = sphi 0, %s125
    %s126 = sphi 0, %s123
    %s127 = sphi 0, %s126
    %s143 = sphi 0, %s127
  $region4: #{dann_forward.4} parent=0 // loop_header_branch
    %13 = sbr.rel (%p11) target = $region8
  $region5: #{dann_forward.4} parent=0 // loop_body
    %s15 = ssub.s32 %s10, 1
    %s16 = ssub.s32 %s10, 2
    %s23 = sadd.s32 1, %s18
    %p24 = scmp.ge.s32.totalorder %s23, 1
    %s25 = scalar_select %p24, 0, %s23
    %s26 = sadd.s32 1, %s17
    %s27 = scalar_select %p24, %s26, %s17
    %p28 = scmp.ge.s32.totalorder %s27, 2
    %s29 = scalar_select %p28, 0, %s27
    %s30 = ssub.s32 %s18, %s25
    %p31 = scmp.eq.s32.totalorder %s30, 0
    %s33 = sadd.s32 %s32, 1
    %s34 = scalar_select %p31, %s32, %s33
    %p37 = pneg %p31
    %p38 = scmp.eq.s32.totalorder %s10, 1
    %p39 = por %p37, %p38
    %p40 = scmp.ne.s32.totalorder %s32, %s35
    %p41 = scmp.eq.s32.totalorder %s10, 0
    %p42 = por %p40, %p41
    %p43 = scmp.ne.s32.totalorder %s32, %s35
    %p44 = scmp.eq.s32.totalorder %s15, 1
    %p45 = por %p43, %p44
    %p46 = scmp.ne.s32.totalorder %s35, %s36
    %p47 = scmp.eq.s32.totalorder %s15, 0
    %p48 = por %p46, %p47
    %p49 = scmp.ne.s32.totalorder %s35, %s36
    %p50 = scmp.eq.s32.totalorder %s16, 1
    %p51 = por %p49, %p50
    %p53 = scmp.ne.s32.totalorder %s36, %s52
    %p54 = scmp.eq.s32.totalorder %s16, 0
    %p55 = por %p53, %p54
    %s57 = sadd.s32 %s56, 1
    %p60 = scmp.eq.s32.totalorder %s10, 1
    %p61 = scmp.ne.s32.totalorder %s56, %s58
    %p62 = scmp.eq.s32.totalorder %s10, 0
    %p63 = por %p61, %p62
    %p64 = scmp.ne.s32.totalorder %s56, %s58
    %p65 = scmp.eq.s32.totalorder %s15, 1
    %p66 = por %p64, %p65
    %p67 = scmp.ne.s32.totalorder %s58, %s59
    %p68 = scmp.eq.s32.totalorder %s15, 0
    %p69 = por %p67, %p68
    %p70 = scmp.ne.s32.totalorder %s58, %s59
    %p71 = scmp.eq.s32.totalorder %s16, 1
    %p72 = por %p70, %p71
    %p74 = scmp.ne.s32.totalorder %s59, %s73
    %p75 = scmp.eq.s32.totalorder %s16, 0
    %p76 = por %p74, %p75
    %s78 = sadd.s32 %s77, 1
    %p81 = scmp.eq.s32.totalorder %s10, 1
    %p82 = scmp.ne.s32.totalorder %s77, %s79
    %p83 = scmp.eq.s32.totalorder %s10, 0
    %p84 = por %p82, %p83
    %p85 = scmp.ne.s32.totalorder %s77, %s79
    %p86 = scmp.eq.s32.totalorder %s15, 1
    %p87 = por %p85, %p86
    %p88 = scmp.ne.s32.totalorder %s79, %s80
    %p89 = scmp.eq.s32.totalorder %s15, 0
    %p90 = por %p88, %p89
    %p91 = scmp.ne.s32.totalorder %s79, %s80
    %p92 = scmp.eq.s32.totalorder %s16, 1
    %p93 = por %p91, %p92
    %p95 = scmp.ne.s32.totalorder %s80, %s94
    %p96 = scmp.eq.s32.totalorder %s16, 0
    %p97 = por %p95, %p96
    %s99 = sadd.s32 %s98, 1
    %p102 = scmp.eq.s32.totalorder %s10, 1
    %p103 = scmp.ne.s32.totalorder %s98, %s100
    %p104 = scmp.eq.s32.totalorder %s10, 0
    %p105 = por %p103, %p104
    %p106 = scmp.ne.s32.totalorder %s98, %s100
    %p107 = scmp.eq.s32.totalorder %s15, 1
    %p108 = por %p106, %p107
    %p109 = scmp.ne.s32.totalorder %s100, %s101
    %p110 = scmp.eq.s32.totalorder %s15, 0
    %p111 = por %p109, %p110
    %p112 = scmp.ne.s32.totalorder %s100, %s101
    %p113 = scmp.eq.s32.totalorder %s16, 1
    %p114 = por %p112, %p113
    %p116 = scmp.ne.s32.totalorder %s101, %s115
    %p117 = scmp.eq.s32.totalorder %s16, 0
    %p118 = por %p116, %p117
    %s119 = smul.u32 %s18, %s17
    %s120 = smul.u32 %s25, %s29
    %s121 = ssub.s32 %s119, %s120
    %p122 = scmp.eq.s32.totalorder %s121, 0
    %s124 = sadd.s32 %s123, 1
    %s125 = scalar_select %p122, %s123, %s124
    %p128 = pneg %p122
    %p129 = scmp.eq.s32.totalorder %s10, 1
    %p130 = por %p128, %p129
    %p131 = scmp.ne.s32.totalorder %s123, %s126
    %p132 = scmp.eq.s32.totalorder %s10, 0
    %p133 = por %p131, %p132
    %p134 = scmp.ne.s32.totalorder %s123, %s126
    %p135 = scmp.eq.s32.totalorder %s15, 1
    %p136 = por %p134, %p135
    %p137 = scmp.ne.s32.totalorder %s126, %s127
    %p138 = scmp.eq.s32.totalorder %s15, 0
    %p139 = por %p137, %p138
    %p140 = scmp.ne.s32.totalorder %s126, %s127
    %p141 = scmp.eq.s32.totalorder %s16, 1
    %p142 = por %p140, %p141
    %p144 = scmp.ne.s32.totalorder %s127, %s143
    %p145 = scmp.eq.s32.totalorder %s16, 0
    %p146 = por %p144, %p145
    %p147 = scmp.le.s32.totalorder 1, %s10
    %p148 = scmp.lt.s32.totalorder %s10, 3
    %p149 = pnand %p147, %p148
    %p150 = pneg %p149
    // Predicated region
    $region9: #{dann_forward.4} parent=5 // pred_check
      _
    $region10: #{dann_forward.4} parent=5 // pred_check_branch
      %152 = sbr.rel (%p149) target = $region12
    $region11: #{dann_forward.4} parent=5 // pred_region
      %s153 = ssub.s32 %s10, 1
      // Predicated region
      $region13: #{dann_forward.4} parent=11 // pred_check
        %p154 = pneg %p48
      $region14: #{dann_forward.4} parent=11 // pred_check_branch
        %156 = sbr.rel (%p154) target = $region16
      $region15: #{dann_forward.4} parent=11 // pred_region
        %s157 = smul.u32 4, %s20
        %p158 = scmp.lt.s32.totalorder %s157, 3
        %s159 = scalar_select %p158, %s157, 3
        %s160 = smul.addr %s159, 4
        %s161 = scalar_lea.vmem %s0, %s160
        %s162 = smul.u32 4, %s20
      $region16: #{dann_forward.4} parent=11 // pred_fallthru
        _
      // Predicated region
      $region17: #{dann_forward.4} parent=11 // pred_check
        %p163 = pneg %p69
      $region18: #{dann_forward.4} parent=11 // pred_check_branch
        %165 = sbr.rel (%p163) target = $region20
      $region19: #{dann_forward.4} parent=11 // pred_region
        _
      $region20: #{dann_forward.4} parent=11 // pred_fallthru
        _
      // Predicated region
      $region21: #{dann_forward.4} parent=11 // pred_check
        %p166 = pneg %p90
      $region22: #{dann_forward.4} parent=11 // pred_check_branch
        %168 = sbr.rel (%p166) target = $region24
      $region23: #{dann_forward.4} parent=11 // pred_region
        _
      $region24: #{dann_forward.4} parent=11 // pred_fallthru
        _
      // Predicated region
      $region25: #{dann_forward.4} parent=11 // pred_check
        %p169 = pneg %p111
      $region26: #{dann_forward.4} parent=11 // pred_check_branch
        %171 = sbr.rel (%p169) target = $region28
      $region27: #{dann_forward.4} parent=11 // pred_region
        _
      $region28: #{dann_forward.4} parent=11 // pred_fallthru
        _
    $region12: #{dann_forward.4} parent=5 // pred_fallthru
      _
    %p172 = scmp.lt.s32.totalorder %s10, 2
    // Predicated region
    $region29: #{dann_forward.4} parent=5 // pred_check
      %p173 = pneg %p172
    $region30: #{dann_forward.4} parent=5 // pred_check_branch
      %175 = sbr.rel (%p173) target = $region32
    $region31: #{dann_forward.4} parent=5 // pred_region
      _
    $region32: #{dann_forward.4} parent=5 // pred_fallthru
      _
    %p176 = scmp.le.s32.totalorder 1, %s10
    %p177 = scmp.lt.s32.totalorder %s10, 3
    %p178 = pnand %p176, %p177
    %p179 = pneg %p178
    // Predicated region
    $region33: #{dann_forward.4} parent=5 // pred_check
      _
    $region34: #{dann_forward.4} parent=5 // pred_check_branch
      %181 = sbr.rel (%p178) target = $region36
    $region35: #{dann_forward.4} parent=5 // pred_region
      %s182 = ssub.s32 %s10, 1
      %s183 = smul.u32 4, %s20
      %p184 = scmp.lt.s32.totalorder %s183, 3
      %s185 = scalar_select %p184, %s183, 3
      %s186 = smul.addr %s185, 4
      %s187 = scalar_lea.vmem %s0, %s186
      %p188 = pneg %p48
      %p189 = pneg %p45
      %p190 = pneg %p69
      %p191 = pneg %p66
      %p192 = pneg %p90
      %p193 = pneg %p87
      %p194 = pneg %p111
      %p195 = pneg %p108
      %p196 = pneg %p139
      %p197 = pneg %p136
      %s198 = smul.u32 %s20, %s19
      %p199 = scmp.lt.s32.totalorder %s198, 0
      %s200 = scalar_select %p199, %s198, 0
      %s201 = smul.addr %s200, 4
      %s202 = scalar_lea.vmem %s4, %s201
      %s203 = smul.u32 4, %s20
      %p204 = scmp.lt.s32.totalorder %s203, 3
      %s205 = scalar_select %p204, %s203, 3
      %s206 = smul.addr %s205, 4
      %s207 = scalar_lea.vmem %s0, %s206
      %s208 = smul.u32 4, %s20
      %s209 = smul.u32 %s20, %s19
      %p210 = scmp.lt.s32.totalorder %s209, 0
      %s211 = scalar_select %p210, %s209, 0
      %s212 = smul.addr %s211, 4
      %s213 = scalar_lea.vmem %s4, %s212
      %s214 = smul.u32 %s20, %s19
      %v216 = vld [vmem:[%s1] sm:$0xff]
      %v217 = vld [vmem:[%s1 + $0x8] sm:$0xff]
      %v218 = vld [vmem:[%s1 + $0x10] sm:$0xff]
      %v219 = vld [vmem:[%s1 + $0x18] sm:$0xff]
      %v220 = vld [vmem:[%s1 + $0x20] sm:$0xff]
      %v221 = vld [vmem:[%s1 + $0x28] sm:$0xff]
      %v222 = vld [vmem:[%s1 + $0x30] sm:$0xf]
      %v223 = vld [vmem:[%s1 + $0x34] sm:$0xff]
      %v224 = vld [vmem:[%s1 + $0x3c] sm:$0xff]
      %v225 = vld [vmem:[%s1 + $0x44] sm:$0xff]
      %v226 = vld [vmem:[%s1 + $0x4c] sm:$0xff]
      %v227 = vld [vmem:[%s1 + $0x54] sm:$0xff]
      %v228 = vld [vmem:[%s1 + $0x5c] sm:$0xff]
      %v229 = vld [vmem:[%s1 + $0x64] sm:$0xf]
      %v230 = vld [vmem:[%s1 + $0x68] sm:$0xff]
      %v231 = vld [vmem:[%s1 + $0x70] sm:$0xff]
      %v232 = vld [vmem:[%s1 + $0x78] sm:$0xff]
      %v233 = vld [vmem:[%s1 + $0x80] sm:$0xff]
      %v234 = vld [vmem:[%s1 + $0x88] sm:$0xff]
      %v235 = vld [vmem:[%s1 + $0x90] sm:$0xff]
      %v236 = vld [vmem:[%s1 + $0x98] sm:$0xf]
      %v237 = vld [vmem:[%s1 + $0x9c] sm:$0xff]
      %v238 = vld [vmem:[%s1 + $0xa4] sm:$0xff]
      %v239 = vld [vmem:[%s1 + $0xac] sm:$0xff]
      %v240 = vld [vmem:[%s1 + $0xb4] sm:$0xff]
      %v241 = vld [vmem:[%s1 + $0xbc] sm:$0xff]
      %v242 = vld [vmem:[%s1 + $0xc4] sm:$0xff]
      %v243 = vld [vmem:[%s1 + $0xcc] sm:$0xf]
      %v244 = vld [vmem:[%s1 + $0xd0] sm:$0xff]
      %v245 = vld [vmem:[%s1 + $0xd8] sm:$0xff]
      %v246 = vld [vmem:[%s1 + $0xe0] sm:$0xff]
      %v247 = vld [vmem:[%s1 + $0xe8] sm:$0xff]
      %v248 = vld [vmem:[%s1 + $0xf0] sm:$0xff]
      %v249 = vld [vmem:[%s1 + $0xf8] sm:$0xff]
      %v250 = vld [vmem:[%s1 + $0x100] sm:$0xf]
      %v251 = vld [vmem:[%s1 + $0x104] sm:$0xff]
      %v252 = vld [vmem:[%s1 + $0x10c] sm:$0xff]
      %v253 = vld [vmem:[%s1 + $0x114] sm:$0xff]
      %v254 = vld [vmem:[%s1 + $0x11c] sm:$0xff]
      %v255 = vld [vmem:[%s1 + $0x124] sm:$0xff]
      %v256 = vld [vmem:[%s1 + $0x12c] sm:$0xff]
      %v257 = vld [vmem:[%s1 + $0x134] sm:$0xf]
      %v258 = vld [vmem:[%s1 + $0x138] sm:$0xff]
      %v259 = vld [vmem:[%s1 + $0x140] sm:$0xff]
      %v260 = vld [vmem:[%s1 + $0x148] sm:$0xff]
      %v261 = vld [vmem:[%s1 + $0x150] sm:$0xff]
      %v262 = vld [vmem:[%s1 + $0x158] sm:$0xff]
      %v263 = vld [vmem:[%s1 + $0x160] sm:$0xff]
      %v264 = vld [vmem:[%s1 + $0x168] sm:$0xf]
      %v265 = vld [vmem:[%s1 + $0x16c] sm:$0xff]
      %v266 = vld [vmem:[%s1 + $0x174] sm:$0xff]
      %v267 = vld [vmem:[%s1 + $0x17c] sm:$0xff]
      %v268 = vld [vmem:[%s1 + $0x184] sm:$0xff]
      %v269 = vld [vmem:[%s1 + $0x18c] sm:$0xff]
      %v270 = vld [vmem:[%s1 + $0x194] sm:$0xff]
      %v271 = vld [vmem:[%s1 + $0x19c] sm:$0xf]
      %v272 = vld [vmem:[%s207] sm:$0xff]
      %v273 = vld [vmem:[%s207 + $0x8] sm:$0xff]
      %v274 = vld [vmem:[%s207 + $0x10] sm:$0xff]
      %v275 = vld [vmem:[%s207 + $0x18] sm:$0xff]
      %v276 = vld [vmem:[%s207 + $0x20] sm:$0xff]
      %v277 = vld [vmem:[%s207 + $0x28] sm:$0xff]
      %v278 = vld [vmem:[%s207 + $0x30] sm:$0xff]
      %v279 = vld [vmem:[%s207 + $0x38] sm:$0xff]
      %v280 = vld [vmem:[%s207 + $0x40] sm:$0xff]
      %v281 = vld [vmem:[%s207 + $0x48] sm:$0xff]
      %v282 = vld [vmem:[%s207 + $0x50] sm:$0xff]
      %v283 = vld [vmem:[%s207 + $0x58] sm:$0xff]
      %v284 = vld [vmem:[%s207 + $0x60] sm:$0xff]
      %v285 = vld [vmem:[%s207 + $0x68] sm:$0xff]
      %v286 = vld [vmem:[%s207 + $0x70] sm:$0xff]
      %v287 = vld [vmem:[%s207 + $0x78] sm:$0xff]
      %v288 = vld [vmem:[%s207 + $0x80] sm:$0xff]
      %v289 = vld [vmem:[%s207 + $0x88] sm:$0xff]
      %v290 = vld [vmem:[%s207 + $0x90] sm:$0xff]
      %v291 = vld [vmem:[%s207 + $0x98] sm:$0xff]
      %v292 = vld [vmem:[%s207 + $0xa0] sm:$0xff]
      %v293 = vld [vmem:[%s207 + $0xa8] sm:$0xff]
      %v294 = vld [vmem:[%s207 + $0xb0] sm:$0xff]
      %v295 = vld [vmem:[%s207 + $0xb8] sm:$0xff]
      %v296 = vld [vmem:[%s207 + $0xc0] sm:$0xff]
      %v297 = vld [vmem:[%s207 + $0xc8] sm:$0xff]
      %v298 = vld [vmem:[%s207 + $0xd0] sm:$0xff]
      %v299 = vld [vmem:[%s207 + $0xd8] sm:$0xff]
      %v300 = vld [vmem:[%s207 + $0xe0] sm:$0xff]
      %v301 = vld [vmem:[%s207 + $0xe8] sm:$0xff]
      %v302 = vld [vmem:[%s207 + $0xf0] sm:$0xff]
      %v303 = vld [vmem:[%s207 + $0xf8] sm:$0xff]
      %v304 = vld [vmem:[%s207 + $0x100] sm:$0xff]
      %v305 = vld [vmem:[%s207 + $0x108] sm:$0xff]
      %v306 = vld [vmem:[%s207 + $0x110] sm:$0xff]
      %v307 = vld [vmem:[%s207 + $0x118] sm:$0xff]
      %v308 = vld [vmem:[%s207 + $0x120] sm:$0xff]
      %v309 = vld [vmem:[%s207 + $0x128] sm:$0xff]
      %v310 = vld [vmem:[%s207 + $0x130] sm:$0xff]
      %v311 = vld [vmem:[%s207 + $0x138] sm:$0xff]
      %v312 = vld [vmem:[%s207 + $0x140] sm:$0xff]
      %v313 = vld [vmem:[%s207 + $0x148] sm:$0xff]
      %v314 = vld [vmem:[%s207 + $0x150] sm:$0xff]
      %v315 = vld [vmem:[%s207 + $0x158] sm:$0xff]
      %v316 = vld [vmem:[%s207 + $0x160] sm:$0xff]
      %v317 = vld [vmem:[%s207 + $0x168] sm:$0xff]
      %v318 = vld [vmem:[%s207 + $0x170] sm:$0xff]
      %v319 = vld [vmem:[%s207 + $0x178] sm:$0xff]
      %v320 = vld [vmem:[%s207 + $0x180] sm:$0xff]
      %v321 = vld [vmem:[%s207 + $0x188] sm:$0xff]
      %v322 = vld [vmem:[%s207 + $0x190] sm:$0xff]
      %v323 = vld [vmem:[%s207 + $0x198] sm:$0xff]
      %v324 = vld [vmem:[%s207 + $0x1a0] sm:$0xff]
      %v325 = vld [vmem:[%s207 + $0x1a8] sm:$0xff]
      %v326 = vld [vmem:[%s207 + $0x1b0] sm:$0xff]
      %v327 = vld [vmem:[%s207 + $0x1b8] sm:$0xff]
      %v328 = vld [vmem:[%s207 + $0x1c0] sm:$0xff]
      %v329 = vld [vmem:[%s207 + $0x1c8] sm:$0xff]
      %v330 = vld [vmem:[%s207 + $0x1d0] sm:$0xff]
      %v331 = vld [vmem:[%s207 + $0x1d8] sm:$0xff]
      %v332 = vld [vmem:[%s207 + $0x1e0] sm:$0xff]
      %v333 = vld [vmem:[%s207 + $0x1e8] sm:$0xff]
      %v334 = vld [vmem:[%s207 + $0x1f0] sm:$0xff]
      %v335 = vld [vmem:[%s207 + $0x1f8] sm:$0xff]
      %v336 = vld [vmem:[%s207 + $0x200] sm:$0xff]
      %v337 = vld [vmem:[%s207 + $0x208] sm:$0xff]
      %v338 = vld [vmem:[%s207 + $0x210] sm:$0xff]
      %v339 = vld [vmem:[%s207 + $0x218] sm:$0xff]
      %v340 = vld [vmem:[%s207 + $0x220] sm:$0xff]
      %v341 = vld [vmem:[%s207 + $0x228] sm:$0xff]
      %v342 = vld [vmem:[%s207 + $0x230] sm:$0xff]
      %v343 = vld [vmem:[%s207 + $0x238] sm:$0xff]
      %v344 = vld [vmem:[%s207 + $0x240] sm:$0xff]
      %v345 = vld [vmem:[%s207 + $0x248] sm:$0xff]
      %v346 = vld [vmem:[%s207 + $0x250] sm:$0xff]
      %v347 = vld [vmem:[%s207 + $0x258] sm:$0xff]
      %v348 = vld [vmem:[%s207 + $0x260] sm:$0xff]
      %v349 = vld [vmem:[%s207 + $0x268] sm:$0xff]
      %v350 = vld [vmem:[%s207 + $0x270] sm:$0xff]
      %v351 = vld [vmem:[%s207 + $0x278] sm:$0xff]
      %v352 = vld [vmem:[%s207 + $0x280] sm:$0xff]
      %v353 = vld [vmem:[%s207 + $0x288] sm:$0xff]
      %v354 = vld [vmem:[%s207 + $0x290] sm:$0xff]
      %v355 = vld [vmem:[%s207 + $0x298] sm:$0xff]
      %v356 = vld [vmem:[%s207 + $0x2a0] sm:$0xff]
      %v357 = vld [vmem:[%s207 + $0x2a8] sm:$0xff]
      %v358 = vld [vmem:[%s207 + $0x2b0] sm:$0xff]
      %v359 = vld [vmem:[%s207 + $0x2b8] sm:$0xff]
      %v360 = vld [vmem:[%s207 + $0x2c0] sm:$0xff]
      %v361 = vld [vmem:[%s207 + $0x2c8] sm:$0xff]
      %v362 = vld [vmem:[%s207 + $0x2d0] sm:$0xff]
      %v363 = vld [vmem:[%s207 + $0x2d8] sm:$0xff]
      %v364 = vld [vmem:[%s207 + $0x2e0] sm:$0xff]
      %v365 = vld [vmem:[%s207 + $0x2e8] sm:$0xff]
      %v366 = vld [vmem:[%s207 + $0x2f0] sm:$0xff]
      %v367 = vld [vmem:[%s207 + $0x2f8] sm:$0xff]
      %v368 = vld [vmem:[%s207 + $0x300] sm:$0xff]
      %v369 = vld [vmem:[%s207 + $0x308] sm:$0xff]
      %v370 = vld [vmem:[%s207 + $0x310] sm:$0xff]
      %v371 = vld [vmem:[%s207 + $0x318] sm:$0xff]
      %v372 = vld [vmem:[%s207 + $0x320] sm:$0xff]
      %v373 = vld [vmem:[%s207 + $0x328] sm:$0xff]
      %v374 = vld [vmem:[%s207 + $0x330] sm:$0xff]
      %v375 = vld [vmem:[%s207 + $0x338] sm:$0xff]
      %v376 = vld [vmem:[%s207 + $0x340] sm:$0xff]
      %v377 = vld [vmem:[%s207 + $0x348] sm:$0xff]
      %v378 = vld [vmem:[%s207 + $0x350] sm:$0xff]
      %v379 = vld [vmem:[%s207 + $0x358] sm:$0xff]
      %v380 = vld [vmem:[%s207 + $0x360] sm:$0xff]
      %v381 = vld [vmem:[%s207 + $0x368] sm:$0xff]
      %v382 = vld [vmem:[%s207 + $0x370] sm:$0xff]
      %v383 = vld [vmem:[%s207 + $0x378] sm:$0xff]
      %v384 = vld [vmem:[%s207 + $0x380] sm:$0xff]
      %v385 = vld [vmem:[%s207 + $0x388] sm:$0xff]
      %v386 = vld [vmem:[%s207 + $0x390] sm:$0xff]
      %v387 = vld [vmem:[%s207 + $0x398] sm:$0xff]
      %v388 = vld [vmem:[%s207 + $0x3a0] sm:$0xff]
      %v389 = vld [vmem:[%s207 + $0x3a8] sm:$0xff]
      %v390 = vld [vmem:[%s207 + $0x3b0] sm:$0xff]
      %v391 = vld [vmem:[%s207 + $0x3b8] sm:$0xff]
      %v392 = vld [vmem:[%s207 + $0x3c0] sm:$0xff]
      %v393 = vld [vmem:[%s207 + $0x3c8] sm:$0xff]
      %v394 = vld [vmem:[%s207 + $0x3d0] sm:$0xff]
      %v395 = vld [vmem:[%s207 + $0x3d8] sm:$0xff]
      %v396 = vld [vmem:[%s207 + $0x3e0] sm:$0xff]
      %v397 = vld [vmem:[%s207 + $0x3e8] sm:$0xff]
      %v398 = vld [vmem:[%s207 + $0x3f0] sm:$0xff]
      %v399 = vld [vmem:[%s207 + $0x3f8] sm:$0xff]
      %v400 = vld [vmem:[%s207 + $0x400] sm:$0xff]
      %v401 = vld [vmem:[%s207 + $0x408] sm:$0xff]
      %v402 = vld [vmem:[%s207 + $0x410] sm:$0xff]
      %v403 = vld [vmem:[%s207 + $0x418] sm:$0xff]
      %v404 = vld [vmem:[%s207 + $0x420] sm:$0xff]
      %v405 = vld [vmem:[%s207 + $0x428] sm:$0xff]
      %v406 = vld [vmem:[%s207 + $0x430] sm:$0xff]
      %v407 = vld [vmem:[%s207 + $0x438] sm:$0xff]
      %v408 = vld [vmem:[%s207 + $0x440] sm:$0xff]
      %v409 = vld [vmem:[%s207 + $0x448] sm:$0xff]
      %v410 = vld [vmem:[%s207 + $0x450] sm:$0xff]
      %v411 = vld [vmem:[%s207 + $0x458] sm:$0xff]
      %v412 = vld [vmem:[%s207 + $0x460] sm:$0xff]
      %v413 = vld [vmem:[%s207 + $0x468] sm:$0xff]
      %v414 = vld [vmem:[%s207 + $0x470] sm:$0xff]
      %v415 = vld [vmem:[%s207 + $0x478] sm:$0xff]
      %v416 = vld [vmem:[%s207 + $0x480] sm:$0xff]
      %v417 = vld [vmem:[%s207 + $0x488] sm:$0xff]
      %v418 = vld [vmem:[%s207 + $0x490] sm:$0xff]
      %v419 = vld [vmem:[%s207 + $0x498] sm:$0xff]
      %v420 = vld [vmem:[%s207 + $0x4a0] sm:$0xff]
      %v421 = vld [vmem:[%s207 + $0x4a8] sm:$0xff]
      %v422 = vld [vmem:[%s207 + $0x4b0] sm:$0xff]
      %v423 = vld [vmem:[%s207 + $0x4b8] sm:$0xff]
      %v424 = vld [vmem:[%s207 + $0x4c0] sm:$0xff]
      %v425 = vld [vmem:[%s207 + $0x4c8] sm:$0xff]
      %v426 = vld [vmem:[%s207 + $0x4d0] sm:$0xff]
      %v427 = vld [vmem:[%s207 + $0x4d8] sm:$0xff]
      %v428 = vld [vmem:[%s207 + $0x4e0] sm:$0xff]
      %v429 = vld [vmem:[%s207 + $0x4e8] sm:$0xff]
      %v430 = vld [vmem:[%s207 + $0x4f0] sm:$0xff]
      %v431 = vld [vmem:[%s207 + $0x4f8] sm:$0xff]
      %v432 = vld [vmem:[%s207 + $0x500] sm:$0xff]
      %v433 = vld [vmem:[%s207 + $0x508] sm:$0xff]
      %v434 = vld [vmem:[%s207 + $0x510] sm:$0xff]
      %v435 = vld [vmem:[%s207 + $0x518] sm:$0xff]
      %v436 = vld [vmem:[%s207 + $0x520] sm:$0xff]
      %v437 = vld [vmem:[%s207 + $0x528] sm:$0xff]
      %v438 = vld [vmem:[%s207 + $0x530] sm:$0xff]
      %v439 = vld [vmem:[%s207 + $0x538] sm:$0xff]
      %v440 = vld [vmem:[%s207 + $0x540] sm:$0xff]
      %v441 = vld [vmem:[%s207 + $0x548] sm:$0xff]
      %v442 = vld [vmem:[%s207 + $0x550] sm:$0xff]
      %v443 = vld [vmem:[%s207 + $0x558] sm:$0xff]
      %v444 = vld [vmem:[%s207 + $0x560] sm:$0xff]
      %v445 = vld [vmem:[%s207 + $0x568] sm:$0xff]
      %v446 = vld [vmem:[%s207 + $0x570] sm:$0xff]
      %v447 = vld [vmem:[%s207 + $0x578] sm:$0xff]
      %v448 = vld [vmem:[%s207 + $0x580] sm:$0xff]
      %v449 = vld [vmem:[%s207 + $0x588] sm:$0xff]
      %v450 = vld [vmem:[%s207 + $0x590] sm:$0xff]
      %v451 = vld [vmem:[%s207 + $0x598] sm:$0xff]
      %v452 = vld [vmem:[%s207 + $0x5a0] sm:$0xff]
      %v453 = vld [vmem:[%s207 + $0x5a8] sm:$0xff]
      %v454 = vld [vmem:[%s207 + $0x5b0] sm:$0xff]
      %v455 = vld [vmem:[%s207 + $0x5b8] sm:$0xff]
      %v456 = vld [vmem:[%s207 + $0x5c0] sm:$0xff]
      %v457 = vld [vmem:[%s207 + $0x5c8] sm:$0xff]
      %v458 = vld [vmem:[%s207 + $0x5d0] sm:$0xff]
      %v459 = vld [vmem:[%s207 + $0x5d8] sm:$0xff]
      %v460 = vld [vmem:[%s207 + $0x5e0] sm:$0xff]
      %v461 = vld [vmem:[%s207 + $0x5e8] sm:$0xff]
      %v462 = vld [vmem:[%s207 + $0x5f0] sm:$0xff]
      %v463 = vld [vmem:[%s207 + $0x5f8] sm:$0xff]
      %v464 = vld [vmem:[%s207 + $0x600] sm:$0xff]
      %v465 = vld [vmem:[%s207 + $0x608] sm:$0xff]
      %v466 = vld [vmem:[%s207 + $0x610] sm:$0xff]
      %v467 = vld [vmem:[%s207 + $0x618] sm:$0xff]
      %v468 = vld [vmem:[%s207 + $0x620] sm:$0xff]
      %v469 = vld [vmem:[%s207 + $0x628] sm:$0xff]
      %v470 = vld [vmem:[%s207 + $0x630] sm:$0xff]
      %v471 = vld [vmem:[%s207 + $0x638] sm:$0xff]
      %v472 = vld [vmem:[%s207 + $0x640] sm:$0xff]
      %v473 = vld [vmem:[%s207 + $0x648] sm:$0xff]
      %v474 = vld [vmem:[%s207 + $0x650] sm:$0xff]
      %v475 = vld [vmem:[%s207 + $0x658] sm:$0xff]
      %v476 = vld [vmem:[%s207 + $0x660] sm:$0xff]
      %v477 = vld [vmem:[%s207 + $0x668] sm:$0xff]
      %v478 = vld [vmem:[%s207 + $0x670] sm:$0xff]
      %v479 = vld [vmem:[%s207 + $0x678] sm:$0xff]
      %v480 = vld [vmem:[%s207 + $0x680] sm:$0xff]
      %v481 = vld [vmem:[%s207 + $0x688] sm:$0xff]
      %v482 = vld [vmem:[%s207 + $0x690] sm:$0xff]
      %v483 = vld [vmem:[%s207 + $0x698] sm:$0xff]
      %v484 = vld [vmem:[%s207 + $0x6a0] sm:$0xff]
      %v485 = vld [vmem:[%s207 + $0x6a8] sm:$0xff]
      %v486 = vld [vmem:[%s207 + $0x6b0] sm:$0xff]
      %v487 = vld [vmem:[%s207 + $0x6b8] sm:$0xff]
      %v488 = vld [vmem:[%s207 + $0x6c0] sm:$0xff]
      %v489 = vld [vmem:[%s207 + $0x6c8] sm:$0xff]
      %v490 = vld [vmem:[%s207 + $0x6d0] sm:$0xff]
      %v491 = vld [vmem:[%s207 + $0x6d8] sm:$0xff]
      %v492 = vld [vmem:[%s207 + $0x6e0] sm:$0xff]
      %v493 = vld [vmem:[%s207 + $0x6e8] sm:$0xff]
      %v494 = vld [vmem:[%s207 + $0x6f0] sm:$0xff]
      %v495 = vld [vmem:[%s207 + $0x6f8] sm:$0xff]
      %v496 = vld [vmem:[%s207 + $0x700] sm:$0xff]
      %v497 = vld [vmem:[%s207 + $0x708] sm:$0xff]
      %v498 = vld [vmem:[%s207 + $0x710] sm:$0xff]
      %v499 = vld [vmem:[%s207 + $0x718] sm:$0xff]
      %v500 = vld [vmem:[%s207 + $0x720] sm:$0xff]
      %v501 = vld [vmem:[%s207 + $0x728] sm:$0xff]
      %v502 = vld [vmem:[%s207 + $0x730] sm:$0xff]
      %v503 = vld [vmem:[%s207 + $0x738] sm:$0xff]
      %v504 = vld [vmem:[%s207 + $0x740] sm:$0xff]
      %v505 = vld [vmem:[%s207 + $0x748] sm:$0xff]
      %v506 = vld [vmem:[%s207 + $0x750] sm:$0xff]
      %v507 = vld [vmem:[%s207 + $0x758] sm:$0xff]
      %v508 = vld [vmem:[%s207 + $0x760] sm:$0xff]
      %v509 = vld [vmem:[%s207 + $0x768] sm:$0xff]
      %v510 = vld [vmem:[%s207 + $0x770] sm:$0xff]
      %v511 = vld [vmem:[%s207 + $0x778] sm:$0xff]
      %v512 = vld [vmem:[%s207 + $0x780] sm:$0xff]
      %v513 = vld [vmem:[%s207 + $0x788] sm:$0xff]
      %v514 = vld [vmem:[%s207 + $0x790] sm:$0xff]
      %v515 = vld [vmem:[%s207 + $0x798] sm:$0xff]
      %v516 = vld [vmem:[%s207 + $0x7a0] sm:$0xff]
      %v517 = vld [vmem:[%s207 + $0x7a8] sm:$0xff]
      %v518 = vld [vmem:[%s207 + $0x7b0] sm:$0xff]
      %v519 = vld [vmem:[%s207 + $0x7b8] sm:$0xff]
      %v520 = vld [vmem:[%s207 + $0x7c0] sm:$0xff]
      %v521 = vld [vmem:[%s207 + $0x7c8] sm:$0xff]
      %v522 = vld [vmem:[%s207 + $0x7d0] sm:$0xff]
      %v523 = vld [vmem:[%s207 + $0x7d8] sm:$0xff]
      %v524 = vld [vmem:[%s207 + $0x7e0] sm:$0xff]
      %v525 = vld [vmem:[%s207 + $0x7e8] sm:$0xff]
      %v526 = vld [vmem:[%s207 + $0x7f0] sm:$0xff]
      %v527 = vld [vmem:[%s207 + $0x7f8] sm:$0xff]
      %v528 = vld [vmem:[%s207 + $0x800] sm:$0xff]
      %v529 = vld [vmem:[%s207 + $0x808] sm:$0xff]
      %v530 = vld [vmem:[%s207 + $0x810] sm:$0xff]
      %v531 = vld [vmem:[%s207 + $0x818] sm:$0xff]
      %v532 = vld [vmem:[%s207 + $0x820] sm:$0xff]
      %v533 = vld [vmem:[%s207 + $0x828] sm:$0xff]
      %v534 = vld [vmem:[%s207 + $0x830] sm:$0xff]
      %v535 = vld [vmem:[%s207 + $0x838] sm:$0xff]
      %v536 = vld [vmem:[%s207 + $0x840] sm:$0xff]
      %v537 = vld [vmem:[%s207 + $0x848] sm:$0xff]
      %v538 = vld [vmem:[%s207 + $0x850] sm:$0xff]
      %v539 = vld [vmem:[%s207 + $0x858] sm:$0xff]
      %v540 = vld [vmem:[%s207 + $0x860] sm:$0xff]
      %v541 = vld [vmem:[%s207 + $0x868] sm:$0xff]
      %v542 = vld [vmem:[%s207 + $0x870] sm:$0xff]
      %v543 = vld [vmem:[%s207 + $0x878] sm:$0xff]
      %v544 = vld [vmem:[%s207 + $0x880] sm:$0xff]
      %v545 = vld [vmem:[%s207 + $0x888] sm:$0xff]
      %v546 = vld [vmem:[%s207 + $0x890] sm:$0xff]
      %v547 = vld [vmem:[%s207 + $0x898] sm:$0xff]
      %v548 = vld [vmem:[%s207 + $0x8a0] sm:$0xff]
      %v549 = vld [vmem:[%s207 + $0x8a8] sm:$0xff]
      %v550 = vld [vmem:[%s207 + $0x8b0] sm:$0xff]
      %v551 = vld [vmem:[%s207 + $0x8b8] sm:$0xff]
      %v552 = vld [vmem:[%s207 + $0x8c0] sm:$0xff]
      %v553 = vld [vmem:[%s207 + $0x8c8] sm:$0xff]
      %v554 = vld [vmem:[%s207 + $0x8d0] sm:$0xff]
      %v555 = vld [vmem:[%s207 + $0x8d8] sm:$0xff]
      %v556 = vld [vmem:[%s207 + $0x8e0] sm:$0xff]
      %v557 = vld [vmem:[%s207 + $0x8e8] sm:$0xff]
      %v558 = vld [vmem:[%s207 + $0x8f0] sm:$0xff]
      %v559 = vld [vmem:[%s207 + $0x8f8] sm:$0xff]
      %v560 = vld [vmem:[%s207 + $0x900] sm:$0xff]
      %v561 = vld [vmem:[%s207 + $0x908] sm:$0xff]
      %v562 = vld [vmem:[%s207 + $0x910] sm:$0xff]
      %v563 = vld [vmem:[%s207 + $0x918] sm:$0xff]
      %v564 = vld [vmem:[%s207 + $0x920] sm:$0xff]
      %v565 = vld [vmem:[%s207 + $0x928] sm:$0xff]
      %v566 = vld [vmem:[%s207 + $0x930] sm:$0xff]
      %v567 = vld [vmem:[%s207 + $0x938] sm:$0xff]
      %v568 = vld [vmem:[%s207 + $0x940] sm:$0xff]
      %v569 = vld [vmem:[%s207 + $0x948] sm:$0xff]
      %v570 = vld [vmem:[%s207 + $0x950] sm:$0xff]
      %v571 = vld [vmem:[%s207 + $0x958] sm:$0xff]
      %v572 = vld [vmem:[%s207 + $0x960] sm:$0xff]
      %v573 = vld [vmem:[%s207 + $0x968] sm:$0xff]
      %v574 = vld [vmem:[%s207 + $0x970] sm:$0xff]
      %v575 = vld [vmem:[%s207 + $0x978] sm:$0xff]
      %v576 = vld [vmem:[%s207 + $0x980] sm:$0xff]
      %v577 = vld [vmem:[%s207 + $0x988] sm:$0xff]
      %v578 = vld [vmem:[%s207 + $0x990] sm:$0xff]
      %v579 = vld [vmem:[%s207 + $0x998] sm:$0xff]
      %v580 = vld [vmem:[%s207 + $0x9a0] sm:$0xff]
      %v581 = vld [vmem:[%s207 + $0x9a8] sm:$0xff]
      %v582 = vld [vmem:[%s207 + $0x9b0] sm:$0xff]
      %v583 = vld [vmem:[%s207 + $0x9b8] sm:$0xff]
      %v584 = vld [vmem:[%s207 + $0x9c0] sm:$0xff]
      %v585 = vld [vmem:[%s207 + $0x9c8] sm:$0xff]
      %v586 = vld [vmem:[%s207 + $0x9d0] sm:$0xff]
      %v587 = vld [vmem:[%s207 + $0x9d8] sm:$0xff]
      %v588 = vld [vmem:[%s207 + $0x9e0] sm:$0xff]
      %v589 = vld [vmem:[%s207 + $0x9e8] sm:$0xff]
      %v590 = vld [vmem:[%s207 + $0x9f0] sm:$0xff]
      %v591 = vld [vmem:[%s207 + $0x9f8] sm:$0xff]
      %v592 = vld [vmem:[%s207 + $0xa00] sm:$0xff]
      %v593 = vld [vmem:[%s207 + $0xa08] sm:$0xff]
      %v594 = vld [vmem:[%s207 + $0xa10] sm:$0xff]
      %v595 = vld [vmem:[%s207 + $0xa18] sm:$0xff]
      %v596 = vld [vmem:[%s207 + $0xa20] sm:$0xff]
      %v597 = vld [vmem:[%s207 + $0xa28] sm:$0xff]
      %v598 = vld [vmem:[%s207 + $0xa30] sm:$0xff]
      %v599 = vld [vmem:[%s207 + $0xa38] sm:$0xff]
      %v600 = vld [vmem:[%s207 + $0xa40] sm:$0xff]
      %v601 = vld [vmem:[%s207 + $0xa48] sm:$0xff]
      %v602 = vld [vmem:[%s207 + $0xa50] sm:$0xff]
      %v603 = vld [vmem:[%s207 + $0xa58] sm:$0xff]
      %v604 = vld [vmem:[%s207 + $0xa60] sm:$0xff]
      %v605 = vld [vmem:[%s207 + $0xa68] sm:$0xff]
      %v606 = vld [vmem:[%s207 + $0xa70] sm:$0xff]
      %v607 = vld [vmem:[%s207 + $0xa78] sm:$0xff]
      %v608 = vld [vmem:[%s207 + $0xa80] sm:$0xff]
      %v609 = vld [vmem:[%s207 + $0xa88] sm:$0xff]
      %v610 = vld [vmem:[%s207 + $0xa90] sm:$0xff]
      %v611 = vld [vmem:[%s207 + $0xa98] sm:$0xff]
      %v612 = vld [vmem:[%s207 + $0xaa0] sm:$0xff]
      %v613 = vld [vmem:[%s207 + $0xaa8] sm:$0xff]
      %v614 = vld [vmem:[%s207 + $0xab0] sm:$0xff]
      %v615 = vld [vmem:[%s207 + $0xab8] sm:$0xff]
      %v616 = vld [vmem:[%s207 + $0xac0] sm:$0xff]
      %v617 = vld [vmem:[%s207 + $0xac8] sm:$0xff]
      %v618 = vld [vmem:[%s207 + $0xad0] sm:$0xff]
      %v619 = vld [vmem:[%s207 + $0xad8] sm:$0xff]
      %v620 = vld [vmem:[%s207 + $0xae0] sm:$0xff]
      %v621 = vld [vmem:[%s207 + $0xae8] sm:$0xff]
      %v622 = vld [vmem:[%s207 + $0xaf0] sm:$0xff]
      %v623 = vld [vmem:[%s207 + $0xaf8] sm:$0xff]
      %v624 = vld [vmem:[%s207 + $0xb00] sm:$0xff]
      %v625 = vld [vmem:[%s207 + $0xb08] sm:$0xff]
      %v626 = vld [vmem:[%s207 + $0xb10] sm:$0xff]
      %v627 = vld [vmem:[%s207 + $0xb18] sm:$0xff]
      %v628 = vld [vmem:[%s207 + $0xb20] sm:$0xff]
      %v629 = vld [vmem:[%s207 + $0xb28] sm:$0xff]
      %v630 = vld [vmem:[%s207 + $0xb30] sm:$0xff]
      %v631 = vld [vmem:[%s207 + $0xb38] sm:$0xff]
      %v632 = vld [vmem:[%s207 + $0xb40] sm:$0xff]
      %v633 = vld [vmem:[%s207 + $0xb48] sm:$0xff]
      %v634 = vld [vmem:[%s207 + $0xb50] sm:$0xff]
      %v635 = vld [vmem:[%s207 + $0xb58] sm:$0xff]
      %v636 = vld [vmem:[%s207 + $0xb60] sm:$0xff]
      %v637 = vld [vmem:[%s207 + $0xb68] sm:$0xff]
      %v638 = vld [vmem:[%s207 + $0xb70] sm:$0xff]
      %v639 = vld [vmem:[%s207 + $0xb78] sm:$0xff]
      %v640 = vld [vmem:[%s207 + $0xb80] sm:$0xff]
      %v641 = vld [vmem:[%s207 + $0xb88] sm:$0xff]
      %v642 = vld [vmem:[%s207 + $0xb90] sm:$0xff]
      %v643 = vld [vmem:[%s207 + $0xb98] sm:$0xff]
      %v644 = vld [vmem:[%s207 + $0xba0] sm:$0xff]
      %v645 = vld [vmem:[%s207 + $0xba8] sm:$0xff]
      %v646 = vld [vmem:[%s207 + $0xbb0] sm:$0xff]
      %v647 = vld [vmem:[%s207 + $0xbb8] sm:$0xff]
      %v648 = vld [vmem:[%s207 + $0xbc0] sm:$0xff]
      %v649 = vld [vmem:[%s207 + $0xbc8] sm:$0xff]
      %v650 = vld [vmem:[%s207 + $0xbd0] sm:$0xff]
      %v651 = vld [vmem:[%s207 + $0xbd8] sm:$0xff]
      %v652 = vld [vmem:[%s207 + $0xbe0] sm:$0xff]
      %v653 = vld [vmem:[%s207 + $0xbe8] sm:$0xff]
      %v654 = vld [vmem:[%s207 + $0xbf0] sm:$0xff]
      %v655 = vld [vmem:[%s207 + $0xbf8] sm:$0xff]
      %v656 = vld [vmem:[%s207 + $0xc00] sm:$0xff]
      %v657 = vld [vmem:[%s207 + $0xc08] sm:$0xff]
      %v658 = vld [vmem:[%s207 + $0xc10] sm:$0xff]
      %v659 = vld [vmem:[%s207 + $0xc18] sm:$0xff]
      %v660 = vld [vmem:[%s207 + $0xc20] sm:$0xff]
      %v661 = vld [vmem:[%s207 + $0xc28] sm:$0xff]
      %v662 = vld [vmem:[%s207 + $0xc30] sm:$0xff]
      %v663 = vld [vmem:[%s207 + $0xc38] sm:$0xff]
      %v664 = vld [vmem:[%s207 + $0xc40] sm:$0xff]
      %v665 = vld [vmem:[%s207 + $0xc48] sm:$0xff]
      %v666 = vld [vmem:[%s207 + $0xc50] sm:$0xff]
      %v667 = vld [vmem:[%s207 + $0xc58] sm:$0xff]
      %v668 = vld [vmem:[%s207 + $0xc60] sm:$0xff]
      %v669 = vld [vmem:[%s207 + $0xc68] sm:$0xff]
      %v670 = vld [vmem:[%s207 + $0xc70] sm:$0xff]
      %v671 = vld [vmem:[%s207 + $0xc78] sm:$0xff]
      %v728 = vunpack.c.l.b16 %v216
      %v729 = vunpack.c.h.b16 %v216
      %v730 = vunpack.c.l.b16 %v217
      %v731 = vunpack.c.h.b16 %v217
      %v732 = vunpack.c.l.b16 %v218
      %v733 = vunpack.c.h.b16 %v218
      %v734 = vunpack.c.l.b16 %v219
      %v735 = vunpack.c.h.b16 %v219
      %v736 = vunpack.c.l.b16 %v220
      %v737 = vunpack.c.h.b16 %v220
      %v738 = vunpack.c.l.b16 %v221
      %v739 = vunpack.c.h.b16 %v221
      %v740 = vunpack.c.l.b16 %v222
      %v741 = vunpack.c.l.b16 %v223
      %v742 = vunpack.c.h.b16 %v223
      %v743 = vunpack.c.l.b16 %v224
      %v744 = vunpack.c.h.b16 %v224
      %v745 = vunpack.c.l.b16 %v225
      %v746 = vunpack.c.h.b16 %v225
      %v747 = vunpack.c.l.b16 %v226
      %v748 = vunpack.c.h.b16 %v226
      %v749 = vunpack.c.l.b16 %v227
      %v750 = vunpack.c.h.b16 %v227
      %v751 = vunpack.c.l.b16 %v228
      %v752 = vunpack.c.h.b16 %v228
      %v753 = vunpack.c.l.b16 %v229
      %v754 = vunpack.c.l.b16 %v230
      %v755 = vunpack.c.h.b16 %v230
      %v756 = vunpack.c.l.b16 %v231
      %v757 = vunpack.c.h.b16 %v231
      %v758 = vunpack.c.l.b16 %v232
      %v759 = vunpack.c.h.b16 %v232
      %v760 = vunpack.c.l.b16 %v233
      %v761 = vunpack.c.h.b16 %v233
      %v762 = vunpack.c.l.b16 %v234
      %v763 = vunpack.c.h.b16 %v234
      %v764 = vunpack.c.l.b16 %v235
      %v765 = vunpack.c.h.b16 %v235
      %v766 = vunpack.c.l.b16 %v236
      %v767 = vunpack.c.l.b16 %v237
      %v768 = vunpack.c.h.b16 %v237
      %v769 = vunpack.c.l.b16 %v238
      %v770 = vunpack.c.h.b16 %v238
      %v771 = vunpack.c.l.b16 %v239
      %v772 = vunpack.c.h.b16 %v239
      %v773 = vunpack.c.l.b16 %v240
      %v774 = vunpack.c.h.b16 %v240
      %v775 = vunpack.c.l.b16 %v241
      %v776 = vunpack.c.h.b16 %v241
      %v777 = vunpack.c.l.b16 %v242
      %v778 = vunpack.c.h.b16 %v242
      %v779 = vunpack.c.l.b16 %v243
      %v780 = vunpack.c.l.b16 %v244
      %v781 = vunpack.c.h.b16 %v244
      %v782 = vunpack.c.l.b16 %v245
      %v783 = vunpack.c.h.b16 %v245
      %v784 = vunpack.c.l.b16 %v246
      %v785 = vunpack.c.h.b16 %v246
      %v786 = vunpack.c.l.b16 %v247
      %v787 = vunpack.c.h.b16 %v247
      %v788 = vunpack.c.l.b16 %v248
      %v789 = vunpack.c.h.b16 %v248
      %v790 = vunpack.c.l.b16 %v249
      %v791 = vunpack.c.h.b16 %v249
      %v792 = vunpack.c.l.b16 %v250
      %v793 = vunpack.c.l.b16 %v251
      %v794 = vunpack.c.h.b16 %v251
      %v795 = vunpack.c.l.b16 %v252
      %v796 = vunpack.c.h.b16 %v252
      %v797 = vunpack.c.l.b16 %v253
      %v798 = vunpack.c.h.b16 %v253
      %v799 = vunpack.c.l.b16 %v254
      %v800 = vunpack.c.h.b16 %v254
      %v801 = vunpack.c.l.b16 %v255
      %v802 = vunpack.c.h.b16 %v255
      %v803 = vunpack.c.l.b16 %v256
      %v804 = vunpack.c.h.b16 %v256
      %v805 = vunpack.c.l.b16 %v257
      %v806 = vunpack.c.l.b16 %v258
      %v807 = vunpack.c.h.b16 %v258
      %v808 = vunpack.c.l.b16 %v259
      %v809 = vunpack.c.h.b16 %v259
      %v810 = vunpack.c.l.b16 %v260
      %v811 = vunpack.c.h.b16 %v260
      %v812 = vunpack.c.l.b16 %v261
      %v813 = vunpack.c.h.b16 %v261
      %v814 = vunpack.c.l.b16 %v262
      %v815 = vunpack.c.h.b16 %v262
      %v816 = vunpack.c.l.b16 %v263
      %v817 = vunpack.c.h.b16 %v263
      %v818 = vunpack.c.l.b16 %v264
      %v819 = vunpack.c.l.b16 %v265
      %v820 = vunpack.c.h.b16 %v265
      %v821 = vunpack.c.l.b16 %v266
      %v822 = vunpack.c.h.b16 %v266
      %v823 = vunpack.c.l.b16 %v267
      %v824 = vunpack.c.h.b16 %v267
      %v825 = vunpack.c.l.b16 %v268
      %v826 = vunpack.c.h.b16 %v268
      %v827 = vunpack.c.l.b16 %v269
      %v828 = vunpack.c.h.b16 %v269
      %v829 = vunpack.c.l.b16 %v270
      %v830 = vunpack.c.h.b16 %v270
      %v831 = vunpack.c.l.b16 %v271
      %v832 = vpack.c.b16 %v741, %v728
      %v833 = vpack.c.b16 %v742, %v729
      %v834 = vpack.c.b16 %v743, %v730
      %v835 = vpack.c.b16 %v744, %v731
      %v836 = vpack.c.b16 %v745, %v732
      %v837 = vpack.c.b16 %v746, %v733
      %v838 = vpack.c.b16 %v747, %v734
      %v839 = vpack.c.b16 %v748, %v735
      %v840 = vpack.c.b16 %v749, %v736
      %v841 = vpack.c.b16 %v750, %v737
      %v842 = vpack.c.b16 %v751, %v738
      %v843 = vpack.c.b16 %v752, %v739
      %v844 = vpack.c.b16 %v753, %v740
      %v845 = vpack.c.b16 %v767, %v754
      %v846 = vpack.c.b16 %v768, %v755
      %v847 = vpack.c.b16 %v769, %v756
      %v848 = vpack.c.b16 %v770, %v757
      %v849 = vpack.c.b16 %v771, %v758
      %v850 = vpack.c.b16 %v772, %v759
      %v851 = vpack.c.b16 %v773, %v760
      %v852 = vpack.c.b16 %v774, %v761
      %v853 = vpack.c.b16 %v775, %v762
      %v854 = vpack.c.b16 %v776, %v763
      %v855 = vpack.c.b16 %v777, %v764
      %v856 = vpack.c.b16 %v778, %v765
      %v857 = vpack.c.b16 %v779, %v766
      %v858 = vpack.c.b16 %v793, %v780
      %v859 = vpack.c.b16 %v794, %v781
      %v860 = vpack.c.b16 %v795, %v782
      %v861 = vpack.c.b16 %v796, %v783
      %v862 = vpack.c.b16 %v797, %v784
      %v863 = vpack.c.b16 %v798, %v785
      %v864 = vpack.c.b16 %v799, %v786
      %v865 = vpack.c.b16 %v800, %v787
      %v866 = vpack.c.b16 %v801, %v788
      %v867 = vpack.c.b16 %v802, %v789
      %v868 = vpack.c.b16 %v803, %v790
      %v869 = vpack.c.b16 %v804, %v791
      %v870 = vpack.c.b16 %v805, %v792
      %v871 = vpack.c.b16 %v819, %v806
      %v872 = vpack.c.b16 %v820, %v807
      %v873 = vpack.c.b16 %v821, %v808
      %v874 = vpack.c.b16 %v822, %v809
      %v875 = vpack.c.b16 %v823, %v810
      %v876 = vpack.c.b16 %v824, %v811
      %v877 = vpack.c.b16 %v825, %v812
      %v878 = vpack.c.b16 %v826, %v813
      %v879 = vpack.c.b16 %v827, %v814
      %v880 = vpack.c.b16 %v828, %v815
      %v881 = vpack.c.b16 %v829, %v816
      %v882 = vpack.c.b16 %v830, %v817
      %v883 = vpack.c.b16 %v831, %v818
      %v1332 = vunpack.c.l.b16 %v272
      %v1333 = vunpack.c.h.b16 %v272
      %v1334 = vunpack.c.l.b16 %v273
      %v1335 = vunpack.c.h.b16 %v273
      %v1336 = vunpack.c.l.b16 %v274
      %v1337 = vunpack.c.h.b16 %v274
      %v1338 = vunpack.c.l.b16 %v275
      %v1339 = vunpack.c.h.b16 %v275
      %v1340 = vunpack.c.l.b16 %v276
      %v1341 = vunpack.c.h.b16 %v276
      %v1342 = vunpack.c.l.b16 %v277
      %v1343 = vunpack.c.h.b16 %v277
      %v1344 = vunpack.c.l.b16 %v278
      %v1345 = vunpack.c.h.b16 %v278
      %v1346 = vunpack.c.l.b16 %v279
      %v1347 = vunpack.c.h.b16 %v279
      %v1348 = vunpack.c.l.b16 %v280
      %v1349 = vunpack.c.h.b16 %v280
      %v1350 = vunpack.c.l.b16 %v281
      %v1351 = vunpack.c.h.b16 %v281
      %v1352 = vunpack.c.l.b16 %v282
      %v1353 = vunpack.c.h.b16 %v282
      %v1354 = vunpack.c.l.b16 %v283
      %v1355 = vunpack.c.h.b16 %v283
      %v1356 = vunpack.c.l.b16 %v284
      %v1357 = vunpack.c.h.b16 %v284
      %v1358 = vunpack.c.l.b16 %v285
      %v1359 = vunpack.c.h.b16 %v285
      %v1360 = vunpack.c.l.b16 %v286
      %v1361 = vunpack.c.h.b16 %v286
      %v1362 = vunpack.c.l.b16 %v287
      %v1363 = vunpack.c.h.b16 %v287
      %v1364 = vunpack.c.l.b16 %v288
      %v1365 = vunpack.c.h.b16 %v288
      %v1366 = vunpack.c.l.b16 %v289
      %v1367 = vunpack.c.h.b16 %v289
      %v1368 = vunpack.c.l.b16 %v290
      %v1369 = vunpack.c.h.b16 %v290
      %v1370 = vunpack.c.l.b16 %v291
      %v1371 = vunpack.c.h.b16 %v291
      %v1372 = vunpack.c.l.b16 %v292
      %v1373 = vunpack.c.h.b16 %v292
      %v1374 = vunpack.c.l.b16 %v293
      %v1375 = vunpack.c.h.b16 %v293
      %v1376 = vunpack.c.l.b16 %v294
      %v1377 = vunpack.c.h.b16 %v294
      %v1378 = vunpack.c.l.b16 %v295
      %v1379 = vunpack.c.h.b16 %v295
      %v1380 = vunpack.c.l.b16 %v296
      %v1381 = vunpack.c.h.b16 %v296
      %v1382 = vunpack.c.l.b16 %v297
      %v1383 = vunpack.c.h.b16 %v297
      %v1384 = vunpack.c.l.b16 %v298
      %v1385 = vunpack.c.h.b16 %v298
      %v1386 = vunpack.c.l.b16 %v299
      %v1387 = vunpack.c.h.b16 %v299
      %v1388 = vunpack.c.l.b16 %v300
      %v1389 = vunpack.c.h.b16 %v300
      %v1390 = vunpack.c.l.b16 %v301
      %v1391 = vunpack.c.h.b16 %v301
      %v1392 = vunpack.c.l.b16 %v302
      %v1393 = vunpack.c.h.b16 %v302
      %v1394 = vunpack.c.l.b16 %v303
      %v1395 = vunpack.c.h.b16 %v303
      %v1396 = vunpack.c.l.b16 %v304
      %v1397 = vunpack.c.h.b16 %v304
      %v1398 = vunpack.c.l.b16 %v305
      %v1399 = vunpack.c.h.b16 %v305
      %v1400 = vunpack.c.l.b16 %v306
      %v1401 = vunpack.c.h.b16 %v306
      %v1402 = vunpack.c.l.b16 %v307
      %v1403 = vunpack.c.h.b16 %v307
      %v1404 = vunpack.c.l.b16 %v308
      %v1405 = vunpack.c.h.b16 %v308
      %v1406 = vunpack.c.l.b16 %v309
      %v1407 = vunpack.c.h.b16 %v309
      %v1408 = vunpack.c.l.b16 %v310
      %v1409 = vunpack.c.h.b16 %v310
      %v1410 = vunpack.c.l.b16 %v311
      %v1411 = vunpack.c.h.b16 %v311
      %v1412 = vunpack.c.l.b16 %v312
      %v1413 = vunpack.c.h.b16 %v312
      %v1414 = vunpack.c.l.b16 %v313
      %v1415 = vunpack.c.h.b16 %v313
      %v1416 = vunpack.c.l.b16 %v314
      %v1417 = vunpack.c.h.b16 %v314
      %v1418 = vunpack.c.l.b16 %v315
      %v1419 = vunpack.c.h.b16 %v315
      %v1420 = vunpack.c.l.b16 %v316
      %v1421 = vunpack.c.h.b16 %v316
      %v1422 = vunpack.c.l.b16 %v317
      %v1423 = vunpack.c.h.b16 %v317
      %v1424 = vunpack.c.l.b16 %v318
      %v1425 = vunpack.c.h.b16 %v318
      %v1426 = vunpack.c.l.b16 %v319
      %v1427 = vunpack.c.h.b16 %v319
      %v1428 = vunpack.c.l.b16 %v320
      %v1429 = vunpack.c.h.b16 %v320
      %v1430 = vunpack.c.l.b16 %v321
      %v1431 = vunpack.c.h.b16 %v321
      %v1432 = vunpack.c.l.b16 %v322
      %v1433 = vunpack.c.h.b16 %v322
      %v1434 = vunpack.c.l.b16 %v323
      %v1435 = vunpack.c.h.b16 %v323
      %v1436 = vunpack.c.l.b16 %v324
      %v1437 = vunpack.c.h.b16 %v324
      %v1438 = vunpack.c.l.b16 %v325
      %v1439 = vunpack.c.h.b16 %v325
      %v1440 = vunpack.c.l.b16 %v326
      %v1441 = vunpack.c.h.b16 %v326
      %v1442 = vunpack.c.l.b16 %v327
      %v1443 = vunpack.c.h.b16 %v327
      %v1444 = vunpack.c.l.b16 %v328
      %v1445 = vunpack.c.h.b16 %v328
      %v1446 = vunpack.c.l.b16 %v329
      %v1447 = vunpack.c.h.b16 %v329
      %v1448 = vunpack.c.l.b16 %v330
      %v1449 = vunpack.c.h.b16 %v330
      %v1450 = vunpack.c.l.b16 %v331
      %v1451 = vunpack.c.h.b16 %v331
      %v1452 = vunpack.c.l.b16 %v332
      %v1453 = vunpack.c.h.b16 %v332
      %v1454 = vunpack.c.l.b16 %v333
      %v1455 = vunpack.c.h.b16 %v333
      %v1456 = vunpack.c.l.b16 %v334
      %v1457 = vunpack.c.h.b16 %v334
      %v1458 = vunpack.c.l.b16 %v335
      %v1459 = vunpack.c.h.b16 %v335
      %v1460 = vunpack.c.l.b16 %v336
      %v1461 = vunpack.c.h.b16 %v336
      %v1462 = vunpack.c.l.b16 %v337
      %v1463 = vunpack.c.h.b16 %v337
      %v1464 = vunpack.c.l.b16 %v338
      %v1465 = vunpack.c.h.b16 %v338
      %v1466 = vunpack.c.l.b16 %v339
      %v1467 = vunpack.c.h.b16 %v339
      %v1468 = vunpack.c.l.b16 %v340
      %v1469 = vunpack.c.h.b16 %v340
      %v1470 = vunpack.c.l.b16 %v341
      %v1471 = vunpack.c.h.b16 %v341
      %v1472 = vunpack.c.l.b16 %v342
      %v1473 = vunpack.c.h.b16 %v342
      %v1474 = vunpack.c.l.b16 %v343
      %v1475 = vunpack.c.h.b16 %v343
      %v1476 = vunpack.c.l.b16 %v344
      %v1477 = vunpack.c.h.b16 %v344
      %v1478 = vunpack.c.l.b16 %v345
      %v1479 = vunpack.c.h.b16 %v345
      %v1480 = vunpack.c.l.b16 %v346
      %v1481 = vunpack.c.h.b16 %v346
      %v1482 = vunpack.c.l.b16 %v347
      %v1483 = vunpack.c.h.b16 %v347
      %v1484 = vunpack.c.l.b16 %v348
      %v1485 = vunpack.c.h.b16 %v348
      %v1486 = vunpack.c.l.b16 %v349
      %v1487 = vunpack.c.h.b16 %v349
      %v1488 = vunpack.c.l.b16 %v350
      %v1489 = vunpack.c.h.b16 %v350
      %v1490 = vunpack.c.l.b16 %v351
      %v1491 = vunpack.c.h.b16 %v351
      %v1492 = vunpack.c.l.b16 %v352
      %v1493 = vunpack.c.h.b16 %v352
      %v1494 = vunpack.c.l.b16 %v353
      %v1495 = vunpack.c.h.b16 %v353
      %v1496 = vunpack.c.l.b16 %v354
      %v1497 = vunpack.c.h.b16 %v354
      %v1498 = vunpack.c.l.b16 %v355
      %v1499 = vunpack.c.h.b16 %v355
      %v1500 = vunpack.c.l.b16 %v356
      %v1501 = vunpack.c.h.b16 %v356
      %v1502 = vunpack.c.l.b16 %v357
      %v1503 = vunpack.c.h.b16 %v357
      %v1504 = vunpack.c.l.b16 %v358
      %v1505 = vunpack.c.h.b16 %v358
      %v1506 = vunpack.c.l.b16 %v359
      %v1507 = vunpack.c.h.b16 %v359
      %v1508 = vunpack.c.l.b16 %v360
      %v1509 = vunpack.c.h.b16 %v360
      %v1510 = vunpack.c.l.b16 %v361
      %v1511 = vunpack.c.h.b16 %v361
      %v1512 = vunpack.c.l.b16 %v362
      %v1513 = vunpack.c.h.b16 %v362
      %v1514 = vunpack.c.l.b16 %v363
      %v1515 = vunpack.c.h.b16 %v363
      %v1516 = vunpack.c.l.b16 %v364
      %v1517 = vunpack.c.h.b16 %v364
      %v1518 = vunpack.c.l.b16 %v365
      %v1519 = vunpack.c.h.b16 %v365
      %v1520 = vunpack.c.l.b16 %v366
      %v1521 = vunpack.c.h.b16 %v366
      %v1522 = vunpack.c.l.b16 %v367
      %v1523 = vunpack.c.h.b16 %v367
      %v1524 = vunpack.c.l.b16 %v368
      %v1525 = vunpack.c.h.b16 %v368
      %v1526 = vunpack.c.l.b16 %v369
      %v1527 = vunpack.c.h.b16 %v369
      %v1528 = vunpack.c.l.b16 %v370
      %v1529 = vunpack.c.h.b16 %v370
      %v1530 = vunpack.c.l.b16 %v371
      %v1531 = vunpack.c.h.b16 %v371
      %v1532 = vunpack.c.l.b16 %v372
      %v1533 = vunpack.c.h.b16 %v372
      %v1534 = vunpack.c.l.b16 %v373
      %v1535 = vunpack.c.h.b16 %v373
      %v1536 = vunpack.c.l.b16 %v374
      %v1537 = vunpack.c.h.b16 %v374
      %v1538 = vunpack.c.l.b16 %v375
      %v1539 = vunpack.c.h.b16 %v375
      %v1540 = vunpack.c.l.b16 %v376
      %v1541 = vunpack.c.h.b16 %v376
      %v1542 = vunpack.c.l.b16 %v377
      %v1543 = vunpack.c.h.b16 %v377
      %v1544 = vunpack.c.l.b16 %v378
      %v1545 = vunpack.c.h.b16 %v378
      %v1546 = vunpack.c.l.b16 %v379
      %v1547 = vunpack.c.h.b16 %v379
      %v1548 = vunpack.c.l.b16 %v380
      %v1549 = vunpack.c.h.b16 %v380
      %v1550 = vunpack.c.l.b16 %v381
      %v1551 = vunpack.c.h.b16 %v381
      %v1552 = vunpack.c.l.b16 %v382
      %v1553 = vunpack.c.h.b16 %v382
      %v1554 = vunpack.c.l.b16 %v383
      %v1555 = vunpack.c.h.b16 %v383
      %v1556 = vunpack.c.l.b16 %v384
      %v1557 = vunpack.c.h.b16 %v384
      %v1558 = vunpack.c.l.b16 %v385
      %v1559 = vunpack.c.h.b16 %v385
      %v1560 = vunpack.c.l.b16 %v386
      %v1561 = vunpack.c.h.b16 %v386
      %v1562 = vunpack.c.l.b16 %v387
      %v1563 = vunpack.c.h.b16 %v387
      %v1564 = vunpack.c.l.b16 %v388
      %v1565 = vunpack.c.h.b16 %v388
      %v1566 = vunpack.c.l.b16 %v389
      %v1567 = vunpack.c.h.b16 %v389
      %v1568 = vunpack.c.l.b16 %v390
      %v1569 = vunpack.c.h.b16 %v390
      %v1570 = vunpack.c.l.b16 %v391
      %v1571 = vunpack.c.h.b16 %v391
      %v1572 = vunpack.c.l.b16 %v392
      %v1573 = vunpack.c.h.b16 %v392
      %v1574 = vunpack.c.l.b16 %v393
      %v1575 = vunpack.c.h.b16 %v393
      %v1576 = vunpack.c.l.b16 %v394
      %v1577 = vunpack.c.h.b16 %v394
      %v1578 = vunpack.c.l.b16 %v395
      %v1579 = vunpack.c.h.b16 %v395
      %v1580 = vunpack.c.l.b16 %v396
      %v1581 = vunpack.c.h.b16 %v396
      %v1582 = vunpack.c.l.b16 %v397
      %v1583 = vunpack.c.h.b16 %v397
      %v1584 = vunpack.c.l.b16 %v398
      %v1585 = vunpack.c.h.b16 %v398
      %v1586 = vunpack.c.l.b16 %v399
      %v1587 = vunpack.c.h.b16 %v399
      %v1588 = vunpack.c.l.b16 %v400
      %v1589 = vunpack.c.h.b16 %v400
      %v1590 = vunpack.c.l.b16 %v401
      %v1591 = vunpack.c.h.b16 %v401
      %v1592 = vunpack.c.l.b16 %v402
      %v1593 = vunpack.c.h.b16 %v402
      %v1594 = vunpack.c.l.b16 %v403
      %v1595 = vunpack.c.h.b16 %v403
      %v1596 = vunpack.c.l.b16 %v404
      %v1597 = vunpack.c.h.b16 %v404
      %v1598 = vunpack.c.l.b16 %v405
      %v1599 = vunpack.c.h.b16 %v405
      %v1600 = vunpack.c.l.b16 %v406
      %v1601 = vunpack.c.h.b16 %v406
      %v1602 = vunpack.c.l.b16 %v407
      %v1603 = vunpack.c.h.b16 %v407
      %v1604 = vunpack.c.l.b16 %v408
      %v1605 = vunpack.c.h.b16 %v408
      %v1606 = vunpack.c.l.b16 %v409
      %v1607 = vunpack.c.h.b16 %v409
      %v1608 = vunpack.c.l.b16 %v410
      %v1609 = vunpack.c.h.b16 %v410
      %v1610 = vunpack.c.l.b16 %v411
      %v1611 = vunpack.c.h.b16 %v411
      %v1612 = vunpack.c.l.b16 %v412
      %v1613 = vunpack.c.h.b16 %v412
      %v1614 = vunpack.c.l.b16 %v413
      %v1615 = vunpack.c.h.b16 %v413
      %v1616 = vunpack.c.l.b16 %v414
      %v1617 = vunpack.c.h.b16 %v414
      %v1618 = vunpack.c.l.b16 %v415
      %v1619 = vunpack.c.h.b16 %v415
      %v1620 = vunpack.c.l.b16 %v416
      %v1621 = vunpack.c.h.b16 %v416
      %v1622 = vunpack.c.l.b16 %v417
      %v1623 = vunpack.c.h.b16 %v417
      %v1624 = vunpack.c.l.b16 %v418
      %v1625 = vunpack.c.h.b16 %v418
      %v1626 = vunpack.c.l.b16 %v419
      %v1627 = vunpack.c.h.b16 %v419
      %v1628 = vunpack.c.l.b16 %v420
      %v1629 = vunpack.c.h.b16 %v420
      %v1630 = vunpack.c.l.b16 %v421
      %v1631 = vunpack.c.h.b16 %v421
      %v1632 = vunpack.c.l.b16 %v422
      %v1633 = vunpack.c.h.b16 %v422
      %v1634 = vunpack.c.l.b16 %v423
      %v1635 = vunpack.c.h.b16 %v423
      %v1636 = vunpack.c.l.b16 %v424
      %v1637 = vunpack.c.h.b16 %v424
      %v1638 = vunpack.c.l.b16 %v425
      %v1639 = vunpack.c.h.b16 %v425
      %v1640 = vunpack.c.l.b16 %v426
      %v1641 = vunpack.c.h.b16 %v426
      %v1642 = vunpack.c.l.b16 %v427
      %v1643 = vunpack.c.h.b16 %v427
      %v1644 = vunpack.c.l.b16 %v428
      %v1645 = vunpack.c.h.b16 %v428
      %v1646 = vunpack.c.l.b16 %v429
      %v1647 = vunpack.c.h.b16 %v429
      %v1648 = vunpack.c.l.b16 %v430
      %v1649 = vunpack.c.h.b16 %v430
      %v1650 = vunpack.c.l.b16 %v431
      %v1651 = vunpack.c.h.b16 %v431
      %v1652 = vunpack.c.l.b16 %v432
      %v1653 = vunpack.c.h.b16 %v432
      %v1654 = vunpack.c.l.b16 %v433
      %v1655 = vunpack.c.h.b16 %v433
      %v1656 = vunpack.c.l.b16 %v434
      %v1657 = vunpack.c.h.b16 %v434
      %v1658 = vunpack.c.l.b16 %v435
      %v1659 = vunpack.c.h.b16 %v435
      %v1660 = vunpack.c.l.b16 %v436
      %v1661 = vunpack.c.h.b16 %v436
      %v1662 = vunpack.c.l.b16 %v437
      %v1663 = vunpack.c.h.b16 %v437
      %v1664 = vunpack.c.l.b16 %v438
      %v1665 = vunpack.c.h.b16 %v438
      %v1666 = vunpack.c.l.b16 %v439
      %v1667 = vunpack.c.h.b16 %v439
      %v1668 = vunpack.c.l.b16 %v440
      %v1669 = vunpack.c.h.b16 %v440
      %v1670 = vunpack.c.l.b16 %v441
      %v1671 = vunpack.c.h.b16 %v441
      %v1672 = vunpack.c.l.b16 %v442
      %v1673 = vunpack.c.h.b16 %v442
      %v1674 = vunpack.c.l.b16 %v443
      %v1675 = vunpack.c.h.b16 %v443
      %v1676 = vunpack.c.l.b16 %v444
      %v1677 = vunpack.c.h.b16 %v444
      %v1678 = vunpack.c.l.b16 %v445
      %v1679 = vunpack.c.h.b16 %v445
      %v1680 = vunpack.c.l.b16 %v446
      %v1681 = vunpack.c.h.b16 %v446
      %v1682 = vunpack.c.l.b16 %v447
      %v1683 = vunpack.c.h.b16 %v447
      %v1684 = vunpack.c.l.b16 %v448
      %v1685 = vunpack.c.h.b16 %v448
      %v1686 = vunpack.c.l.b16 %v449
      %v1687 = vunpack.c.h.b16 %v449
      %v1688 = vunpack.c.l.b16 %v450
      %v1689 = vunpack.c.h.b16 %v450
      %v1690 = vunpack.c.l.b16 %v451
      %v1691 = vunpack.c.h.b16 %v451
      %v1692 = vunpack.c.l.b16 %v452
      %v1693 = vunpack.c.h.b16 %v452
      %v1694 = vunpack.c.l.b16 %v453
      %v1695 = vunpack.c.h.b16 %v453
      %v1696 = vunpack.c.l.b16 %v454
      %v1697 = vunpack.c.h.b16 %v454
      %v1698 = vunpack.c.l.b16 %v455
      %v1699 = vunpack.c.h.b16 %v455
      %v1700 = vunpack.c.l.b16 %v456
      %v1701 = vunpack.c.h.b16 %v456
      %v1702 = vunpack.c.l.b16 %v457
      %v1703 = vunpack.c.h.b16 %v457
      %v1704 = vunpack.c.l.b16 %v458
      %v1705 = vunpack.c.h.b16 %v458
      %v1706 = vunpack.c.l.b16 %v459
      %v1707 = vunpack.c.h.b16 %v459
      %v1708 = vunpack.c.l.b16 %v460
      %v1709 = vunpack.c.h.b16 %v460
      %v1710 = vunpack.c.l.b16 %v461
      %v1711 = vunpack.c.h.b16 %v461
      %v1712 = vunpack.c.l.b16 %v462
      %v1713 = vunpack.c.h.b16 %v462
      %v1714 = vunpack.c.l.b16 %v463
      %v1715 = vunpack.c.h.b16 %v463
      %v1716 = vunpack.c.l.b16 %v464
      %v1717 = vunpack.c.h.b16 %v464
      %v1718 = vunpack.c.l.b16 %v465
      %v1719 = vunpack.c.h.b16 %v465
      %v1720 = vunpack.c.l.b16 %v466
      %v1721 = vunpack.c.h.b16 %v466
      %v1722 = vunpack.c.l.b16 %v467
      %v1723 = vunpack.c.h.b16 %v467
      %v1724 = vunpack.c.l.b16 %v468
      %v1725 = vunpack.c.h.b16 %v468
      %v1726 = vunpack.c.l.b16 %v469
      %v1727 = vunpack.c.h.b16 %v469
      %v1728 = vunpack.c.l.b16 %v470
      %v1729 = vunpack.c.h.b16 %v470
      %v1730 = vunpack.c.l.b16 %v471
      %v1731 = vunpack.c.h.b16 %v471
      %v1732 = vunpack.c.l.b16 %v472
      %v1733 = vunpack.c.h.b16 %v472
      %v1734 = vunpack.c.l.b16 %v473
      %v1735 = vunpack.c.h.b16 %v473
      %v1736 = vunpack.c.l.b16 %v474
      %v1737 = vunpack.c.h.b16 %v474
      %v1738 = vunpack.c.l.b16 %v475
      %v1739 = vunpack.c.h.b16 %v475
      %v1740 = vunpack.c.l.b16 %v476
      %v1741 = vunpack.c.h.b16 %v476
      %v1742 = vunpack.c.l.b16 %v477
      %v1743 = vunpack.c.h.b16 %v477
      %v1744 = vunpack.c.l.b16 %v478
      %v1745 = vunpack.c.h.b16 %v478
      %v1746 = vunpack.c.l.b16 %v479
      %v1747 = vunpack.c.h.b16 %v479
      %v1748 = vunpack.c.l.b16 %v480
      %v1749 = vunpack.c.h.b16 %v480
      %v1750 = vunpack.c.l.b16 %v481
      %v1751 = vunpack.c.h.b16 %v481
      %v1752 = vunpack.c.l.b16 %v482
      %v1753 = vunpack.c.h.b16 %v482
      %v1754 = vunpack.c.l.b16 %v483
      %v1755 = vunpack.c.h.b16 %v483
      %v1756 = vunpack.c.l.b16 %v484
      %v1757 = vunpack.c.h.b16 %v484
      %v1758 = vunpack.c.l.b16 %v485
      %v1759 = vunpack.c.h.b16 %v485
      %v1760 = vunpack.c.l.b16 %v486
      %v1761 = vunpack.c.h.b16 %v486
      %v1762 = vunpack.c.l.b16 %v487
      %v1763 = vunpack.c.h.b16 %v487
      %v1764 = vunpack.c.l.b16 %v488
      %v1765 = vunpack.c.h.b16 %v488
      %v1766 = vunpack.c.l.b16 %v489
      %v1767 = vunpack.c.h.b16 %v489
      %v1768 = vunpack.c.l.b16 %v490
      %v1769 = vunpack.c.h.b16 %v490
      %v1770 = vunpack.c.l.b16 %v491
      %v1771 = vunpack.c.h.b16 %v491
      %v1772 = vunpack.c.l.b16 %v492
      %v1773 = vunpack.c.h.b16 %v492
      %v1774 = vunpack.c.l.b16 %v493
      %v1775 = vunpack.c.h.b16 %v493
      %v1776 = vunpack.c.l.b16 %v494
      %v1777 = vunpack.c.h.b16 %v494
      %v1778 = vunpack.c.l.b16 %v495
      %v1779 = vunpack.c.h.b16 %v495
      %v1780 = vunpack.c.l.b16 %v496
      %v1781 = vunpack.c.h.b16 %v496
      %v1782 = vunpack.c.l.b16 %v497
      %v1783 = vunpack.c.h.b16 %v497
      %v1784 = vunpack.c.l.b16 %v498
      %v1785 = vunpack.c.h.b16 %v498
      %v1786 = vunpack.c.l.b16 %v499
      %v1787 = vunpack.c.h.b16 %v499
      %v1788 = vunpack.c.l.b16 %v500
      %v1789 = vunpack.c.h.b16 %v500
      %v1790 = vunpack.c.l.b16 %v501
      %v1791 = vunpack.c.h.b16 %v501
      %v1792 = vunpack.c.l.b16 %v502
      %v1793 = vunpack.c.h.b16 %v502
      %v1794 = vunpack.c.l.b16 %v503
      %v1795 = vunpack.c.h.b16 %v503
      %v1796 = vunpack.c.l.b16 %v504
      %v1797 = vunpack.c.h.b16 %v504
      %v1798 = vunpack.c.l.b16 %v505
      %v1799 = vunpack.c.h.b16 %v505
      %v1800 = vunpack.c.l.b16 %v506
      %v1801 = vunpack.c.h.b16 %v506
      %v1802 = vunpack.c.l.b16 %v507
      %v1803 = vunpack.c.h.b16 %v507
      %v1804 = vunpack.c.l.b16 %v508
      %v1805 = vunpack.c.h.b16 %v508
      %v1806 = vunpack.c.l.b16 %v509
      %v1807 = vunpack.c.h.b16 %v509
      %v1808 = vunpack.c.l.b16 %v510
      %v1809 = vunpack.c.h.b16 %v510
      %v1810 = vunpack.c.l.b16 %v511
      %v1811 = vunpack.c.h.b16 %v511
      %v1812 = vunpack.c.l.b16 %v512
      %v1813 = vunpack.c.h.b16 %v512
      %v1814 = vunpack.c.l.b16 %v513
      %v1815 = vunpack.c.h.b16 %v513
      %v1816 = vunpack.c.l.b16 %v514
      %v1817 = vunpack.c.h.b16 %v514
      %v1818 = vunpack.c.l.b16 %v515
      %v1819 = vunpack.c.h.b16 %v515
      %v1820 = vunpack.c.l.b16 %v516
      %v1821 = vunpack.c.h.b16 %v516
      %v1822 = vunpack.c.l.b16 %v517
      %v1823 = vunpack.c.h.b16 %v517
      %v1824 = vunpack.c.l.b16 %v518
      %v1825 = vunpack.c.h.b16 %v518
      %v1826 = vunpack.c.l.b16 %v519
      %v1827 = vunpack.c.h.b16 %v519
      %v1828 = vunpack.c.l.b16 %v520
      %v1829 = vunpack.c.h.b16 %v520
      %v1830 = vunpack.c.l.b16 %v521
      %v1831 = vunpack.c.h.b16 %v521
      %v1832 = vunpack.c.l.b16 %v522
      %v1833 = vunpack.c.h.b16 %v522
      %v1834 = vunpack.c.l.b16 %v523
      %v1835 = vunpack.c.h.b16 %v523
      %v1836 = vunpack.c.l.b16 %v524
      %v1837 = vunpack.c.h.b16 %v524
      %v1838 = vunpack.c.l.b16 %v525
      %v1839 = vunpack.c.h.b16 %v525
      %v1840 = vunpack.c.l.b16 %v526
      %v1841 = vunpack.c.h.b16 %v526
      %v1842 = vunpack.c.l.b16 %v527
      %v1843 = vunpack.c.h.b16 %v527
      %v1844 = vunpack.c.l.b16 %v528
      %v1845 = vunpack.c.h.b16 %v528
      %v1846 = vunpack.c.l.b16 %v529
      %v1847 = vunpack.c.h.b16 %v529
      %v1848 = vunpack.c.l.b16 %v530
      %v1849 = vunpack.c.h.b16 %v530
      %v1850 = vunpack.c.l.b16 %v531
      %v1851 = vunpack.c.h.b16 %v531
      %v1852 = vunpack.c.l.b16 %v532
      %v1853 = vunpack.c.h.b16 %v532
      %v1854 = vunpack.c.l.b16 %v533
      %v1855 = vunpack.c.h.b16 %v533
      %v1856 = vunpack.c.l.b16 %v534
      %v1857 = vunpack.c.h.b16 %v534
      %v1858 = vunpack.c.l.b16 %v535
      %v1859 = vunpack.c.h.b16 %v535
      %v1860 = vunpack.c.l.b16 %v536
      %v1861 = vunpack.c.h.b16 %v536
      %v1862 = vunpack.c.l.b16 %v537
      %v1863 = vunpack.c.h.b16 %v537
      %v1864 = vunpack.c.l.b16 %v538
      %v1865 = vunpack.c.h.b16 %v538
      %v1866 = vunpack.c.l.b16 %v539
      %v1867 = vunpack.c.h.b16 %v539
      %v1868 = vunpack.c.l.b16 %v540
      %v1869 = vunpack.c.h.b16 %v540
      %v1870 = vunpack.c.l.b16 %v541
      %v1871 = vunpack.c.h.b16 %v541
      %v1872 = vunpack.c.l.b16 %v542
      %v1873 = vunpack.c.h.b16 %v542
      %v1874 = vunpack.c.l.b16 %v543
      %v1875 = vunpack.c.h.b16 %v543
      %v1876 = vunpack.c.l.b16 %v544
      %v1877 = vunpack.c.h.b16 %v544
      %v1878 = vunpack.c.l.b16 %v545
      %v1879 = vunpack.c.h.b16 %v545
      %v1880 = vunpack.c.l.b16 %v546
      %v1881 = vunpack.c.h.b16 %v546
      %v1882 = vunpack.c.l.b16 %v547
      %v1883 = vunpack.c.h.b16 %v547
      %v1884 = vunpack.c.l.b16 %v548
      %v1885 = vunpack.c.h.b16 %v548
      %v1886 = vunpack.c.l.b16 %v549
      %v1887 = vunpack.c.h.b16 %v549
      %v1888 = vunpack.c.l.b16 %v550
      %v1889 = vunpack.c.h.b16 %v550
      %v1890 = vunpack.c.l.b16 %v551
      %v1891 = vunpack.c.h.b16 %v551
      %v1892 = vunpack.c.l.b16 %v552
      %v1893 = vunpack.c.h.b16 %v552
      %v1894 = vunpack.c.l.b16 %v553
      %v1895 = vunpack.c.h.b16 %v553
      %v1896 = vunpack.c.l.b16 %v554
      %v1897 = vunpack.c.h.b16 %v554
      %v1898 = vunpack.c.l.b16 %v555
      %v1899 = vunpack.c.h.b16 %v555
      %v1900 = vunpack.c.l.b16 %v556
      %v1901 = vunpack.c.h.b16 %v556
      %v1902 = vunpack.c.l.b16 %v557
      %v1903 = vunpack.c.h.b16 %v557
      %v1904 = vunpack.c.l.b16 %v558
      %v1905 = vunpack.c.h.b16 %v558
      %v1906 = vunpack.c.l.b16 %v559
      %v1907 = vunpack.c.h.b16 %v559
      %v1908 = vunpack.c.l.b16 %v560
      %v1909 = vunpack.c.h.b16 %v560
      %v1910 = vunpack.c.l.b16 %v561
      %v1911 = vunpack.c.h.b16 %v561
      %v1912 = vunpack.c.l.b16 %v562
      %v1913 = vunpack.c.h.b16 %v562
      %v1914 = vunpack.c.l.b16 %v563
      %v1915 = vunpack.c.h.b16 %v563
      %v1916 = vunpack.c.l.b16 %v564
      %v1917 = vunpack.c.h.b16 %v564
      %v1918 = vunpack.c.l.b16 %v565
      %v1919 = vunpack.c.h.b16 %v565
      %v1920 = vunpack.c.l.b16 %v566
      %v1921 = vunpack.c.h.b16 %v566
      %v1922 = vunpack.c.l.b16 %v567
      %v1923 = vunpack.c.h.b16 %v567
      %v1924 = vunpack.c.l.b16 %v568
      %v1925 = vunpack.c.h.b16 %v568
      %v1926 = vunpack.c.l.b16 %v569
      %v1927 = vunpack.c.h.b16 %v569
      %v1928 = vunpack.c.l.b16 %v570
      %v1929 = vunpack.c.h.b16 %v570
      %v1930 = vunpack.c.l.b16 %v571
      %v1931 = vunpack.c.h.b16 %v571
      %v1932 = vunpack.c.l.b16 %v572
      %v1933 = vunpack.c.h.b16 %v572
      %v1934 = vunpack.c.l.b16 %v573
      %v1935 = vunpack.c.h.b16 %v573
      %v1936 = vunpack.c.l.b16 %v574
      %v1937 = vunpack.c.h.b16 %v574
      %v1938 = vunpack.c.l.b16 %v575
      %v1939 = vunpack.c.h.b16 %v575
      %v1940 = vunpack.c.l.b16 %v576
      %v1941 = vunpack.c.h.b16 %v576
      %v1942 = vunpack.c.l.b16 %v577
      %v1943 = vunpack.c.h.b16 %v577
      %v1944 = vunpack.c.l.b16 %v578
      %v1945 = vunpack.c.h.b16 %v578
      %v1946 = vunpack.c.l.b16 %v579
      %v1947 = vunpack.c.h.b16 %v579
      %v1948 = vunpack.c.l.b16 %v580
      %v1949 = vunpack.c.h.b16 %v580
      %v1950 = vunpack.c.l.b16 %v581
      %v1951 = vunpack.c.h.b16 %v581
      %v1952 = vunpack.c.l.b16 %v582
      %v1953 = vunpack.c.h.b16 %v582
      %v1954 = vunpack.c.l.b16 %v583
      %v1955 = vunpack.c.h.b16 %v583
      %v1956 = vunpack.c.l.b16 %v584
      %v1957 = vunpack.c.h.b16 %v584
      %v1958 = vunpack.c.l.b16 %v585
      %v1959 = vunpack.c.h.b16 %v585
      %v1960 = vunpack.c.l.b16 %v586
      %v1961 = vunpack.c.h.b16 %v586
      %v1962 = vunpack.c.l.b16 %v587
      %v1963 = vunpack.c.h.b16 %v587
      %v1964 = vunpack.c.l.b16 %v588
      %v1965 = vunpack.c.h.b16 %v588
      %v1966 = vunpack.c.l.b16 %v589
      %v1967 = vunpack.c.h.b16 %v589
      %v1968 = vunpack.c.l.b16 %v590
      %v1969 = vunpack.c.h.b16 %v590
      %v1970 = vunpack.c.l.b16 %v591
      %v1971 = vunpack.c.h.b16 %v591
      %v1972 = vunpack.c.l.b16 %v592
      %v1973 = vunpack.c.h.b16 %v592
      %v1974 = vunpack.c.l.b16 %v593
      %v1975 = vunpack.c.h.b16 %v593
      %v1976 = vunpack.c.l.b16 %v594
      %v1977 = vunpack.c.h.b16 %v594
      %v1978 = vunpack.c.l.b16 %v595
      %v1979 = vunpack.c.h.b16 %v595
      %v1980 = vunpack.c.l.b16 %v596
      %v1981 = vunpack.c.h.b16 %v596
      %v1982 = vunpack.c.l.b16 %v597
      %v1983 = vunpack.c.h.b16 %v597
      %v1984 = vunpack.c.l.b16 %v598
      %v1985 = vunpack.c.h.b16 %v598
      %v1986 = vunpack.c.l.b16 %v599
      %v1987 = vunpack.c.h.b16 %v599
      %v1988 = vunpack.c.l.b16 %v600
      %v1989 = vunpack.c.h.b16 %v600
      %v1990 = vunpack.c.l.b16 %v601
      %v1991 = vunpack.c.h.b16 %v601
      %v1992 = vunpack.c.l.b16 %v602
      %v1993 = vunpack.c.h.b16 %v602
      %v1994 = vunpack.c.l.b16 %v603
      %v1995 = vunpack.c.h.b16 %v603
      %v1996 = vunpack.c.l.b16 %v604
      %v1997 = vunpack.c.h.b16 %v604
      %v1998 = vunpack.c.l.b16 %v605
      %v1999 = vunpack.c.h.b16 %v605
      %v2000 = vunpack.c.l.b16 %v606
      %v2001 = vunpack.c.h.b16 %v606
      %v2002 = vunpack.c.l.b16 %v607
      %v2003 = vunpack.c.h.b16 %v607
      %v2004 = vunpack.c.l.b16 %v608
      %v2005 = vunpack.c.h.b16 %v608
      %v2006 = vunpack.c.l.b16 %v609
      %v2007 = vunpack.c.h.b16 %v609
      %v2008 = vunpack.c.l.b16 %v610
      %v2009 = vunpack.c.h.b16 %v610
      %v2010 = vunpack.c.l.b16 %v611
      %v2011 = vunpack.c.h.b16 %v611
      %v2012 = vunpack.c.l.b16 %v612
      %v2013 = vunpack.c.h.b16 %v612
      %v2014 = vunpack.c.l.b16 %v613
      %v2015 = vunpack.c.h.b16 %v613
      %v2016 = vunpack.c.l.b16 %v614
      %v2017 = vunpack.c.h.b16 %v614
      %v2018 = vunpack.c.l.b16 %v615
      %v2019 = vunpack.c.h.b16 %v615
      %v2020 = vunpack.c.l.b16 %v616
      %v2021 = vunpack.c.h.b16 %v616
      %v2022 = vunpack.c.l.b16 %v617
      %v2023 = vunpack.c.h.b16 %v617
      %v2024 = vunpack.c.l.b16 %v618
      %v2025 = vunpack.c.h.b16 %v618
      %v2026 = vunpack.c.l.b16 %v619
      %v2027 = vunpack.c.h.b16 %v619
      %v2028 = vunpack.c.l.b16 %v620
      %v2029 = vunpack.c.h.b16 %v620
      %v2030 = vunpack.c.l.b16 %v621
      %v2031 = vunpack.c.h.b16 %v621
      %v2032 = vunpack.c.l.b16 %v622
      %v2033 = vunpack.c.h.b16 %v622
      %v2034 = vunpack.c.l.b16 %v623
      %v2035 = vunpack.c.h.b16 %v623
      %v2036 = vunpack.c.l.b16 %v624
      %v2037 = vunpack.c.h.b16 %v624
      %v2038 = vunpack.c.l.b16 %v625
      %v2039 = vunpack.c.h.b16 %v625
      %v2040 = vunpack.c.l.b16 %v626
      %v2041 = vunpack.c.h.b16 %v626
      %v2042 = vunpack.c.l.b16 %v627
      %v2043 = vunpack.c.h.b16 %v627
      %v2044 = vunpack.c.l.b16 %v628
      %v2045 = vunpack.c.h.b16 %v628
      %v2046 = vunpack.c.l.b16 %v629
      %v2047 = vunpack.c.h.b16 %v629
      %v2048 = vunpack.c.l.b16 %v630
      %v2049 = vunpack.c.h.b16 %v630
      %v2050 = vunpack.c.l.b16 %v631
      %v2051 = vunpack.c.h.b16 %v631
      %v2052 = vunpack.c.l.b16 %v632
      %v2053 = vunpack.c.h.b16 %v632
      %v2054 = vunpack.c.l.b16 %v633
      %v2055 = vunpack.c.h.b16 %v633
      %v2056 = vunpack.c.l.b16 %v634
      %v2057 = vunpack.c.h.b16 %v634
      %v2058 = vunpack.c.l.b16 %v635
      %v2059 = vunpack.c.h.b16 %v635
      %v2060 = vunpack.c.l.b16 %v636
      %v2061 = vunpack.c.h.b16 %v636
      %v2062 = vunpack.c.l.b16 %v637
      %v2063 = vunpack.c.h.b16 %v637
      %v2064 = vunpack.c.l.b16 %v638
      %v2065 = vunpack.c.h.b16 %v638
      %v2066 = vunpack.c.l.b16 %v639
      %v2067 = vunpack.c.h.b16 %v639
      %v2068 = vunpack.c.l.b16 %v640
      %v2069 = vunpack.c.h.b16 %v640
      %v2070 = vunpack.c.l.b16 %v641
      %v2071 = vunpack.c.h.b16 %v641
      %v2072 = vunpack.c.l.b16 %v642
      %v2073 = vunpack.c.h.b16 %v642
      %v2074 = vunpack.c.l.b16 %v643
      %v2075 = vunpack.c.h.b16 %v643
      %v2076 = vunpack.c.l.b16 %v644
      %v2077 = vunpack.c.h.b16 %v644
      %v2078 = vunpack.c.l.b16 %v645
      %v2079 = vunpack.c.h.b16 %v645
      %v2080 = vunpack.c.l.b16 %v646
      %v2081 = vunpack.c.h.b16 %v646
      %v2082 = vunpack.c.l.b16 %v647
      %v2083 = vunpack.c.h.b16 %v647
      %v2084 = vunpack.c.l.b16 %v648
      %v2085 = vunpack.c.h.b16 %v648
      %v2086 = vunpack.c.l.b16 %v649
      %v2087 = vunpack.c.h.b16 %v649
      %v2088 = vunpack.c.l.b16 %v650
      %v2089 = vunpack.c.h.b16 %v650
      %v2090 = vunpack.c.l.b16 %v651
      %v2091 = vunpack.c.h.b16 %v651
      %v2092 = vunpack.c.l.b16 %v652
      %v2093 = vunpack.c.h.b16 %v652
      %v2094 = vunpack.c.l.b16 %v653
      %v2095 = vunpack.c.h.b16 %v653
      %v2096 = vunpack.c.l.b16 %v654
      %v2097 = vunpack.c.h.b16 %v654
      %v2098 = vunpack.c.l.b16 %v655
      %v2099 = vunpack.c.h.b16 %v655
      %v2100 = vunpack.c.l.b16 %v656
      %v2101 = vunpack.c.h.b16 %v656
      %v2102 = vunpack.c.l.b16 %v657
      %v2103 = vunpack.c.h.b16 %v657
      %v2104 = vunpack.c.l.b16 %v658
      %v2105 = vunpack.c.h.b16 %v658
      %v2106 = vunpack.c.l.b16 %v659
      %v2107 = vunpack.c.h.b16 %v659
      %v2108 = vunpack.c.l.b16 %v660
      %v2109 = vunpack.c.h.b16 %v660
      %v2110 = vunpack.c.l.b16 %v661
      %v2111 = vunpack.c.h.b16 %v661
      %v2112 = vunpack.c.l.b16 %v662
      %v2113 = vunpack.c.h.b16 %v662
      %v2114 = vunpack.c.l.b16 %v663
      %v2115 = vunpack.c.h.b16 %v663
      %v2116 = vunpack.c.l.b16 %v664
      %v2117 = vunpack.c.h.b16 %v664
      %v2118 = vunpack.c.l.b16 %v665
      %v2119 = vunpack.c.h.b16 %v665
      %v2120 = vunpack.c.l.b16 %v666
      %v2121 = vunpack.c.h.b16 %v666
      %v2122 = vunpack.c.l.b16 %v667
      %v2123 = vunpack.c.h.b16 %v667
      %v2124 = vunpack.c.l.b16 %v668
      %v2125 = vunpack.c.h.b16 %v668
      %v2126 = vunpack.c.l.b16 %v669
      %v2127 = vunpack.c.h.b16 %v669
      %v2128 = vunpack.c.l.b16 %v670
      %v2129 = vunpack.c.h.b16 %v670
      %v2130 = vunpack.c.l.b16 %v671
      %v2131 = vunpack.c.h.b16 %v671
      %v2132 = vpack.c.b16 %v1336, %v1332
      %v2133 = vpack.c.b16 %v1337, %v1333
      %v2134 = vpack.c.b16 %v1338, %v1334
      %v2135 = vpack.c.b16 %v1339, %v1335
      %v2136 = vpack.c.b16 %v1344, %v1340
      %v2137 = vpack.c.b16 %v1345, %v1341
      %v2138 = vpack.c.b16 %v1346, %v1342
      %v2139 = vpack.c.b16 %v1347, %v1343
      %v2140 = vpack.c.b16 %v1352, %v1348
      %v2141 = vpack.c.b16 %v1353, %v1349
      %v2142 = vpack.c.b16 %v1354, %v1350
      %v2143 = vpack.c.b16 %v1355, %v1351
      %v2144 = vpack.c.b16 %v1360, %v1356
      %v2145 = vpack.c.b16 %v1361, %v1357
      %v2146 = vpack.c.b16 %v1362, %v1358
      %v2147 = vpack.c.b16 %v1363, %v1359
      %v2148 = vpack.c.b16 %v1368, %v1364
      %v2149 = vpack.c.b16 %v1369, %v1365
      %v2150 = vpack.c.b16 %v1370, %v1366
      %v2151 = vpack.c.b16 %v1371, %v1367
      %v2152 = vpack.c.b16 %v1376, %v1372
      %v2153 = vpack.c.b16 %v1377, %v1373
      %v2154 = vpack.c.b16 %v1378, %v1374
      %v2155 = vpack.c.b16 %v1379, %v1375
      %v2156 = vpack.c.b16 %v1384, %v1380
      %v2157 = vpack.c.b16 %v1385, %v1381
      %v2158 = vpack.c.b16 %v1386, %v1382
      %v2159 = vpack.c.b16 %v1387, %v1383
      %v2160 = vpack.c.b16 %v1392, %v1388
      %v2161 = vpack.c.b16 %v1393, %v1389
      %v2162 = vpack.c.b16 %v1394, %v1390
      %v2163 = vpack.c.b16 %v1395, %v1391
      %v2164 = vpack.c.b16 %v1400, %v1396
      %v2165 = vpack.c.b16 %v1401, %v1397
      %v2166 = vpack.c.b16 %v1402, %v1398
      %v2167 = vpack.c.b16 %v1403, %v1399
      %v2168 = vpack.c.b16 %v1408, %v1404
      %v2169 = vpack.c.b16 %v1409, %v1405
      %v2170 = vpack.c.b16 %v1410, %v1406
      %v2171 = vpack.c.b16 %v1411, %v1407
      %v2172 = vpack.c.b16 %v1416, %v1412
      %v2173 = vpack.c.b16 %v1417, %v1413
      %v2174 = vpack.c.b16 %v1418, %v1414
      %v2175 = vpack.c.b16 %v1419, %v1415
      %v2176 = vpack.c.b16 %v1424, %v1420
      %v2177 = vpack.c.b16 %v1425, %v1421
      %v2178 = vpack.c.b16 %v1426, %v1422
      %v2179 = vpack.c.b16 %v1427, %v1423
      %v2180 = vpack.c.b16 %v1432, %v1428
      %v2181 = vpack.c.b16 %v1433, %v1429
      %v2182 = vpack.c.b16 %v1434, %v1430
      %v2183 = vpack.c.b16 %v1435, %v1431
      %v2184 = vpack.c.b16 %v1440, %v1436
      %v2185 = vpack.c.b16 %v1441, %v1437
      %v2186 = vpack.c.b16 %v1442, %v1438
      %v2187 = vpack.c.b16 %v1443, %v1439
      %v2188 = vpack.c.b16 %v1448, %v1444
      %v2189 = vpack.c.b16 %v1449, %v1445
      %v2190 = vpack.c.b16 %v1450, %v1446
      %v2191 = vpack.c.b16 %v1451, %v1447
      %v2192 = vpack.c.b16 %v1456, %v1452
      %v2193 = vpack.c.b16 %v1457, %v1453
      %v2194 = vpack.c.b16 %v1458, %v1454
      %v2195 = vpack.c.b16 %v1459, %v1455
      %v2196 = vpack.c.b16 %v1464, %v1460
      %v2197 = vpack.c.b16 %v1465, %v1461
      %v2198 = vpack.c.b16 %v1466, %v1462
      %v2199 = vpack.c.b16 %v1467, %v1463
      %v2200 = vpack.c.b16 %v1472, %v1468
      %v2201 = vpack.c.b16 %v1473, %v1469
      %v2202 = vpack.c.b16 %v1474, %v1470
      %v2203 = vpack.c.b16 %v1475, %v1471
      %v2204 = vpack.c.b16 %v1480, %v1476
      %v2205 = vpack.c.b16 %v1481, %v1477
      %v2206 = vpack.c.b16 %v1482, %v1478
      %v2207 = vpack.c.b16 %v1483, %v1479
      %v2208 = vpack.c.b16 %v1488, %v1484
      %v2209 = vpack.c.b16 %v1489, %v1485
      %v2210 = vpack.c.b16 %v1490, %v1486
      %v2211 = vpack.c.b16 %v1491, %v1487
      %v2212 = vpack.c.b16 %v1496, %v1492
      %v2213 = vpack.c.b16 %v1497, %v1493
      %v2214 = vpack.c.b16 %v1498, %v1494
      %v2215 = vpack.c.b16 %v1499, %v1495
      %v2216 = vpack.c.b16 %v1504, %v1500
      %v2217 = vpack.c.b16 %v1505, %v1501
      %v2218 = vpack.c.b16 %v1506, %v1502
      %v2219 = vpack.c.b16 %v1507, %v1503
      %v2220 = vpack.c.b16 %v1512, %v1508
      %v2221 = vpack.c.b16 %v1513, %v1509
      %v2222 = vpack.c.b16 %v1514, %v1510
      %v2223 = vpack.c.b16 %v1515, %v1511
      %v2224 = vpack.c.b16 %v1520, %v1516
      %v2225 = vpack.c.b16 %v1521, %v1517
      %v2226 = vpack.c.b16 %v1522, %v1518
      %v2227 = vpack.c.b16 %v1523, %v1519
      %v2228 = vpack.c.b16 %v1528, %v1524
      %v2229 = vpack.c.b16 %v1529, %v1525
      %v2230 = vpack.c.b16 %v1530, %v1526
      %v2231 = vpack.c.b16 %v1531, %v1527
      %v2232 = vpack.c.b16 %v1536, %v1532
      %v2233 = vpack.c.b16 %v1537, %v1533
      %v2234 = vpack.c.b16 %v1538, %v1534
      %v2235 = vpack.c.b16 %v1539, %v1535
      %v2236 = vpack.c.b16 %v1544, %v1540
      %v2237 = vpack.c.b16 %v1545, %v1541
      %v2238 = vpack.c.b16 %v1546, %v1542
      %v2239 = vpack.c.b16 %v1547, %v1543
      %v2240 = vpack.c.b16 %v1552, %v1548
      %v2241 = vpack.c.b16 %v1553, %v1549
      %v2242 = vpack.c.b16 %v1554, %v1550
      %v2243 = vpack.c.b16 %v1555, %v1551
      %v2244 = vpack.c.b16 %v1560, %v1556
      %v2245 = vpack.c.b16 %v1561, %v1557
      %v2246 = vpack.c.b16 %v1562, %v1558
      %v2247 = vpack.c.b16 %v1563, %v1559
      %v2248 = vpack.c.b16 %v1568, %v1564
      %v2249 = vpack.c.b16 %v1569, %v1565
      %v2250 = vpack.c.b16 %v1570, %v1566
      %v2251 = vpack.c.b16 %v1571, %v1567
      %v2252 = vpack.c.b16 %v1576, %v1572
      %v2253 = vpack.c.b16 %v1577, %v1573
      %v2254 = vpack.c.b16 %v1578, %v1574
      %v2255 = vpack.c.b16 %v1579, %v1575
      %v2256 = vpack.c.b16 %v1584, %v1580
      %v2257 = vpack.c.b16 %v1585, %v1581
      %v2258 = vpack.c.b16 %v1586, %v1582
      %v2259 = vpack.c.b16 %v1587, %v1583
      %v2260 = vpack.c.b16 %v1592, %v1588
      %v2261 = vpack.c.b16 %v1593, %v1589
      %v2262 = vpack.c.b16 %v1594, %v1590
      %v2263 = vpack.c.b16 %v1595, %v1591
      %v2264 = vpack.c.b16 %v1600, %v1596
      %v2265 = vpack.c.b16 %v1601, %v1597
      %v2266 = vpack.c.b16 %v1602, %v1598
      %v2267 = vpack.c.b16 %v1603, %v1599
      %v2268 = vpack.c.b16 %v1608, %v1604
      %v2269 = vpack.c.b16 %v1609, %v1605
      %v2270 = vpack.c.b16 %v1610, %v1606
      %v2271 = vpack.c.b16 %v1611, %v1607
      %v2272 = vpack.c.b16 %v1616, %v1612
      %v2273 = vpack.c.b16 %v1617, %v1613
      %v2274 = vpack.c.b16 %v1618, %v1614
      %v2275 = vpack.c.b16 %v1619, %v1615
      %v2276 = vpack.c.b16 %v1624, %v1620
      %v2277 = vpack.c.b16 %v1625, %v1621
      %v2278 = vpack.c.b16 %v1626, %v1622
      %v2279 = vpack.c.b16 %v1627, %v1623
      %v2280 = vpack.c.b16 %v1632, %v1628
      %v2281 = vpack.c.b16 %v1633, %v1629
      %v2282 = vpack.c.b16 %v1634, %v1630
      %v2283 = vpack.c.b16 %v1635, %v1631
      %v2284 = vpack.c.b16 %v1640, %v1636
      %v2285 = vpack.c.b16 %v1641, %v1637
      %v2286 = vpack.c.b16 %v1642, %v1638
      %v2287 = vpack.c.b16 %v1643, %v1639
      %v2288 = vpack.c.b16 %v1648, %v1644
      %v2289 = vpack.c.b16 %v1649, %v1645
      %v2290 = vpack.c.b16 %v1650, %v1646
      %v2291 = vpack.c.b16 %v1651, %v1647
      %v2292 = vpack.c.b16 %v1656, %v1652
      %v2293 = vpack.c.b16 %v1657, %v1653
      %v2294 = vpack.c.b16 %v1658, %v1654
      %v2295 = vpack.c.b16 %v1659, %v1655
      %v2296 = vpack.c.b16 %v1664, %v1660
      %v2297 = vpack.c.b16 %v1665, %v1661
      %v2298 = vpack.c.b16 %v1666, %v1662
      %v2299 = vpack.c.b16 %v1667, %v1663
      %v2300 = vpack.c.b16 %v1672, %v1668
      %v2301 = vpack.c.b16 %v1673, %v1669
      %v2302 = vpack.c.b16 %v1674, %v1670
      %v2303 = vpack.c.b16 %v1675, %v1671
      %v2304 = vpack.c.b16 %v1680, %v1676
      %v2305 = vpack.c.b16 %v1681, %v1677
      %v2306 = vpack.c.b16 %v1682, %v1678
      %v2307 = vpack.c.b16 %v1683, %v1679
      %v2308 = vpack.c.b16 %v1688, %v1684
      %v2309 = vpack.c.b16 %v1689, %v1685
      %v2310 = vpack.c.b16 %v1690, %v1686
      %v2311 = vpack.c.b16 %v1691, %v1687
      %v2312 = vpack.c.b16 %v1696, %v1692
      %v2313 = vpack.c.b16 %v1697, %v1693
      %v2314 = vpack.c.b16 %v1698, %v1694
      %v2315 = vpack.c.b16 %v1699, %v1695
      %v2316 = vpack.c.b16 %v1704, %v1700
      %v2317 = vpack.c.b16 %v1705, %v1701
      %v2318 = vpack.c.b16 %v1706, %v1702
      %v2319 = vpack.c.b16 %v1707, %v1703
      %v2320 = vpack.c.b16 %v1712, %v1708
      %v2321 = vpack.c.b16 %v1713, %v1709
      %v2322 = vpack.c.b16 %v1714, %v1710
      %v2323 = vpack.c.b16 %v1715, %v1711
      %v2324 = vpack.c.b16 %v1720, %v1716
      %v2325 = vpack.c.b16 %v1721, %v1717
      %v2326 = vpack.c.b16 %v1722, %v1718
      %v2327 = vpack.c.b16 %v1723, %v1719
      %v2328 = vpack.c.b16 %v1728, %v1724
      %v2329 = vpack.c.b16 %v1729, %v1725
      %v2330 = vpack.c.b16 %v1730, %v1726
      %v2331 = vpack.c.b16 %v1731, %v1727
      %v2332 = vpack.c.b16 %v1736, %v1732
      %v2333 = vpack.c.b16 %v1737, %v1733
      %v2334 = vpack.c.b16 %v1738, %v1734
      %v2335 = vpack.c.b16 %v1739, %v1735
      %v2336 = vpack.c.b16 %v1744, %v1740
      %v2337 = vpack.c.b16 %v1745, %v1741
      %v2338 = vpack.c.b16 %v1746, %v1742
      %v2339 = vpack.c.b16 %v1747, %v1743
      %v2340 = vpack.c.b16 %v1752, %v1748
      %v2341 = vpack.c.b16 %v1753, %v1749
      %v2342 = vpack.c.b16 %v1754, %v1750
      %v2343 = vpack.c.b16 %v1755, %v1751
      %v2344 = vpack.c.b16 %v1760, %v1756
      %v2345 = vpack.c.b16 %v1761, %v1757
      %v2346 = vpack.c.b16 %v1762, %v1758
      %v2347 = vpack.c.b16 %v1763, %v1759
      %v2348 = vpack.c.b16 %v1768, %v1764
      %v2349 = vpack.c.b16 %v1769, %v1765
      %v2350 = vpack.c.b16 %v1770, %v1766
      %v2351 = vpack.c.b16 %v1771, %v1767
      %v2352 = vpack.c.b16 %v1776, %v1772
      %v2353 = vpack.c.b16 %v1777, %v1773
      %v2354 = vpack.c.b16 %v1778, %v1774
      %v2355 = vpack.c.b16 %v1779, %v1775
      %v2356 = vpack.c.b16 %v1784, %v1780
      %v2357 = vpack.c.b16 %v1785, %v1781
      %v2358 = vpack.c.b16 %v1786, %v1782
      %v2359 = vpack.c.b16 %v1787, %v1783
      %v2360 = vpack.c.b16 %v1792, %v1788
      %v2361 = vpack.c.b16 %v1793, %v1789
      %v2362 = vpack.c.b16 %v1794, %v1790
      %v2363 = vpack.c.b16 %v1795, %v1791
      %v2364 = vpack.c.b16 %v1800, %v1796
      %v2365 = vpack.c.b16 %v1801, %v1797
      %v2366 = vpack.c.b16 %v1802, %v1798
      %v2367 = vpack.c.b16 %v1803, %v1799
      %v2368 = vpack.c.b16 %v1808, %v1804
      %v2369 = vpack.c.b16 %v1809, %v1805
      %v2370 = vpack.c.b16 %v1810, %v1806
      %v2371 = vpack.c.b16 %v1811, %v1807
      %v2372 = vpack.c.b16 %v1816, %v1812
      %v2373 = vpack.c.b16 %v1817, %v1813
      %v2374 = vpack.c.b16 %v1818, %v1814
      %v2375 = vpack.c.b16 %v1819, %v1815
      %v2376 = vpack.c.b16 %v1824, %v1820
      %v2377 = vpack.c.b16 %v1825, %v1821
      %v2378 = vpack.c.b16 %v1826, %v1822
      %v2379 = vpack.c.b16 %v1827, %v1823
      %v2380 = vpack.c.b16 %v1832, %v1828
      %v2381 = vpack.c.b16 %v1833, %v1829
      %v2382 = vpack.c.b16 %v1834, %v1830
      %v2383 = vpack.c.b16 %v1835, %v1831
      %v2384 = vpack.c.b16 %v1840, %v1836
      %v2385 = vpack.c.b16 %v1841, %v1837
      %v2386 = vpack.c.b16 %v1842, %v1838
      %v2387 = vpack.c.b16 %v1843, %v1839
      %v2388 = vpack.c.b16 %v1848, %v1844
      %v2389 = vpack.c.b16 %v1849, %v1845
      %v2390 = vpack.c.b16 %v1850, %v1846
      %v2391 = vpack.c.b16 %v1851, %v1847
      %v2392 = vpack.c.b16 %v1856, %v1852
      %v2393 = vpack.c.b16 %v1857, %v1853
      %v2394 = vpack.c.b16 %v1858, %v1854
      %v2395 = vpack.c.b16 %v1859, %v1855
      %v2396 = vpack.c.b16 %v1864, %v1860
      %v2397 = vpack.c.b16 %v1865, %v1861
      %v2398 = vpack.c.b16 %v1866, %v1862
      %v2399 = vpack.c.b16 %v1867, %v1863
      %v2400 = vpack.c.b16 %v1872, %v1868
      %v2401 = vpack.c.b16 %v1873, %v1869
      %v2402 = vpack.c.b16 %v1874, %v1870
      %v2403 = vpack.c.b16 %v1875, %v1871
      %v2404 = vpack.c.b16 %v1880, %v1876
      %v2405 = vpack.c.b16 %v1881, %v1877
      %v2406 = vpack.c.b16 %v1882, %v1878
      %v2407 = vpack.c.b16 %v1883, %v1879
      %v2408 = vpack.c.b16 %v1888, %v1884
      %v2409 = vpack.c.b16 %v1889, %v1885
      %v2410 = vpack.c.b16 %v1890, %v1886
      %v2411 = vpack.c.b16 %v1891, %v1887
      %v2412 = vpack.c.b16 %v1896, %v1892
      %v2413 = vpack.c.b16 %v1897, %v1893
      %v2414 = vpack.c.b16 %v1898, %v1894
      %v2415 = vpack.c.b16 %v1899, %v1895
      %v2416 = vpack.c.b16 %v1904, %v1900
      %v2417 = vpack.c.b16 %v1905, %v1901
      %v2418 = vpack.c.b16 %v1906, %v1902
      %v2419 = vpack.c.b16 %v1907, %v1903
      %v2420 = vpack.c.b16 %v1912, %v1908
      %v2421 = vpack.c.b16 %v1913, %v1909
      %v2422 = vpack.c.b16 %v1914, %v1910
      %v2423 = vpack.c.b16 %v1915, %v1911
      %v2424 = vpack.c.b16 %v1920, %v1916
      %v2425 = vpack.c.b16 %v1921, %v1917
      %v2426 = vpack.c.b16 %v1922, %v1918
      %v2427 = vpack.c.b16 %v1923, %v1919
      %v2428 = vpack.c.b16 %v1928, %v1924
      %v2429 = vpack.c.b16 %v1929, %v1925
      %v2430 = vpack.c.b16 %v1930, %v1926
      %v2431 = vpack.c.b16 %v1931, %v1927
      %v2432 = vpack.c.b16 %v1936, %v1932
      %v2433 = vpack.c.b16 %v1937, %v1933
      %v2434 = vpack.c.b16 %v1938, %v1934
      %v2435 = vpack.c.b16 %v1939, %v1935
      %v2436 = vpack.c.b16 %v1944, %v1940
      %v2437 = vpack.c.b16 %v1945, %v1941
      %v2438 = vpack.c.b16 %v1946, %v1942
      %v2439 = vpack.c.b16 %v1947, %v1943
      %v2440 = vpack.c.b16 %v1952, %v1948
      %v2441 = vpack.c.b16 %v1953, %v1949
      %v2442 = vpack.c.b16 %v1954, %v1950
      %v2443 = vpack.c.b16 %v1955, %v1951
      %v2444 = vpack.c.b16 %v1960, %v1956
      %v2445 = vpack.c.b16 %v1961, %v1957
      %v2446 = vpack.c.b16 %v1962, %v1958
      %v2447 = vpack.c.b16 %v1963, %v1959
      %v2448 = vpack.c.b16 %v1968, %v1964
      %v2449 = vpack.c.b16 %v1969, %v1965
      %v2450 = vpack.c.b16 %v1970, %v1966
      %v2451 = vpack.c.b16 %v1971, %v1967
      %v2452 = vpack.c.b16 %v1976, %v1972
      %v2453 = vpack.c.b16 %v1977, %v1973
      %v2454 = vpack.c.b16 %v1978, %v1974
      %v2455 = vpack.c.b16 %v1979, %v1975
      %v2456 = vpack.c.b16 %v1984, %v1980
      %v2457 = vpack.c.b16 %v1985, %v1981
      %v2458 = vpack.c.b16 %v1986, %v1982
      %v2459 = vpack.c.b16 %v1987, %v1983
      %v2460 = vpack.c.b16 %v1992, %v1988
      %v2461 = vpack.c.b16 %v1993, %v1989
      %v2462 = vpack.c.b16 %v1994, %v1990
      %v2463 = vpack.c.b16 %v1995, %v1991
      %v2464 = vpack.c.b16 %v2000, %v1996
      %v2465 = vpack.c.b16 %v2001, %v1997
      %v2466 = vpack.c.b16 %v2002, %v1998
      %v2467 = vpack.c.b16 %v2003, %v1999
      %v2468 = vpack.c.b16 %v2008, %v2004
      %v2469 = vpack.c.b16 %v2009, %v2005
      %v2470 = vpack.c.b16 %v2010, %v2006
      %v2471 = vpack.c.b16 %v2011, %v2007
      %v2472 = vpack.c.b16 %v2016, %v2012
      %v2473 = vpack.c.b16 %v2017, %v2013
      %v2474 = vpack.c.b16 %v2018, %v2014
      %v2475 = vpack.c.b16 %v2019, %v2015
      %v2476 = vpack.c.b16 %v2024, %v2020
      %v2477 = vpack.c.b16 %v2025, %v2021
      %v2478 = vpack.c.b16 %v2026, %v2022
      %v2479 = vpack.c.b16 %v2027, %v2023
      %v2480 = vpack.c.b16 %v2032, %v2028
      %v2481 = vpack.c.b16 %v2033, %v2029
      %v2482 = vpack.c.b16 %v2034, %v2030
      %v2483 = vpack.c.b16 %v2035, %v2031
      %v2484 = vpack.c.b16 %v2040, %v2036
      %v2485 = vpack.c.b16 %v2041, %v2037
      %v2486 = vpack.c.b16 %v2042, %v2038
      %v2487 = vpack.c.b16 %v2043, %v2039
      %v2488 = vpack.c.b16 %v2048, %v2044
      %v2489 = vpack.c.b16 %v2049, %v2045
      %v2490 = vpack.c.b16 %v2050, %v2046
      %v2491 = vpack.c.b16 %v2051, %v2047
      %v2492 = vpack.c.b16 %v2056, %v2052
      %v2493 = vpack.c.b16 %v2057, %v2053
      %v2494 = vpack.c.b16 %v2058, %v2054
      %v2495 = vpack.c.b16 %v2059, %v2055
      %v2496 = vpack.c.b16 %v2064, %v2060
      %v2497 = vpack.c.b16 %v2065, %v2061
      %v2498 = vpack.c.b16 %v2066, %v2062
      %v2499 = vpack.c.b16 %v2067, %v2063
      %v2500 = vpack.c.b16 %v2072, %v2068
      %v2501 = vpack.c.b16 %v2073, %v2069
      %v2502 = vpack.c.b16 %v2074, %v2070
      %v2503 = vpack.c.b16 %v2075, %v2071
      %v2504 = vpack.c.b16 %v2080, %v2076
      %v2505 = vpack.c.b16 %v2081, %v2077
      %v2506 = vpack.c.b16 %v2082, %v2078
      %v2507 = vpack.c.b16 %v2083, %v2079
      %v2508 = vpack.c.b16 %v2088, %v2084
      %v2509 = vpack.c.b16 %v2089, %v2085
      %v2510 = vpack.c.b16 %v2090, %v2086
      %v2511 = vpack.c.b16 %v2091, %v2087
      %v2512 = vpack.c.b16 %v2096, %v2092
      %v2513 = vpack.c.b16 %v2097, %v2093
      %v2514 = vpack.c.b16 %v2098, %v2094
      %v2515 = vpack.c.b16 %v2099, %v2095
      %v2516 = vpack.c.b16 %v2104, %v2100
      %v2517 = vpack.c.b16 %v2105, %v2101
      %v2518 = vpack.c.b16 %v2106, %v2102
      %v2519 = vpack.c.b16 %v2107, %v2103
      %v2520 = vpack.c.b16 %v2112, %v2108
      %v2521 = vpack.c.b16 %v2113, %v2109
      %v2522 = vpack.c.b16 %v2114, %v2110
      %v2523 = vpack.c.b16 %v2115, %v2111
      %v2524 = vpack.c.b16 %v2120, %v2116
      %v2525 = vpack.c.b16 %v2121, %v2117
      %v2526 = vpack.c.b16 %v2122, %v2118
      %v2527 = vpack.c.b16 %v2123, %v2119
      %v2528 = vpack.c.b16 %v2128, %v2124
      %v2529 = vpack.c.b16 %v2129, %v2125
      %v2530 = vpack.c.b16 %v2130, %v2126
      %v2531 = vpack.c.b16 %v2131, %v2127
      %vm2932 = vcmask 523264
      %v2934 = vsel %vm2932, %v844, 0
      %v2937 = vsel %vm2932, %v857, 0
      %v2940 = vsel %vm2932, %v870, 0
      %v2943 = vsel %vm2932, %v883, 0
      %2945 = vmatprep.subr.bf16.mxu0 %v2161
      %2946 = vmatpush1.bf16.msra.mxu0 %v2160
      %2947 = vmatprep.subr.bf16.mxu0 %v2157
      %2948 = vmatpush1.bf16.msra.mxu0 %v2156
      %2949 = vmatprep.subr.bf16.mxu0 %v2153
      %2950 = vmatpush1.bf16.msra.mxu0 %v2152
      %2951 = vmatprep.subr.bf16.mxu0 %v2149
      %2952 = vmatpush1.bf16.msra.mxu0 %v2148
      %2953 = vmatprep.subr.bf16.mxu0 %v2145
      %2954 = vmatpush1.bf16.msra.mxu0 %v2144
      %2955 = vmatprep.subr.bf16.mxu0 %v2141
      %2956 = vmatpush1.bf16.msra.mxu0 %v2140
      %2957 = vmatprep.subr.bf16.mxu0 %v2137
      %2958 = vmatpush1.bf16.msra.mxu0 %v2136
      %2959 = vmatprep.subr.bf16.mxu0 %v2133
      %2960 = vmatpush1.bf16.msra.mxu0 %v2132
      %2961 = vmatprep.subr.bf16.mxu0 %v2193
      %2962 = vmatpush2.bf16.msra.mxu0 %v2192
      %2963 = vmatprep.subr.bf16.mxu0 %v2189
      %2964 = vmatpush2.bf16.msra.mxu0 %v2188
      %2965 = vmatprep.subr.bf16.mxu0 %v2185
      %2966 = vmatpush2.bf16.msra.mxu0 %v2184
      %2967 = vmatprep.subr.bf16.mxu0 %v2181
      %2968 = vmatpush2.bf16.msra.mxu0 %v2180
      %2969 = vmatprep.subr.bf16.mxu0 %v2177
      %2970 = vmatpush2.bf16.msra.mxu0 %v2176
      %2971 = vmatprep.subr.bf16.mxu0 %v2173
      %2972 = vmatpush2.bf16.msra.mxu0 %v2172
      %2973 = vmatprep.subr.bf16.mxu0 %v2169
      %2974 = vmatpush2.bf16.msra.mxu0 %v2168
      %2975 = vmatprep.subr.bf16.mxu0 %v2165
      %2976 = vmatpush2.bf16.msra.mxu0 %v2164
      %2977 = vmatprep.mubr.bf16.mxu0 %v833
      %2978 = vmatmul.mubr.bf16.gmra.mxu0 %v832
      %v2979 = vpop.f32.mrf.mxu0
      %v2980 = vadd.f32 0.0, %v2979
      %v2981 = vpop.f32.mrf.mxu0
      %v2982 = vadd.f32 0.0, %v2981
      %v2983 = vpop.f32.mrf.mxu0
      %v2984 = vadd.f32 0.0, %v2983
      %v2985 = vpop.f32.mrf.mxu0
      %v2986 = vadd.f32 0.0, %v2985
      %2987 = vmatprep.mubr.bf16.mxu0 %v846
      %2988 = vmatmul.mubr.bf16.gmra.mxu0 %v845
      %v2989 = vpop.f32.mrf.mxu0
      %v2990 = vadd.f32 0.0, %v2989
      %v2991 = vpop.f32.mrf.mxu0
      %v2992 = vadd.f32 0.0, %v2991
      %v2993 = vpop.f32.mrf.mxu0
      %v2994 = vadd.f32 0.0, %v2993
      %v2995 = vpop.f32.mrf.mxu0
      %v2996 = vadd.f32 0.0, %v2995
      %2997 = vmatprep.mubr.bf16.mxu0 %v859
      %2998 = vmatmul.mubr.bf16.gmra.mxu0 %v858
      %v2999 = vpop.f32.mrf.mxu0
      %v3000 = vadd.f32 0.0, %v2999
      %v3001 = vpop.f32.mrf.mxu0
      %v3002 = vadd.f32 0.0, %v3001
      %v3003 = vpop.f32.mrf.mxu0
      %v3004 = vadd.f32 0.0, %v3003
      %v3005 = vpop.f32.mrf.mxu0
      %v3006 = vadd.f32 0.0, %v3005
      %3007 = vmatprep.mubr.bf16.mxu0 %v872
      %3008 = vmatmul.mubr.bf16.gmra.mxu0 %v871
      %v3009 = vpop.f32.mrf.mxu0
      %v3010 = vadd.f32 0.0, %v3009
      %v3011 = vpop.f32.mrf.mxu0
      %v3012 = vadd.f32 0.0, %v3011
      %v3013 = vpop.f32.mrf.mxu0
      %v3014 = vadd.f32 0.0, %v3013
      %v3015 = vpop.f32.mrf.mxu0
      %v3016 = vadd.f32 0.0, %v3015
      %3017 = vdwg.mxu0
      %3018 = vmatprep.subr.bf16.mxu0 %v2225
      %3019 = vmatpush1.bf16.msra.mxu0 %v2224
      %3020 = vmatprep.subr.bf16.mxu0 %v2221
      %3021 = vmatpush1.bf16.msra.mxu0 %v2220
      %3022 = vmatprep.subr.bf16.mxu0 %v2217
      %3023 = vmatpush1.bf16.msra.mxu0 %v2216
      %3024 = vmatprep.subr.bf16.mxu0 %v2213
      %3025 = vmatpush1.bf16.msra.mxu0 %v2212
      %3026 = vmatprep.subr.bf16.mxu0 %v2209
      %3027 = vmatpush1.bf16.msra.mxu0 %v2208
      %3028 = vmatprep.subr.bf16.mxu0 %v2205
      %3029 = vmatpush1.bf16.msra.mxu0 %v2204
      %3030 = vmatprep.subr.bf16.mxu0 %v2201
      %3031 = vmatpush1.bf16.msra.mxu0 %v2200
      %3032 = vmatprep.subr.bf16.mxu0 %v2197
      %3033 = vmatpush1.bf16.msra.mxu0 %v2196
      %3034 = vmatprep.subr.bf16.mxu0 %v2257
      %3035 = vmatpush2.bf16.msra.mxu0 %v2256
      %3036 = vmatprep.subr.bf16.mxu0 %v2253
      %3037 = vmatpush2.bf16.msra.mxu0 %v2252
      %3038 = vmatprep.subr.bf16.mxu0 %v2249
      %3039 = vmatpush2.bf16.msra.mxu0 %v2248
      %3040 = vmatprep.subr.bf16.mxu0 %v2245
      %3041 = vmatpush2.bf16.msra.mxu0 %v2244
      %3042 = vmatprep.subr.bf16.mxu0 %v2241
      %3043 = vmatpush2.bf16.msra.mxu0 %v2240
      %3044 = vmatprep.subr.bf16.mxu0 %v2237
      %3045 = vmatpush2.bf16.msra.mxu0 %v2236
      %3046 = vmatprep.subr.bf16.mxu0 %v2233
      %3047 = vmatpush2.bf16.msra.mxu0 %v2232
      %3048 = vmatprep.subr.bf16.mxu0 %v2229
      %3049 = vmatpush2.bf16.msra.mxu0 %v2228
      %3050 = vmatprep.mubr.bf16.mxu0 %v835
      %3051 = vmatmul.mubr.bf16.gmra.mxu0 %v834
      %v3052 = vpop.f32.mrf.mxu0
      %v3053 = vadd.f32 %v2980, %v3052
      %v3054 = vpop.f32.mrf.mxu0
      %v3055 = vadd.f32 %v2982, %v3054
      %v3056 = vpop.f32.mrf.mxu0
      %v3057 = vadd.f32 %v2984, %v3056
      %v3058 = vpop.f32.mrf.mxu0
      %v3059 = vadd.f32 %v2986, %v3058
      %3060 = vmatprep.mubr.bf16.mxu0 %v848
      %3061 = vmatmul.mubr.bf16.gmra.mxu0 %v847
      %v3062 = vpop.f32.mrf.mxu0
      %v3063 = vadd.f32 %v2990, %v3062
      %v3064 = vpop.f32.mrf.mxu0
      %v3065 = vadd.f32 %v2992, %v3064
      %v3066 = vpop.f32.mrf.mxu0
      %v3067 = vadd.f32 %v2994, %v3066
      %v3068 = vpop.f32.mrf.mxu0
      %v3069 = vadd.f32 %v2996, %v3068
      %3070 = vmatprep.mubr.bf16.mxu0 %v861
      %3071 = vmatmul.mubr.bf16.gmra.mxu0 %v860
      %v3072 = vpop.f32.mrf.mxu0
      %v3073 = vadd.f32 %v3000, %v3072
      %v3074 = vpop.f32.mrf.mxu0
      %v3075 = vadd.f32 %v3002, %v3074
      %v3076 = vpop.f32.mrf.mxu0
      %v3077 = vadd.f32 %v3004, %v3076
      %v3078 = vpop.f32.mrf.mxu0
      %v3079 = vadd.f32 %v3006, %v3078
      %3080 = vmatprep.mubr.bf16.mxu0 %v874
      %3081 = vmatmul.mubr.bf16.gmra.mxu0 %v873
      %v3082 = vpop.f32.mrf.mxu0
      %v3083 = vadd.f32 %v3010, %v3082
      %v3084 = vpop.f32.mrf.mxu0
      %v3085 = vadd.f32 %v3012, %v3084
      %v3086 = vpop.f32.mrf.mxu0
      %v3087 = vadd.f32 %v3014, %v3086
      %v3088 = vpop.f32.mrf.mxu0
      %v3089 = vadd.f32 %v3016, %v3088
      %3090 = vdwg.mxu0
      %3091 = vmatprep.subr.bf16.mxu0 %v2289
      %3092 = vmatpush1.bf16.msra.mxu0 %v2288
      %3093 = vmatprep.subr.bf16.mxu0 %v2285
      %3094 = vmatpush1.bf16.msra.mxu0 %v2284
      %3095 = vmatprep.subr.bf16.mxu0 %v2281
      %3096 = vmatpush1.bf16.msra.mxu0 %v2280
      %3097 = vmatprep.subr.bf16.mxu0 %v2277
      %3098 = vmatpush1.bf16.msra.mxu0 %v2276
      %3099 = vmatprep.subr.bf16.mxu0 %v2273
      %3100 = vmatpush1.bf16.msra.mxu0 %v2272
      %3101 = vmatprep.subr.bf16.mxu0 %v2269
      %3102 = vmatpush1.bf16.msra.mxu0 %v2268
      %3103 = vmatprep.subr.bf16.mxu0 %v2265
      %3104 = vmatpush1.bf16.msra.mxu0 %v2264
      %3105 = vmatprep.subr.bf16.mxu0 %v2261
      %3106 = vmatpush1.bf16.msra.mxu0 %v2260
      %3107 = vmatprep.subr.bf16.mxu0 %v2321
      %3108 = vmatpush2.bf16.msra.mxu0 %v2320
      %3109 = vmatprep.subr.bf16.mxu0 %v2317
      %3110 = vmatpush2.bf16.msra.mxu0 %v2316
      %3111 = vmatprep.subr.bf16.mxu0 %v2313
      %3112 = vmatpush2.bf16.msra.mxu0 %v2312
      %3113 = vmatprep.subr.bf16.mxu0 %v2309
      %3114 = vmatpush2.bf16.msra.mxu0 %v2308
      %3115 = vmatprep.subr.bf16.mxu0 %v2305
      %3116 = vmatpush2.bf16.msra.mxu0 %v2304
      %3117 = vmatprep.subr.bf16.mxu0 %v2301
      %3118 = vmatpush2.bf16.msra.mxu0 %v2300
      %3119 = vmatprep.subr.bf16.mxu0 %v2297
      %3120 = vmatpush2.bf16.msra.mxu0 %v2296
      %3121 = vmatprep.subr.bf16.mxu0 %v2293
      %3122 = vmatpush2.bf16.msra.mxu0 %v2292
      %3123 = vmatprep.mubr.bf16.mxu0 %v837
      %3124 = vmatmul.mubr.bf16.gmra.mxu0 %v836
      %v3125 = vpop.f32.mrf.mxu0
      %v3126 = vadd.f32 %v3053, %v3125
      %v3127 = vpop.f32.mrf.mxu0
      %v3128 = vadd.f32 %v3055, %v3127
      %v3129 = vpop.f32.mrf.mxu0
      %v3130 = vadd.f32 %v3057, %v3129
      %v3131 = vpop.f32.mrf.mxu0
      %v3132 = vadd.f32 %v3059, %v3131
      %3133 = vmatprep.mubr.bf16.mxu0 %v850
      %3134 = vmatmul.mubr.bf16.gmra.mxu0 %v849
      %v3135 = vpop.f32.mrf.mxu0
      %v3136 = vadd.f32 %v3063, %v3135
      %v3137 = vpop.f32.mrf.mxu0
      %v3138 = vadd.f32 %v3065, %v3137
      %v3139 = vpop.f32.mrf.mxu0
      %v3140 = vadd.f32 %v3067, %v3139
      %v3141 = vpop.f32.mrf.mxu0
      %v3142 = vadd.f32 %v3069, %v3141
      %3143 = vmatprep.mubr.bf16.mxu0 %v863
      %3144 = vmatmul.mubr.bf16.gmra.mxu0 %v862
      %v3145 = vpop.f32.mrf.mxu0
      %v3146 = vadd.f32 %v3073, %v3145
      %v3147 = vpop.f32.mrf.mxu0
      %v3148 = vadd.f32 %v3075, %v3147
      %v3149 = vpop.f32.mrf.mxu0
      %v3150 = vadd.f32 %v3077, %v3149
      %v3151 = vpop.f32.mrf.mxu0
      %v3152 = vadd.f32 %v3079, %v3151
      %3153 = vmatprep.mubr.bf16.mxu0 %v876
      %3154 = vmatmul.mubr.bf16.gmra.mxu0 %v875
      %v3155 = vpop.f32.mrf.mxu0
      %v3156 = vadd.f32 %v3083, %v3155
      %v3157 = vpop.f32.mrf.mxu0
      %v3158 = vadd.f32 %v3085, %v3157
      %v3159 = vpop.f32.mrf.mxu0
      %v3160 = vadd.f32 %v3087, %v3159
      %v3161 = vpop.f32.mrf.mxu0
      %v3162 = vadd.f32 %v3089, %v3161
      %3163 = vdwg.mxu0
      %3164 = vmatprep.subr.bf16.mxu0 %v2353
      %3165 = vmatpush1.bf16.msra.mxu0 %v2352
      %3166 = vmatprep.subr.bf16.mxu0 %v2349
      %3167 = vmatpush1.bf16.msra.mxu0 %v2348
      %3168 = vmatprep.subr.bf16.mxu0 %v2345
      %3169 = vmatpush1.bf16.msra.mxu0 %v2344
      %3170 = vmatprep.subr.bf16.mxu0 %v2341
      %3171 = vmatpush1.bf16.msra.mxu0 %v2340
      %3172 = vmatprep.subr.bf16.mxu0 %v2337
      %3173 = vmatpush1.bf16.msra.mxu0 %v2336
      %3174 = vmatprep.subr.bf16.mxu0 %v2333
      %3175 = vmatpush1.bf16.msra.mxu0 %v2332
      %3176 = vmatprep.subr.bf16.mxu0 %v2329
      %3177 = vmatpush1.bf16.msra.mxu0 %v2328
      %3178 = vmatprep.subr.bf16.mxu0 %v2325
      %3179 = vmatpush1.bf16.msra.mxu0 %v2324
      %3180 = vmatprep.subr.bf16.mxu0 %v2385
      %3181 = vmatpush2.bf16.msra.mxu0 %v2384
      %3182 = vmatprep.subr.bf16.mxu0 %v2381
      %3183 = vmatpush2.bf16.msra.mxu0 %v2380
      %3184 = vmatprep.subr.bf16.mxu0 %v2377
      %3185 = vmatpush2.bf16.msra.mxu0 %v2376
      %3186 = vmatprep.subr.bf16.mxu0 %v2373
      %3187 = vmatpush2.bf16.msra.mxu0 %v2372
      %3188 = vmatprep.subr.bf16.mxu0 %v2369
      %3189 = vmatpush2.bf16.msra.mxu0 %v2368
      %3190 = vmatprep.subr.bf16.mxu0 %v2365
      %3191 = vmatpush2.bf16.msra.mxu0 %v2364
      %3192 = vmatprep.subr.bf16.mxu0 %v2361
      %3193 = vmatpush2.bf16.msra.mxu0 %v2360
      %3194 = vmatprep.subr.bf16.mxu0 %v2357
      %3195 = vmatpush2.bf16.msra.mxu0 %v2356
      %3196 = vmatprep.mubr.bf16.mxu0 %v839
      %3197 = vmatmul.mubr.bf16.gmra.mxu0 %v838
      %v3198 = vpop.f32.mrf.mxu0
      %v3199 = vadd.f32 %v3126, %v3198
      %v3200 = vpop.f32.mrf.mxu0
      %v3201 = vadd.f32 %v3128, %v3200
      %v3202 = vpop.f32.mrf.mxu0
      %v3203 = vadd.f32 %v3130, %v3202
      %v3204 = vpop.f32.mrf.mxu0
      %v3205 = vadd.f32 %v3132, %v3204
      %3206 = vmatprep.mubr.bf16.mxu0 %v852
      %3207 = vmatmul.mubr.bf16.gmra.mxu0 %v851
      %v3208 = vpop.f32.mrf.mxu0
      %v3209 = vadd.f32 %v3136, %v3208
      %v3210 = vpop.f32.mrf.mxu0
      %v3211 = vadd.f32 %v3138, %v3210
      %v3212 = vpop.f32.mrf.mxu0
      %v3213 = vadd.f32 %v3140, %v3212
      %v3214 = vpop.f32.mrf.mxu0
      %v3215 = vadd.f32 %v3142, %v3214
      %3216 = vmatprep.mubr.bf16.mxu0 %v865
      %3217 = vmatmul.mubr.bf16.gmra.mxu0 %v864
      %v3218 = vpop.f32.mrf.mxu0
      %v3219 = vadd.f32 %v3146, %v3218
      %v3220 = vpop.f32.mrf.mxu0
      %v3221 = vadd.f32 %v3148, %v3220
      %v3222 = vpop.f32.mrf.mxu0
      %v3223 = vadd.f32 %v3150, %v3222
      %v3224 = vpop.f32.mrf.mxu0
      %v3225 = vadd.f32 %v3152, %v3224
      %3226 = vmatprep.mubr.bf16.mxu0 %v878
      %3227 = vmatmul.mubr.bf16.gmra.mxu0 %v877
      %v3228 = vpop.f32.mrf.mxu0
      %v3229 = vadd.f32 %v3156, %v3228
      %v3230 = vpop.f32.mrf.mxu0
      %v3231 = vadd.f32 %v3158, %v3230
      %v3232 = vpop.f32.mrf.mxu0
      %v3233 = vadd.f32 %v3160, %v3232
      %v3234 = vpop.f32.mrf.mxu0
      %v3235 = vadd.f32 %v3162, %v3234
      %3236 = vdwg.mxu0
      %3237 = vmatprep.subr.bf16.mxu0 %v2417
      %3238 = vmatpush1.bf16.msra.mxu0 %v2416
      %3239 = vmatprep.subr.bf16.mxu0 %v2413
      %3240 = vmatpush1.bf16.msra.mxu0 %v2412
      %3241 = vmatprep.subr.bf16.mxu0 %v2409
      %3242 = vmatpush1.bf16.msra.mxu0 %v2408
      %3243 = vmatprep.subr.bf16.mxu0 %v2405
      %3244 = vmatpush1.bf16.msra.mxu0 %v2404
      %3245 = vmatprep.subr.bf16.mxu0 %v2401
      %3246 = vmatpush1.bf16.msra.mxu0 %v2400
      %3247 = vmatprep.subr.bf16.mxu0 %v2397
      %3248 = vmatpush1.bf16.msra.mxu0 %v2396
      %3249 = vmatprep.subr.bf16.mxu0 %v2393
      %3250 = vmatpush1.bf16.msra.mxu0 %v2392
      %3251 = vmatprep.subr.bf16.mxu0 %v2389
      %3252 = vmatpush1.bf16.msra.mxu0 %v2388
      %3253 = vmatprep.subr.bf16.mxu0 %v2449
      %3254 = vmatpush2.bf16.msra.mxu0 %v2448
      %3255 = vmatprep.subr.bf16.mxu0 %v2445
      %3256 = vmatpush2.bf16.msra.mxu0 %v2444
      %3257 = vmatprep.subr.bf16.mxu0 %v2441
      %3258 = vmatpush2.bf16.msra.mxu0 %v2440
      %3259 = vmatprep.subr.bf16.mxu0 %v2437
      %3260 = vmatpush2.bf16.msra.mxu0 %v2436
      %3261 = vmatprep.subr.bf16.mxu0 %v2433
      %3262 = vmatpush2.bf16.msra.mxu0 %v2432
      %3263 = vmatprep.subr.bf16.mxu0 %v2429
      %3264 = vmatpush2.bf16.msra.mxu0 %v2428
      %3265 = vmatprep.subr.bf16.mxu0 %v2425
      %3266 = vmatpush2.bf16.msra.mxu0 %v2424
      %3267 = vmatprep.subr.bf16.mxu0 %v2421
      %3268 = vmatpush2.bf16.msra.mxu0 %v2420
      %3269 = vmatprep.mubr.bf16.mxu0 %v841
      %3270 = vmatmul.mubr.bf16.gmra.mxu0 %v840
      %v3271 = vpop.f32.mrf.mxu0
      %v3272 = vadd.f32 %v3199, %v3271
      %v3273 = vpop.f32.mrf.mxu0
      %v3274 = vadd.f32 %v3201, %v3273
      %v3275 = vpop.f32.mrf.mxu0
      %v3276 = vadd.f32 %v3203, %v3275
      %v3277 = vpop.f32.mrf.mxu0
      %v3278 = vadd.f32 %v3205, %v3277
      %3279 = vmatprep.mubr.bf16.mxu0 %v854
      %3280 = vmatmul.mubr.bf16.gmra.mxu0 %v853
      %v3281 = vpop.f32.mrf.mxu0
      %v3282 = vadd.f32 %v3209, %v3281
      %v3283 = vpop.f32.mrf.mxu0
      %v3284 = vadd.f32 %v3211, %v3283
      %v3285 = vpop.f32.mrf.mxu0
      %v3286 = vadd.f32 %v3213, %v3285
      %v3287 = vpop.f32.mrf.mxu0
      %v3288 = vadd.f32 %v3215, %v3287
      %3289 = vmatprep.mubr.bf16.mxu0 %v867
      %3290 = vmatmul.mubr.bf16.gmra.mxu0 %v866
      %v3291 = vpop.f32.mrf.mxu0
      %v3292 = vadd.f32 %v3219, %v3291
      %v3293 = vpop.f32.mrf.mxu0
      %v3294 = vadd.f32 %v3221, %v3293
      %v3295 = vpop.f32.mrf.mxu0
      %v3296 = vadd.f32 %v3223, %v3295
      %v3297 = vpop.f32.mrf.mxu0
      %v3298 = vadd.f32 %v3225, %v3297
      %3299 = vmatprep.mubr.bf16.mxu0 %v880
      %3300 = vmatmul.mubr.bf16.gmra.mxu0 %v879
      %v3301 = vpop.f32.mrf.mxu0
      %v3302 = vadd.f32 %v3229, %v3301
      %v3303 = vpop.f32.mrf.mxu0
      %v3304 = vadd.f32 %v3231, %v3303
      %v3305 = vpop.f32.mrf.mxu0
      %v3306 = vadd.f32 %v3233, %v3305
      %v3307 = vpop.f32.mrf.mxu0
      %v3308 = vadd.f32 %v3235, %v3307
      %3309 = vdwg.mxu0
      %3310 = vmatprep.subr.bf16.mxu0 %v2481
      %3311 = vmatpush1.bf16.msra.mxu0 %v2480
      %3312 = vmatprep.subr.bf16.mxu0 %v2477
      %3313 = vmatpush1.bf16.msra.mxu0 %v2476
      %3314 = vmatprep.subr.bf16.mxu0 %v2473
      %3315 = vmatpush1.bf16.msra.mxu0 %v2472
      %3316 = vmatprep.subr.bf16.mxu0 %v2469
      %3317 = vmatpush1.bf16.msra.mxu0 %v2468
      %3318 = vmatprep.subr.bf16.mxu0 %v2465
      %3319 = vmatpush1.bf16.msra.mxu0 %v2464
      %3320 = vmatprep.subr.bf16.mxu0 %v2461
      %3321 = vmatpush1.bf16.msra.mxu0 %v2460
      %3322 = vmatprep.subr.bf16.mxu0 %v2457
      %3323 = vmatpush1.bf16.msra.mxu0 %v2456
      %3324 = vmatprep.subr.bf16.mxu0 %v2453
      %3325 = vmatpush1.bf16.msra.mxu0 %v2452
      %3326 = vmatprep.subr.bf16.mxu0 %v2513
      %3327 = vmatpush2.bf16.msra.mxu0 %v2512
      %3328 = vmatprep.subr.bf16.mxu0 %v2509
      %3329 = vmatpush2.bf16.msra.mxu0 %v2508
      %3330 = vmatprep.subr.bf16.mxu0 %v2505
      %3331 = vmatpush2.bf16.msra.mxu0 %v2504
      %3332 = vmatprep.subr.bf16.mxu0 %v2501
      %3333 = vmatpush2.bf16.msra.mxu0 %v2500
      %3334 = vmatprep.subr.bf16.mxu0 %v2497
      %3335 = vmatpush2.bf16.msra.mxu0 %v2496
      %3336 = vmatprep.subr.bf16.mxu0 %v2493
      %3337 = vmatpush2.bf16.msra.mxu0 %v2492
      %3338 = vmatprep.subr.bf16.mxu0 %v2489
      %3339 = vmatpush2.bf16.msra.mxu0 %v2488
      %3340 = vmatprep.subr.bf16.mxu0 %v2485
      %3341 = vmatpush2.bf16.msra.mxu0 %v2484
      %3342 = vmatprep.mubr.bf16.mxu0 %v843
      %3343 = vmatmul.mubr.bf16.gmra.mxu0 %v842
      %v3344 = vpop.f32.mrf.mxu0
      %v3345 = vadd.f32 %v3272, %v3344
      %v3346 = vpop.f32.mrf.mxu0
      %v3347 = vadd.f32 %v3274, %v3346
      %v3348 = vpop.f32.mrf.mxu0
      %v3349 = vadd.f32 %v3276, %v3348
      %v3350 = vpop.f32.mrf.mxu0
      %v3351 = vadd.f32 %v3278, %v3350
      %3352 = vmatprep.mubr.bf16.mxu0 %v856
      %3353 = vmatmul.mubr.bf16.gmra.mxu0 %v855
      %v3354 = vpop.f32.mrf.mxu0
      %v3355 = vadd.f32 %v3282, %v3354
      %v3356 = vpop.f32.mrf.mxu0
      %v3357 = vadd.f32 %v3284, %v3356
      %v3358 = vpop.f32.mrf.mxu0
      %v3359 = vadd.f32 %v3286, %v3358
      %v3360 = vpop.f32.mrf.mxu0
      %v3361 = vadd.f32 %v3288, %v3360
      %3362 = vmatprep.mubr.bf16.mxu0 %v869
      %3363 = vmatmul.mubr.bf16.gmra.mxu0 %v868
      %v3364 = vpop.f32.mrf.mxu0
      %v3365 = vadd.f32 %v3292, %v3364
      %v3366 = vpop.f32.mrf.mxu0
      %v3367 = vadd.f32 %v3294, %v3366
      %v3368 = vpop.f32.mrf.mxu0
      %v3369 = vadd.f32 %v3296, %v3368
      %v3370 = vpop.f32.mrf.mxu0
      %v3371 = vadd.f32 %v3298, %v3370
      %3372 = vmatprep.mubr.bf16.mxu0 %v882
      %3373 = vmatmul.mubr.bf16.gmra.mxu0 %v881
      %v3374 = vpop.f32.mrf.mxu0
      %v3375 = vadd.f32 %v3302, %v3374
      %v3376 = vpop.f32.mrf.mxu0
      %v3377 = vadd.f32 %v3304, %v3376
      %v3378 = vpop.f32.mrf.mxu0
      %v3379 = vadd.f32 %v3306, %v3378
      %v3380 = vpop.f32.mrf.mxu0
      %v3381 = vadd.f32 %v3308, %v3380
      %3382 = vdwg.mxu0
      %3383 = vmatprep.subr.bf16.mxu0 0
      %3384 = vmatpush1.bf16.msra.mxu0 0
      %3385 = vmatprep.subr.bf16.mxu0 0
      %3386 = vmatpush1.bf16.msra.mxu0 0
      %3387 = vmatprep.subr.bf16.mxu0 0
      %3388 = vmatpush1.bf16.msra.mxu0 0
      %3389 = vmatprep.subr.bf16.mxu0 0
      %3390 = vmatpush1.bf16.msra.mxu0 0
      %3391 = vmatprep.subr.bf16.mxu0 %v2529
      %3392 = vmatpush1.bf16.msra.mxu0 %v2528
      %3393 = vmatprep.subr.bf16.mxu0 %v2525
      %3394 = vmatpush1.bf16.msra.mxu0 %v2524
      %3395 = vmatprep.subr.bf16.mxu0 %v2521
      %3396 = vmatpush1.bf16.msra.mxu0 %v2520
      %3397 = vmatprep.subr.bf16.mxu0 %v2517
      %3398 = vmatpush1.bf16.msra.mxu0 %v2516
      %3399 = vmatprep.subr.bf16.mxu0 0
      %3400 = vmatpush2.bf16.msra.mxu0 0
      %3401 = vmatprep.subr.bf16.mxu0 0
      %3402 = vmatpush2.bf16.msra.mxu0 0
      %3403 = vmatprep.subr.bf16.mxu0 0
      %3404 = vmatpush2.bf16.msra.mxu0 0
      %3405 = vmatprep.subr.bf16.mxu0 0
      %3406 = vmatpush2.bf16.msra.mxu0 0
      %3407 = vmatprep.subr.bf16.mxu0 0
      %3408 = vmatpush2.bf16.msra.mxu0 0
      %3409 = vmatprep.subr.bf16.mxu0 0
      %3410 = vmatpush2.bf16.msra.mxu0 0
      %3411 = vmatprep.subr.bf16.mxu0 0
      %3412 = vmatpush2.bf16.msra.mxu0 0
      %3413 = vmatprep.subr.bf16.mxu0 0
      %3414 = vmatpush2.bf16.msra.mxu0 0
      %3415 = vmatprep.mubr.bf16.mxu0 0
      %3416 = vmatmul.mubr.bf16.gmra.mxu0 %v2934
      %v3417 = vpop.f32.mrf.mxu0
      %v3418 = vadd.f32 %v3345, %v3417
      %v3419 = vpop.f32.mrf.mxu0
      %v3420 = vadd.f32 %v3347, %v3419
      %v3421 = vpop.f32.mrf.mxu0
      %v3422 = vadd.f32 %v3349, %v3421
      %v3423 = vpop.f32.mrf.mxu0
      %v3424 = vadd.f32 %v3351, %v3423
      %3425 = vmatprep.mubr.bf16.mxu0 0
      %3426 = vmatmul.mubr.bf16.gmra.mxu0 %v2937
      %v3427 = vpop.f32.mrf.mxu0
      %v3428 = vadd.f32 %v3355, %v3427
      %v3429 = vpop.f32.mrf.mxu0
      %v3430 = vadd.f32 %v3357, %v3429
      %v3431 = vpop.f32.mrf.mxu0
      %v3432 = vadd.f32 %v3359, %v3431
      %v3433 = vpop.f32.mrf.mxu0
      %v3434 = vadd.f32 %v3361, %v3433
      %3435 = vmatprep.mubr.bf16.mxu0 0
      %3436 = vmatmul.mubr.bf16.gmra.mxu0 %v2940
      %v3437 = vpop.f32.mrf.mxu0
      %v3438 = vadd.f32 %v3365, %v3437
      %v3439 = vpop.f32.mrf.mxu0
      %v3440 = vadd.f32 %v3367, %v3439
      %v3441 = vpop.f32.mrf.mxu0
      %v3442 = vadd.f32 %v3369, %v3441
      %v3443 = vpop.f32.mrf.mxu0
      %v3444 = vadd.f32 %v3371, %v3443
      %3445 = vmatprep.mubr.bf16.mxu0 0
      %3446 = vmatmul.mubr.bf16.gmra.mxu0 %v2943
      %v3447 = vpop.f32.mrf.mxu0
      %v3448 = vadd.f32 %v3375, %v3447
      %v3449 = vpop.f32.mrf.mxu0
      %v3450 = vadd.f32 %v3377, %v3449
      %v3451 = vpop.f32.mrf.mxu0
      %v3452 = vadd.f32 %v3379, %v3451
      %v3453 = vpop.f32.mrf.mxu0
      %v3454 = vadd.f32 %v3381, %v3453
      %3455 = vdwg.mxu0
      %3456 = vmatprep.subr.bf16.mxu0 %v2163
      %3457 = vmatpush1.bf16.msra.mxu0 %v2162
      %3458 = vmatprep.subr.bf16.mxu0 %v2159
      %3459 = vmatpush1.bf16.msra.mxu0 %v2158
      %3460 = vmatprep.subr.bf16.mxu0 %v2155
      %3461 = vmatpush1.bf16.msra.mxu0 %v2154
      %3462 = vmatprep.subr.bf16.mxu0 %v2151
      %3463 = vmatpush1.bf16.msra.mxu0 %v2150
      %3464 = vmatprep.subr.bf16.mxu0 %v2147
      %3465 = vmatpush1.bf16.msra.mxu0 %v2146
      %3466 = vmatprep.subr.bf16.mxu0 %v2143
      %3467 = vmatpush1.bf16.msra.mxu0 %v2142
      %3468 = vmatprep.subr.bf16.mxu0 %v2139
      %3469 = vmatpush1.bf16.msra.mxu0 %v2138
      %3470 = vmatprep.subr.bf16.mxu0 %v2135
      %3471 = vmatpush1.bf16.msra.mxu0 %v2134
      %3472 = vmatprep.subr.bf16.mxu0 %v2195
      %3473 = vmatpush2.bf16.msra.mxu0 %v2194
      %3474 = vmatprep.subr.bf16.mxu0 %v2191
      %3475 = vmatpush2.bf16.msra.mxu0 %v2190
      %3476 = vmatprep.subr.bf16.mxu0 %v2187
      %3477 = vmatpush2.bf16.msra.mxu0 %v2186
      %3478 = vmatprep.subr.bf16.mxu0 %v2183
      %3479 = vmatpush2.bf16.msra.mxu0 %v2182
      %3480 = vmatprep.subr.bf16.mxu0 %v2179
      %3481 = vmatpush2.bf16.msra.mxu0 %v2178
      %3482 = vmatprep.subr.bf16.mxu0 %v2175
      %3483 = vmatpush2.bf16.msra.mxu0 %v2174
      %3484 = vmatprep.subr.bf16.mxu0 %v2171
      %3485 = vmatpush2.bf16.msra.mxu0 %v2170
      %3486 = vmatprep.subr.bf16.mxu0 %v2167
      %3487 = vmatpush2.bf16.msra.mxu0 %v2166
      %3488 = vmatprep.mubr.bf16.mxu0 %v833
      %3489 = vmatmul.mubr.bf16.gmra.mxu0 %v832
      %v3490 = vpop.f32.mrf.mxu0
      %v3491 = vadd.f32 0.0, %v3490
      %v3492 = vpop.f32.mrf.mxu0
      %v3493 = vadd.f32 0.0, %v3492
      %v3494 = vpop.f32.mrf.mxu0
      %v3495 = vadd.f32 0.0, %v3494
      %v3496 = vpop.f32.mrf.mxu0
      %v3497 = vadd.f32 0.0, %v3496
      %3498 = vmatprep.mubr.bf16.mxu0 %v846
      %3499 = vmatmul.mubr.bf16.gmra.mxu0 %v845
      %v3500 = vpop.f32.mrf.mxu0
      %v3501 = vadd.f32 0.0, %v3500
      %v3502 = vpop.f32.mrf.mxu0
      %v3503 = vadd.f32 0.0, %v3502
      %v3504 = vpop.f32.mrf.mxu0
      %v3505 = vadd.f32 0.0, %v3504
      %v3506 = vpop.f32.mrf.mxu0
      %v3507 = vadd.f32 0.0, %v3506
      %3508 = vmatprep.mubr.bf16.mxu0 %v859
      %3509 = vmatmul.mubr.bf16.gmra.mxu0 %v858
      %v3510 = vpop.f32.mrf.mxu0
      %v3511 = vadd.f32 0.0, %v3510
      %v3512 = vpop.f32.mrf.mxu0
      %v3513 = vadd.f32 0.0, %v3512
      %v3514 = vpop.f32.mrf.mxu0
      %v3515 = vadd.f32 0.0, %v3514
      %v3516 = vpop.f32.mrf.mxu0
      %v3517 = vadd.f32 0.0, %v3516
      %3518 = vmatprep.mubr.bf16.mxu0 %v872
      %3519 = vmatmul.mubr.bf16.gmra.mxu0 %v871
      %v3520 = vpop.f32.mrf.mxu0
      %v3521 = vadd.f32 0.0, %v3520
      %v3522 = vpop.f32.mrf.mxu0
      %v3523 = vadd.f32 0.0, %v3522
      %v3524 = vpop.f32.mrf.mxu0
      %v3525 = vadd.f32 0.0, %v3524
      %v3526 = vpop.f32.mrf.mxu0
      %v3527 = vadd.f32 0.0, %v3526
      %3528 = vdwg.mxu0
      %3529 = vmatprep.subr.bf16.mxu0 %v2227
      %3530 = vmatpush1.bf16.msra.mxu0 %v2226
      %3531 = vmatprep.subr.bf16.mxu0 %v2223
      %3532 = vmatpush1.bf16.msra.mxu0 %v2222
      %3533 = vmatprep.subr.bf16.mxu0 %v2219
      %3534 = vmatpush1.bf16.msra.mxu0 %v2218
      %3535 = vmatprep.subr.bf16.mxu0 %v2215
      %3536 = vmatpush1.bf16.msra.mxu0 %v2214
      %3537 = vmatprep.subr.bf16.mxu0 %v2211
      %3538 = vmatpush1.bf16.msra.mxu0 %v2210
      %3539 = vmatprep.subr.bf16.mxu0 %v2207
      %3540 = vmatpush1.bf16.msra.mxu0 %v2206
      %3541 = vmatprep.subr.bf16.mxu0 %v2203
      %3542 = vmatpush1.bf16.msra.mxu0 %v2202
      %3543 = vmatprep.subr.bf16.mxu0 %v2199
      %3544 = vmatpush1.bf16.msra.mxu0 %v2198
      %3545 = vmatprep.subr.bf16.mxu0 %v2259
      %3546 = vmatpush2.bf16.msra.mxu0 %v2258
      %3547 = vmatprep.subr.bf16.mxu0 %v2255
      %3548 = vmatpush2.bf16.msra.mxu0 %v2254
      %3549 = vmatprep.subr.bf16.mxu0 %v2251
      %3550 = vmatpush2.bf16.msra.mxu0 %v2250
      %3551 = vmatprep.subr.bf16.mxu0 %v2247
      %3552 = vmatpush2.bf16.msra.mxu0 %v2246
      %3553 = vmatprep.subr.bf16.mxu0 %v2243
      %3554 = vmatpush2.bf16.msra.mxu0 %v2242
      %3555 = vmatprep.subr.bf16.mxu0 %v2239
      %3556 = vmatpush2.bf16.msra.mxu0 %v2238
      %3557 = vmatprep.subr.bf16.mxu0 %v2235
      %3558 = vmatpush2.bf16.msra.mxu0 %v2234
      %3559 = vmatprep.subr.bf16.mxu0 %v2231
      %3560 = vmatpush2.bf16.msra.mxu0 %v2230
      %3561 = vmatprep.mubr.bf16.mxu0 %v835
      %3562 = vmatmul.mubr.bf16.gmra.mxu0 %v834
      %v3563 = vpop.f32.mrf.mxu0
      %v3564 = vadd.f32 %v3491, %v3563
      %v3565 = vpop.f32.mrf.mxu0
      %v3566 = vadd.f32 %v3493, %v3565
      %v3567 = vpop.f32.mrf.mxu0
      %v3568 = vadd.f32 %v3495, %v3567
      %v3569 = vpop.f32.mrf.mxu0
      %v3570 = vadd.f32 %v3497, %v3569
      %3571 = vmatprep.mubr.bf16.mxu0 %v848
      %3572 = vmatmul.mubr.bf16.gmra.mxu0 %v847
      %v3573 = vpop.f32.mrf.mxu0
      %v3574 = vadd.f32 %v3501, %v3573
      %v3575 = vpop.f32.mrf.mxu0
      %v3576 = vadd.f32 %v3503, %v3575
      %v3577 = vpop.f32.mrf.mxu0
      %v3578 = vadd.f32 %v3505, %v3577
      %v3579 = vpop.f32.mrf.mxu0
      %v3580 = vadd.f32 %v3507, %v3579
      %3581 = vmatprep.mubr.bf16.mxu0 %v861
      %3582 = vmatmul.mubr.bf16.gmra.mxu0 %v860
      %v3583 = vpop.f32.mrf.mxu0
      %v3584 = vadd.f32 %v3511, %v3583
      %v3585 = vpop.f32.mrf.mxu0
      %v3586 = vadd.f32 %v3513, %v3585
      %v3587 = vpop.f32.mrf.mxu0
      %v3588 = vadd.f32 %v3515, %v3587
      %v3589 = vpop.f32.mrf.mxu0
      %v3590 = vadd.f32 %v3517, %v3589
      %3591 = vmatprep.mubr.bf16.mxu0 %v874
      %3592 = vmatmul.mubr.bf16.gmra.mxu0 %v873
      %v3593 = vpop.f32.mrf.mxu0
      %v3594 = vadd.f32 %v3521, %v3593
      %v3595 = vpop.f32.mrf.mxu0
      %v3596 = vadd.f32 %v3523, %v3595
      %v3597 = vpop.f32.mrf.mxu0
      %v3598 = vadd.f32 %v3525, %v3597
      %v3599 = vpop.f32.mrf.mxu0
      %v3600 = vadd.f32 %v3527, %v3599
      %3601 = vdwg.mxu0
      %3602 = vmatprep.subr.bf16.mxu0 %v2291
      %3603 = vmatpush1.bf16.msra.mxu0 %v2290
      %3604 = vmatprep.subr.bf16.mxu0 %v2287
      %3605 = vmatpush1.bf16.msra.mxu0 %v2286
      %3606 = vmatprep.subr.bf16.mxu0 %v2283
      %3607 = vmatpush1.bf16.msra.mxu0 %v2282
      %3608 = vmatprep.subr.bf16.mxu0 %v2279
      %3609 = vmatpush1.bf16.msra.mxu0 %v2278
      %3610 = vmatprep.subr.bf16.mxu0 %v2275
      %3611 = vmatpush1.bf16.msra.mxu0 %v2274
      %3612 = vmatprep.subr.bf16.mxu0 %v2271
      %3613 = vmatpush1.bf16.msra.mxu0 %v2270
      %3614 = vmatprep.subr.bf16.mxu0 %v2267
      %3615 = vmatpush1.bf16.msra.mxu0 %v2266
      %3616 = vmatprep.subr.bf16.mxu0 %v2263
      %3617 = vmatpush1.bf16.msra.mxu0 %v2262
      %3618 = vmatprep.subr.bf16.mxu0 %v2323
      %3619 = vmatpush2.bf16.msra.mxu0 %v2322
      %3620 = vmatprep.subr.bf16.mxu0 %v2319
      %3621 = vmatpush2.bf16.msra.mxu0 %v2318
      %3622 = vmatprep.subr.bf16.mxu0 %v2315
      %3623 = vmatpush2.bf16.msra.mxu0 %v2314
      %3624 = vmatprep.subr.bf16.mxu0 %v2311
      %3625 = vmatpush2.bf16.msra.mxu0 %v2310
      %3626 = vmatprep.subr.bf16.mxu0 %v2307
      %3627 = vmatpush2.bf16.msra.mxu0 %v2306
      %3628 = vmatprep.subr.bf16.mxu0 %v2303
      %3629 = vmatpush2.bf16.msra.mxu0 %v2302
      %3630 = vmatprep.subr.bf16.mxu0 %v2299
      %3631 = vmatpush2.bf16.msra.mxu0 %v2298
      %3632 = vmatprep.subr.bf16.mxu0 %v2295
      %3633 = vmatpush2.bf16.msra.mxu0 %v2294
      %3634 = vmatprep.mubr.bf16.mxu0 %v837
      %3635 = vmatmul.mubr.bf16.gmra.mxu0 %v836
      %v3636 = vpop.f32.mrf.mxu0
      %v3637 = vadd.f32 %v3564, %v3636
      %v3638 = vpop.f32.mrf.mxu0
      %v3639 = vadd.f32 %v3566, %v3638
      %v3640 = vpop.f32.mrf.mxu0
      %v3641 = vadd.f32 %v3568, %v3640
      %v3642 = vpop.f32.mrf.mxu0
      %v3643 = vadd.f32 %v3570, %v3642
      %3644 = vmatprep.mubr.bf16.mxu0 %v850
      %3645 = vmatmul.mubr.bf16.gmra.mxu0 %v849
      %v3646 = vpop.f32.mrf.mxu0
      %v3647 = vadd.f32 %v3574, %v3646
      %v3648 = vpop.f32.mrf.mxu0
      %v3649 = vadd.f32 %v3576, %v3648
      %v3650 = vpop.f32.mrf.mxu0
      %v3651 = vadd.f32 %v3578, %v3650
      %v3652 = vpop.f32.mrf.mxu0
      %v3653 = vadd.f32 %v3580, %v3652
      %3654 = vmatprep.mubr.bf16.mxu0 %v863
      %3655 = vmatmul.mubr.bf16.gmra.mxu0 %v862
      %v3656 = vpop.f32.mrf.mxu0
      %v3657 = vadd.f32 %v3584, %v3656
      %v3658 = vpop.f32.mrf.mxu0
      %v3659 = vadd.f32 %v3586, %v3658
      %v3660 = vpop.f32.mrf.mxu0
      %v3661 = vadd.f32 %v3588, %v3660
      %v3662 = vpop.f32.mrf.mxu0
      %v3663 = vadd.f32 %v3590, %v3662
      %3664 = vmatprep.mubr.bf16.mxu0 %v876
      %3665 = vmatmul.mubr.bf16.gmra.mxu0 %v875
      %v3666 = vpop.f32.mrf.mxu0
      %v3667 = vadd.f32 %v3594, %v3666
      %v3668 = vpop.f32.mrf.mxu0
      %v3669 = vadd.f32 %v3596, %v3668
      %v3670 = vpop.f32.mrf.mxu0
      %v3671 = vadd.f32 %v3598, %v3670
      %v3672 = vpop.f32.mrf.mxu0
      %v3673 = vadd.f32 %v3600, %v3672
      %3674 = vdwg.mxu0
      %3675 = vmatprep.subr.bf16.mxu0 %v2355
      %3676 = vmatpush1.bf16.msra.mxu0 %v2354
      %3677 = vmatprep.subr.bf16.mxu0 %v2351
      %3678 = vmatpush1.bf16.msra.mxu0 %v2350
      %3679 = vmatprep.subr.bf16.mxu0 %v2347
      %3680 = vmatpush1.bf16.msra.mxu0 %v2346
      %3681 = vmatprep.subr.bf16.mxu0 %v2343
      %3682 = vmatpush1.bf16.msra.mxu0 %v2342
      %3683 = vmatprep.subr.bf16.mxu0 %v2339
      %3684 = vmatpush1.bf16.msra.mxu0 %v2338
      %3685 = vmatprep.subr.bf16.mxu0 %v2335
      %3686 = vmatpush1.bf16.msra.mxu0 %v2334
      %3687 = vmatprep.subr.bf16.mxu0 %v2331
      %3688 = vmatpush1.bf16.msra.mxu0 %v2330
      %3689 = vmatprep.subr.bf16.mxu0 %v2327
      %3690 = vmatpush1.bf16.msra.mxu0 %v2326
      %3691 = vmatprep.subr.bf16.mxu0 %v2387
      %3692 = vmatpush2.bf16.msra.mxu0 %v2386
      %3693 = vmatprep.subr.bf16.mxu0 %v2383
      %3694 = vmatpush2.bf16.msra.mxu0 %v2382
      %3695 = vmatprep.subr.bf16.mxu0 %v2379
      %3696 = vmatpush2.bf16.msra.mxu0 %v2378
      %3697 = vmatprep.subr.bf16.mxu0 %v2375
      %3698 = vmatpush2.bf16.msra.mxu0 %v2374
      %3699 = vmatprep.subr.bf16.mxu0 %v2371
      %3700 = vmatpush2.bf16.msra.mxu0 %v2370
      %3701 = vmatprep.subr.bf16.mxu0 %v2367
      %3702 = vmatpush2.bf16.msra.mxu0 %v2366
      %3703 = vmatprep.subr.bf16.mxu0 %v2363
      %3704 = vmatpush2.bf16.msra.mxu0 %v2362
      %3705 = vmatprep.subr.bf16.mxu0 %v2359
      %3706 = vmatpush2.bf16.msra.mxu0 %v2358
      %3707 = vmatprep.mubr.bf16.mxu0 %v839
      %3708 = vmatmul.mubr.bf16.gmra.mxu0 %v838
      %v3709 = vpop.f32.mrf.mxu0
      %v3710 = vadd.f32 %v3637, %v3709
      %v3711 = vpop.f32.mrf.mxu0
      %v3712 = vadd.f32 %v3639, %v3711
      %v3713 = vpop.f32.mrf.mxu0
      %v3714 = vadd.f32 %v3641, %v3713
      %v3715 = vpop.f32.mrf.mxu0
      %v3716 = vadd.f32 %v3643, %v3715
      %3717 = vmatprep.mubr.bf16.mxu0 %v852
      %3718 = vmatmul.mubr.bf16.gmra.mxu0 %v851
      %v3719 = vpop.f32.mrf.mxu0
      %v3720 = vadd.f32 %v3647, %v3719
      %v3721 = vpop.f32.mrf.mxu0
      %v3722 = vadd.f32 %v3649, %v3721
      %v3723 = vpop.f32.mrf.mxu0
      %v3724 = vadd.f32 %v3651, %v3723
      %v3725 = vpop.f32.mrf.mxu0
      %v3726 = vadd.f32 %v3653, %v3725
      %3727 = vmatprep.mubr.bf16.mxu0 %v865
      %3728 = vmatmul.mubr.bf16.gmra.mxu0 %v864
      %v3729 = vpop.f32.mrf.mxu0
      %v3730 = vadd.f32 %v3657, %v3729
      %v3731 = vpop.f32.mrf.mxu0
      %v3732 = vadd.f32 %v3659, %v3731
      %v3733 = vpop.f32.mrf.mxu0
      %v3734 = vadd.f32 %v3661, %v3733
      %v3735 = vpop.f32.mrf.mxu0
      %v3736 = vadd.f32 %v3663, %v3735
      %3737 = vmatprep.mubr.bf16.mxu0 %v878
      %3738 = vmatmul.mubr.bf16.gmra.mxu0 %v877
      %v3739 = vpop.f32.mrf.mxu0
      %v3740 = vadd.f32 %v3667, %v3739
      %v3741 = vpop.f32.mrf.mxu0
      %v3742 = vadd.f32 %v3669, %v3741
      %v3743 = vpop.f32.mrf.mxu0
      %v3744 = vadd.f32 %v3671, %v3743
      %v3745 = vpop.f32.mrf.mxu0
      %v3746 = vadd.f32 %v3673, %v3745
      %3747 = vdwg.mxu0
      %3748 = vmatprep.subr.bf16.mxu0 %v2419
      %3749 = vmatpush1.bf16.msra.mxu0 %v2418
      %3750 = vmatprep.subr.bf16.mxu0 %v2415
      %3751 = vmatpush1.bf16.msra.mxu0 %v2414
      %3752 = vmatprep.subr.bf16.mxu0 %v2411
      %3753 = vmatpush1.bf16.msra.mxu0 %v2410
      %3754 = vmatprep.subr.bf16.mxu0 %v2407
      %3755 = vmatpush1.bf16.msra.mxu0 %v2406
      %3756 = vmatprep.subr.bf16.mxu0 %v2403
      %3757 = vmatpush1.bf16.msra.mxu0 %v2402
      %3758 = vmatprep.subr.bf16.mxu0 %v2399
      %3759 = vmatpush1.bf16.msra.mxu0 %v2398
      %3760 = vmatprep.subr.bf16.mxu0 %v2395
      %3761 = vmatpush1.bf16.msra.mxu0 %v2394
      %3762 = vmatprep.subr.bf16.mxu0 %v2391
      %3763 = vmatpush1.bf16.msra.mxu0 %v2390
      %3764 = vmatprep.subr.bf16.mxu0 %v2451
      %3765 = vmatpush2.bf16.msra.mxu0 %v2450
      %3766 = vmatprep.subr.bf16.mxu0 %v2447
      %3767 = vmatpush2.bf16.msra.mxu0 %v2446
      %3768 = vmatprep.subr.bf16.mxu0 %v2443
      %3769 = vmatpush2.bf16.msra.mxu0 %v2442
      %3770 = vmatprep.subr.bf16.mxu0 %v2439
      %3771 = vmatpush2.bf16.msra.mxu0 %v2438
      %3772 = vmatprep.subr.bf16.mxu0 %v2435
      %3773 = vmatpush2.bf16.msra.mxu0 %v2434
      %3774 = vmatprep.subr.bf16.mxu0 %v2431
      %3775 = vmatpush2.bf16.msra.mxu0 %v2430
      %3776 = vmatprep.subr.bf16.mxu0 %v2427
      %3777 = vmatpush2.bf16.msra.mxu0 %v2426
      %3778 = vmatprep.subr.bf16.mxu0 %v2423
      %3779 = vmatpush2.bf16.msra.mxu0 %v2422
      %3780 = vmatprep.mubr.bf16.mxu0 %v841
      %3781 = vmatmul.mubr.bf16.gmra.mxu0 %v840
      %v3782 = vpop.f32.mrf.mxu0
      %v3783 = vadd.f32 %v3710, %v3782
      %v3784 = vpop.f32.mrf.mxu0
      %v3785 = vadd.f32 %v3712, %v3784
      %v3786 = vpop.f32.mrf.mxu0
      %v3787 = vadd.f32 %v3714, %v3786
      %v3788 = vpop.f32.mrf.mxu0
      %v3789 = vadd.f32 %v3716, %v3788
      %3790 = vmatprep.mubr.bf16.mxu0 %v854
      %3791 = vmatmul.mubr.bf16.gmra.mxu0 %v853
      %v3792 = vpop.f32.mrf.mxu0
      %v3793 = vadd.f32 %v3720, %v3792
      %v3794 = vpop.f32.mrf.mxu0
      %v3795 = vadd.f32 %v3722, %v3794
      %v3796 = vpop.f32.mrf.mxu0
      %v3797 = vadd.f32 %v3724, %v3796
      %v3798 = vpop.f32.mrf.mxu0
      %v3799 = vadd.f32 %v3726, %v3798
      %3800 = vmatprep.mubr.bf16.mxu0 %v867
      %3801 = vmatmul.mubr.bf16.gmra.mxu0 %v866
      %v3802 = vpop.f32.mrf.mxu0
      %v3803 = vadd.f32 %v3730, %v3802
      %v3804 = vpop.f32.mrf.mxu0
      %v3805 = vadd.f32 %v3732, %v3804
      %v3806 = vpop.f32.mrf.mxu0
      %v3807 = vadd.f32 %v3734, %v3806
      %v3808 = vpop.f32.mrf.mxu0
      %v3809 = vadd.f32 %v3736, %v3808
      %3810 = vmatprep.mubr.bf16.mxu0 %v880
      %3811 = vmatmul.mubr.bf16.gmra.mxu0 %v879
      %v3812 = vpop.f32.mrf.mxu0
      %v3813 = vadd.f32 %v3740, %v3812
      %v3814 = vpop.f32.mrf.mxu0
      %v3815 = vadd.f32 %v3742, %v3814
      %v3816 = vpop.f32.mrf.mxu0
      %v3817 = vadd.f32 %v3744, %v3816
      %v3818 = vpop.f32.mrf.mxu0
      %v3819 = vadd.f32 %v3746, %v3818
      %3820 = vdwg.mxu0
      %3821 = vmatprep.subr.bf16.mxu0 %v2483
      %3822 = vmatpush1.bf16.msra.mxu0 %v2482
      %3823 = vmatprep.subr.bf16.mxu0 %v2479
      %3824 = vmatpush1.bf16.msra.mxu0 %v2478
      %3825 = vmatprep.subr.bf16.mxu0 %v2475
      %3826 = vmatpush1.bf16.msra.mxu0 %v2474
      %3827 = vmatprep.subr.bf16.mxu0 %v2471
      %3828 = vmatpush1.bf16.msra.mxu0 %v2470
      %3829 = vmatprep.subr.bf16.mxu0 %v2467
      %3830 = vmatpush1.bf16.msra.mxu0 %v2466
      %3831 = vmatprep.subr.bf16.mxu0 %v2463
      %3832 = vmatpush1.bf16.msra.mxu0 %v2462
      %3833 = vmatprep.subr.bf16.mxu0 %v2459
      %3834 = vmatpush1.bf16.msra.mxu0 %v2458
      %3835 = vmatprep.subr.bf16.mxu0 %v2455
      %3836 = vmatpush1.bf16.msra.mxu0 %v2454
      %3837 = vmatprep.subr.bf16.mxu0 %v2515
      %3838 = vmatpush2.bf16.msra.mxu0 %v2514
      %3839 = vmatprep.subr.bf16.mxu0 %v2511
      %3840 = vmatpush2.bf16.msra.mxu0 %v2510
      %3841 = vmatprep.subr.bf16.mxu0 %v2507
      %3842 = vmatpush2.bf16.msra.mxu0 %v2506
      %3843 = vmatprep.subr.bf16.mxu0 %v2503
      %3844 = vmatpush2.bf16.msra.mxu0 %v2502
      %3845 = vmatprep.subr.bf16.mxu0 %v2499
      %3846 = vmatpush2.bf16.msra.mxu0 %v2498
      %3847 = vmatprep.subr.bf16.mxu0 %v2495
      %3848 = vmatpush2.bf16.msra.mxu0 %v2494
      %3849 = vmatprep.subr.bf16.mxu0 %v2491
      %3850 = vmatpush2.bf16.msra.mxu0 %v2490
      %3851 = vmatprep.subr.bf16.mxu0 %v2487
      %3852 = vmatpush2.bf16.msra.mxu0 %v2486
      %3853 = vmatprep.mubr.bf16.mxu0 %v843
      %3854 = vmatmul.mubr.bf16.gmra.mxu0 %v842
      %v3855 = vpop.f32.mrf.mxu0
      %v3856 = vadd.f32 %v3783, %v3855
      %v3857 = vpop.f32.mrf.mxu0
      %v3858 = vadd.f32 %v3785, %v3857
      %v3859 = vpop.f32.mrf.mxu0
      %v3860 = vadd.f32 %v3787, %v3859
      %v3861 = vpop.f32.mrf.mxu0
      %v3862 = vadd.f32 %v3789, %v3861
      %3863 = vmatprep.mubr.bf16.mxu0 %v856
      %3864 = vmatmul.mubr.bf16.gmra.mxu0 %v855
      %v3865 = vpop.f32.mrf.mxu0
      %v3866 = vadd.f32 %v3793, %v3865
      %v3867 = vpop.f32.mrf.mxu0
      %v3868 = vadd.f32 %v3795, %v3867
      %v3869 = vpop.f32.mrf.mxu0
      %v3870 = vadd.f32 %v3797, %v3869
      %v3871 = vpop.f32.mrf.mxu0
      %v3872 = vadd.f32 %v3799, %v3871
      %3873 = vmatprep.mubr.bf16.mxu0 %v869
      %3874 = vmatmul.mubr.bf16.gmra.mxu0 %v868
      %v3875 = vpop.f32.mrf.mxu0
      %v3876 = vadd.f32 %v3803, %v3875
      %v3877 = vpop.f32.mrf.mxu0
      %v3878 = vadd.f32 %v3805, %v3877
      %v3879 = vpop.f32.mrf.mxu0
      %v3880 = vadd.f32 %v3807, %v3879
      %v3881 = vpop.f32.mrf.mxu0
      %v3882 = vadd.f32 %v3809, %v3881
      %3883 = vmatprep.mubr.bf16.mxu0 %v882
      %3884 = vmatmul.mubr.bf16.gmra.mxu0 %v881
      %v3885 = vpop.f32.mrf.mxu0
      %v3886 = vadd.f32 %v3813, %v3885
      %v3887 = vpop.f32.mrf.mxu0
      %v3888 = vadd.f32 %v3815, %v3887
      %v3889 = vpop.f32.mrf.mxu0
      %v3890 = vadd.f32 %v3817, %v3889
      %v3891 = vpop.f32.mrf.mxu0
      %v3892 = vadd.f32 %v3819, %v3891
      %3893 = vdwg.mxu0
      %3894 = vmatprep.subr.bf16.mxu0 0
      %3895 = vmatpush1.bf16.msra.mxu0 0
      %3896 = vmatprep.subr.bf16.mxu0 0
      %3897 = vmatpush1.bf16.msra.mxu0 0
      %3898 = vmatprep.subr.bf16.mxu0 0
      %3899 = vmatpush1.bf16.msra.mxu0 0
      %3900 = vmatprep.subr.bf16.mxu0 0
      %3901 = vmatpush1.bf16.msra.mxu0 0
      %3902 = vmatprep.subr.bf16.mxu0 %v2531
      %3903 = vmatpush1.bf16.msra.mxu0 %v2530
      %3904 = vmatprep.subr.bf16.mxu0 %v2527
      %3905 = vmatpush1.bf16.msra.mxu0 %v2526
      %3906 = vmatprep.subr.bf16.mxu0 %v2523
      %3907 = vmatpush1.bf16.msra.mxu0 %v2522
      %3908 = vmatprep.subr.bf16.mxu0 %v2519
      %3909 = vmatpush1.bf16.msra.mxu0 %v2518
      %3910 = vmatprep.subr.bf16.mxu0 0
      %3911 = vmatpush2.bf16.msra.mxu0 0
      %3912 = vmatprep.subr.bf16.mxu0 0
      %3913 = vmatpush2.bf16.msra.mxu0 0
      %3914 = vmatprep.subr.bf16.mxu0 0
      %3915 = vmatpush2.bf16.msra.mxu0 0
      %3916 = vmatprep.subr.bf16.mxu0 0
      %3917 = vmatpush2.bf16.msra.mxu0 0
      %3918 = vmatprep.subr.bf16.mxu0 0
      %3919 = vmatpush2.bf16.msra.mxu0 0
      %3920 = vmatprep.subr.bf16.mxu0 0
      %3921 = vmatpush2.bf16.msra.mxu0 0
      %3922 = vmatprep.subr.bf16.mxu0 0
      %3923 = vmatpush2.bf16.msra.mxu0 0
      %3924 = vmatprep.subr.bf16.mxu0 0
      %3925 = vmatpush2.bf16.msra.mxu0 0
      %3926 = vmatprep.mubr.bf16.mxu0 0
      %3927 = vmatmul.mubr.bf16.gmra.mxu0 %v2934
      %v3928 = vpop.f32.mrf.mxu0
      %v3929 = vadd.f32 %v3856, %v3928
      %v3930 = vpop.f32.mrf.mxu0
      %v3931 = vadd.f32 %v3858, %v3930
      %v3932 = vpop.f32.mrf.mxu0
      %v3933 = vadd.f32 %v3860, %v3932
      %v3934 = vpop.f32.mrf.mxu0
      %v3935 = vadd.f32 %v3862, %v3934
      %3936 = vmatprep.mubr.bf16.mxu0 0
      %3937 = vmatmul.mubr.bf16.gmra.mxu0 %v2937
      %v3938 = vpop.f32.mrf.mxu0
      %v3939 = vadd.f32 %v3866, %v3938
      %v3940 = vpop.f32.mrf.mxu0
      %v3941 = vadd.f32 %v3868, %v3940
      %v3942 = vpop.f32.mrf.mxu0
      %v3943 = vadd.f32 %v3870, %v3942
      %v3944 = vpop.f32.mrf.mxu0
      %v3945 = vadd.f32 %v3872, %v3944
      %3946 = vmatprep.mubr.bf16.mxu0 0
      %3947 = vmatmul.mubr.bf16.gmra.mxu0 %v2940
      %v3948 = vpop.f32.mrf.mxu0
      %v3949 = vadd.f32 %v3876, %v3948
      %v3950 = vpop.f32.mrf.mxu0
      %v3951 = vadd.f32 %v3878, %v3950
      %v3952 = vpop.f32.mrf.mxu0
      %v3953 = vadd.f32 %v3880, %v3952
      %v3954 = vpop.f32.mrf.mxu0
      %v3955 = vadd.f32 %v3882, %v3954
      %3956 = vmatprep.mubr.bf16.mxu0 0
      %3957 = vmatmul.mubr.bf16.gmra.mxu0 %v2943
      %v3958 = vpop.f32.mrf.mxu0
      %v3959 = vadd.f32 %v3886, %v3958
      %v3960 = vpop.f32.mrf.mxu0
      %v3961 = vadd.f32 %v3888, %v3960
      %v3962 = vpop.f32.mrf.mxu0
      %v3963 = vadd.f32 %v3890, %v3962
      %v3964 = vpop.f32.mrf.mxu0
      %v3965 = vadd.f32 %v3892, %v3964
      %3966 = vdwg.mxu0
      %p3967 = scmp.eq.s32.totalorder %s19, 0
      %p3968 = scmp.eq.s32.totalorder %s20, 0
      %p3969 = pnand %p3967, %p3968
      %p3970 = pneg %p3969
      // Predicated region
      $region37: #{dann_forward.4} parent=35 // pred_check
        _
      $region38: #{dann_forward.4} parent=35 // pred_check_branch
        %3972 = sbr.rel (%p3969) target = $region40
      $region39: #{dann_forward.4} parent=35 // pred_region
        %vm3973 = vcmask 7168
        %3974 = vst.msk [vmem:[#allocation2] sm:$0xff] %vm3973, 0.0
        %3975 = vst.msk [vmem:[#allocation2 + $0x8] sm:$0xff] %vm3973, 0.0
        %3976 = vst.msk [vmem:[#allocation2 + $0x10] sm:$0xff] %vm3973, 0.0
        %3977 = vst.msk [vmem:[#allocation2 + $0x18] sm:$0xff] %vm3973, 0.0
        %3978 = vst.msk [vmem:[#allocation2 + $0x20] sm:$0xff] %vm3973, 0.0
        %3979 = vst.msk [vmem:[#allocation2 + $0x28] sm:$0xff] %vm3973, 0.0
        %3980 = vst.msk [vmem:[#allocation2 + $0x30] sm:$0xff] %vm3973, 0.0
        %3981 = vst.msk [vmem:[#allocation2 + $0x38] sm:$0xff] %vm3973, 0.0
        %3982 = vst.msk [vmem:[#allocation3] sm:$0xff] %vm3973, 0.0
        %3983 = vst.msk [vmem:[#allocation3 + $0x8] sm:$0xff] %vm3973, 0.0
        %3984 = vst.msk [vmem:[#allocation3 + $0x10] sm:$0xff] %vm3973, 0.0
        %3985 = vst.msk [vmem:[#allocation3 + $0x18] sm:$0xff] %vm3973, 0.0
        %3986 = vst.msk [vmem:[#allocation3 + $0x20] sm:$0xff] %vm3973, 0.0
        %3987 = vst.msk [vmem:[#allocation3 + $0x28] sm:$0xff] %vm3973, 0.0
        %3988 = vst.msk [vmem:[#allocation3 + $0x30] sm:$0xff] %vm3973, 0.0
        %3989 = vst.msk [vmem:[#allocation3 + $0x38] sm:$0xff] %vm3973, 0.0
      $region40: #{dann_forward.4} parent=35 // pred_fallthru
        _
      // Predicated region
      $region41: #{dann_forward.4} parent=35 // pred_check
        %p3990 = pneg %p3967
      $region42: #{dann_forward.4} parent=35 // pred_check_branch
        %3992 = sbr.rel (%p3990) target = $region44
      $region43: #{dann_forward.4} parent=35 // pred_region
        %v3993 = vld [vmem:[#allocation2] sm:$0xff]
        %v3994 = vld [vmem:[#allocation2 + $0x8] sm:$0xff]
        %v3995 = vld [vmem:[#allocation2 + $0x10] sm:$0xff]
        %v3996 = vld [vmem:[#allocation2 + $0x18] sm:$0xff]
        %v3997 = vld [vmem:[#allocation2 + $0x20] sm:$0xff]
        %v3998 = vld [vmem:[#allocation2 + $0x28] sm:$0xff]
        %v3999 = vld [vmem:[#allocation2 + $0x30] sm:$0xff]
        %v4000 = vld [vmem:[#allocation2 + $0x38] sm:$0xff]
        %v4001 = vadd.f32 %v3418, %v3420
        %v4002 = vadd.f32 %v4001, %v3929
        %v4003 = vadd.f32 %v4002, %v3931
        %4004 = vadd.xlane.f32.xlu0 %v4003
        %v4005 = vpop.xlane.xlu0 %4004
        %v4006 = vadd.f32 %v3422, %v3424
        %v4007 = vadd.f32 %v4006, %v3933
        %v4008 = vadd.f32 %v4007, %v3935
        %4009 = vadd.xlane.f32.xlu0 %v4008
        %v4010 = vpop.xlane.xlu0 %4009
        %v4011 = vadd.f32 %v3428, %v3430
        %v4012 = vadd.f32 %v4011, %v3939
        %v4013 = vadd.f32 %v4012, %v3941
        %4014 = vadd.xlane.f32.xlu0 %v4013
        %v4015 = vpop.xlane.xlu0 %4014
        %v4016 = vadd.f32 %v3432, %v3434
        %v4017 = vadd.f32 %v4016, %v3943
        %v4018 = vadd.f32 %v4017, %v3945
        %4019 = vadd.xlane.f32.xlu0 %v4018
        %v4020 = vpop.xlane.xlu0 %4019
        %v4021 = vadd.f32 %v3438, %v3440
        %v4022 = vadd.f32 %v4021, %v3949
        %v4023 = vadd.f32 %v4022, %v3951
        %4024 = vadd.xlane.f32.xlu0 %v4023
        %v4025 = vpop.xlane.xlu0 %4024
        %v4026 = vadd.f32 %v3442, %v3444
        %v4027 = vadd.f32 %v4026, %v3953
        %v4028 = vadd.f32 %v4027, %v3955
        %4029 = vadd.xlane.f32.xlu0 %v4028
        %v4030 = vpop.xlane.xlu0 %4029
        %v4031 = vadd.f32 %v3448, %v3450
        %v4032 = vadd.f32 %v4031, %v3959
        %v4033 = vadd.f32 %v4032, %v3961
        %4034 = vadd.xlane.f32.xlu0 %v4033
        %v4035 = vpop.xlane.xlu0 %4034
        %v4036 = vadd.f32 %v3452, %v3454
        %v4037 = vadd.f32 %v4036, %v3963
        %v4038 = vadd.f32 %v4037, %v3965
        %4039 = vadd.xlane.f32.xlu0 %v4038
        %v4040 = vpop.xlane.xlu0 %4039
        %v4041 = vadd.f32 %v3993, %v4005
        %v4042 = vadd.f32 %v3994, %v4010
        %v4043 = vadd.f32 %v3995, %v4015
        %v4044 = vadd.f32 %v3996, %v4020
        %v4045 = vadd.f32 %v3997, %v4025
        %v4046 = vadd.f32 %v3998, %v4030
        %v4047 = vadd.f32 %v3999, %v4035
        %v4048 = vadd.f32 %v4000, %v4040
        %vm4049 = vcmask 7168
        %4050 = vst.msk [vmem:[#allocation2] sm:$0xff] %vm4049, %v4041
        %4051 = vst.msk [vmem:[#allocation2 + $0x8] sm:$0xff] %vm4049, %v4042
        %4052 = vst.msk [vmem:[#allocation2 + $0x10] sm:$0xff] %vm4049, %v4043
        %4053 = vst.msk [vmem:[#allocation2 + $0x18] sm:$0xff] %vm4049, %v4044
        %4054 = vst.msk [vmem:[#allocation2 + $0x20] sm:$0xff] %vm4049, %v4045
        %4055 = vst.msk [vmem:[#allocation2 + $0x28] sm:$0xff] %vm4049, %v4046
        %4056 = vst.msk [vmem:[#allocation2 + $0x30] sm:$0xff] %vm4049, %v4047
        %4057 = vst.msk [vmem:[#allocation2 + $0x38] sm:$0xff] %vm4049, %v4048
        %v4058 = vld [vmem:[#allocation3] sm:$0xff]
        %v4059 = vld [vmem:[#allocation3 + $0x8] sm:$0xff]
        %v4060 = vld [vmem:[#allocation3 + $0x10] sm:$0xff]
        %v4061 = vld [vmem:[#allocation3 + $0x18] sm:$0xff]
        %v4062 = vld [vmem:[#allocation3 + $0x20] sm:$0xff]
        %v4063 = vld [vmem:[#allocation3 + $0x28] sm:$0xff]
        %v4064 = vld [vmem:[#allocation3 + $0x30] sm:$0xff]
        %v4065 = vld [vmem:[#allocation3 + $0x38] sm:$0xff]
        %v4066 = vmul.f32 %v3418, %v3418
        %v4067 = vmul.f32 %v3420, %v3420
        %v4068 = vmul.f32 %v3929, %v3929
        %v4069 = vmul.f32 %v3931, %v3931
        %v4070 = vmul.f32 %v3422, %v3422
        %v4071 = vmul.f32 %v3424, %v3424
        %v4072 = vmul.f32 %v3933, %v3933
        %v4073 = vmul.f32 %v3935, %v3935
        %v4074 = vmul.f32 %v3428, %v3428
        %v4075 = vmul.f32 %v3430, %v3430
        %v4076 = vmul.f32 %v3939, %v3939
        %v4077 = vmul.f32 %v3941, %v3941
        %v4078 = vmul.f32 %v3432, %v3432
        %v4079 = vmul.f32 %v3434, %v3434
        %v4080 = vmul.f32 %v3943, %v3943
        %v4081 = vmul.f32 %v3945, %v3945
        %v4082 = vmul.f32 %v3438, %v3438
        %v4083 = vmul.f32 %v3440, %v3440
        %v4084 = vmul.f32 %v3949, %v3949
        %v4085 = vmul.f32 %v3951, %v3951
        %v4086 = vmul.f32 %v3442, %v3442
        %v4087 = vmul.f32 %v3444, %v3444
        %v4088 = vmul.f32 %v3953, %v3953
        %v4089 = vmul.f32 %v3955, %v3955
        %v4090 = vmul.f32 %v3448, %v3448
        %v4091 = vmul.f32 %v3450, %v3450
        %v4092 = vmul.f32 %v3959, %v3959
        %v4093 = vmul.f32 %v3961, %v3961
        %v4094 = vmul.f32 %v3452, %v3452
        %v4095 = vmul.f32 %v3454, %v3454
        %v4096 = vmul.f32 %v3963, %v3963
        %v4097 = vmul.f32 %v3965, %v3965
        %v4098 = vadd.f32 %v4066, %v4067
        %v4099 = vadd.f32 %v4098, %v4068
        %v4100 = vadd.f32 %v4099, %v4069
        %4101 = vadd.xlane.f32.xlu0 %v4100
        %v4102 = vpop.xlane.xlu0 %4101
        %v4103 = vadd.f32 %v4070, %v4071
        %v4104 = vadd.f32 %v4103, %v4072
        %v4105 = vadd.f32 %v4104, %v4073
        %4106 = vadd.xlane.f32.xlu0 %v4105
        %v4107 = vpop.xlane.xlu0 %4106
        %v4108 = vadd.f32 %v4074, %v4075
        %v4109 = vadd.f32 %v4108, %v4076
        %v4110 = vadd.f32 %v4109, %v4077
        %4111 = vadd.xlane.f32.xlu0 %v4110
        %v4112 = vpop.xlane.xlu0 %4111
        %v4113 = vadd.f32 %v4078, %v4079
        %v4114 = vadd.f32 %v4113, %v4080
        %v4115 = vadd.f32 %v4114, %v4081
        %4116 = vadd.xlane.f32.xlu0 %v4115
        %v4117 = vpop.xlane.xlu0 %4116
        %v4118 = vadd.f32 %v4082, %v4083
        %v4119 = vadd.f32 %v4118, %v4084
        %v4120 = vadd.f32 %v4119, %v4085
        %4121 = vadd.xlane.f32.xlu0 %v4120
        %v4122 = vpop.xlane.xlu0 %4121
        %v4123 = vadd.f32 %v4086, %v4087
        %v4124 = vadd.f32 %v4123, %v4088
        %v4125 = vadd.f32 %v4124, %v4089
        %4126 = vadd.xlane.f32.xlu0 %v4125
        %v4127 = vpop.xlane.xlu0 %4126
        %v4128 = vadd.f32 %v4090, %v4091
        %v4129 = vadd.f32 %v4128, %v4092
        %v4130 = vadd.f32 %v4129, %v4093
        %4131 = vadd.xlane.f32.xlu0 %v4130
        %v4132 = vpop.xlane.xlu0 %4131
        %v4133 = vadd.f32 %v4094, %v4095
        %v4134 = vadd.f32 %v4133, %v4096
        %v4135 = vadd.f32 %v4134, %v4097
        %4136 = vadd.xlane.f32.xlu0 %v4135
        %v4137 = vpop.xlane.xlu0 %4136
        %v4138 = vadd.f32 %v4058, %v4102
        %v4139 = vadd.f32 %v4059, %v4107
        %v4140 = vadd.f32 %v4060, %v4112
        %v4141 = vadd.f32 %v4061, %v4117
        %v4142 = vadd.f32 %v4062, %v4122
        %v4143 = vadd.f32 %v4063, %v4127
        %v4144 = vadd.f32 %v4064, %v4132
        %v4145 = vadd.f32 %v4065, %v4137
        %4146 = vst.msk [vmem:[#allocation3] sm:$0xff] %vm4049, %v4138
        %4147 = vst.msk [vmem:[#allocation3 + $0x8] sm:$0xff] %vm4049, %v4139
        %4148 = vst.msk [vmem:[#allocation3 + $0x10] sm:$0xff] %vm4049, %v4140
        %4149 = vst.msk [vmem:[#allocation3 + $0x18] sm:$0xff] %vm4049, %v4141
        %4150 = vst.msk [vmem:[#allocation3 + $0x20] sm:$0xff] %vm4049, %v4142
        %4151 = vst.msk [vmem:[#allocation3 + $0x28] sm:$0xff] %vm4049, %v4143
        %4152 = vst.msk [vmem:[#allocation3 + $0x30] sm:$0xff] %vm4049, %v4144
        %4153 = vst.msk [vmem:[#allocation3 + $0x38] sm:$0xff] %vm4049, %v4145
      $region44: #{dann_forward.4} parent=35 // pred_fallthru
        _
      %p4154 = scmp.eq.s32.totalorder %s19, 1
      // Predicated region
      $region45: #{dann_forward.4} parent=35 // pred_check
        %p4155 = pneg %p4154
      $region46: #{dann_forward.4} parent=35 // pred_check_branch
        %4157 = sbr.rel (%p4155) target = $region48
      $region47: #{dann_forward.4} parent=35 // pred_region
        %v4158 = vld [vmem:[#allocation2] sm:$0xff]
        %v4159 = vld [vmem:[#allocation2 + $0x8] sm:$0xff]
        %v4160 = vld [vmem:[#allocation2 + $0x10] sm:$0xff]
        %v4161 = vld [vmem:[#allocation2 + $0x18] sm:$0xff]
        %v4162 = vld [vmem:[#allocation2 + $0x20] sm:$0xff]
        %v4163 = vld [vmem:[#allocation2 + $0x28] sm:$0xff]
        %v4164 = vld [vmem:[#allocation2 + $0x30] sm:$0xff]
        %v4165 = vld [vmem:[#allocation2 + $0x38] sm:$0xff]
        %v4166 = vmul.f32 %v4158, 0.0078125
        %v4167 = vmul.f32 %v4159, 0.0078125
        %v4168 = vmul.f32 %v4160, 0.0078125
        %v4169 = vmul.f32 %v4161, 0.0078125
        %v4170 = vmul.f32 %v4162, 0.0078125
        %v4171 = vmul.f32 %v4163, 0.0078125
        %v4172 = vmul.f32 %v4164, 0.0078125
        %v4173 = vmul.f32 %v4165, 0.0078125
        %v4174 = vld [vmem:[#allocation3] sm:$0xff]
        %v4175 = vld [vmem:[#allocation3 + $0x8] sm:$0xff]
        %v4176 = vld [vmem:[#allocation3 + $0x10] sm:$0xff]
        %v4177 = vld [vmem:[#allocation3 + $0x18] sm:$0xff]
        %v4178 = vld [vmem:[#allocation3 + $0x20] sm:$0xff]
        %v4179 = vld [vmem:[#allocation3 + $0x28] sm:$0xff]
        %v4180 = vld [vmem:[#allocation3 + $0x30] sm:$0xff]
        %v4181 = vld [vmem:[#allocation3 + $0x38] sm:$0xff]
        %v4182 = vmul.f32 %v4174, 0.0078125
        %v4183 = vmul.f32 %v4175, 0.0078125
        %v4184 = vmul.f32 %v4176, 0.0078125
        %v4185 = vmul.f32 %v4177, 0.0078125
        %v4186 = vmul.f32 %v4178, 0.0078125
        %v4187 = vmul.f32 %v4179, 0.0078125
        %v4188 = vmul.f32 %v4180, 0.0078125
        %v4189 = vmul.f32 %v4181, 0.0078125
        %v4190 = vmul.f32 %v4166, %v4166
        %v4191 = vmul.f32 %v4167, %v4167
        %v4192 = vmul.f32 %v4168, %v4168
        %v4193 = vmul.f32 %v4169, %v4169
        %v4194 = vmul.f32 %v4170, %v4170
        %v4195 = vmul.f32 %v4171, %v4171
        %v4196 = vmul.f32 %v4172, %v4172
        %v4197 = vmul.f32 %v4173, %v4173
        %v4198 = vsub.f32 %v4182, %v4190
        %v4199 = vsub.f32 %v4183, %v4191
        %v4200 = vsub.f32 %v4184, %v4192
        %v4201 = vsub.f32 %v4185, %v4193
        %v4202 = vsub.f32 %v4186, %v4194
        %v4203 = vsub.f32 %v4187, %v4195
        %v4204 = vsub.f32 %v4188, %v4196
        %v4205 = vsub.f32 %v4189, %v4197
        %v4206 = vld [vmem:[%s2] sm:$0xff]
        %v4207 = vld [vmem:[%s2 + $0x8] sm:$0xff]
        %v4208 = vld [vmem:[%s2 + $0x10] sm:$0xff]
        %v4209 = vld [vmem:[%s2 + $0x18] sm:$0xff]
        %v4210 = vld [vmem:[%s2 + $0x20] sm:$0xff]
        %v4211 = vld [vmem:[%s2 + $0x28] sm:$0xff]
        %v4212 = vld [vmem:[%s2 + $0x30] sm:$0xff]
        %v4213 = vld [vmem:[%s2 + $0x38] sm:$0xff]
        %v4214 = vadd.f32 %v4198, 1e-05
        %v4215 = vadd.f32 %v4199, 1e-05
        %v4216 = vadd.f32 %v4200, 1e-05
        %v4217 = vadd.f32 %v4201, 1e-05
        %v4218 = vadd.f32 %v4202, 1e-05
        %v4219 = vadd.f32 %v4203, 1e-05
        %v4220 = vadd.f32 %v4204, 1e-05
        %v4221 = vadd.f32 %v4205, 1e-05
        %v4222 = vrsqrt.pop %v4214
        %v4223 = vrsqrt.pop %v4215
        %v4224 = vrsqrt.pop %v4216
        %v4225 = vrsqrt.pop %v4217
        %v4226 = vrsqrt.pop %v4218
        %v4227 = vrsqrt.pop %v4219
        %v4228 = vrsqrt.pop %v4220
        %v4229 = vrsqrt.pop %v4221
        %v4230 = vmul.f32 %v4206, %v4222
        %v4231 = vmul.f32 %v4207, %v4223
        %v4232 = vmul.f32 %v4208, %v4224
        %v4233 = vmul.f32 %v4209, %v4225
        %v4234 = vmul.f32 %v4210, %v4226
        %v4235 = vmul.f32 %v4211, %v4227
        %v4236 = vmul.f32 %v4212, %v4228
        %v4237 = vmul.f32 %v4213, %v4229
        %v4238 = vld [vmem:[%s3] sm:$0xff]
        %v4239 = vld [vmem:[%s3 + $0x8] sm:$0xff]
        %v4240 = vld [vmem:[%s3 + $0x10] sm:$0xff]
        %v4241 = vld [vmem:[%s3 + $0x18] sm:$0xff]
        %v4242 = vld [vmem:[%s3 + $0x20] sm:$0xff]
        %v4243 = vld [vmem:[%s3 + $0x28] sm:$0xff]
        %v4244 = vld [vmem:[%s3 + $0x30] sm:$0xff]
        %v4245 = vld [vmem:[%s3 + $0x38] sm:$0xff]
        %v4246 = vmul.f32 %v4166, %v4230
        %v4247 = vmul.f32 %v4167, %v4231
        %v4248 = vmul.f32 %v4168, %v4232
        %v4249 = vmul.f32 %v4169, %v4233
        %v4250 = vmul.f32 %v4170, %v4234
        %v4251 = vmul.f32 %v4171, %v4235
        %v4252 = vmul.f32 %v4172, %v4236
        %v4253 = vmul.f32 %v4173, %v4237
        %v4254 = vsub.f32 %v4238, %v4246
        %v4255 = vsub.f32 %v4239, %v4247
        %v4256 = vsub.f32 %v4240, %v4248
        %v4257 = vsub.f32 %v4241, %v4249
        %v4258 = vsub.f32 %v4242, %v4250
        %v4259 = vsub.f32 %v4243, %v4251
        %v4260 = vsub.f32 %v4244, %v4252
        %v4261 = vsub.f32 %v4245, %v4253
        %4263 = vset.pattern.permute.xlu0 0
        %4264 = vperm.xlu0 %4263, %v4230
        %v4265 = vpop.permute.xlu0 %4264
        %4268 = vset.pattern.permute.xlu0 0
        %4269 = vperm.xlu0 %4268, %v4231
        %v4270 = vpop.permute.xlu0 %4269
        %4273 = vset.pattern.permute.xlu0 0
        %4274 = vperm.xlu0 %4273, %v4232
        %v4275 = vpop.permute.xlu0 %4274
        %4278 = vset.pattern.permute.xlu0 0
        %4279 = vperm.xlu0 %4278, %v4233
        %v4280 = vpop.permute.xlu0 %4279
        %4283 = vset.pattern.permute.xlu0 0
        %4284 = vperm.xlu0 %4283, %v4234
        %v4285 = vpop.permute.xlu0 %4284
        %4288 = vset.pattern.permute.xlu0 0
        %4289 = vperm.xlu0 %4288, %v4235
        %v4290 = vpop.permute.xlu0 %4289
        %4293 = vset.pattern.permute.xlu0 0
        %4294 = vperm.xlu0 %4293, %v4236
        %v4295 = vpop.permute.xlu0 %4294
        %4298 = vset.pattern.permute.xlu0 0
        %4299 = vperm.xlu0 %4298, %v4237
        %v4300 = vpop.permute.xlu0 %4299
        %v4302 = vmul.f32 %v3418, %v4265
        %v4303 = vmul.f32 %v3420, %v4265
        %v4304 = vmul.f32 %v3929, %v4265
        %v4305 = vmul.f32 %v3931, %v4265
        %v4306 = vmul.f32 %v3422, %v4270
        %v4307 = vmul.f32 %v3424, %v4270
        %v4308 = vmul.f32 %v3933, %v4270
        %v4309 = vmul.f32 %v3935, %v4270
        %v4310 = vmul.f32 %v3428, %v4275
        %v4311 = vmul.f32 %v3430, %v4275
        %v4312 = vmul.f32 %v3939, %v4275
        %v4313 = vmul.f32 %v3941, %v4275
        %v4314 = vmul.f32 %v3432, %v4280
        %v4315 = vmul.f32 %v3434, %v4280
        %v4316 = vmul.f32 %v3943, %v4280
        %v4317 = vmul.f32 %v3945, %v4280
        %v4318 = vmul.f32 %v3438, %v4285
        %v4319 = vmul.f32 %v3440, %v4285
        %v4320 = vmul.f32 %v3949, %v4285
        %v4321 = vmul.f32 %v3951, %v4285
        %v4322 = vmul.f32 %v3442, %v4290
        %v4323 = vmul.f32 %v3444, %v4290
        %v4324 = vmul.f32 %v3953, %v4290
        %v4325 = vmul.f32 %v3955, %v4290
        %v4326 = vmul.f32 %v3448, %v4295
        %v4327 = vmul.f32 %v3450, %v4295
        %v4328 = vmul.f32 %v3959, %v4295
        %v4329 = vmul.f32 %v3961, %v4295
        %v4330 = vmul.f32 %v3452, %v4300
        %v4331 = vmul.f32 %v3454, %v4300
        %v4332 = vmul.f32 %v3963, %v4300
        %v4333 = vmul.f32 %v3965, %v4300
        %4335 = vset.pattern.permute.xlu0 0
        %4336 = vperm.xlu0 %4335, %v4254
        %v4337 = vpop.permute.xlu0 %4336
        %4340 = vset.pattern.permute.xlu0 0
        %4341 = vperm.xlu0 %4340, %v4255
        %v4342 = vpop.permute.xlu0 %4341
        %4345 = vset.pattern.permute.xlu0 0
        %4346 = vperm.xlu0 %4345, %v4256
        %v4347 = vpop.permute.xlu0 %4346
        %4350 = vset.pattern.permute.xlu0 0
        %4351 = vperm.xlu0 %4350, %v4257
        %v4352 = vpop.permute.xlu0 %4351
        %4355 = vset.pattern.permute.xlu0 0
        %4356 = vperm.xlu0 %4355, %v4258
        %v4357 = vpop.permute.xlu0 %4356
        %4360 = vset.pattern.permute.xlu0 0
        %4361 = vperm.xlu0 %4360, %v4259
        %v4362 = vpop.permute.xlu0 %4361
        %4365 = vset.pattern.permute.xlu0 0
        %4366 = vperm.xlu0 %4365, %v4260
        %v4367 = vpop.permute.xlu0 %4366
        %4370 = vset.pattern.permute.xlu0 0
        %4371 = vperm.xlu0 %4370, %v4261
        %v4372 = vpop.permute.xlu0 %4371
        %v4374 = vadd.f32 %v4302, %v4337
        %v4375 = vadd.f32 %v4303, %v4337
        %v4376 = vadd.f32 %v4304, %v4337
        %v4377 = vadd.f32 %v4305, %v4337
        %v4378 = vadd.f32 %v4306, %v4342
        %v4379 = vadd.f32 %v4307, %v4342
        %v4380 = vadd.f32 %v4308, %v4342
        %v4381 = vadd.f32 %v4309, %v4342
        %v4382 = vadd.f32 %v4310, %v4347
        %v4383 = vadd.f32 %v4311, %v4347
        %v4384 = vadd.f32 %v4312, %v4347
        %v4385 = vadd.f32 %v4313, %v4347
        %v4386 = vadd.f32 %v4314, %v4352
        %v4387 = vadd.f32 %v4315, %v4352
        %v4388 = vadd.f32 %v4316, %v4352
        %v4389 = vadd.f32 %v4317, %v4352
        %v4390 = vadd.f32 %v4318, %v4357
        %v4391 = vadd.f32 %v4319, %v4357
        %v4392 = vadd.f32 %v4320, %v4357
        %v4393 = vadd.f32 %v4321, %v4357
        %v4394 = vadd.f32 %v4322, %v4362
        %v4395 = vadd.f32 %v4323, %v4362
        %v4396 = vadd.f32 %v4324, %v4362
        %v4397 = vadd.f32 %v4325, %v4362
        %v4398 = vadd.f32 %v4326, %v4367
        %v4399 = vadd.f32 %v4327, %v4367
        %v4400 = vadd.f32 %v4328, %v4367
        %v4401 = vadd.f32 %v4329, %v4367
        %v4402 = vadd.f32 %v4330, %v4372
        %v4403 = vadd.f32 %v4331, %v4372
        %v4404 = vadd.f32 %v4332, %v4372
        %v4405 = vadd.f32 %v4333, %v4372
        %v4406 = vmax.f32 %v4374, %v4375
        %v4407 = vmax.f32 %v4378, %v4379
        %v4408 = vmax.f32 %v4382, %v4383
        %v4409 = vmax.f32 %v4386, %v4387
        %v4410 = vmax.f32 %v4390, %v4391
        %v4411 = vmax.f32 %v4394, %v4395
        %v4412 = vmax.f32 %v4398, %v4399
        %v4413 = vmax.f32 %v4402, %v4403
        %v4414 = vmax.f32 %v4406, %v4376
        %v4415 = vmax.f32 %v4407, %v4380
        %v4416 = vmax.f32 %v4408, %v4384
        %v4417 = vmax.f32 %v4409, %v4388
        %v4418 = vmax.f32 %v4410, %v4392
        %v4419 = vmax.f32 %v4411, %v4396
        %v4420 = vmax.f32 %v4412, %v4400
        %v4421 = vmax.f32 %v4413, %v4404
        %v4422 = vmax.f32 %v4414, %v4377
        %v4423 = vmax.f32 %v4415, %v4381
        %v4424 = vmax.f32 %v4416, %v4385
        %v4425 = vmax.f32 %v4417, %v4389
        %v4426 = vmax.f32 %v4418, %v4393
        %v4427 = vmax.f32 %v4419, %v4397
        %v4428 = vmax.f32 %v4420, %v4401
        %v4429 = vmax.f32 %v4421, %v4405
        %v4430 = vmax.f32 %v4422, 0.0
        %v4431 = vmax.f32 %v4423, 0.0
        %v4432 = vmax.f32 %v4424, 0.0
        %v4433 = vmax.f32 %v4425, 0.0
        %v4434 = vmax.f32 %v4426, 0.0
        %v4435 = vmax.f32 %v4427, 0.0
        %v4436 = vmax.f32 %v4428, 0.0
        %v4437 = vmax.f32 %v4429, 0.0
        %v4438 = vpack.c.bf16 %v4431, %v4430
        %v4439 = vpack.c.bf16 %v4433, %v4432
        %v4440 = vpack.c.bf16 %v4435, %v4434
        %v4441 = vpack.c.bf16 %v4437, %v4436
        %v4446 = vunpack.c.l.b16 %v4438
        %v4447 = vunpack.c.h.b16 %v4438
        %v4448 = vunpack.c.l.b16 %v4439
        %v4449 = vunpack.c.h.b16 %v4439
        %v4450 = vunpack.c.l.b16 %v4440
        %v4451 = vunpack.c.h.b16 %v4440
        %v4452 = vunpack.c.l.b16 %v4441
        %v4453 = vunpack.c.h.b16 %v4441
        %v4454 = vpack.c.b16 %v4446, %v4446
        %v4455 = vpack.c.b16 %v4447, %v4447
        %v4456 = vpack.c.b16 %v4448, %v4448
        %v4457 = vpack.c.b16 %v4449, %v4449
        %v4458 = vpack.c.b16 %v4450, %v4450
        %v4459 = vpack.c.b16 %v4451, %v4451
        %v4460 = vpack.c.b16 %v4452, %v4452
        %v4461 = vpack.c.b16 %v4453, %v4453
        %4470 = vst [vmem:[%s213] sm:$0xf] %v4454
        %4471 = vst [vmem:[%s213 + $0x4] sm:$0xf] %v4455
        %4472 = vst [vmem:[%s213 + $0x8] sm:$0xf] %v4456
        %4473 = vst [vmem:[%s213 + $0xc] sm:$0xf] %v4457
        %4474 = vst [vmem:[%s213 + $0x10] sm:$0xf] %v4458
        %4475 = vst [vmem:[%s213 + $0x14] sm:$0xf] %v4459
        %4476 = vst [vmem:[%s213 + $0x18] sm:$0xf] %v4460
        %4477 = vst [vmem:[%s213 + $0x1c] sm:$0xf] %v4461
      $region48: #{dann_forward.4} parent=35 // pred_fallthru
        _
      %s4478 = smul.u32 %s20, %s19
      %p4479 = scmp.lt.s32.totalorder %s4478, 0
      %s4480 = scalar_select %p4479, %s4478, 0
      %s4481 = smul.addr %s4480, 4
      %s4482 = scalar_lea.vmem %s4, %s4481
      // Predicated region
      $region49: #{dann_forward.4} parent=35 // pred_check
        %p4483 = pneg %p136
      $region50: #{dann_forward.4} parent=35 // pred_check_branch
        %4485 = sbr.rel (%p4483) target = $region52
      $region51: #{dann_forward.4} parent=35 // pred_region
        %s4486 = smul.u32 %s20, %s19
      $region52: #{dann_forward.4} parent=35 // pred_fallthru
        _
    $region36: #{dann_forward.4} parent=5 // pred_fallthru
      _
    %p4487 = scmp.le.s32.totalorder 2, %s10
    // Predicated region
    $region53: #{dann_forward.4} parent=5 // pred_check
      %p4488 = pneg %p4487
    $region54: #{dann_forward.4} parent=5 // pred_check_branch
      %4490 = sbr.rel (%p4488) target = $region56
    $region55: #{dann_forward.4} parent=5 // pred_region
      %s4491 = ssub.s32 %s10, 2
      // Predicated region
      $region57: #{dann_forward.4} parent=55 // pred_check
        %p4492 = pneg %p142
      $region58: #{dann_forward.4} parent=55 // pred_check_branch
        %4494 = sbr.rel (%p4492) target = $region60
      $region59: #{dann_forward.4} parent=55 // pred_region
        %s4495 = smul.u32 %s22, %s21
        %p4496 = scmp.lt.s32.totalorder %s4495, 0
        %s4497 = scalar_select %p4496, %s4495, 0
        %s4498 = smul.addr %s4497, 4
        %s4499 = scalar_lea.vmem %s4, %s4498
      $region60: #{dann_forward.4} parent=55 // pred_fallthru
        _
    $region56: #{dann_forward.4} parent=5 // pred_fallthru
      _
  $region6: #{dann_forward.4} parent=0 // loop_footer
    %s14 = sadd.s32 1, %s10
  $region7: #{dann_forward.4} parent=0 // loop_footer_branch
    %9 = sbr.rel target = $region3
  $region8: #{dann_forward.4} parent=0 // loop_exit
    _

// kernel: dann_forward.5
$region0: #{dann_forward.5}
  #allocation0 [shape = 'u32[]', space=smem, size = 0x4, offset = 0x4, fixed_abs, tag = 'smem constant byte address 0x4 - core index']
  #allocation1 [shape = 'u32[144,128]{1,0:T(1,128)}', space=vmem, size = 0x12000, scoped, tag = 'internal scratch']
  %s0 = inlined_call_operand.vmem [shape: bf16[2,800], index: 0, kind: input, shape index: {}]
  %s1 = inlined_call_operand.vmem [shape: bf16[800,256], index: 1, kind: input, shape index: {}]
  %s2 = inlined_call_operand.vmem [shape: f32[2,256], index: 2, kind: input, shape index: {}]
  %s3 = inlined_call_operand.vmem [shape: bf16[256,128], index: 3, kind: input, shape index: {}]
  %s4 = inlined_call_operand.vmem [shape: f32[2,128], index: 4, kind: input, shape index: {}]
  %s5 = inlined_call_operand.vmem [shape: bf16[128,10], index: 5, kind: input, shape index: {}]
  %s6 = inlined_call_operand.vmem [shape: f32[1,12], index: 6, kind: input, shape index: {}]
  %s7 = inlined_call_operand.hbm [shape: f32[2,10], index: 7, kind: output, shape index: {0}]
  %s8 = inlined_call_operand.hbm [shape: f32[2,2], index: 8, kind: output, shape index: {1}]
  %9 = xla_tuple %s7, %s8
  %s10 = sld [smem:[#allocation0]]
  $region46: #{dann_forward.5} parent=0
    _
  %s12 = ssub.s32 1, %s10
  %s13 = scalar_select 0, %s12, %s10
  $region1: #{dann_forward.5} parent=0
    #allocation2 [shape = 'u8[1024]{0}', space=vmem, size = 0x400, scoped, tag = 'output window, operand 0, single buffered']
    #allocation3 [shape = 's32[1]{0}', space=sflag, size = 0x4, scoped, tag = 'scoped memory for dann_forward.5']
    #allocation4 [shape = 'u8[1024]{0}', space=vmem, size = 0x400, scoped, tag = 'output window, operand 1, single buffered']
    #allocation5 [shape = 's32[1]{0}', space=sflag, size = 0x4, scoped, tag = 'scoped memory for dann_forward.5']
    %14 = vsyncpa [#allocation3], 0
    %15 = vsyncpa [#allocation5], 0
    // Predicated region
    $region2: #{dann_forward.5} parent=1 // pred_check
      _
    $region3: #{dann_forward.5} parent=1 // pred_check_branch
      %17 = sbr.rel (0) target = $region5
    $region4: #{dann_forward.5} parent=1 // pred_region
      _
    $region5: #{dann_forward.5} parent=1 // pred_fallthru
      _
    // Predicated region
    $region6: #{dann_forward.5} parent=1 // pred_check
      _
    $region7: #{dann_forward.5} parent=1 // pred_check_branch
      %19 = sbr.rel (0) target = $region9
    $region8: #{dann_forward.5} parent=1 // pred_region
      _
    $region9: #{dann_forward.5} parent=1 // pred_fallthru
      _
    // Predicated region
    $region10: #{dann_forward.5} parent=1 // pred_check
      _
    $region11: #{dann_forward.5} parent=1 // pred_check_branch
      %21 = sbr.rel (0) target = $region13
    $region12: #{dann_forward.5} parent=1 // pred_region
      _
    $region13: #{dann_forward.5} parent=1 // pred_fallthru
      _
    // Predicated region
    $region14: #{dann_forward.5} parent=1 // pred_check
      _
    $region15: #{dann_forward.5} parent=1 // pred_check_branch
      %23 = sbr.rel (0) target = $region17
    $region16: #{dann_forward.5} parent=1 // pred_region
      _
    $region17: #{dann_forward.5} parent=1 // pred_fallthru
      _
    // Predicated region
    $region18: #{dann_forward.5} parent=1 // pred_check
      _
    $region19: #{dann_forward.5} parent=1 // pred_check_branch
      %25 = sbr.rel (0) target = $region21
    $region20: #{dann_forward.5} parent=1 // pred_region
      _
    $region21: #{dann_forward.5} parent=1 // pred_fallthru
      _
    // Predicated region
    $region22: #{dann_forward.5} parent=1 // pred_check
      _
    $region23: #{dann_forward.5} parent=1 // pred_check_branch
      %27 = sbr.rel (0) target = $region25
    $region24: #{dann_forward.5} parent=1 // pred_region
      _
    $region25: #{dann_forward.5} parent=1 // pred_fallthru
      _
    // Predicated region
    $region26: #{dann_forward.5} parent=1 // pred_check
      _
    $region27: #{dann_forward.5} parent=1 // pred_check_branch
      %29 = sbr.rel (0) target = $region29
    $region28: #{dann_forward.5} parent=1 // pred_region
      _
    $region29: #{dann_forward.5} parent=1 // pred_fallthru
      _
    %v31 = vld [vmem:[%s0] sm:$0x7f]
    %v32 = vld [vmem:[%s1] sm:$0xff]
    %v33 = vld [vmem:[%s1 + $0x8] sm:$0xff]
    %v34 = vld [vmem:[%s1 + $0x10] sm:$0xff]
    %v35 = vld [vmem:[%s1 + $0x18] sm:$0xff]
    %v36 = vld [vmem:[%s1 + $0x20] sm:$0xff]
    %v37 = vld [vmem:[%s1 + $0x28] sm:$0xff]
    %v38 = vld [vmem:[%s1 + $0x30] sm:$0xff]
    %v39 = vld [vmem:[%s1 + $0x38] sm:$0xff]
    %v40 = vld [vmem:[%s1 + $0x40] sm:$0xff]
    %v41 = vld [vmem:[%s1 + $0x48] sm:$0xff]
    %v42 = vld [vmem:[%s1 + $0x50] sm:$0xff]
    %v43 = vld [vmem:[%s1 + $0x58] sm:$0xff]
    %v44 = vld [vmem:[%s1 + $0x60] sm:$0xff]
    %v45 = vld [vmem:[%s1 + $0x68] sm:$0xff]
    %v46 = vld [vmem:[%s1 + $0x70] sm:$0xff]
    %v47 = vld [vmem:[%s1 + $0x78] sm:$0xff]
    %v48 = vld [vmem:[%s1 + $0x80] sm:$0xff]
    %v49 = vld [vmem:[%s1 + $0x88] sm:$0xff]
    %v50 = vld [vmem:[%s1 + $0x90] sm:$0xff]
    %v51 = vld [vmem:[%s1 + $0x98] sm:$0xff]
    %v52 = vld [vmem:[%s1 + $0xa0] sm:$0xff]
    %v53 = vld [vmem:[%s1 + $0xa8] sm:$0xff]
    %v54 = vld [vmem:[%s1 + $0xb0] sm:$0xff]
    %v55 = vld [vmem:[%s1 + $0xb8] sm:$0xff]
    %v56 = vld [vmem:[%s1 + $0xc0] sm:$0xff]
    %v57 = vld [vmem:[%s1 + $0xc8] sm:$0xff]
    %v58 = vld [vmem:[%s1 + $0xd0] sm:$0xff]
    %v59 = vld [vmem:[%s1 + $0xd8] sm:$0xff]
    %v60 = vld [vmem:[%s1 + $0xe0] sm:$0xff]
    %v61 = vld [vmem:[%s1 + $0xe8] sm:$0xff]
    %v62 = vld [vmem:[%s1 + $0xf0] sm:$0xff]
    %v63 = vld [vmem:[%s1 + $0xf8] sm:$0xff]
    %v64 = vld [vmem:[%s1 + $0x100] sm:$0xff]
    %v65 = vld [vmem:[%s1 + $0x108] sm:$0xff]
    %v66 = vld [vmem:[%s1 + $0x110] sm:$0xff]
    %v67 = vld [vmem:[%s1 + $0x118] sm:$0xff]
    %v68 = vld [vmem:[%s1 + $0x120] sm:$0xff]
    %v69 = vld [vmem:[%s1 + $0x128] sm:$0xff]
    %v70 = vld [vmem:[%s1 + $0x130] sm:$0xff]
    %v71 = vld [vmem:[%s1 + $0x138] sm:$0xff]
    %v72 = vld [vmem:[%s1 + $0x140] sm:$0xff]
    %v73 = vld [vmem:[%s1 + $0x148] sm:$0xff]
    %v74 = vld [vmem:[%s1 + $0x150] sm:$0xff]
    %v75 = vld [vmem:[%s1 + $0x158] sm:$0xff]
    %v76 = vld [vmem:[%s1 + $0x160] sm:$0xff]
    %v77 = vld [vmem:[%s1 + $0x168] sm:$0xff]
    %v78 = vld [vmem:[%s1 + $0x170] sm:$0xff]
    %v79 = vld [vmem:[%s1 + $0x178] sm:$0xff]
    %v80 = vld [vmem:[%s1 + $0x180] sm:$0xff]
    %v81 = vld [vmem:[%s1 + $0x188] sm:$0xff]
    %v82 = vld [vmem:[%s1 + $0x190] sm:$0xff]
    %v83 = vld [vmem:[%s1 + $0x198] sm:$0xff]
    %v84 = vld [vmem:[%s1 + $0x1a0] sm:$0xff]
    %v85 = vld [vmem:[%s1 + $0x1a8] sm:$0xff]
    %v86 = vld [vmem:[%s1 + $0x1b0] sm:$0xff]
    %v87 = vld [vmem:[%s1 + $0x1b8] sm:$0xff]
    %v88 = vld [vmem:[%s1 + $0x1c0] sm:$0xff]
    %v89 = vld [vmem:[%s1 + $0x1c8] sm:$0xff]
    %v90 = vld [vmem:[%s1 + $0x1d0] sm:$0xff]
    %v91 = vld [vmem:[%s1 + $0x1d8] sm:$0xff]
    %v92 = vld [vmem:[%s1 + $0x1e0] sm:$0xff]
    %v93 = vld [vmem:[%s1 + $0x1e8] sm:$0xff]
    %v94 = vld [vmem:[%s1 + $0x1f0] sm:$0xff]
    %v95 = vld [vmem:[%s1 + $0x1f8] sm:$0xff]
    %v96 = vld [vmem:[%s1 + $0x200] sm:$0xff]
    %v97 = vld [vmem:[%s1 + $0x208] sm:$0xff]
    %v98 = vld [vmem:[%s1 + $0x210] sm:$0xff]
    %v99 = vld [vmem:[%s1 + $0x218] sm:$0xff]
    %v100 = vld [vmem:[%s1 + $0x220] sm:$0xff]
    %v101 = vld [vmem:[%s1 + $0x228] sm:$0xff]
    %v102 = vld [vmem:[%s1 + $0x230] sm:$0xff]
    %v103 = vld [vmem:[%s1 + $0x238] sm:$0xff]
    %v104 = vld [vmem:[%s1 + $0x240] sm:$0xff]
    %v105 = vld [vmem:[%s1 + $0x248] sm:$0xff]
    %v106 = vld [vmem:[%s1 + $0x250] sm:$0xff]
    %v107 = vld [vmem:[%s1 + $0x258] sm:$0xff]
    %v108 = vld [vmem:[%s1 + $0x260] sm:$0xff]
    %v109 = vld [vmem:[%s1 + $0x268] sm:$0xff]
    %v110 = vld [vmem:[%s1 + $0x270] sm:$0xff]
    %v111 = vld [vmem:[%s1 + $0x278] sm:$0xff]
    %v112 = vld [vmem:[%s1 + $0x280] sm:$0xff]
    %v113 = vld [vmem:[%s1 + $0x288] sm:$0xff]
    %v114 = vld [vmem:[%s1 + $0x290] sm:$0xff]
    %v115 = vld [vmem:[%s1 + $0x298] sm:$0xff]
    %v116 = vld [vmem:[%s1 + $0x2a0] sm:$0xff]
    %v117 = vld [vmem:[%s1 + $0x2a8] sm:$0xff]
    %v118 = vld [vmem:[%s1 + $0x2b0] sm:$0xff]
    %v119 = vld [vmem:[%s1 + $0x2b8] sm:$0xff]
    %v120 = vld [vmem:[%s1 + $0x2c0] sm:$0xff]
    %v121 = vld [vmem:[%s1 + $0x2c8] sm:$0xff]
    %v122 = vld [vmem:[%s1 + $0x2d0] sm:$0xff]
    %v123 = vld [vmem:[%s1 + $0x2d8] sm:$0xff]
    %v124 = vld [vmem:[%s1 + $0x2e0] sm:$0xff]
    %v125 = vld [vmem:[%s1 + $0x2e8] sm:$0xff]
    %v126 = vld [vmem:[%s1 + $0x2f0] sm:$0xff]
    %v127 = vld [vmem:[%s1 + $0x2f8] sm:$0xff]
    %v128 = vld [vmem:[%s1 + $0x300] sm:$0xff]
    %v129 = vld [vmem:[%s1 + $0x308] sm:$0xff]
    %v130 = vld [vmem:[%s1 + $0x310] sm:$0xff]
    %v131 = vld [vmem:[%s1 + $0x318] sm:$0xff]
    %v133 = vcombine.high %v31, %v31
    %v135 = vunpack.c.l.s4 1966171168
    %v136 = vunpack.c.0.s8 %v135
    %v137 = vlaneseq
    %v138 = vshrl.u32 %v137, 7
    %v139 = vsub.s32 %v136, %v138
    %v140 = vrot.slane %v31, %v139
    %v142 = vunpack.c.l.s4 1966171168
    %v143 = vunpack.c.0.s8 %v142
    %v144 = vlaneseq
    %v145 = vshrl.u32 %v144, 7
    %v146 = vsub.s32 %v143, %v145
    %v147 = vrot.slane %v133, %v146
    %v148 = vcombine.high %v140, %v140
    %v149 = vcombine.high %v147, %v147
    %v151 = vunpack.c.l.s4 1966171168
    %v152 = vunpack.c.0.s8 %v151
    %v153 = vlaneseq
    %v154 = vshrl.u32 %v153, 7
    %v155 = vsub.s32 %v152, %v154
    %v156 = vrot.slane %v140, %v155
    %v158 = vunpack.c.l.s4 1966171168
    %v159 = vunpack.c.0.s8 %v158
    %v160 = vlaneseq
    %v161 = vshrl.u32 %v160, 7
    %v162 = vsub.s32 %v159, %v161
    %v163 = vrot.slane %v147, %v162
    %v165 = vunpack.c.l.s4 1966171168
    %v166 = vunpack.c.0.s8 %v165
    %v167 = vlaneseq
    %v168 = vshrl.u32 %v167, 7
    %v169 = vsub.s32 %v166, %v168
    %v170 = vrot.slane %v148, %v169
    %v172 = vunpack.c.l.s4 1966171168
    %v173 = vunpack.c.0.s8 %v172
    %v174 = vlaneseq
    %v175 = vshrl.u32 %v174, 7
    %v176 = vsub.s32 %v173, %v175
    %v177 = vrot.slane %v149, %v176
    %v178 = vcombine.high %v156, %v156
    %v179 = vcombine.high %v163, %v163
    %v180 = vcombine.high %v170, %v170
    %v287 = vunpack.c.l.b16 %v32
    %v288 = vunpack.c.h.b16 %v32
    %v289 = vunpack.c.l.b16 %v33
    %v290 = vunpack.c.h.b16 %v33
    %v291 = vunpack.c.l.b16 %v34
    %v292 = vunpack.c.h.b16 %v34
    %v293 = vunpack.c.l.b16 %v35
    %v294 = vunpack.c.h.b16 %v35
    %v295 = vunpack.c.l.b16 %v36
    %v296 = vunpack.c.h.b16 %v36
    %v297 = vunpack.c.l.b16 %v37
    %v298 = vunpack.c.h.b16 %v37
    %v299 = vunpack.c.l.b16 %v38
    %v300 = vunpack.c.h.b16 %v38
    %v301 = vunpack.c.l.b16 %v39
    %v302 = vunpack.c.h.b16 %v39
    %v303 = vunpack.c.l.b16 %v40
    %v304 = vunpack.c.h.b16 %v40
    %v305 = vunpack.c.l.b16 %v41
    %v306 = vunpack.c.h.b16 %v41
    %v307 = vunpack.c.l.b16 %v42
    %v308 = vunpack.c.h.b16 %v42
    %v309 = vunpack.c.l.b16 %v43
    %v310 = vunpack.c.h.b16 %v43
    %v311 = vunpack.c.l.b16 %v44
    %v312 = vunpack.c.h.b16 %v44
    %v313 = vunpack.c.l.b16 %v45
    %v314 = vunpack.c.h.b16 %v45
    %v315 = vunpack.c.l.b16 %v46
    %v316 = vunpack.c.h.b16 %v46
    %v317 = vunpack.c.l.b16 %v47
    %v318 = vunpack.c.h.b16 %v47
    %v319 = vunpack.c.l.b16 %v48
    %v320 = vunpack.c.h.b16 %v48
    %v321 = vunpack.c.l.b16 %v49
    %v322 = vunpack.c.h.b16 %v49
    %v323 = vunpack.c.l.b16 %v50
    %v324 = vunpack.c.h.b16 %v50
    %v325 = vunpack.c.l.b16 %v51
    %v326 = vunpack.c.h.b16 %v51
    %v327 = vunpack.c.l.b16 %v52
    %v328 = vunpack.c.h.b16 %v52
    %v329 = vunpack.c.l.b16 %v53
    %v330 = vunpack.c.h.b16 %v53
    %v331 = vunpack.c.l.b16 %v54
    %v332 = vunpack.c.h.b16 %v54
    %v333 = vunpack.c.l.b16 %v55
    %v334 = vunpack.c.h.b16 %v55
    %v335 = vunpack.c.l.b16 %v56
    %v336 = vunpack.c.h.b16 %v56
    %v337 = vunpack.c.l.b16 %v57
    %v338 = vunpack.c.h.b16 %v57
    %v339 = vunpack.c.l.b16 %v58
    %v340 = vunpack.c.h.b16 %v58
    %v341 = vunpack.c.l.b16 %v59
    %v342 = vunpack.c.h.b16 %v59
    %v343 = vunpack.c.l.b16 %v60
    %v344 = vunpack.c.h.b16 %v60
    %v345 = vunpack.c.l.b16 %v61
    %v346 = vunpack.c.h.b16 %v61
    %v347 = vunpack.c.l.b16 %v62
    %v348 = vunpack.c.h.b16 %v62
    %v349 = vunpack.c.l.b16 %v63
    %v350 = vunpack.c.h.b16 %v63
    %v351 = vunpack.c.l.b16 %v64
    %v352 = vunpack.c.h.b16 %v64
    %v353 = vunpack.c.l.b16 %v65
    %v354 = vunpack.c.h.b16 %v65
    %v355 = vunpack.c.l.b16 %v66
    %v356 = vunpack.c.h.b16 %v66
    %v357 = vunpack.c.l.b16 %v67
    %v358 = vunpack.c.h.b16 %v67
    %v359 = vunpack.c.l.b16 %v68
    %v360 = vunpack.c.h.b16 %v68
    %v361 = vunpack.c.l.b16 %v69
    %v362 = vunpack.c.h.b16 %v69
    %v363 = vunpack.c.l.b16 %v70
    %v364 = vunpack.c.h.b16 %v70
    %v365 = vunpack.c.l.b16 %v71
    %v366 = vunpack.c.h.b16 %v71
    %v367 = vunpack.c.l.b16 %v72
    %v368 = vunpack.c.h.b16 %v72
    %v369 = vunpack.c.l.b16 %v73
    %v370 = vunpack.c.h.b16 %v73
    %v371 = vunpack.c.l.b16 %v74
    %v372 = vunpack.c.h.b16 %v74
    %v373 = vunpack.c.l.b16 %v75
    %v374 = vunpack.c.h.b16 %v75
    %v375 = vunpack.c.l.b16 %v76
    %v376 = vunpack.c.h.b16 %v76
    %v377 = vunpack.c.l.b16 %v77
    %v378 = vunpack.c.h.b16 %v77
    %v379 = vunpack.c.l.b16 %v78
    %v380 = vunpack.c.h.b16 %v78
    %v381 = vunpack.c.l.b16 %v79
    %v382 = vunpack.c.h.b16 %v79
    %v383 = vunpack.c.l.b16 %v80
    %v384 = vunpack.c.h.b16 %v80
    %v385 = vunpack.c.l.b16 %v81
    %v386 = vunpack.c.h.b16 %v81
    %v387 = vunpack.c.l.b16 %v82
    %v388 = vunpack.c.h.b16 %v82
    %v389 = vunpack.c.l.b16 %v83
    %v390 = vunpack.c.h.b16 %v83
    %v391 = vunpack.c.l.b16 %v84
    %v392 = vunpack.c.h.b16 %v84
    %v393 = vunpack.c.l.b16 %v85
    %v394 = vunpack.c.h.b16 %v85
    %v395 = vunpack.c.l.b16 %v86
    %v396 = vunpack.c.h.b16 %v86
    %v397 = vunpack.c.l.b16 %v87
    %v398 = vunpack.c.h.b16 %v87
    %v399 = vunpack.c.l.b16 %v88
    %v400 = vunpack.c.h.b16 %v88
    %v401 = vunpack.c.l.b16 %v89
    %v402 = vunpack.c.h.b16 %v89
    %v403 = vunpack.c.l.b16 %v90
    %v404 = vunpack.c.h.b16 %v90
    %v405 = vunpack.c.l.b16 %v91
    %v406 = vunpack.c.h.b16 %v91
    %v407 = vunpack.c.l.b16 %v92
    %v408 = vunpack.c.h.b16 %v92
    %v409 = vunpack.c.l.b16 %v93
    %v410 = vunpack.c.h.b16 %v93
    %v411 = vunpack.c.l.b16 %v94
    %v412 = vunpack.c.h.b16 %v94
    %v413 = vunpack.c.l.b16 %v95
    %v414 = vunpack.c.h.b16 %v95
    %v415 = vunpack.c.l.b16 %v96
    %v416 = vunpack.c.h.b16 %v96
    %v417 = vunpack.c.l.b16 %v97
    %v418 = vunpack.c.h.b16 %v97
    %v419 = vunpack.c.l.b16 %v98
    %v420 = vunpack.c.h.b16 %v98
    %v421 = vunpack.c.l.b16 %v99
    %v422 = vunpack.c.h.b16 %v99
    %v423 = vunpack.c.l.b16 %v100
    %v424 = vunpack.c.h.b16 %v100
    %v425 = vunpack.c.l.b16 %v101
    %v426 = vunpack.c.h.b16 %v101
    %v427 = vunpack.c.l.b16 %v102
    %v428 = vunpack.c.h.b16 %v102
    %v429 = vunpack.c.l.b16 %v103
    %v430 = vunpack.c.h.b16 %v103
    %v431 = vunpack.c.l.b16 %v104
    %v432 = vunpack.c.h.b16 %v104
    %v433 = vunpack.c.l.b16 %v105
    %v434 = vunpack.c.h.b16 %v105
    %v435 = vunpack.c.l.b16 %v106
    %v436 = vunpack.c.h.b16 %v106
    %v437 = vunpack.c.l.b16 %v107
    %v438 = vunpack.c.h.b16 %v107
    %v439 = vunpack.c.l.b16 %v108
    %v440 = vunpack.c.h.b16 %v108
    %v441 = vunpack.c.l.b16 %v109
    %v442 = vunpack.c.h.b16 %v109
    %v443 = vunpack.c.l.b16 %v110
    %v444 = vunpack.c.h.b16 %v110
    %v445 = vunpack.c.l.b16 %v111
    %v446 = vunpack.c.h.b16 %v111
    %v447 = vunpack.c.l.b16 %v112
    %v448 = vunpack.c.h.b16 %v112
    %v449 = vunpack.c.l.b16 %v113
    %v450 = vunpack.c.h.b16 %v113
    %v451 = vunpack.c.l.b16 %v114
    %v452 = vunpack.c.h.b16 %v114
    %v453 = vunpack.c.l.b16 %v115
    %v454 = vunpack.c.h.b16 %v115
    %v455 = vunpack.c.l.b16 %v116
    %v456 = vunpack.c.h.b16 %v116
    %v457 = vunpack.c.l.b16 %v117
    %v458 = vunpack.c.h.b16 %v117
    %v459 = vunpack.c.l.b16 %v118
    %v460 = vunpack.c.h.b16 %v118
    %v461 = vunpack.c.l.b16 %v119
    %v462 = vunpack.c.h.b16 %v119
    %v463 = vunpack.c.l.b16 %v120
    %v464 = vunpack.c.h.b16 %v120
    %v465 = vunpack.c.l.b16 %v121
    %v466 = vunpack.c.h.b16 %v121
    %v467 = vunpack.c.l.b16 %v122
    %v468 = vunpack.c.h.b16 %v122
    %v469 = vunpack.c.l.b16 %v123
    %v470 = vunpack.c.h.b16 %v123
    %v471 = vunpack.c.l.b16 %v124
    %v472 = vunpack.c.h.b16 %v124
    %v473 = vunpack.c.l.b16 %v125
    %v474 = vunpack.c.h.b16 %v125
    %v475 = vunpack.c.l.b16 %v126
    %v476 = vunpack.c.h.b16 %v126
    %v477 = vunpack.c.l.b16 %v127
    %v478 = vunpack.c.h.b16 %v127
    %v479 = vunpack.c.l.b16 %v128
    %v480 = vunpack.c.h.b16 %v128
    %v481 = vunpack.c.l.b16 %v129
    %v482 = vunpack.c.h.b16 %v129
    %v483 = vunpack.c.l.b16 %v130
    %v484 = vunpack.c.h.b16 %v130
    %v485 = vunpack.c.l.b16 %v131
    %v486 = vunpack.c.h.b16 %v131
    %v487 = vpack.c.b16 %v289, %v287
    %v488 = vpack.c.b16 %v290, %v288
    %v489 = vpack.c.b16 %v293, %v291
    %v490 = vpack.c.b16 %v294, %v292
    %v491 = vpack.c.b16 %v297, %v295
    %v492 = vpack.c.b16 %v298, %v296
    %v493 = vpack.c.b16 %v301, %v299
    %v494 = vpack.c.b16 %v302, %v300
    %v495 = vpack.c.b16 %v305, %v303
    %v496 = vpack.c.b16 %v306, %v304
    %v497 = vpack.c.b16 %v309, %v307
    %v498 = vpack.c.b16 %v310, %v308
    %v499 = vpack.c.b16 %v313, %v311
    %v500 = vpack.c.b16 %v314, %v312
    %v501 = vpack.c.b16 %v317, %v315
    %v502 = vpack.c.b16 %v318, %v316
    %v503 = vpack.c.b16 %v321, %v319
    %v504 = vpack.c.b16 %v322, %v320
    %v505 = vpack.c.b16 %v325, %v323
    %v506 = vpack.c.b16 %v326, %v324
    %v507 = vpack.c.b16 %v329, %v327
    %v508 = vpack.c.b16 %v330, %v328
    %v509 = vpack.c.b16 %v333, %v331
    %v510 = vpack.c.b16 %v334, %v332
    %v511 = vpack.c.b16 %v337, %v335
    %v512 = vpack.c.b16 %v338, %v336
    %v513 = vpack.c.b16 %v341, %v339
    %v514 = vpack.c.b16 %v342, %v340
    %v515 = vpack.c.b16 %v345, %v343
    %v516 = vpack.c.b16 %v346, %v344
    %v517 = vpack.c.b16 %v349, %v347
    %v518 = vpack.c.b16 %v350, %v348
    %v519 = vpack.c.b16 %v353, %v351
    %v520 = vpack.c.b16 %v354, %v352
    %v521 = vpack.c.b16 %v357, %v355
    %v522 = vpack.c.b16 %v358, %v356
    %v523 = vpack.c.b16 %v361, %v359
    %v524 = vpack.c.b16 %v362, %v360
    %v525 = vpack.c.b16 %v365, %v363
    %v526 = vpack.c.b16 %v366, %v364
    %v527 = vpack.c.b16 %v369, %v367
    %v528 = vpack.c.b16 %v370, %v368
    %v529 = vpack.c.b16 %v373, %v371
    %v530 = vpack.c.b16 %v374, %v372
    %v531 = vpack.c.b16 %v377, %v375
    %v532 = vpack.c.b16 %v378, %v376
    %v533 = vpack.c.b16 %v381, %v379
    %v534 = vpack.c.b16 %v382, %v380
    %v535 = vpack.c.b16 %v385, %v383
    %v536 = vpack.c.b16 %v386, %v384
    %v537 = vpack.c.b16 %v389, %v387
    %v538 = vpack.c.b16 %v390, %v388
    %v539 = vpack.c.b16 %v393, %v391
    %v540 = vpack.c.b16 %v394, %v392
    %v541 = vpack.c.b16 %v397, %v395
    %v542 = vpack.c.b16 %v398, %v396
    %v543 = vpack.c.b16 %v401, %v399
    %v544 = vpack.c.b16 %v402, %v400
    %v545 = vpack.c.b16 %v405, %v403
    %v546 = vpack.c.b16 %v406, %v404
    %v547 = vpack.c.b16 %v409, %v407
    %v548 = vpack.c.b16 %v410, %v408
    %v549 = vpack.c.b16 %v413, %v411
    %v550 = vpack.c.b16 %v414, %v412
    %v551 = vpack.c.b16 %v417, %v415
    %v552 = vpack.c.b16 %v418, %v416
    %v553 = vpack.c.b16 %v421, %v419
    %v554 = vpack.c.b16 %v422, %v420
    %v555 = vpack.c.b16 %v425, %v423
    %v556 = vpack.c.b16 %v426, %v424
    %v557 = vpack.c.b16 %v429, %v427
    %v558 = vpack.c.b16 %v430, %v428
    %v559 = vpack.c.b16 %v433, %v431
    %v560 = vpack.c.b16 %v434, %v432
    %v561 = vpack.c.b16 %v437, %v435
    %v562 = vpack.c.b16 %v438, %v436
    %v563 = vpack.c.b16 %v441, %v439
    %v564 = vpack.c.b16 %v442, %v440
    %v565 = vpack.c.b16 %v445, %v443
    %v566 = vpack.c.b16 %v446, %v444
    %v567 = vpack.c.b16 %v449, %v447
    %v568 = vpack.c.b16 %v450, %v448
    %v569 = vpack.c.b16 %v453, %v451
    %v570 = vpack.c.b16 %v454, %v452
    %v571 = vpack.c.b16 %v457, %v455
    %v572 = vpack.c.b16 %v458, %v456
    %v573 = vpack.c.b16 %v461, %v459
    %v574 = vpack.c.b16 %v462, %v460
    %v575 = vpack.c.b16 %v465, %v463
    %v576 = vpack.c.b16 %v466, %v464
    %v577 = vpack.c.b16 %v469, %v467
    %v578 = vpack.c.b16 %v470, %v468
    %v579 = vpack.c.b16 %v473, %v471
    %v580 = vpack.c.b16 %v474, %v472
    %v581 = vpack.c.b16 %v477, %v475
    %v582 = vpack.c.b16 %v478, %v476
    %v583 = vpack.c.b16 %v481, %v479
    %v584 = vpack.c.b16 %v482, %v480
    %v585 = vpack.c.b16 %v485, %v483
    %v586 = vpack.c.b16 %v486, %v484
    %vm687 = vcmask 261120
    %v689 = vsel %vm687, %v179, 0
    %691 = vmatprep.subr.bf16.mxu0 %v502
    %692 = vmatpush1.bf16.msra.mxu0 %v501
    %693 = vmatprep.subr.bf16.mxu0 %v500
    %694 = vmatpush1.bf16.msra.mxu0 %v499
    %695 = vmatprep.subr.bf16.mxu0 %v498
    %696 = vmatpush1.bf16.msra.mxu0 %v497
    %697 = vmatprep.subr.bf16.mxu0 %v496
    %698 = vmatpush1.bf16.msra.mxu0 %v495
    %699 = vmatprep.subr.bf16.mxu0 %v494
    %700 = vmatpush1.bf16.msra.mxu0 %v493
    %701 = vmatprep.subr.bf16.mxu0 %v492
    %702 = vmatpush1.bf16.msra.mxu0 %v491
    %703 = vmatprep.subr.bf16.mxu0 %v490
    %704 = vmatpush1.bf16.msra.mxu0 %v489
    %705 = vmatprep.subr.bf16.mxu0 %v488
    %706 = vmatpush1.bf16.msra.mxu0 %v487
    %707 = vmatprep.subr.bf16.mxu0 %v518
    %708 = vmatpush2.bf16.msra.mxu0 %v517
    %709 = vmatprep.subr.bf16.mxu0 %v516
    %710 = vmatpush2.bf16.msra.mxu0 %v515
    %711 = vmatprep.subr.bf16.mxu0 %v514
    %712 = vmatpush2.bf16.msra.mxu0 %v513
    %713 = vmatprep.subr.bf16.mxu0 %v512
    %714 = vmatpush2.bf16.msra.mxu0 %v511
    %715 = vmatprep.subr.bf16.mxu0 %v510
    %716 = vmatpush2.bf16.msra.mxu0 %v509
    %717 = vmatprep.subr.bf16.mxu0 %v508
    %718 = vmatpush2.bf16.msra.mxu0 %v507
    %719 = vmatprep.subr.bf16.mxu0 %v506
    %720 = vmatpush2.bf16.msra.mxu0 %v505
    %721 = vmatprep.subr.bf16.mxu0 %v504
    %722 = vmatpush2.bf16.msra.mxu0 %v503
    %723 = vmatprep.mubr.bf16.mxu0 %v170
    %724 = vmatmul.mubr.bf16.gmra.mxu0 %v156
    %v725 = vpop.f32.mrf.mxu0
    %v726 = vadd.f32 0.0, %v725
    %v727 = vpop.f32.mrf.mxu0
    %v728 = vadd.f32 0.0, %v727
    %v729 = vpop.f32.mrf.mxu0
    %v730 = vpop.f32.mrf.mxu0
    %731 = vdwg.mxu0
    %732 = vmatprep.subr.bf16.mxu0 %v534
    %733 = vmatpush1.bf16.msra.mxu0 %v533
    %734 = vmatprep.subr.bf16.mxu0 %v532
    %735 = vmatpush1.bf16.msra.mxu0 %v531
    %736 = vmatprep.subr.bf16.mxu0 %v530
    %737 = vmatpush1.bf16.msra.mxu0 %v529
    %738 = vmatprep.subr.bf16.mxu0 %v528
    %739 = vmatpush1.bf16.msra.mxu0 %v527
    %740 = vmatprep.subr.bf16.mxu0 %v526
    %741 = vmatpush1.bf16.msra.mxu0 %v525
    %742 = vmatprep.subr.bf16.mxu0 %v524
    %743 = vmatpush1.bf16.msra.mxu0 %v523
    %744 = vmatprep.subr.bf16.mxu0 %v522
    %745 = vmatpush1.bf16.msra.mxu0 %v521
    %746 = vmatprep.subr.bf16.mxu0 %v520
    %747 = vmatpush1.bf16.msra.mxu0 %v519
    %748 = vmatprep.subr.bf16.mxu0 %v550
    %749 = vmatpush2.bf16.msra.mxu0 %v549
    %750 = vmatprep.subr.bf16.mxu0 %v548
    %751 = vmatpush2.bf16.msra.mxu0 %v547
    %752 = vmatprep.subr.bf16.mxu0 %v546
    %753 = vmatpush2.bf16.msra.mxu0 %v545
    %754 = vmatprep.subr.bf16.mxu0 %v544
    %755 = vmatpush2.bf16.msra.mxu0 %v543
    %756 = vmatprep.subr.bf16.mxu0 %v542
    %757 = vmatpush2.bf16.msra.mxu0 %v541
    %758 = vmatprep.subr.bf16.mxu0 %v540
    %759 = vmatpush2.bf16.msra.mxu0 %v539
    %760 = vmatprep.subr.bf16.mxu0 %v538
    %761 = vmatpush2.bf16.msra.mxu0 %v537
    %762 = vmatprep.subr.bf16.mxu0 %v536
    %763 = vmatpush2.bf16.msra.mxu0 %v535
    %764 = vmatprep.mubr.bf16.mxu0 %v180
    %765 = vmatmul.mubr.bf16.gmra.mxu0 %v178
    %v766 = vpop.f32.mrf.mxu0
    %v767 = vadd.f32 %v726, %v766
    %v768 = vpop.f32.mrf.mxu0
    %v769 = vadd.f32 %v728, %v768
    %v770 = vpop.f32.mrf.mxu0
    %v771 = vpop.f32.mrf.mxu0
    %772 = vdwg.mxu0
    %773 = vmatprep.subr.bf16.mxu0 %v566
    %774 = vmatpush1.bf16.msra.mxu0 %v565
    %775 = vmatprep.subr.bf16.mxu0 %v564
    %776 = vmatpush1.bf16.msra.mxu0 %v563
    %777 = vmatprep.subr.bf16.mxu0 %v562
    %778 = vmatpush1.bf16.msra.mxu0 %v561
    %779 = vmatprep.subr.bf16.mxu0 %v560
    %780 = vmatpush1.bf16.msra.mxu0 %v559
    %781 = vmatprep.subr.bf16.mxu0 %v558
    %782 = vmatpush1.bf16.msra.mxu0 %v557
    %783 = vmatprep.subr.bf16.mxu0 %v556
    %784 = vmatpush1.bf16.msra.mxu0 %v555
    %785 = vmatprep.subr.bf16.mxu0 %v554
    %786 = vmatpush1.bf16.msra.mxu0 %v553
    %787 = vmatprep.subr.bf16.mxu0 %v552
    %788 = vmatpush1.bf16.msra.mxu0 %v551
    %789 = vmatprep.subr.bf16.mxu0 %v582
    %790 = vmatpush2.bf16.msra.mxu0 %v581
    %791 = vmatprep.subr.bf16.mxu0 %v580
    %792 = vmatpush2.bf16.msra.mxu0 %v579
    %793 = vmatprep.subr.bf16.mxu0 %v578
    %794 = vmatpush2.bf16.msra.mxu0 %v577
    %795 = vmatprep.subr.bf16.mxu0 %v576
    %796 = vmatpush2.bf16.msra.mxu0 %v575
    %797 = vmatprep.subr.bf16.mxu0 %v574
    %798 = vmatpush2.bf16.msra.mxu0 %v573
    %799 = vmatprep.subr.bf16.mxu0 %v572
    %800 = vmatpush2.bf16.msra.mxu0 %v571
    %801 = vmatprep.subr.bf16.mxu0 %v570
    %802 = vmatpush2.bf16.msra.mxu0 %v569
    %803 = vmatprep.subr.bf16.mxu0 %v568
    %804 = vmatpush2.bf16.msra.mxu0 %v567
    %805 = vmatprep.mubr.bf16.mxu0 %v177
    %806 = vmatmul.mubr.bf16.gmra.mxu0 %v163
    %v807 = vpop.f32.mrf.mxu0
    %v808 = vadd.f32 %v767, %v807
    %v809 = vpop.f32.mrf.mxu0
    %v810 = vadd.f32 %v769, %v809
    %v811 = vpop.f32.mrf.mxu0
    %v812 = vpop.f32.mrf.mxu0
    %813 = vdwg.mxu0
    %814 = vmatprep.subr.bf16.mxu0 0
    %815 = vmatpush1.bf16.msra.mxu0 0
    %816 = vmatprep.subr.bf16.mxu0 0
    %817 = vmatpush1.bf16.msra.mxu0 0
    %818 = vmatprep.subr.bf16.mxu0 0
    %819 = vmatpush1.bf16.msra.mxu0 0
    %820 = vmatprep.subr.bf16.mxu0 0
    %821 = vmatpush1.bf16.msra.mxu0 0
    %822 = vmatprep.subr.bf16.mxu0 0
    %823 = vmatpush1.bf16.msra.mxu0 0
    %824 = vmatprep.subr.bf16.mxu0 0
    %825 = vmatpush1.bf16.msra.mxu0 0
    %826 = vmatprep.subr.bf16.mxu0 %v586
    %827 = vmatpush1.bf16.msra.mxu0 %v585
    %828 = vmatprep.subr.bf16.mxu0 %v584
    %829 = vmatpush1.bf16.msra.mxu0 %v583
    %830 = vmatprep.subr.bf16.mxu0 0
    %831 = vmatpush2.bf16.msra.mxu0 0
    %832 = vmatprep.subr.bf16.mxu0 0
    %833 = vmatpush2.bf16.msra.mxu0 0
    %834 = vmatprep.subr.bf16.mxu0 0
    %835 = vmatpush2.bf16.msra.mxu0 0
    %836 = vmatprep.subr.bf16.mxu0 0
    %837 = vmatpush2.bf16.msra.mxu0 0
    %838 = vmatprep.subr.bf16.mxu0 0
    %839 = vmatpush2.bf16.msra.mxu0 0
    %840 = vmatprep.subr.bf16.mxu0 0
    %841 = vmatpush2.bf16.msra.mxu0 0
    %842 = vmatprep.subr.bf16.mxu0 0
    %843 = vmatpush2.bf16.msra.mxu0 0
    %844 = vmatprep.subr.bf16.mxu0 0
    %845 = vmatpush2.bf16.msra.mxu0 0
    %846 = vmatprep.mubr.bf16.mxu0 0
    %847 = vmatmul.mubr.bf16.gmra.mxu0 %v689
    %v848 = vpop.f32.mrf.mxu0
    %v849 = vadd.f32 %v808, %v848
    %v850 = vpop.f32.mrf.mxu0
    %v851 = vadd.f32 %v810, %v850
    %v852 = vpop.f32.mrf.mxu0
    %v853 = vpop.f32.mrf.mxu0
    %854 = vdwg.mxu0
    %v855 = vld [vmem:[%s2] sm:$0xf]
    %vm856 = vcmask 1041408
    %v857 = vsel %vm856, %v849, 0.0
    %v858 = vrot.slane %v857, 4
    %v859 = vadd.f32 %v857, %v858
    %v860 = vrot.slane %v859, 2
    %v861 = vadd.f32 %v859, %v860
    %v862 = vrot.slane %v861, 1
    %v863 = vadd.f32 %v861, %v862
    %v864 = vsel %vm856, %v851, 0.0
    %v865 = vrot.slane %v864, 4
    %v866 = vadd.f32 %v864, %v865
    %v867 = vrot.slane %v866, 2
    %v868 = vadd.f32 %v866, %v867
    %v869 = vrot.slane %v868, 1
    %v870 = vadd.f32 %v868, %v869
    %v871 = vmul.f32 %v863, 0.5
    %v872 = vmul.f32 %v870, 0.5
    %v873 = vmul.f32 %v849, %v849
    %v874 = vmul.f32 %v851, %v851
    %v875 = vsel %vm856, %v873, 0.0
    %v876 = vrot.slane %v875, 4
    %v877 = vadd.f32 %v875, %v876
    %v878 = vrot.slane %v877, 2
    %v879 = vadd.f32 %v877, %v878
    %v880 = vrot.slane %v879, 1
    %v881 = vadd.f32 %v879, %v880
    %v882 = vsel %vm856, %v874, 0.0
    %v883 = vrot.slane %v882, 4
    %v884 = vadd.f32 %v882, %v883
    %v885 = vrot.slane %v884, 2
    %v886 = vadd.f32 %v884, %v885
    %v887 = vrot.slane %v886, 1
    %v888 = vadd.f32 %v886, %v887
    %v889 = vmul.f32 %v881, 0.5
    %v890 = vmul.f32 %v888, 0.5
    %v891 = vmul.f32 %v871, %v871
    %v892 = vmul.f32 %v872, %v872
    %v893 = vsub.f32 %v889, %v891
    %v894 = vsub.f32 %v890, %v892
    %v895 = vadd.f32 %v893, 1e-05
    %v896 = vadd.f32 %v894, 1e-05
    %v897 = vrsqrt.pop %v895
    %v898 = vrsqrt.pop %v896
    %v901 = vcombine.low %v897, %v898
    %v903 = vunpack.c.l.s4 1983009808
    %v904 = vunpack.c.0.s8 %v903
    %v905 = vlaneseq
    %v906 = vshrl.u32 %v905, 7
    %v907 = vsub.s32 %v904, %v906
    %v908 = vrot.slane %v901, %v907
    %v910 = vmul.f32 %v855, %v908
    %v912 = vlaneseq
    %v913 = vshrl.u32 %v912, 7
    %v914 = vsub.s32 0, %v913
    %v915 = vrot.slane %v910, %v914
    %v916 = vlaneseq
    %v917 = vshrl.u32 %v916, 7
    %v918 = vsub.s32 2, %v917
    %v919 = vrot.slane %v910, %v918
    %v922 = vlaneseq
    %v923 = vshrl.u32 %v922, 7
    %v924 = vsub.s32 0, %v923
    %v925 = vrot.slane %v915, %v924
    %v926 = vlaneseq
    %v927 = vshrl.u32 %v926, 7
    %v928 = vsub.s32 0, %v927
    %v929 = vrot.slane %v919, %v928
    %v930 = vmul.f32 %v849, %v925
    %v931 = vmul.f32 %v851, %v929
    %v932 = vmul.f32 %v871, %v915
    %v933 = vmul.f32 %v872, %v919
    %v936 = vcombine.low %v932, %v933
    %v938 = vunpack.c.l.s4 1983009808
    %v939 = vunpack.c.0.s8 %v938
    %v940 = vlaneseq
    %v941 = vshrl.u32 %v940, 7
    %v942 = vsub.s32 %v939, %v941
    %v943 = vrot.slane %v936, %v942
    %v944 = vrot.slane %v943, 7
    %v946 = vsub.f32 %v855, %v944
    %v948 = vlaneseq
    %v949 = vshrl.u32 %v948, 7
    %v950 = vsub.s32 1, %v949
    %v951 = vrot.slane %v946, %v950
    %v952 = vlaneseq
    %v953 = vshrl.u32 %v952, 7
    %v954 = vsub.s32 3, %v953
    %v955 = vrot.slane %v946, %v954
    %v958 = vlaneseq
    %v959 = vshrl.u32 %v958, 7
    %v960 = vsub.s32 1, %v959
    %v961 = vrot.slane %v951, %v960
    %v962 = vlaneseq
    %v963 = vshrl.u32 %v962, 7
    %v964 = vsub.s32 1, %v963
    %v965 = vrot.slane %v955, %v964
    %v966 = vadd.f32 %v930, %v961
    %v967 = vadd.f32 %v931, %v965
    %v968 = vmax.f32 %v966, 0.0
    %v969 = vmax.f32 %v967, 0.0
    %v970 = vpack.c.bf16 %v968, %v968
    %v971 = vpack.c.bf16 %v969, %v969
    %v972 = vld [vmem:[%s3] sm:$0xf]
    %v973 = vld [vmem:[%s3 + $0x4] sm:$0xf]
    %v974 = vld [vmem:[%s3 + $0x8] sm:$0xf]
    %v975 = vld [vmem:[%s3 + $0xc] sm:$0xf]
    %v976 = vld [vmem:[%s3 + $0x10] sm:$0xf]
    %v977 = vld [vmem:[%s3 + $0x14] sm:$0xf]
    %v978 = vld [vmem:[%s3 + $0x18] sm:$0xf]
    %v979 = vld [vmem:[%s3 + $0x1c] sm:$0xf]
    %v980 = vld [vmem:[%s3 + $0x20] sm:$0xf]
    %v981 = vld [vmem:[%s3 + $0x24] sm:$0xf]
    %v982 = vld [vmem:[%s3 + $0x28] sm:$0xf]
    %v983 = vld [vmem:[%s3 + $0x2c] sm:$0xf]
    %v984 = vld [vmem:[%s3 + $0x30] sm:$0xf]
    %v985 = vld [vmem:[%s3 + $0x34] sm:$0xf]
    %v986 = vld [vmem:[%s3 + $0x38] sm:$0xf]
    %v987 = vld [vmem:[%s3 + $0x3c] sm:$0xf]
    %v988 = vld [vmem:[%s3 + $0x40] sm:$0xf]
    %v989 = vld [vmem:[%s3 + $0x44] sm:$0xf]
    %v990 = vld [vmem:[%s3 + $0x48] sm:$0xf]
    %v991 = vld [vmem:[%s3 + $0x4c] sm:$0xf]
    %v992 = vld [vmem:[%s3 + $0x50] sm:$0xf]
    %v993 = vld [vmem:[%s3 + $0x54] sm:$0xf]
    %v994 = vld [vmem:[%s3 + $0x58] sm:$0xf]
    %v995 = vld [vmem:[%s3 + $0x5c] sm:$0xf]
    %v996 = vld [vmem:[%s3 + $0x60] sm:$0xf]
    %v997 = vld [vmem:[%s3 + $0x64] sm:$0xf]
    %v998 = vld [vmem:[%s3 + $0x68] sm:$0xf]
    %v999 = vld [vmem:[%s3 + $0x6c] sm:$0xf]
    %v1000 = vld [vmem:[%s3 + $0x70] sm:$0xf]
    %v1001 = vld [vmem:[%s3 + $0x74] sm:$0xf]
    %v1002 = vld [vmem:[%s3 + $0x78] sm:$0xf]
    %v1003 = vld [vmem:[%s3 + $0x7c] sm:$0xf]
    %v1036 = vunpack.c.l.b16 %v972
    %v1037 = vunpack.c.l.b16 %v973
    %v1038 = vunpack.c.l.b16 %v974
    %v1039 = vunpack.c.l.b16 %v975
    %v1040 = vunpack.c.l.b16 %v976
    %v1041 = vunpack.c.l.b16 %v977
    %v1042 = vunpack.c.l.b16 %v978
    %v1043 = vunpack.c.l.b16 %v979
    %v1044 = vunpack.c.l.b16 %v980
    %v1045 = vunpack.c.l.b16 %v981
    %v1046 = vunpack.c.l.b16 %v982
    %v1047 = vunpack.c.l.b16 %v983
    %v1048 = vunpack.c.l.b16 %v984
    %v1049 = vunpack.c.l.b16 %v985
    %v1050 = vunpack.c.l.b16 %v986
    %v1051 = vunpack.c.l.b16 %v987
    %v1052 = vunpack.c.l.b16 %v988
    %v1053 = vunpack.c.l.b16 %v989
    %v1054 = vunpack.c.l.b16 %v990
    %v1055 = vunpack.c.l.b16 %v991
    %v1056 = vunpack.c.l.b16 %v992
    %v1057 = vunpack.c.l.b16 %v993
    %v1058 = vunpack.c.l.b16 %v994
    %v1059 = vunpack.c.l.b16 %v995
    %v1060 = vunpack.c.l.b16 %v996
    %v1061 = vunpack.c.l.b16 %v997
    %v1062 = vunpack.c.l.b16 %v998
    %v1063 = vunpack.c.l.b16 %v999
    %v1064 = vunpack.c.l.b16 %v1000
    %v1065 = vunpack.c.l.b16 %v1001
    %v1066 = vunpack.c.l.b16 %v1002
    %v1067 = vunpack.c.l.b16 %v1003
    %v1068 = vpack.c.b16 %v1037, %v1036
    %v1069 = vpack.c.b16 %v1039, %v1038
    %v1070 = vpack.c.b16 %v1041, %v1040
    %v1071 = vpack.c.b16 %v1043, %v1042
    %v1072 = vpack.c.b16 %v1045, %v1044
    %v1073 = vpack.c.b16 %v1047, %v1046
    %v1074 = vpack.c.b16 %v1049, %v1048
    %v1075 = vpack.c.b16 %v1051, %v1050
    %v1076 = vpack.c.b16 %v1053, %v1052
    %v1077 = vpack.c.b16 %v1055, %v1054
    %v1078 = vpack.c.b16 %v1057, %v1056
    %v1079 = vpack.c.b16 %v1059, %v1058
    %v1080 = vpack.c.b16 %v1061, %v1060
    %v1081 = vpack.c.b16 %v1063, %v1062
    %v1082 = vpack.c.b16 %v1065, %v1064
    %v1083 = vpack.c.b16 %v1067, %v1066
    %1100 = vmatprep.subr.bf16.mxu0 0
    %1101 = vmatpush1.bf16.msra.mxu0 %v1075
    %1102 = vmatprep.subr.bf16.mxu0 0
    %1103 = vmatpush1.bf16.msra.mxu0 %v1074
    %1104 = vmatprep.subr.bf16.mxu0 0
    %1105 = vmatpush1.bf16.msra.mxu0 %v1073
    %1106 = vmatprep.subr.bf16.mxu0 0
    %1107 = vmatpush1.bf16.msra.mxu0 %v1072
    %1108 = vmatprep.subr.bf16.mxu0 0
    %1109 = vmatpush1.bf16.msra.mxu0 %v1071
    %1110 = vmatprep.subr.bf16.mxu0 0
    %1111 = vmatpush1.bf16.msra.mxu0 %v1070
    %1112 = vmatprep.subr.bf16.mxu0 0
    %1113 = vmatpush1.bf16.msra.mxu0 %v1069
    %1114 = vmatprep.subr.bf16.mxu0 0
    %1115 = vmatpush1.bf16.msra.mxu0 %v1068
    %1116 = vmatprep.subr.bf16.mxu0 0
    %1117 = vmatpush2.bf16.msra.mxu0 %v1083
    %1118 = vmatprep.subr.bf16.mxu0 0
    %1119 = vmatpush2.bf16.msra.mxu0 %v1082
    %1120 = vmatprep.subr.bf16.mxu0 0
    %1121 = vmatpush2.bf16.msra.mxu0 %v1081
    %1122 = vmatprep.subr.bf16.mxu0 0
    %1123 = vmatpush2.bf16.msra.mxu0 %v1080
    %1124 = vmatprep.subr.bf16.mxu0 0
    %1125 = vmatpush2.bf16.msra.mxu0 %v1079
    %1126 = vmatprep.subr.bf16.mxu0 0
    %1127 = vmatpush2.bf16.msra.mxu0 %v1078
    %1128 = vmatprep.subr.bf16.mxu0 0
    %1129 = vmatpush2.bf16.msra.mxu0 %v1077
    %1130 = vmatprep.subr.bf16.mxu0 0
    %1131 = vmatpush2.bf16.msra.mxu0 %v1076
    %1132 = vmatprep.mubr.bf16.mxu0 %v971
    %1133 = vmatmul.mubr.bf16.gmra.mxu0 %v970
    %v1134 = vpop.f32.mrf.mxu0
    %v1135 = vadd.f32 0.0, %v1134
    %v1136 = vpop.f32.mrf.mxu0
    %v1137 = vpop.f32.mrf.mxu0
    %v1138 = vpop.f32.mrf.mxu0
    %1139 = vdwg.mxu0
    %v1140 = vld [vmem:[%s6] sm:$0x1]
    %v1142 = vlaneseq
    %v1143 = vshrl.u32 %v1142, 7
    %v1144 = vsub.s32 0, %v1143
    %v1145 = vrot.slane %v1140, %v1144
    %1146 = vrot.lane.b32.xlu0 %v1145, 90
    %v1147 = vpop.permute.xlu0 %1146
    %v1149 = vadd.f32 %v1135, %v1147
    %v1150 = vld [vmem:[%s4] sm:$0x3]
    %v1151 = vsel %vm856, %v1135, 0.0
    %v1152 = vrot.slane %v1151, 4
    %v1153 = vadd.f32 %v1151, %v1152
    %v1154 = vrot.slane %v1153, 2
    %v1155 = vadd.f32 %v1153, %v1154
    %v1156 = vrot.slane %v1155, 1
    %v1157 = vadd.f32 %v1155, %v1156
    %v1158 = vmul.f32 %v1157, 0.5
    %v1159 = vmul.f32 %v1135, %v1135
    %v1160 = vsel %vm856, %v1159, 0.0
    %v1161 = vrot.slane %v1160, 4
    %v1162 = vadd.f32 %v1160, %v1161
    %v1163 = vrot.slane %v1162, 2
    %v1164 = vadd.f32 %v1162, %v1163
    %v1165 = vrot.slane %v1164, 1
    %v1166 = vadd.f32 %v1164, %v1165
    %v1167 = vmul.f32 %v1166, 0.5
    %v1168 = vmul.f32 %v1158, %v1158
    %v1169 = vsub.f32 %v1167, %v1168
    %v1170 = vadd.f32 %v1169, 1e-05
    %v1171 = vrsqrt.pop %v1170
    %v1172 = vmul.f32 %v1150, %v1171
    %v1173 = vlaneseq
    %v1174 = vshrl.u32 %v1173, 7
    %v1175 = vsub.s32 0, %v1174
    %v1176 = vrot.slane %v1172, %v1175
    %v1177 = vmul.f32 %v1135, %v1176
    %v1178 = vmul.f32 %v1158, %v1172
    %v1180 = vrot.slane %v1178, 7
    %v1182 = vsub.f32 %v1150, %v1180
    %v1183 = vlaneseq
    %v1184 = vshrl.u32 %v1183, 7
    %v1185 = vsub.s32 1, %v1184
    %v1186 = vrot.slane %v1182, %v1185
    %v1187 = vadd.f32 %v1177, %v1186
    %v1188 = vmax.f32 %v1187, 0.0
    %v1189 = vpack.c.bf16 %v1188, %v1188
    %v1190 = vld [vmem:[%s5] sm:$0xf]
    %v1191 = vld [vmem:[%s5 + $0x4] sm:$0xf]
    %v1192 = vld [vmem:[%s5 + $0x8] sm:$0xf]
    %v1193 = vld [vmem:[%s5 + $0xc] sm:$0xf]
    %v1194 = vld [vmem:[%s5 + $0x10] sm:$0xf]
    %v1195 = vld [vmem:[%s5 + $0x14] sm:$0xf]
    %v1196 = vld [vmem:[%s5 + $0x18] sm:$0xf]
    %v1197 = vld [vmem:[%s5 + $0x1c] sm:$0xf]
    %v1198 = vld [vmem:[%s5 + $0x20] sm:$0xf]
    %v1199 = vld [vmem:[%s5 + $0x24] sm:$0xf]
    %v1200 = vld [vmem:[%s5 + $0x28] sm:$0xf]
    %v1201 = vld [vmem:[%s5 + $0x2c] sm:$0xf]
    %v1202 = vld [vmem:[%s5 + $0x30] sm:$0xf]
    %v1203 = vld [vmem:[%s5 + $0x34] sm:$0xf]
    %v1204 = vld [vmem:[%s5 + $0x38] sm:$0xf]
    %v1205 = vld [vmem:[%s5 + $0x3c] sm:$0xf]
    %v1223 = vunpack.c.l.b16 %v1190
    %v1224 = vunpack.c.l.b16 %v1191
    %v1225 = vunpack.c.l.b16 %v1192
    %v1226 = vunpack.c.l.b16 %v1193
    %v1227 = vunpack.c.l.b16 %v1194
    %v1228 = vunpack.c.l.b16 %v1195
    %v1229 = vunpack.c.l.b16 %v1196
    %v1230 = vunpack.c.l.b16 %v1197
    %v1231 = vunpack.c.l.b16 %v1198
    %v1232 = vunpack.c.l.b16 %v1199
    %v1233 = vunpack.c.l.b16 %v1200
    %v1234 = vunpack.c.l.b16 %v1201
    %v1235 = vunpack.c.l.b16 %v1202
    %v1236 = vunpack.c.l.b16 %v1203
    %v1237 = vunpack.c.l.b16 %v1204
    %v1238 = vunpack.c.l.b16 %v1205
    %v1239 = vpack.c.b16 %v1224, %v1223
    %v1240 = vpack.c.b16 %v1226, %v1225
    %v1241 = vpack.c.b16 %v1228, %v1227
    %v1242 = vpack.c.b16 %v1230, %v1229
    %v1243 = vpack.c.b16 %v1232, %v1231
    %v1244 = vpack.c.b16 %v1234, %v1233
    %v1245 = vpack.c.b16 %v1236, %v1235
    %v1246 = vpack.c.b16 %v1238, %v1237
    %1255 = vmatprep.subr.bf16.mxu0 0
    %1256 = vmatpush1.bf16.msra.mxu0 %v1246
    %1257 = vmatprep.subr.bf16.mxu0 0
    %1258 = vmatpush1.bf16.msra.mxu0 %v1245
    %1259 = vmatprep.subr.bf16.mxu0 0
    %1260 = vmatpush1.bf16.msra.mxu0 %v1244
    %1261 = vmatprep.subr.bf16.mxu0 0
    %1262 = vmatpush1.bf16.msra.mxu0 %v1243
    %1263 = vmatprep.subr.bf16.mxu0 0
    %1264 = vmatpush1.bf16.msra.mxu0 %v1242
    %1265 = vmatprep.subr.bf16.mxu0 0
    %1266 = vmatpush1.bf16.msra.mxu0 %v1241
    %1267 = vmatprep.subr.bf16.mxu0 0
    %1268 = vmatpush1.bf16.msra.mxu0 %v1240
    %1269 = vmatprep.subr.bf16.mxu0 0
    %1270 = vmatpush1.bf16.msra.mxu0 %v1239
    %1271 = vmatprep.subr.bf16.mxu0 0
    %1272 = vmatpush2.bf16.msra.mxu0 0
    %1273 = vmatprep.subr.bf16.mxu0 0
    %1274 = vmatpush2.bf16.msra.mxu0 0
    %1275 = vmatprep.subr.bf16.mxu0 0
    %1276 = vmatpush2.bf16.msra.mxu0 0
    %1277 = vmatprep.subr.bf16.mxu0 0
    %1278 = vmatpush2.bf16.msra.mxu0 0
    %1279 = vmatprep.subr.bf16.mxu0 0
    %1280 = vmatpush2.bf16.msra.mxu0 0
    %1281 = vmatprep.subr.bf16.mxu0 0
    %1282 = vmatpush2.bf16.msra.mxu0 0
    %1283 = vmatprep.subr.bf16.mxu0 0
    %1284 = vmatpush2.bf16.msra.mxu0 0
    %1285 = vmatprep.subr.bf16.mxu0 0
    %1286 = vmatpush2.bf16.msra.mxu0 0
    %1287 = vmatprep.mubr.bf16.mxu0 0
    %1288 = vmatmul.mubr.bf16.gmra.mxu0 %v1189
    %v1289 = vpop.f32.mrf.mxu0
    %v1290 = vadd.f32 %v1145, %v1289
    %v1291 = vpop.f32.mrf.mxu0
    %v1292 = vpop.f32.mrf.mxu0
    %v1293 = vpop.f32.mrf.mxu0
    %1294 = vdwg.mxu0
    %vm1295 = vcmask 74752
    %v1296 = vsel %vm1295, %v1290, -inf
    %1297 = vmax.xlane.f32.xlu0 %v1296
    %v1298 = vpop.xlane.xlu0 %1297
    %v1299 = vsub.f32 %v1290, %v1298
    %v1300 = vmul.f32 %v1299, 1.442695
    %v1301 = vpow.pop %v1300
    %v1302 = vsel %vm1295, %v1301, 0.0
    %1303 = vadd.xlane.f32.xlu0 %v1302
    %v1304 = vpop.xlane.xlu0 %1303
    %v1305 = vlog2.pop %v1304
    %v1306 = vmul.f32 %v1305, 0.6931472
    %v1307 = vsub.f32 %v1299, %v1306
    %1308 = vst.msk [vmem:[#allocation2] sm:$0x3] %vm1295, %v1307
    %vm1309 = vcmask 829216
    %v1310 = vsel %vm1309, %v1149, -inf
    %1311 = vmax.xlane.f32.xlu0 %v1310
    %v1312 = vpop.xlane.xlu0 %1311
    %v1313 = vsub.f32 %v1149, %v1312
    %v1314 = vmul.f32 %v1313, 1.442695
    %v1315 = vpow.pop %v1314
    %1317 = vrot.lane.b32.xlu0 %v1315, 28
    %v1318 = vpop.permute.xlu0 %1317
    %vm1320 = vcmask 9216
    %v1321 = vsel %vm1320, %v1318, 0.0
    %1322 = vadd.xlane.f32.xlu0 %v1321
    %v1323 = vpop.xlane.xlu0 %1322
    %v1324 = vlog2.pop %v1323
    %v1325 = vmul.f32 %v1324, 0.6931472
    %v1326 = vsub.f32 %v1313, %v1325
    %1328 = vrot.lane.b32.xlu0 %v1326, 28
    %v1329 = vpop.permute.xlu0 %1328
    %1331 = vst.msk [vmem:[#allocation4] sm:$0x3] %vm1320, %v1329
    // Predicated region
    $region30: #{dann_forward.5} parent=1 // pred_check
      _
    $region31: #{dann_forward.5} parent=1 // pred_check_branch
      %1333 = sbr.rel (0) target = $region33
    $region32: #{dann_forward.5} parent=1 // pred_region
      %s1335 = ssub.s32 32, 32
      %1336 = vsyncadd [#allocation3], %s1335
      %s1338 = sshll.u32 [#allocation2], 4
      %s1339 = int_to_ptr.vmem [resolvable:$true] %s1338
      %1341 = dma.vmem_to_hbm [thread:$0]  %s1339, 32, %s7, [#allocation3]
    $region33: #{dann_forward.5} parent=1 // pred_fallthru
      _
    // Predicated region
    $region34: #{dann_forward.5} parent=1 // pred_check
      _
    $region35: #{dann_forward.5} parent=1 // pred_check_branch
      %1343 = sbr.rel (0) target = $region37
    $region36: #{dann_forward.5} parent=1 // pred_region
      %s1345 = ssub.s32 32, 32
      %1346 = vsyncadd [#allocation5], %s1345
      %s1348 = sshll.u32 [#allocation4], 4
      %s1349 = int_to_ptr.vmem [resolvable:$true] %s1348
      %1351 = dma.vmem_to_hbm [thread:$0]  %s1349, 32, %s8, [#allocation5]
    $region37: #{dann_forward.5} parent=1 // pred_fallthru
      _
    // Predicated region
    $region38: #{dann_forward.5} parent=1 // pred_check
      _
    $region39: #{dann_forward.5} parent=1 // pred_check_branch
      %1353 = sbr.rel (0) target = $region41
    $region40: #{dann_forward.5} parent=1 // pred_region
      %1354 = dma.done [#allocation3], 32
    $region41: #{dann_forward.5} parent=1 // pred_fallthru
      _
    // Predicated region
    $region42: #{dann_forward.5} parent=1 // pred_check
      _
    $region43: #{dann_forward.5} parent=1 // pred_check_branch
      %1356 = sbr.rel (0) target = $region45
    $region44: #{dann_forward.5} parent=1 // pred_region
      %1357 = dma.done [#allocation5], 32
    $region45: #{dann_forward.5} parent=1 // pred_fallthru
      _
    %1358 = vsyncpa [#allocation3], 1
    %1359 = vsyncpa [#allocation5], 1

</llo_original>
